<compile_context>
chip_gen: v6e
topology: v6e:2x2x1
jax: 0.10.0
libtpu: 0.0.40
codegen_flags: <defaults>
</compile_context>

<pallas_src>
import math
import functools

import jax
import jax.numpy as jnp
from jax.experimental import pallas as pl
from jax.experimental.pallas import tpu as pltpu

# ----------------------------- hyperparameters ------------------------------
IMG = 32
PATCH = 16
CHANNELS = 3
HIDDEN = 128
NUM_HEADS = 4
HEAD_DIM = HIDDEN // NUM_HEADS
MLP_DIM = 256
NUM_LAYERS = 2
EMBED_DIM = 64
LN_EPS = 1e-12                        # HF ViT layer_norm_eps
NUM_PATCHES = (IMG // PATCH) ** 2     # 4
SEQ = NUM_PATCHES + 1                 # 5 real tokens (CLS + patches)
SEQ_PAD = 8                           # pad to one (8,128) sublane tile
PATCH_DIM = CHANNELS * PATCH * PATCH  # 768
QKVO_DIM = 2 * HIDDEN + NUM_HEADS * HIDDEN   # 768: [q | k | folded v@Wo per head]
VEC_W = max(2 * HIDDEN, MLP_DIM)             # 256: width of the bias/LN slab
OUT_PAD = 128                                # lane-dense output width


# ----------------------------- in-kernel helpers ----------------------------
def _layernorm(x, w, b):
    mu = jnp.mean(x, axis=-1, keepdims=True)
    var = jnp.mean((x - mu) ** 2, axis=-1, keepdims=True)
    return (x - mu) * jax.lax.rsqrt(var + LN_EPS) * w + b


def _gelu(x):
    # tanh-based GELU: one EUP tanh instead of ~12 VALU ops for a polynomial erf.
    c = math.sqrt(2.0 / math.pi)
    return 0.5 * x * (1.0 + jnp.tanh(c * (x + 0.044715 * x * x * x)))


# --------------------------------- kernel -----------------------------------
def fused_vit_kernel(
    patches_ref,    # (B_TILE*8, 768) bf16 : rows (b, s); s=0 (CLS) & s>=SEQ are 0
    patch_w_ref,    # (768, 128)      bf16
    tok_ref,        # (8, 128)        f32  : cls+pos / pos+conv_b / 0 token slab
    wqkvo_ref,      # (L, 128, 768)   bf16
    w1_ref,         # (L, 128, 256)   bf16
    w2_ref,         # (L, 256, 128)   bf16
    vec_ref,        # (L, 8, 256)     f32  : ln1w,ln1b,[bq|bk],attn_b,ln2w,ln2b,b1,b2
    misc_ref,       # (8, 128)        f32  : lnf_w, lnf_b, proj_b, zeros...
    projw_ref,      # (128, 128)      bf16 : cols >= EMBED_DIM are 0
    o_ref,          # (B_TILE, 128)   f32
):
    f32 = jnp.float32
    bf16 = jnp.bfloat16
    T = patches_ref.shape[0]          # B_TILE * SEQ_PAD token rows
    B = T // SEQ_PAD

    def mm(a, w):
        # bf16 operands on the MXU, f32 accumulation.
        return jnp.dot(a.astype(bf16), w, preferred_element_type=f32)

    # ---------------- patch embedding + token assembly (one matmul) ----------
    # CLS / pad rows of `patches` are zero, so row 0 gets exactly cls+pos[0] from
    # the token slab; patch rows get patch@W + pos + conv_bias; pad rows stay 0.
    x = mm(patches_ref[...], patch_w_ref[...])                       # (T, H)
    x = (x.reshape(B, SEQ_PAD, HIDDEN) + tok_ref[...]).reshape(T, HIDDEN)

    # key-padding mask: tokens >= SEQ are padding, removed from every softmax.
    kidx = jax.lax.broadcasted_iota(jnp.int32, (1, SEQ_PAD), 1)
    kmask = jnp.where(kidx < SEQ, 0.0, -1e30).astype(f32)            # (1, 8)
    scale = 1.0 / math.sqrt(HEAD_DIM)

    # ----------------------------- encoder layers ----------------------------
    for l in range(NUM_LAYERS):                                      # static
        vecs = vec_ref[l]                                            # (8, 256)
        ln1w = vecs[0:1, :HIDDEN]
        ln1b = vecs[1:2, :HIDDEN]
        bq = vecs[2:3, :HIDDEN]
        bk = vecs[2:3, HIDDEN:2 * HIDDEN]
        attnb = vecs[3:4, :HIDDEN]
        ln2w = vecs[4:5, :HIDDEN]
        ln2b = vecs[5:6, :HIDDEN]
        b1 = vecs[6:7, :MLP_DIM]
        b2 = vecs[7:8, :HIDDEN]

        # ---- self attention (pre-LN), single fused q/k/vo projection ----
        h = _layernorm(x, ln1w, ln1b)                                # (T, H) f32
        qkvo = mm(h, wqkvo_ref[l])                                   # (T, 768) f32
        q = (qkvo[:, :HIDDEN] + bq).reshape(B, SEQ_PAD, HIDDEN)
        k = (qkvo[:, HIDDEN:2 * HIDDEN] + bk).reshape(B, SEQ_PAD, HIDDEN)
        vo = qkvo[:, 2 * HIDDEN:].reshape(B, SEQ_PAD, NUM_HEADS * HIDDEN)

        # scores for every head, then ONE batched masked softmax.
        s_parts = []
        for hh in range(NUM_HEADS):                                  # static
            sl = slice(hh * HEAD_DIM, (hh + 1) * HEAD_DIM)
            s_parts.append(jnp.einsum(
                'bqd,bkd->bqk',
                q[..., sl].astype(bf16), k[..., sl].astype(bf16),
                preferred_element_type=f32))
        s = jnp.concatenate(s_parts, axis=0) * scale + kmask         # (NH*B, 8, 8)
        s = s - jnp.max(s, axis=-1, keepdims=True)
        p = jnp.exp(s)
        # exact reciprocal: folded bias (bv@Wo + bo) assumes row-sums == 1.
        p = p * pl.reciprocal(jnp.sum(p, axis=-1, keepdims=True), approx=False)
        pb = p.astype(bf16)

        # per-head value+output projection already folded into wvo (128 lanes).
        attn = jnp.zeros((B, SEQ_PAD, HIDDEN), f32)
        for hh in range(NUM_HEADS):                                  # static
            voh = vo[..., hh * HIDDEN:(hh + 1) * HIDDEN].astype(bf16)
            attn = attn + jnp.einsum('bqk,bkd->bqd',
                                     pb[hh * B:(hh + 1) * B], voh,
                                     preferred_element_type=f32)
        x = x + attn.reshape(T, HIDDEN) + attnb                      # residual

        # ---- MLP (pre-LN) ----
        h2 = _layernorm(x, ln2w, ln2b)
        m = _gelu(mm(h2, w1_ref[l]) + b1)
        x = x + mm(m, w2_ref[l]) + b2                                # residual

    # ----------------- final LN on CLS + projection + L2 norm ----------------
    lnfw = misc_ref[0:1, :]
    lnfb = misc_ref[1:2, :]
    projb = misc_ref[2:3, :]
    cls = x.reshape(B, SEQ_PAD, HIDDEN)[:, 0, :]                     # (B, H)
    cls = _layernorm(cls, lnfw, lnfb)
    e = mm(cls, projw_ref[...]) + projb                              # (B, 128)
    # padded projection columns are exactly zero, so the norm over 128 lanes
    # equals the norm over the real EMBED_DIM columns.
    ss = jnp.sum(e * e, axis=-1, keepdims=True)
    o_ref[...] = e * jax.lax.rsqrt(jnp.maximum(ss, 1e-24))           # F.normalize


# ------------------------------- parameters ---------------------------------
def init_params(key):
    bf16 = jnp.bfloat16

    def nrm(k, shape, scale=0.02):
        return (scale * jax.random.normal(k, shape)).astype(jnp.float32)

    keys = iter(jax.random.split(key, 4 + NUM_LAYERS * 6))

    # patch embedding: Conv2d(C, H, kernel=P, stride=P) weight flattened (c,ph,pw).
    conv_w = nrm(next(keys), (HIDDEN, CHANNELS, PATCH, PATCH))
    patch_w = conv_w.reshape(HIDDEN, PATCH_DIM).T                    # (768, 128)
    conv_b = jnp.zeros((HIDDEN,), jnp.float32)
    cls_token = nrm(next(keys), (1, HIDDEN))
    pos_emb = nrm(next(keys), (SEQ, HIDDEN))

    # token slab: row0 = cls+pos[0]; rows 1..NP = pos + conv bias; pad rows = 0.
    tok = jnp.zeros((SEQ_PAD, HIDDEN), jnp.float32)
    tok = tok.at[0].set(cls_token[0] + pos_emb[0])
    tok = tok.at[1:SEQ].set(pos_emb[1:] + conv_b[None, :])

    def pad_vec(v):
        return jnp.pad(v, (0, VEC_W - v.shape[0]))

    wqkvo_l, w1_l, w2_l, vec_l = [], [], [], []
    for _ in range(NUM_LAYERS):
        wq = nrm(next(keys), (HIDDEN, HIDDEN))
        wk = nrm(next(keys), (HIDDEN, HIDDEN))
        wv = nrm(next(keys), (HIDDEN, HIDDEN))
        wo = nrm(next(keys), (HIDDEN, HIDDEN))
        bq = jnp.zeros((HIDDEN,), jnp.float32)
        bk = jnp.zeros((HIDDEN,), jnp.float32)
        bv = jnp.zeros((HIDDEN,), jnp.float32)
        bo = jnp.zeros((HIDDEN,), jnp.float32)
        w1 = nrm(next(keys), (HIDDEN, MLP_DIM))
        w2 = nrm(next(keys), (MLP_DIM, HIDDEN))
        b1 = jnp.zeros((MLP_DIM,), jnp.float32)
        b2 = jnp.zeros((HIDDEN,), jnp.float32)

        # offline foldings: per-head V@Wo, plus q/k/vo concatenation.
        wvo = jnp.concatenate(
            [wv[:, h * HEAD_DIM:(h + 1) * HEAD_DIM]
             @ wo[h * HEAD_DIM:(h + 1) * HEAD_DIM, :]
             for h in range(NUM_HEADS)], axis=1)                     # (H, NH*H)
        attn_b = bv @ wo + bo                                        # (H,)
        wqkvo = jnp.concatenate([wq, wk, wvo], axis=1)               # (H, 768)

        vec = jnp.stack([
            pad_vec(jnp.ones((HIDDEN,), jnp.float32)),               # ln1_w
            pad_vec(jnp.zeros((HIDDEN,), jnp.float32)),              # ln1_b
            jnp.concatenate([bq, bk]),                               # [bq | bk]
            pad_vec(attn_b),                                         # attn bias
            pad_vec(jnp.ones((HIDDEN,), jnp.float32)),               # ln2_w
            pad_vec(jnp.zeros((HIDDEN,), jnp.float32)),              # ln2_b
            b1,                                                      # (256,)
            pad_vec(b2),
        ], axis=0)                                                   # (8, 256)

        wqkvo_l.append(wqkvo.astype(bf16))
        w1_l.append(w1.astype(bf16))
        w2_l.append(w2.astype(bf16))
        vec_l.append(vec)

    proj_w = nrm(next(keys), (HIDDEN, EMBED_DIM))
    proj_b = jnp.zeros((EMBED_DIM,), jnp.float32)
    proj_w_pad = jnp.pad(proj_w, ((0, 0), (0, OUT_PAD - EMBED_DIM)))
    proj_b_pad = jnp.pad(proj_b, (0, OUT_PAD - EMBED_DIM))
    zrow = jnp.zeros((HIDDEN,), jnp.float32)
    misc = jnp.stack([jnp.ones((HIDDEN,), jnp.float32),              # lnf_w
                      jnp.zeros((HIDDEN,), jnp.float32),             # lnf_b
                      proj_b_pad, zrow, zrow, zrow, zrow, zrow], axis=0)

    return dict(
        patch_w=patch_w.astype(bf16),
        tok_emb=tok,
        w_qkvo=jnp.stack(wqkvo_l),       # (L, 128, 768) bf16
        w1=jnp.stack(w1_l),              # (L, 128, 256) bf16
        w2=jnp.stack(w2_l),              # (L, 256, 128) bf16
        vec=jnp.stack(vec_l),            # (L, 8, 256)   f32
        misc=misc,                       # (8, 128)      f32
        proj_w=proj_w_pad.astype(bf16),  # (128, 128)    bf16
    )


# --------------------------------- forward ----------------------------------
def _round_up(x, m):
    return (x + m - 1) // m * m


def extract_patches(pix):
    # NCHW -> (B, num_patches, C*P*P) flattened in (c, ph, pw) order to match
    # the flattened Conv2d weight.
    B, C, H, W = pix.shape
    gh, gw = H // PATCH, W // PATCH
    x = pix.reshape(B, C, gh, PATCH, gw, PATCH)
    x = x.transpose(0, 2, 4, 1, 3, 5)                  # (B, gh, gw, C, P, P)
    return x.reshape(B, gh * gw, C * PATCH * PATCH)


def vit_image_encoder(params, pixel_values, b_tile=None):
    pixel_values = pixel_values.astype(jnp.float32)
    B = pixel_values.shape[0]
    if b_tile is None:
        # 32 images/step -> 256 token rows per matmul (full v6e/v7x MXU M dim);
        # tiny batches collapse to one step.  Per-step VMEM: patches block
        # 2 x 384 KiB (double-buffered) + ~0.9 MiB resident weights -> far under
        # the 32 MiB scoped limit even on v7x.
        b_tile = min(32, _round_up(B, 8))
    B_pad = _round_up(B, b_tile)

    # Pre-padded, pre-cast bf16 patch slab with zero CLS/pad rows.
    patches = extract_patches(pixel_values).astype(jnp.bfloat16)     # (B, NP, 768)
    slab = jnp.zeros((B_pad, SEQ_PAD, PATCH_DIM), jnp.bfloat16)
    slab = slab.at[:B, 1:1 + NUM_PATCHES, :].set(patches)
    slab = slab.reshape(B_pad * SEQ_PAD, PATCH_DIM)

    L = NUM_LAYERS
    out = pl.pallas_call(
        fused_vit_kernel,
        out_shape=jax.ShapeDtypeStruct((B_pad, OUT_PAD), jnp.float32),
        grid_spec=pltpu.PrefetchScalarGridSpec(
            num_scalar_prefetch=0,
            grid=(B_pad // b_tile,),
            in_specs=[
                pl.BlockSpec((b_tile * SEQ_PAD, PATCH_DIM), lambda i: (i, 0)),
                pl.BlockSpec((PATCH_DIM, HIDDEN), lambda i: (0, 0)),
                pl.BlockSpec((SEQ_PAD, HIDDEN), lambda i: (0, 0)),
                pl.BlockSpec((L, HIDDEN, QKVO_DIM), lambda i: (0, 0, 0)),
                pl.BlockSpec((L, HIDDEN, MLP_DIM), lambda i: (0, 0, 0)),
                pl.BlockSpec((L, MLP_DIM, HIDDEN), lambda i: (0, 0, 0)),
                pl.BlockSpec((L, 8, VEC_W), lambda i: (0, 0, 0)),
                pl.BlockSpec((8, HIDDEN), lambda i: (0, 0)),
                pl.BlockSpec((HIDDEN, OUT_PAD), lambda i: (0, 0)),
            ],
            out_specs=pl.BlockSpec((b_tile, OUT_PAD), lambda i: (i, 0)),
        ),
        compiler_params=pltpu.CompilerParams(
            dimension_semantics=("parallel",),
            vmem_limit_bytes=32 * 1024 * 1024,
        ),
    )(slab, params['patch_w'], params['tok_emb'], params['w_qkvo'],
      params['w1'], params['w2'], params['vec'], params['misc'],
      params['proj_w'])
    return out[:B, :EMBED_DIM]


# ----------------------------------- main ------------------------------------
if __name__ == "__main__":
    key = jax.random.PRNGKey(0)
    k_pix, k_par = jax.random.split(key)
    pixel_values = jax.random.normal(k_pix, (2, CHANNELS, IMG, IMG), jnp.float32)
    params = init_params(k_par)

    fwd = jax.jit(functools.partial(vit_image_encoder, params))
    emb = fwd(pixel_values)
    jax.block_until_ready(emb)

    assert emb.shape == (2, EMBED_DIM), emb.shape
    # sanity: outputs are unit-norm rows
    norms = jnp.linalg.norm(emb, axis=1)
    assert bool(jnp.all(jnp.abs(norms - 1.0) < 1e-3)), norms
    print("KERNEL_OK")
</pallas_src>

<mosaic_0001>
module attributes {stable_mosaic.version = 11 : i64} {
  func.func @fused_vit_kernel(%arg0: i32, %arg1: memref<64x768xbf16, #tpu.memory_space<vmem>>, %arg2: memref<768x128xbf16, #tpu.memory_space<vmem>>, %arg3: memref<8x128xf32, #tpu.memory_space<vmem>>, %arg4: memref<2x128x768xbf16, #tpu.memory_space<vmem>>, %arg5: memref<2x128x256xbf16, #tpu.memory_space<vmem>>, %arg6: memref<2x256x128xbf16, #tpu.memory_space<vmem>>, %arg7: memref<2x8x256xf32, #tpu.memory_space<vmem>>, %arg8: memref<8x128xf32, #tpu.memory_space<vmem>>, %arg9: memref<128x128xbf16, #tpu.memory_space<vmem>>, %arg10: memref<8x128xf32, #tpu.memory_space<vmem>>) attributes {dimension_semantics = [#tpu.dimension_semantics<parallel>], iteration_bounds = array<i64: 1>, scalar_prefetch = 0 : i64, scratch_operands = 0 : i64, tpu.core_type = #tpu.core_type<tc>, window_params = [{transform_indices = @transform_0, window_bounds = array<i64: 64, 768>}, {pipeline_mode = #tpu.pipeline_mode<synchronous>, transform_indices = @transform_1, window_bounds = array<i64: 768, 128>}, {pipeline_mode = #tpu.pipeline_mode<synchronous>, transform_indices = @transform_2, window_bounds = array<i64: 8, 128>}, {pipeline_mode = #tpu.pipeline_mode<synchronous>, transform_indices = @transform_3, window_bounds = array<i64: 2, 128, 768>}, {pipeline_mode = #tpu.pipeline_mode<synchronous>, transform_indices = @transform_4, window_bounds = array<i64: 2, 128, 256>}, {pipeline_mode = #tpu.pipeline_mode<synchronous>, transform_indices = @transform_5, window_bounds = array<i64: 2, 256, 128>}, {pipeline_mode = #tpu.pipeline_mode<synchronous>, transform_indices = @transform_6, window_bounds = array<i64: 2, 8, 256>}, {pipeline_mode = #tpu.pipeline_mode<synchronous>, transform_indices = @transform_7, window_bounds = array<i64: 8, 128>}, {pipeline_mode = #tpu.pipeline_mode<synchronous>, transform_indices = @transform_8, window_bounds = array<i64: 128, 128>}, {transform_indices = @transform_9, window_bounds = array<i64: 8, 128>}]} {
    %c0 = arith.constant 0 : index
    %c0_0 = arith.constant 0 : index
    %0 = vector.load %arg1[%c0, %c0_0] : memref<64x768xbf16, #tpu.memory_space<vmem>>, vector<64x768xbf16>
    %c0_1 = arith.constant 0 : index
    %c0_2 = arith.constant 0 : index
    %1 = vector.load %arg2[%c0_1, %c0_2] : memref<768x128xbf16, #tpu.memory_space<vmem>>, vector<768x128xbf16>
    %cst = arith.constant dense<0.000000e+00> : vector<64x128xf32>
    %2 = tpu.matmul %0, %1, %cst {dimension_numbers = #tpu.dot_dimension_numbers<[1], [0], [0], [1], [0, 0, 1, 1], [], []>} : vector<64x768xbf16>, vector<768x128xbf16>, vector<64x128xf32> -> vector<64x128xf32>
    %3 = vector.shape_cast %2 : vector<64x128xf32> to vector<8x8x128xf32>
    %c0_3 = arith.constant 0 : index
    %c0_4 = arith.constant 0 : index
    %4 = vector.load %arg3[%c0_3, %c0_4] : memref<8x128xf32, #tpu.memory_space<vmem>>, vector<8x128xf32>
    %5 = vector.shape_cast %4 : vector<8x128xf32> to vector<1x8x128xf32>
    %6 = vector.broadcast %5 : vector<1x8x128xf32> to vector<8x8x128xf32>
    %7 = arith.addf %3, %6 : vector<8x8x128xf32>
    %8 = vector.shape_cast %7 : vector<8x8x128xf32> to vector<64x128xf32>
    %9 = tpu.iota {dimensions = array<i32: 1>} : vector<1x8xi32>
    %c5_i32 = arith.constant 5 : i32
    %10 = vector.broadcast %c5_i32 : i32 to vector<1x8xi32>
    %11 = arith.cmpi slt, %9, %10 : vector<1x8xi32>
    %cst_5 = arith.constant 0.000000e+00 : f32
    %cst_6 = arith.constant -1.000000e+30 : f32
    %12 = vector.broadcast %cst_5 : f32 to vector<1x8xf32>
    %13 = vector.broadcast %cst_6 : f32 to vector<1x8xf32>
    %14 = arith.select %11, %12, %13 : vector<1x8xi1>, vector<1x8xf32>
    %c0_7 = arith.constant 0 : index
    %c0_8 = arith.constant 0 : index
    %c0_9 = arith.constant 0 : index
    %15 = vector.load %arg7[%c0_7, %c0_8, %c0_9] : memref<2x8x256xf32, #tpu.memory_space<vmem>>, vector<1x8x256xf32>
    %16 = vector.shape_cast %15 : vector<1x8x256xf32> to vector<8x256xf32>
    %17 = vector.extract_strided_slice %16 {offsets = [0, 0], sizes = [1, 128], strides = [1, 1]} : vector<8x256xf32> to vector<1x128xf32>
    %18 = vector.extract_strided_slice %16 {offsets = [1, 0], sizes = [1, 128], strides = [1, 1]} : vector<8x256xf32> to vector<1x128xf32>
    %19 = vector.extract_strided_slice %16 {offsets = [2, 0], sizes = [1, 128], strides = [1, 1]} : vector<8x256xf32> to vector<1x128xf32>
    %20 = vector.extract_strided_slice %16 {offsets = [2, 128], sizes = [1, 128], strides = [1, 1]} : vector<8x256xf32> to vector<1x128xf32>
    %21 = vector.extract_strided_slice %16 {offsets = [3, 0], sizes = [1, 128], strides = [1, 1]} : vector<8x256xf32> to vector<1x128xf32>
    %22 = vector.extract_strided_slice %16 {offsets = [4, 0], sizes = [1, 128], strides = [1, 1]} : vector<8x256xf32> to vector<1x128xf32>
    %23 = vector.extract_strided_slice %16 {offsets = [5, 0], sizes = [1, 128], strides = [1, 1]} : vector<8x256xf32> to vector<1x128xf32>
    %24 = vector.extract_strided_slice %16 {offsets = [6, 0], sizes = [1, 256], strides = [1, 1]} : vector<8x256xf32> to vector<1x256xf32>
    %25 = vector.extract_strided_slice %16 {offsets = [7, 0], sizes = [1, 128], strides = [1, 1]} : vector<8x256xf32> to vector<1x128xf32>
    %cst_10 = arith.constant dense<0.000000e+00> : vector<64xf32>
    %26 = vector.multi_reduction <add>, %8, %cst_10 [1] : vector<64x128xf32> to vector<64xf32>
    %27 = vector.shape_cast %26 : vector<64xf32> to vector<64x1xf32>
    %cst_11 = arith.constant 1.280000e+02 : f32
    %28 = vector.broadcast %cst_11 : f32 to vector<64x1xf32>
    %29 = arith.divf %27, %28 : vector<64x1xf32>
    %30 = vector.broadcast %29 : vector<64x1xf32> to vector<64x128xf32>
    %31 = arith.subf %8, %30 : vector<64x128xf32>
    %32 = arith.mulf %31, %31 : vector<64x128xf32>
    %cst_12 = arith.constant dense<0.000000e+00> : vector<64xf32>
    %33 = vector.multi_reduction <add>, %32, %cst_12 [1] : vector<64x128xf32> to vector<64xf32>
    %34 = vector.shape_cast %33 : vector<64xf32> to vector<64x1xf32>
    %cst_13 = arith.constant 1.280000e+02 : f32
    %35 = vector.broadcast %cst_13 : f32 to vector<64x1xf32>
    %36 = arith.divf %34, %35 : vector<64x1xf32>
    %37 = vector.broadcast %29 : vector<64x1xf32> to vector<64x128xf32>
    %38 = arith.subf %8, %37 : vector<64x128xf32>
    %cst_14 = arith.constant 9.99999996E-13 : f32
    %39 = vector.broadcast %cst_14 : f32 to vector<64x1xf32>
    %40 = arith.addf %36, %39 : vector<64x1xf32>
    %41 = math.rsqrt %40 : vector<64x1xf32>
    %42 = vector.broadcast %41 : vector<64x1xf32> to vector<64x128xf32>
    %43 = arith.mulf %38, %42 : vector<64x128xf32>
    %44 = vector.broadcast %17 : vector<1x128xf32> to vector<64x128xf32>
    %45 = arith.mulf %43, %44 : vector<64x128xf32>
    %46 = vector.broadcast %18 : vector<1x128xf32> to vector<64x128xf32>
    %47 = arith.addf %45, %46 : vector<64x128xf32>
    %c0_15 = arith.constant 0 : index
    %c0_16 = arith.constant 0 : index
    %c0_17 = arith.constant 0 : index
    %48 = vector.load %arg4[%c0_15, %c0_16, %c0_17] : memref<2x128x768xbf16, #tpu.memory_space<vmem>>, vector<1x128x768xbf16>
    %49 = vector.shape_cast %48 : vector<1x128x768xbf16> to vector<128x768xbf16>
    %50 = arith.truncf %47 : vector<64x128xf32> to vector<64x128xbf16>
    %cst_18 = arith.constant dense<0.000000e+00> : vector<64x768xf32>
    %51 = tpu.matmul %50, %49, %cst_18 {dimension_numbers = #tpu.dot_dimension_numbers<[1], [0], [0], [1], [0, 0, 1, 1], [], []>} : vector<64x128xbf16>, vector<128x768xbf16>, vector<64x768xf32> -> vector<64x768xf32>
    %52 = vector.extract_strided_slice %51 {offsets = [0, 0], sizes = [64, 128], strides = [1, 1]} : vector<64x768xf32> to vector<64x128xf32>
    %53 = vector.broadcast %19 : vector<1x128xf32> to vector<64x128xf32>
    %54 = arith.addf %52, %53 : vector<64x128xf32>
    %55 = vector.shape_cast %54 : vector<64x128xf32> to vector<8x8x128xf32>
    %56 = vector.extract_strided_slice %51 {offsets = [0, 128], sizes = [64, 128], strides = [1, 1]} : vector<64x768xf32> to vector<64x128xf32>
    %57 = vector.broadcast %20 : vector<1x128xf32> to vector<64x128xf32>
    %58 = arith.addf %56, %57 : vector<64x128xf32>
    %59 = vector.shape_cast %58 : vector<64x128xf32> to vector<8x8x128xf32>
    %60 = vector.extract_strided_slice %51 {offsets = [0, 256], sizes = [64, 512], strides = [1, 1]} : vector<64x768xf32> to vector<64x512xf32>
    %61 = vector.shape_cast %60 : vector<64x512xf32> to vector<8x8x512xf32>
    %62 = vector.extract_strided_slice %55 {offsets = [0, 0, 0], sizes = [8, 8, 32], strides = [1, 1, 1]} : vector<8x8x128xf32> to vector<8x8x32xf32>
    %63 = arith.truncf %62 : vector<8x8x32xf32> to vector<8x8x32xbf16>
    %64 = vector.extract_strided_slice %59 {offsets = [0, 0, 0], sizes = [8, 8, 32], strides = [1, 1, 1]} : vector<8x8x128xf32> to vector<8x8x32xf32>
    %65 = arith.truncf %64 : vector<8x8x32xf32> to vector<8x8x32xbf16>
    "tpu.trace_start"() <{level = 10 : i32, message = "bqd,bkd->bqk"}> : () -> ()
    %cst_19 = arith.constant dense<0.000000e+00> : vector<8x8x8xf32>
    %66 = tpu.matmul %63, %65, %cst_19 {dimension_numbers = #tpu.dot_dimension_numbers<[2], [2], [1], [1], [0, 0, 0, 1, 1, 1], [0], [0]>} : vector<8x8x32xbf16>, vector<8x8x32xbf16>, vector<8x8x8xf32> -> vector<8x8x8xf32>
    "tpu.trace_stop"() : () -> ()
    %67 = vector.extract_strided_slice %55 {offsets = [0, 0, 32], sizes = [8, 8, 32], strides = [1, 1, 1]} : vector<8x8x128xf32> to vector<8x8x32xf32>
    %68 = arith.truncf %67 : vector<8x8x32xf32> to vector<8x8x32xbf16>
    %69 = vector.extract_strided_slice %59 {offsets = [0, 0, 32], sizes = [8, 8, 32], strides = [1, 1, 1]} : vector<8x8x128xf32> to vector<8x8x32xf32>
    %70 = arith.truncf %69 : vector<8x8x32xf32> to vector<8x8x32xbf16>
    "tpu.trace_start"() <{level = 10 : i32, message = "bqd,bkd->bqk"}> : () -> ()
    %cst_20 = arith.constant dense<0.000000e+00> : vector<8x8x8xf32>
    %71 = tpu.matmul %68, %70, %cst_20 {dimension_numbers = #tpu.dot_dimension_numbers<[2], [2], [1], [1], [0, 0, 0, 1, 1, 1], [0], [0]>} : vector<8x8x32xbf16>, vector<8x8x32xbf16>, vector<8x8x8xf32> -> vector<8x8x8xf32>
    "tpu.trace_stop"() : () -> ()
    %72 = vector.extract_strided_slice %55 {offsets = [0, 0, 64], sizes = [8, 8, 32], strides = [1, 1, 1]} : vector<8x8x128xf32> to vector<8x8x32xf32>
    %73 = arith.truncf %72 : vector<8x8x32xf32> to vector<8x8x32xbf16>
    %74 = vector.extract_strided_slice %59 {offsets = [0, 0, 64], sizes = [8, 8, 32], strides = [1, 1, 1]} : vector<8x8x128xf32> to vector<8x8x32xf32>
    %75 = arith.truncf %74 : vector<8x8x32xf32> to vector<8x8x32xbf16>
    "tpu.trace_start"() <{level = 10 : i32, message = "bqd,bkd->bqk"}> : () -> ()
    %cst_21 = arith.constant dense<0.000000e+00> : vector<8x8x8xf32>
    %76 = tpu.matmul %73, %75, %cst_21 {dimension_numbers = #tpu.dot_dimension_numbers<[2], [2], [1], [1], [0, 0, 0, 1, 1, 1], [0], [0]>} : vector<8x8x32xbf16>, vector<8x8x32xbf16>, vector<8x8x8xf32> -> vector<8x8x8xf32>
    "tpu.trace_stop"() : () -> ()
    %77 = vector.extract_strided_slice %55 {offsets = [0, 0, 96], sizes = [8, 8, 32], strides = [1, 1, 1]} : vector<8x8x128xf32> to vector<8x8x32xf32>
    %78 = arith.truncf %77 : vector<8x8x32xf32> to vector<8x8x32xbf16>
    %79 = vector.extract_strided_slice %59 {offsets = [0, 0, 96], sizes = [8, 8, 32], strides = [1, 1, 1]} : vector<8x8x128xf32> to vector<8x8x32xf32>
    %80 = arith.truncf %79 : vector<8x8x32xf32> to vector<8x8x32xbf16>
    "tpu.trace_start"() <{level = 10 : i32, message = "bqd,bkd->bqk"}> : () -> ()
    %cst_22 = arith.constant dense<0.000000e+00> : vector<8x8x8xf32>
    %81 = tpu.matmul %78, %80, %cst_22 {dimension_numbers = #tpu.dot_dimension_numbers<[2], [2], [1], [1], [0, 0, 0, 1, 1, 1], [0], [0]>} : vector<8x8x32xbf16>, vector<8x8x32xbf16>, vector<8x8x8xf32> -> vector<8x8x8xf32>
    "tpu.trace_stop"() : () -> ()
    %82 = tpu.concatenate %66, %71, %76, %81 in 0 : vector<8x8x8xf32>, vector<8x8x8xf32>, vector<8x8x8xf32>, vector<8x8x8xf32> -> vector<32x8x8xf32>
    %cst_23 = arith.constant 0.176776692 : f32
    %83 = vector.broadcast %cst_23 : f32 to vector<32x8x8xf32>
    %84 = arith.mulf %82, %83 : vector<32x8x8xf32>
    %85 = vector.shape_cast %14 : vector<1x8xf32> to vector<1x1x8xf32>
    %86 = vector.broadcast %85 : vector<1x1x8xf32> to vector<32x8x8xf32>
    %87 = arith.addf %84, %86 : vector<32x8x8xf32>
    %cst_24 = arith.constant dense<0xFF800000> : vector<32x8xf32>
    %88 = vector.multi_reduction <maximumf>, %87, %cst_24 [2] : vector<32x8x8xf32> to vector<32x8xf32>
    %89 = vector.shape_cast %88 : vector<32x8xf32> to vector<32x8x1xf32>
    %90 = vector.broadcast %89 : vector<32x8x1xf32> to vector<32x8x8xf32>
    %91 = arith.subf %87, %90 : vector<32x8x8xf32>
    %92 = math.exp %91 : vector<32x8x8xf32>
    %cst_25 = arith.constant dense<0.000000e+00> : vector<32x8xf32>
    %93 = vector.multi_reduction <add>, %92, %cst_25 [2] : vector<32x8x8xf32> to vector<32x8xf32>
    %94 = vector.shape_cast %93 : vector<32x8xf32> to vector<32x8x1xf32>
    %95 = tpu.reciprocal %94 : vector<32x8x1xf32> -> vector<32x8x1xf32>
    %96 = vector.broadcast %95 : vector<32x8x1xf32> to vector<32x8x8xf32>
    %97 = arith.mulf %92, %96 : vector<32x8x8xf32>
    %98 = arith.truncf %97 : vector<32x8x8xf32> to vector<32x8x8xbf16>
    %cst_26 = arith.constant 0.000000e+00 : f32
    %99 = vector.broadcast %cst_26 : f32 to vector<8x8x128xf32>
    %100 = vector.extract_strided_slice %61 {offsets = [0, 0, 0], sizes = [8, 8, 128], strides = [1, 1, 1]} : vector<8x8x512xf32> to vector<8x8x128xf32>
    %101 = arith.truncf %100 : vector<8x8x128xf32> to vector<8x8x128xbf16>
    %102 = vector.extract_strided_slice %98 {offsets = [0, 0, 0], sizes = [8, 8, 8], strides = [1, 1, 1]} : vector<32x8x8xbf16> to vector<8x8x8xbf16>
    "tpu.trace_start"() <{level = 10 : i32, message = "bqk,bkd->bqd"}> : () -> ()
    %cst_27 = arith.constant dense<0.000000e+00> : vector<8x8x128xf32>
    %103 = tpu.matmul %102, %101, %cst_27 {dimension_numbers = #tpu.dot_dimension_numbers<[2], [1], [1], [2], [0, 0, 0, 1, 1, 2], [0], [0]>} : vector<8x8x8xbf16>, vector<8x8x128xbf16>, vector<8x8x128xf32> -> vector<8x8x128xf32>
    "tpu.trace_stop"() : () -> ()
    %104 = arith.addf %99, %103 : vector<8x8x128xf32>
    %105 = vector.extract_strided_slice %61 {offsets = [0, 0, 128], sizes = [8, 8, 128], strides = [1, 1, 1]} : vector<8x8x512xf32> to vector<8x8x128xf32>
    %106 = arith.truncf %105 : vector<8x8x128xf32> to vector<8x8x128xbf16>
    %107 = vector.extract_strided_slice %98 {offsets = [8, 0, 0], sizes = [8, 8, 8], strides = [1, 1, 1]} : vector<32x8x8xbf16> to vector<8x8x8xbf16>
    "tpu.trace_start"() <{level = 10 : i32, message = "bqk,bkd->bqd"}> : () -> ()
    %cst_28 = arith.constant dense<0.000000e+00> : vector<8x8x128xf32>
    %108 = tpu.matmul %107, %106, %cst_28 {dimension_numbers = #tpu.dot_dimension_numbers<[2], [1], [1], [2], [0, 0, 0, 1, 1, 2], [0], [0]>} : vector<8x8x8xbf16>, vector<8x8x128xbf16>, vector<8x8x128xf32> -> vector<8x8x128xf32>
    "tpu.trace_stop"() : () -> ()
    %109 = arith.addf %104, %108 : vector<8x8x128xf32>
    %110 = vector.extract_strided_slice %61 {offsets = [0, 0, 256], sizes = [8, 8, 128], strides = [1, 1, 1]} : vector<8x8x512xf32> to vector<8x8x128xf32>
    %111 = arith.truncf %110 : vector<8x8x128xf32> to vector<8x8x128xbf16>
    %112 = vector.extract_strided_slice %98 {offsets = [16, 0, 0], sizes = [8, 8, 8], strides = [1, 1, 1]} : vector<32x8x8xbf16> to vector<8x8x8xbf16>
    "tpu.trace_start"() <{level = 10 : i32, message = "bqk,bkd->bqd"}> : () -> ()
    %cst_29 = arith.constant dense<0.000000e+00> : vector<8x8x128xf32>
    %113 = tpu.matmul %112, %111, %cst_29 {dimension_numbers = #tpu.dot_dimension_numbers<[2], [1], [1], [2], [0, 0, 0, 1, 1, 2], [0], [0]>} : vector<8x8x8xbf16>, vector<8x8x128xbf16>, vector<8x8x128xf32> -> vector<8x8x128xf32>
    "tpu.trace_stop"() : () -> ()
    %114 = arith.addf %109, %113 : vector<8x8x128xf32>
    %115 = vector.extract_strided_slice %61 {offsets = [0, 0, 384], sizes = [8, 8, 128], strides = [1, 1, 1]} : vector<8x8x512xf32> to vector<8x8x128xf32>
    %116 = arith.truncf %115 : vector<8x8x128xf32> to vector<8x8x128xbf16>
    %117 = vector.extract_strided_slice %98 {offsets = [24, 0, 0], sizes = [8, 8, 8], strides = [1, 1, 1]} : vector<32x8x8xbf16> to vector<8x8x8xbf16>
    "tpu.trace_start"() <{level = 10 : i32, message = "bqk,bkd->bqd"}> : () -> ()
    %cst_30 = arith.constant dense<0.000000e+00> : vector<8x8x128xf32>
    %118 = tpu.matmul %117, %116, %cst_30 {dimension_numbers = #tpu.dot_dimension_numbers<[2], [1], [1], [2], [0, 0, 0, 1, 1, 2], [0], [0]>} : vector<8x8x8xbf16>, vector<8x8x128xbf16>, vector<8x8x128xf32> -> vector<8x8x128xf32>
    "tpu.trace_stop"() : () -> ()
    %119 = arith.addf %114, %118 : vector<8x8x128xf32>
    %120 = vector.shape_cast %119 : vector<8x8x128xf32> to vector<64x128xf32>
    %121 = arith.addf %8, %120 : vector<64x128xf32>
    %122 = vector.broadcast %21 : vector<1x128xf32> to vector<64x128xf32>
    %123 = arith.addf %121, %122 : vector<64x128xf32>
    %cst_31 = arith.constant dense<0.000000e+00> : vector<64xf32>
    %124 = vector.multi_reduction <add>, %123, %cst_31 [1] : vector<64x128xf32> to vector<64xf32>
    %125 = vector.shape_cast %124 : vector<64xf32> to vector<64x1xf32>
    %cst_32 = arith.constant 1.280000e+02 : f32
    %126 = vector.broadcast %cst_32 : f32 to vector<64x1xf32>
    %127 = arith.divf %125, %126 : vector<64x1xf32>
    %128 = vector.broadcast %127 : vector<64x1xf32> to vector<64x128xf32>
    %129 = arith.subf %123, %128 : vector<64x128xf32>
    %130 = arith.mulf %129, %129 : vector<64x128xf32>
    %cst_33 = arith.constant dense<0.000000e+00> : vector<64xf32>
    %131 = vector.multi_reduction <add>, %130, %cst_33 [1] : vector<64x128xf32> to vector<64xf32>
    %132 = vector.shape_cast %131 : vector<64xf32> to vector<64x1xf32>
    %cst_34 = arith.constant 1.280000e+02 : f32
    %133 = vector.broadcast %cst_34 : f32 to vector<64x1xf32>
    %134 = arith.divf %132, %133 : vector<64x1xf32>
    %135 = vector.broadcast %127 : vector<64x1xf32> to vector<64x128xf32>
    %136 = arith.subf %123, %135 : vector<64x128xf32>
    %cst_35 = arith.constant 9.99999996E-13 : f32
    %137 = vector.broadcast %cst_35 : f32 to vector<64x1xf32>
    %138 = arith.addf %134, %137 : vector<64x1xf32>
    %139 = math.rsqrt %138 : vector<64x1xf32>
    %140 = vector.broadcast %139 : vector<64x1xf32> to vector<64x128xf32>
    %141 = arith.mulf %136, %140 : vector<64x128xf32>
    %142 = vector.broadcast %22 : vector<1x128xf32> to vector<64x128xf32>
    %143 = arith.mulf %141, %142 : vector<64x128xf32>
    %144 = vector.broadcast %23 : vector<1x128xf32> to vector<64x128xf32>
    %145 = arith.addf %143, %144 : vector<64x128xf32>
    %c0_36 = arith.constant 0 : index
    %c0_37 = arith.constant 0 : index
    %c0_38 = arith.constant 0 : index
    %146 = vector.load %arg5[%c0_36, %c0_37, %c0_38] : memref<2x128x256xbf16, #tpu.memory_space<vmem>>, vector<1x128x256xbf16>
    %147 = vector.shape_cast %146 : vector<1x128x256xbf16> to vector<128x256xbf16>
    %148 = arith.truncf %145 : vector<64x128xf32> to vector<64x128xbf16>
    %cst_39 = arith.constant dense<0.000000e+00> : vector<64x256xf32>
    %149 = tpu.matmul %148, %147, %cst_39 {dimension_numbers = #tpu.dot_dimension_numbers<[1], [0], [0], [1], [0, 0, 1, 1], [], []>} : vector<64x128xbf16>, vector<128x256xbf16>, vector<64x256xf32> -> vector<64x256xf32>
    %150 = vector.broadcast %24 : vector<1x256xf32> to vector<64x256xf32>
    %151 = arith.addf %149, %150 : vector<64x256xf32>
    %cst_40 = arith.constant 5.000000e-01 : f32
    %152 = vector.broadcast %cst_40 : f32 to vector<64x256xf32>
    %153 = arith.mulf %152, %151 : vector<64x256xf32>
    %cst_41 = arith.constant 4.471500e-02 : f32
    %154 = vector.broadcast %cst_41 : f32 to vector<64x256xf32>
    %155 = arith.mulf %154, %151 : vector<64x256xf32>
    %156 = arith.mulf %155, %151 : vector<64x256xf32>
    %157 = arith.mulf %156, %151 : vector<64x256xf32>
    %158 = arith.addf %151, %157 : vector<64x256xf32>
    %cst_42 = arith.constant 0.797884583 : f32
    %159 = vector.broadcast %cst_42 : f32 to vector<64x256xf32>
    %160 = arith.mulf %159, %158 : vector<64x256xf32>
    %161 = math.tanh %160 : vector<64x256xf32>
    %cst_43 = arith.constant 1.000000e+00 : f32
    %162 = vector.broadcast %cst_43 : f32 to vector<64x256xf32>
    %163 = arith.addf %162, %161 : vector<64x256xf32>
    %164 = arith.mulf %153, %163 : vector<64x256xf32>
    %c0_44 = arith.constant 0 : index
    %c0_45 = arith.constant 0 : index
    %c0_46 = arith.constant 0 : index
    %165 = vector.load %arg6[%c0_44, %c0_45, %c0_46] : memref<2x256x128xbf16, #tpu.memory_space<vmem>>, vector<1x256x128xbf16>
    %166 = vector.shape_cast %165 : vector<1x256x128xbf16> to vector<256x128xbf16>
    %167 = arith.truncf %164 : vector<64x256xf32> to vector<64x256xbf16>
    %cst_47 = arith.constant dense<0.000000e+00> : vector<64x128xf32>
    %168 = tpu.matmul %167, %166, %cst_47 {dimension_numbers = #tpu.dot_dimension_numbers<[1], [0], [0], [1], [0, 0, 1, 1], [], []>} : vector<64x256xbf16>, vector<256x128xbf16>, vector<64x128xf32> -> vector<64x128xf32>
    %169 = arith.addf %123, %168 : vector<64x128xf32>
    %170 = vector.broadcast %25 : vector<1x128xf32> to vector<64x128xf32>
    %171 = arith.addf %169, %170 : vector<64x128xf32>
    %c1 = arith.constant 1 : index
    %c0_48 = arith.constant 0 : index
    %c0_49 = arith.constant 0 : index
    %172 = vector.load %arg7[%c1, %c0_48, %c0_49] : memref<2x8x256xf32, #tpu.memory_space<vmem>>, vector<1x8x256xf32>
    %173 = vector.shape_cast %172 : vector<1x8x256xf32> to vector<8x256xf32>
    %174 = vector.extract_strided_slice %173 {offsets = [0, 0], sizes = [1, 128], strides = [1, 1]} : vector<8x256xf32> to vector<1x128xf32>
    %175 = vector.extract_strided_slice %173 {offsets = [1, 0], sizes = [1, 128], strides = [1, 1]} : vector<8x256xf32> to vector<1x128xf32>
    %176 = vector.extract_strided_slice %173 {offsets = [2, 0], sizes = [1, 128], strides = [1, 1]} : vector<8x256xf32> to vector<1x128xf32>
    %177 = vector.extract_strided_slice %173 {offsets = [2, 128], sizes = [1, 128], strides = [1, 1]} : vector<8x256xf32> to vector<1x128xf32>
    %178 = vector.extract_strided_slice %173 {offsets = [3, 0], sizes = [1, 128], strides = [1, 1]} : vector<8x256xf32> to vector<1x128xf32>
    %179 = vector.extract_strided_slice %173 {offsets = [4, 0], sizes = [1, 128], strides = [1, 1]} : vector<8x256xf32> to vector<1x128xf32>
    %180 = vector.extract_strided_slice %173 {offsets = [5, 0], sizes = [1, 128], strides = [1, 1]} : vector<8x256xf32> to vector<1x128xf32>
    %181 = vector.extract_strided_slice %173 {offsets = [6, 0], sizes = [1, 256], strides = [1, 1]} : vector<8x256xf32> to vector<1x256xf32>
    %182 = vector.extract_strided_slice %173 {offsets = [7, 0], sizes = [1, 128], strides = [1, 1]} : vector<8x256xf32> to vector<1x128xf32>
    %cst_50 = arith.constant dense<0.000000e+00> : vector<64xf32>
    %183 = vector.multi_reduction <add>, %171, %cst_50 [1] : vector<64x128xf32> to vector<64xf32>
    %184 = vector.shape_cast %183 : vector<64xf32> to vector<64x1xf32>
    %cst_51 = arith.constant 1.280000e+02 : f32
    %185 = vector.broadcast %cst_51 : f32 to vector<64x1xf32>
    %186 = arith.divf %184, %185 : vector<64x1xf32>
    %187 = vector.broadcast %186 : vector<64x1xf32> to vector<64x128xf32>
    %188 = arith.subf %171, %187 : vector<64x128xf32>
    %189 = arith.mulf %188, %188 : vector<64x128xf32>
    %cst_52 = arith.constant dense<0.000000e+00> : vector<64xf32>
    %190 = vector.multi_reduction <add>, %189, %cst_52 [1] : vector<64x128xf32> to vector<64xf32>
    %191 = vector.shape_cast %190 : vector<64xf32> to vector<64x1xf32>
    %cst_53 = arith.constant 1.280000e+02 : f32
    %192 = vector.broadcast %cst_53 : f32 to vector<64x1xf32>
    %193 = arith.divf %191, %192 : vector<64x1xf32>
    %194 = vector.broadcast %186 : vector<64x1xf32> to vector<64x128xf32>
    %195 = arith.subf %171, %194 : vector<64x128xf32>
    %cst_54 = arith.constant 9.99999996E-13 : f32
    %196 = vector.broadcast %cst_54 : f32 to vector<64x1xf32>
    %197 = arith.addf %193, %196 : vector<64x1xf32>
    %198 = math.rsqrt %197 : vector<64x1xf32>
    %199 = vector.broadcast %198 : vector<64x1xf32> to vector<64x128xf32>
    %200 = arith.mulf %195, %199 : vector<64x128xf32>
    %201 = vector.broadcast %174 : vector<1x128xf32> to vector<64x128xf32>
    %202 = arith.mulf %200, %201 : vector<64x128xf32>
    %203 = vector.broadcast %175 : vector<1x128xf32> to vector<64x128xf32>
    %204 = arith.addf %202, %203 : vector<64x128xf32>
    %c1_55 = arith.constant 1 : index
    %c0_56 = arith.constant 0 : index
    %c0_57 = arith.constant 0 : index
    %205 = vector.load %arg4[%c1_55, %c0_56, %c0_57] : memref<2x128x768xbf16, #tpu.memory_space<vmem>>, vector<1x128x768xbf16>
    %206 = vector.shape_cast %205 : vector<1x128x768xbf16> to vector<128x768xbf16>
    %207 = arith.truncf %204 : vector<64x128xf32> to vector<64x128xbf16>
    %cst_58 = arith.constant dense<0.000000e+00> : vector<64x768xf32>
    %208 = tpu.matmul %207, %206, %cst_58 {dimension_numbers = #tpu.dot_dimension_numbers<[1], [0], [0], [1], [0, 0, 1, 1], [], []>} : vector<64x128xbf16>, vector<128x768xbf16>, vector<64x768xf32> -> vector<64x768xf32>
    %209 = vector.extract_strided_slice %208 {offsets = [0, 0], sizes = [64, 128], strides = [1, 1]} : vector<64x768xf32> to vector<64x128xf32>
    %210 = vector.broadcast %176 : vector<1x128xf32> to vector<64x128xf32>
    %211 = arith.addf %209, %210 : vector<64x128xf32>
    %212 = vector.shape_cast %211 : vector<64x128xf32> to vector<8x8x128xf32>
    %213 = vector.extract_strided_slice %208 {offsets = [0, 128], sizes = [64, 128], strides = [1, 1]} : vector<64x768xf32> to vector<64x128xf32>
    %214 = vector.broadcast %177 : vector<1x128xf32> to vector<64x128xf32>
    %215 = arith.addf %213, %214 : vector<64x128xf32>
    %216 = vector.shape_cast %215 : vector<64x128xf32> to vector<8x8x128xf32>
    %217 = vector.extract_strided_slice %208 {offsets = [0, 256], sizes = [64, 512], strides = [1, 1]} : vector<64x768xf32> to vector<64x512xf32>
    %218 = vector.shape_cast %217 : vector<64x512xf32> to vector<8x8x512xf32>
    %219 = vector.extract_strided_slice %212 {offsets = [0, 0, 0], sizes = [8, 8, 32], strides = [1, 1, 1]} : vector<8x8x128xf32> to vector<8x8x32xf32>
    %220 = arith.truncf %219 : vector<8x8x32xf32> to vector<8x8x32xbf16>
    %221 = vector.extract_strided_slice %216 {offsets = [0, 0, 0], sizes = [8, 8, 32], strides = [1, 1, 1]} : vector<8x8x128xf32> to vector<8x8x32xf32>
    %222 = arith.truncf %221 : vector<8x8x32xf32> to vector<8x8x32xbf16>
    "tpu.trace_start"() <{level = 10 : i32, message = "bqd,bkd->bqk"}> : () -> ()
    %cst_59 = arith.constant dense<0.000000e+00> : vector<8x8x8xf32>
    %223 = tpu.matmul %220, %222, %cst_59 {dimension_numbers = #tpu.dot_dimension_numbers<[2], [2], [1], [1], [0, 0, 0, 1, 1, 1], [0], [0]>} : vector<8x8x32xbf16>, vector<8x8x32xbf16>, vector<8x8x8xf32> -> vector<8x8x8xf32>
    "tpu.trace_stop"() : () -> ()
    %224 = vector.extract_strided_slice %212 {offsets = [0, 0, 32], sizes = [8, 8, 32], strides = [1, 1, 1]} : vector<8x8x128xf32> to vector<8x8x32xf32>
    %225 = arith.truncf %224 : vector<8x8x32xf32> to vector<8x8x32xbf16>
    %226 = vector.extract_strided_slice %216 {offsets = [0, 0, 32], sizes = [8, 8, 32], strides = [1, 1, 1]} : vector<8x8x128xf32> to vector<8x8x32xf32>
    %227 = arith.truncf %226 : vector<8x8x32xf32> to vector<8x8x32xbf16>
    "tpu.trace_start"() <{level = 10 : i32, message = "bqd,bkd->bqk"}> : () -> ()
    %cst_60 = arith.constant dense<0.000000e+00> : vector<8x8x8xf32>
    %228 = tpu.matmul %225, %227, %cst_60 {dimension_numbers = #tpu.dot_dimension_numbers<[2], [2], [1], [1], [0, 0, 0, 1, 1, 1], [0], [0]>} : vector<8x8x32xbf16>, vector<8x8x32xbf16>, vector<8x8x8xf32> -> vector<8x8x8xf32>
    "tpu.trace_stop"() : () -> ()
    %229 = vector.extract_strided_slice %212 {offsets = [0, 0, 64], sizes = [8, 8, 32], strides = [1, 1, 1]} : vector<8x8x128xf32> to vector<8x8x32xf32>
    %230 = arith.truncf %229 : vector<8x8x32xf32> to vector<8x8x32xbf16>
    %231 = vector.extract_strided_slice %216 {offsets = [0, 0, 64], sizes = [8, 8, 32], strides = [1, 1, 1]} : vector<8x8x128xf32> to vector<8x8x32xf32>
    %232 = arith.truncf %231 : vector<8x8x32xf32> to vector<8x8x32xbf16>
    "tpu.trace_start"() <{level = 10 : i32, message = "bqd,bkd->bqk"}> : () -> ()
    %cst_61 = arith.constant dense<0.000000e+00> : vector<8x8x8xf32>
    %233 = tpu.matmul %230, %232, %cst_61 {dimension_numbers = #tpu.dot_dimension_numbers<[2], [2], [1], [1], [0, 0, 0, 1, 1, 1], [0], [0]>} : vector<8x8x32xbf16>, vector<8x8x32xbf16>, vector<8x8x8xf32> -> vector<8x8x8xf32>
    "tpu.trace_stop"() : () -> ()
    %234 = vector.extract_strided_slice %212 {offsets = [0, 0, 96], sizes = [8, 8, 32], strides = [1, 1, 1]} : vector<8x8x128xf32> to vector<8x8x32xf32>
    %235 = arith.truncf %234 : vector<8x8x32xf32> to vector<8x8x32xbf16>
    %236 = vector.extract_strided_slice %216 {offsets = [0, 0, 96], sizes = [8, 8, 32], strides = [1, 1, 1]} : vector<8x8x128xf32> to vector<8x8x32xf32>
    %237 = arith.truncf %236 : vector<8x8x32xf32> to vector<8x8x32xbf16>
    "tpu.trace_start"() <{level = 10 : i32, message = "bqd,bkd->bqk"}> : () -> ()
    %cst_62 = arith.constant dense<0.000000e+00> : vector<8x8x8xf32>
    %238 = tpu.matmul %235, %237, %cst_62 {dimension_numbers = #tpu.dot_dimension_numbers<[2], [2], [1], [1], [0, 0, 0, 1, 1, 1], [0], [0]>} : vector<8x8x32xbf16>, vector<8x8x32xbf16>, vector<8x8x8xf32> -> vector<8x8x8xf32>
    "tpu.trace_stop"() : () -> ()
    %239 = tpu.concatenate %223, %228, %233, %238 in 0 : vector<8x8x8xf32>, vector<8x8x8xf32>, vector<8x8x8xf32>, vector<8x8x8xf32> -> vector<32x8x8xf32>
    %cst_63 = arith.constant 0.176776692 : f32
    %240 = vector.broadcast %cst_63 : f32 to vector<32x8x8xf32>
    %241 = arith.mulf %239, %240 : vector<32x8x8xf32>
    %242 = vector.shape_cast %14 : vector<1x8xf32> to vector<1x1x8xf32>
    %243 = vector.broadcast %242 : vector<1x1x8xf32> to vector<32x8x8xf32>
    %244 = arith.addf %241, %243 : vector<32x8x8xf32>
    %cst_64 = arith.constant dense<0xFF800000> : vector<32x8xf32>
    %245 = vector.multi_reduction <maximumf>, %244, %cst_64 [2] : vector<32x8x8xf32> to vector<32x8xf32>
    %246 = vector.shape_cast %245 : vector<32x8xf32> to vector<32x8x1xf32>
    %247 = vector.broadcast %246 : vector<32x8x1xf32> to vector<32x8x8xf32>
    %248 = arith.subf %244, %247 : vector<32x8x8xf32>
    %249 = math.exp %248 : vector<32x8x8xf32>
    %cst_65 = arith.constant dense<0.000000e+00> : vector<32x8xf32>
    %250 = vector.multi_reduction <add>, %249, %cst_65 [2] : vector<32x8x8xf32> to vector<32x8xf32>
    %251 = vector.shape_cast %250 : vector<32x8xf32> to vector<32x8x1xf32>
    %252 = tpu.reciprocal %251 : vector<32x8x1xf32> -> vector<32x8x1xf32>
    %253 = vector.broadcast %252 : vector<32x8x1xf32> to vector<32x8x8xf32>
    %254 = arith.mulf %249, %253 : vector<32x8x8xf32>
    %255 = arith.truncf %254 : vector<32x8x8xf32> to vector<32x8x8xbf16>
    %cst_66 = arith.constant 0.000000e+00 : f32
    %256 = vector.broadcast %cst_66 : f32 to vector<8x8x128xf32>
    %257 = vector.extract_strided_slice %218 {offsets = [0, 0, 0], sizes = [8, 8, 128], strides = [1, 1, 1]} : vector<8x8x512xf32> to vector<8x8x128xf32>
    %258 = arith.truncf %257 : vector<8x8x128xf32> to vector<8x8x128xbf16>
    %259 = vector.extract_strided_slice %255 {offsets = [0, 0, 0], sizes = [8, 8, 8], strides = [1, 1, 1]} : vector<32x8x8xbf16> to vector<8x8x8xbf16>
    "tpu.trace_start"() <{level = 10 : i32, message = "bqk,bkd->bqd"}> : () -> ()
    %cst_67 = arith.constant dense<0.000000e+00> : vector<8x8x128xf32>
    %260 = tpu.matmul %259, %258, %cst_67 {dimension_numbers = #tpu.dot_dimension_numbers<[2], [1], [1], [2], [0, 0, 0, 1, 1, 2], [0], [0]>} : vector<8x8x8xbf16>, vector<8x8x128xbf16>, vector<8x8x128xf32> -> vector<8x8x128xf32>
    "tpu.trace_stop"() : () -> ()
    %261 = arith.addf %256, %260 : vector<8x8x128xf32>
    %262 = vector.extract_strided_slice %218 {offsets = [0, 0, 128], sizes = [8, 8, 128], strides = [1, 1, 1]} : vector<8x8x512xf32> to vector<8x8x128xf32>
    %263 = arith.truncf %262 : vector<8x8x128xf32> to vector<8x8x128xbf16>
    %264 = vector.extract_strided_slice %255 {offsets = [8, 0, 0], sizes = [8, 8, 8], strides = [1, 1, 1]} : vector<32x8x8xbf16> to vector<8x8x8xbf16>
    "tpu.trace_start"() <{level = 10 : i32, message = "bqk,bkd->bqd"}> : () -> ()
    %cst_68 = arith.constant dense<0.000000e+00> : vector<8x8x128xf32>
    %265 = tpu.matmul %264, %263, %cst_68 {dimension_numbers = #tpu.dot_dimension_numbers<[2], [1], [1], [2], [0, 0, 0, 1, 1, 2], [0], [0]>} : vector<8x8x8xbf16>, vector<8x8x128xbf16>, vector<8x8x128xf32> -> vector<8x8x128xf32>
    "tpu.trace_stop"() : () -> ()
    %266 = arith.addf %261, %265 : vector<8x8x128xf32>
    %267 = vector.extract_strided_slice %218 {offsets = [0, 0, 256], sizes = [8, 8, 128], strides = [1, 1, 1]} : vector<8x8x512xf32> to vector<8x8x128xf32>
    %268 = arith.truncf %267 : vector<8x8x128xf32> to vector<8x8x128xbf16>
    %269 = vector.extract_strided_slice %255 {offsets = [16, 0, 0], sizes = [8, 8, 8], strides = [1, 1, 1]} : vector<32x8x8xbf16> to vector<8x8x8xbf16>
    "tpu.trace_start"() <{level = 10 : i32, message = "bqk,bkd->bqd"}> : () -> ()
    %cst_69 = arith.constant dense<0.000000e+00> : vector<8x8x128xf32>
    %270 = tpu.matmul %269, %268, %cst_69 {dimension_numbers = #tpu.dot_dimension_numbers<[2], [1], [1], [2], [0, 0, 0, 1, 1, 2], [0], [0]>} : vector<8x8x8xbf16>, vector<8x8x128xbf16>, vector<8x8x128xf32> -> vector<8x8x128xf32>
    "tpu.trace_stop"() : () -> ()
    %271 = arith.addf %266, %270 : vector<8x8x128xf32>
    %272 = vector.extract_strided_slice %218 {offsets = [0, 0, 384], sizes = [8, 8, 128], strides = [1, 1, 1]} : vector<8x8x512xf32> to vector<8x8x128xf32>
    %273 = arith.truncf %272 : vector<8x8x128xf32> to vector<8x8x128xbf16>
    %274 = vector.extract_strided_slice %255 {offsets = [24, 0, 0], sizes = [8, 8, 8], strides = [1, 1, 1]} : vector<32x8x8xbf16> to vector<8x8x8xbf16>
    "tpu.trace_start"() <{level = 10 : i32, message = "bqk,bkd->bqd"}> : () -> ()
    %cst_70 = arith.constant dense<0.000000e+00> : vector<8x8x128xf32>
    %275 = tpu.matmul %274, %273, %cst_70 {dimension_numbers = #tpu.dot_dimension_numbers<[2], [1], [1], [2], [0, 0, 0, 1, 1, 2], [0], [0]>} : vector<8x8x8xbf16>, vector<8x8x128xbf16>, vector<8x8x128xf32> -> vector<8x8x128xf32>
    "tpu.trace_stop"() : () -> ()
    %276 = arith.addf %271, %275 : vector<8x8x128xf32>
    %277 = vector.shape_cast %276 : vector<8x8x128xf32> to vector<64x128xf32>
    %278 = arith.addf %171, %277 : vector<64x128xf32>
    %279 = vector.broadcast %178 : vector<1x128xf32> to vector<64x128xf32>
    %280 = arith.addf %278, %279 : vector<64x128xf32>
    %cst_71 = arith.constant dense<0.000000e+00> : vector<64xf32>
    %281 = vector.multi_reduction <add>, %280, %cst_71 [1] : vector<64x128xf32> to vector<64xf32>
    %282 = vector.shape_cast %281 : vector<64xf32> to vector<64x1xf32>
    %cst_72 = arith.constant 1.280000e+02 : f32
    %283 = vector.broadcast %cst_72 : f32 to vector<64x1xf32>
    %284 = arith.divf %282, %283 : vector<64x1xf32>
    %285 = vector.broadcast %284 : vector<64x1xf32> to vector<64x128xf32>
    %286 = arith.subf %280, %285 : vector<64x128xf32>
    %287 = arith.mulf %286, %286 : vector<64x128xf32>
    %cst_73 = arith.constant dense<0.000000e+00> : vector<64xf32>
    %288 = vector.multi_reduction <add>, %287, %cst_73 [1] : vector<64x128xf32> to vector<64xf32>
    %289 = vector.shape_cast %288 : vector<64xf32> to vector<64x1xf32>
    %cst_74 = arith.constant 1.280000e+02 : f32
    %290 = vector.broadcast %cst_74 : f32 to vector<64x1xf32>
    %291 = arith.divf %289, %290 : vector<64x1xf32>
    %292 = vector.broadcast %284 : vector<64x1xf32> to vector<64x128xf32>
    %293 = arith.subf %280, %292 : vector<64x128xf32>
    %cst_75 = arith.constant 9.99999996E-13 : f32
    %294 = vector.broadcast %cst_75 : f32 to vector<64x1xf32>
    %295 = arith.addf %291, %294 : vector<64x1xf32>
    %296 = math.rsqrt %295 : vector<64x1xf32>
    %297 = vector.broadcast %296 : vector<64x1xf32> to vector<64x128xf32>
    %298 = arith.mulf %293, %297 : vector<64x128xf32>
    %299 = vector.broadcast %179 : vector<1x128xf32> to vector<64x128xf32>
    %300 = arith.mulf %298, %299 : vector<64x128xf32>
    %301 = vector.broadcast %180 : vector<1x128xf32> to vector<64x128xf32>
    %302 = arith.addf %300, %301 : vector<64x128xf32>
    %c1_76 = arith.constant 1 : index
    %c0_77 = arith.constant 0 : index
    %c0_78 = arith.constant 0 : index
    %303 = vector.load %arg5[%c1_76, %c0_77, %c0_78] : memref<2x128x256xbf16, #tpu.memory_space<vmem>>, vector<1x128x256xbf16>
    %304 = vector.shape_cast %303 : vector<1x128x256xbf16> to vector<128x256xbf16>
    %305 = arith.truncf %302 : vector<64x128xf32> to vector<64x128xbf16>
    %cst_79 = arith.constant dense<0.000000e+00> : vector<64x256xf32>
    %306 = tpu.matmul %305, %304, %cst_79 {dimension_numbers = #tpu.dot_dimension_numbers<[1], [0], [0], [1], [0, 0, 1, 1], [], []>} : vector<64x128xbf16>, vector<128x256xbf16>, vector<64x256xf32> -> vector<64x256xf32>
    %307 = vector.broadcast %181 : vector<1x256xf32> to vector<64x256xf32>
    %308 = arith.addf %306, %307 : vector<64x256xf32>
    %cst_80 = arith.constant 5.000000e-01 : f32
    %309 = vector.broadcast %cst_80 : f32 to vector<64x256xf32>
    %310 = arith.mulf %309, %308 : vector<64x256xf32>
    %cst_81 = arith.constant 4.471500e-02 : f32
    %311 = vector.broadcast %cst_81 : f32 to vector<64x256xf32>
    %312 = arith.mulf %311, %308 : vector<64x256xf32>
    %313 = arith.mulf %312, %308 : vector<64x256xf32>
    %314 = arith.mulf %313, %308 : vector<64x256xf32>
    %315 = arith.addf %308, %314 : vector<64x256xf32>
    %cst_82 = arith.constant 0.797884583 : f32
    %316 = vector.broadcast %cst_82 : f32 to vector<64x256xf32>
    %317 = arith.mulf %316, %315 : vector<64x256xf32>
    %318 = math.tanh %317 : vector<64x256xf32>
    %cst_83 = arith.constant 1.000000e+00 : f32
    %319 = vector.broadcast %cst_83 : f32 to vector<64x256xf32>
    %320 = arith.addf %319, %318 : vector<64x256xf32>
    %321 = arith.mulf %310, %320 : vector<64x256xf32>
    %c1_84 = arith.constant 1 : index
    %c0_85 = arith.constant 0 : index
    %c0_86 = arith.constant 0 : index
    %322 = vector.load %arg6[%c1_84, %c0_85, %c0_86] : memref<2x256x128xbf16, #tpu.memory_space<vmem>>, vector<1x256x128xbf16>
    %323 = vector.shape_cast %322 : vector<1x256x128xbf16> to vector<256x128xbf16>
    %324 = arith.truncf %321 : vector<64x256xf32> to vector<64x256xbf16>
    %cst_87 = arith.constant dense<0.000000e+00> : vector<64x128xf32>
    %325 = tpu.matmul %324, %323, %cst_87 {dimension_numbers = #tpu.dot_dimension_numbers<[1], [0], [0], [1], [0, 0, 1, 1], [], []>} : vector<64x256xbf16>, vector<256x128xbf16>, vector<64x128xf32> -> vector<64x128xf32>
    %326 = arith.addf %280, %325 : vector<64x128xf32>
    %327 = vector.broadcast %182 : vector<1x128xf32> to vector<64x128xf32>
    %328 = arith.addf %326, %327 : vector<64x128xf32>
    %c0_88 = arith.constant 0 : index
    %c0_89 = arith.constant 0 : index
    %329 = vector.load %arg8[%c0_88, %c0_89] : memref<8x128xf32, #tpu.memory_space<vmem>>, vector<1x128xf32>
    %c1_90 = arith.constant 1 : index
    %c0_91 = arith.constant 0 : index
    %330 = vector.load %arg8[%c1_90, %c0_91] : memref<8x128xf32, #tpu.memory_space<vmem>>, vector<1x128xf32>
    %c2 = arith.constant 2 : index
    %c0_92 = arith.constant 0 : index
    %331 = vector.load %arg8[%c2, %c0_92] : memref<8x128xf32, #tpu.memory_space<vmem>>, vector<1x128xf32>
    %332 = vector.shape_cast %328 : vector<64x128xf32> to vector<8x8x128xf32>
    %333 = vector.extract_strided_slice %332 {offsets = [0, 0, 0], sizes = [8, 1, 128], strides = [1, 1, 1]} : vector<8x8x128xf32> to vector<8x1x128xf32>
    %334 = vector.shape_cast %333 : vector<8x1x128xf32> to vector<8x128xf32>
    %cst_93 = arith.constant dense<0.000000e+00> : vector<8xf32>
    %335 = vector.multi_reduction <add>, %334, %cst_93 [1] : vector<8x128xf32> to vector<8xf32>
    %336 = vector.shape_cast %335 : vector<8xf32> to vector<8x1xf32>
    %cst_94 = arith.constant 1.280000e+02 : f32
    %337 = vector.broadcast %cst_94 : f32 to vector<8x1xf32>
    %338 = arith.divf %336, %337 : vector<8x1xf32>
    %339 = vector.broadcast %338 : vector<8x1xf32> to vector<8x128xf32>
    %340 = arith.subf %334, %339 : vector<8x128xf32>
    %341 = arith.mulf %340, %340 : vector<8x128xf32>
    %cst_95 = arith.constant dense<0.000000e+00> : vector<8xf32>
    %342 = vector.multi_reduction <add>, %341, %cst_95 [1] : vector<8x128xf32> to vector<8xf32>
    %343 = vector.shape_cast %342 : vector<8xf32> to vector<8x1xf32>
    %cst_96 = arith.constant 1.280000e+02 : f32
    %344 = vector.broadcast %cst_96 : f32 to vector<8x1xf32>
    %345 = arith.divf %343, %344 : vector<8x1xf32>
    %346 = vector.broadcast %338 : vector<8x1xf32> to vector<8x128xf32>
    %347 = arith.subf %334, %346 : vector<8x128xf32>
    %cst_97 = arith.constant 9.99999996E-13 : f32
    %348 = vector.broadcast %cst_97 : f32 to vector<8x1xf32>
    %349 = arith.addf %345, %348 : vector<8x1xf32>
    %350 = math.rsqrt %349 : vector<8x1xf32>
    %351 = vector.broadcast %350 : vector<8x1xf32> to vector<8x128xf32>
    %352 = arith.mulf %347, %351 : vector<8x128xf32>
    %353 = vector.broadcast %329 : vector<1x128xf32> to vector<8x128xf32>
    %354 = arith.mulf %352, %353 : vector<8x128xf32>
    %355 = vector.broadcast %330 : vector<1x128xf32> to vector<8x128xf32>
    %356 = arith.addf %354, %355 : vector<8x128xf32>
    %c0_98 = arith.constant 0 : index
    %c0_99 = arith.constant 0 : index
    %357 = vector.load %arg9[%c0_98, %c0_99] : memref<128x128xbf16, #tpu.memory_space<vmem>>, vector<128x128xbf16>
    %358 = arith.truncf %356 : vector<8x128xf32> to vector<8x128xbf16>
    %cst_100 = arith.constant dense<0.000000e+00> : vector<8x128xf32>
    %359 = tpu.matmul %358, %357, %cst_100 {dimension_numbers = #tpu.dot_dimension_numbers<[1], [0], [0], [1], [0, 0, 1, 1], [], []>} : vector<8x128xbf16>, vector<128x128xbf16>, vector<8x128xf32> -> vector<8x128xf32>
    %360 = vector.broadcast %331 : vector<1x128xf32> to vector<8x128xf32>
    %361 = arith.addf %359, %360 : vector<8x128xf32>
    %362 = arith.mulf %361, %361 : vector<8x128xf32>
    %cst_101 = arith.constant dense<0.000000e+00> : vector<8xf32>
    %363 = vector.multi_reduction <add>, %362, %cst_101 [1] : vector<8x128xf32> to vector<8xf32>
    %364 = vector.shape_cast %363 : vector<8xf32> to vector<8x1xf32>
    %cst_102 = arith.constant 1.000000e-24 : f32
    %365 = vector.broadcast %cst_102 : f32 to vector<8x1xf32>
    %366 = arith.maximumf %364, %365 : vector<8x1xf32>
    %367 = math.rsqrt %366 : vector<8x1xf32>
    %368 = vector.broadcast %367 : vector<8x1xf32> to vector<8x128xf32>
    %369 = arith.mulf %361, %368 : vector<8x128xf32>
    %c0_103 = arith.constant 0 : index
    %c0_104 = arith.constant 0 : index
    %370 = vector.load %arg10[%c0_103, %c0_104] : memref<8x128xf32, #tpu.memory_space<vmem>>, vector<8x128xf32>
    tpu.vector_store %arg10[%c0_103, %c0_104], %369 {strides = array<i32>} : memref<8x128xf32, #tpu.memory_space<vmem>>, vector<8x128xf32>,
    return
  }
  func.func @transform_0(%arg0: i32) -> (i32, i32) {
    %c0_i32 = arith.constant 0 : i32
    %c0_i32_0 = arith.constant 0 : i32
    return %arg0, %c0_i32 : i32, i32
  }
  func.func @transform_1(%arg0: i32) -> (i32, i32) {
    %c0_i32 = arith.constant 0 : i32
    %c0_i32_0 = arith.constant 0 : i32
    %c0_i32_1 = arith.constant 0 : i32
    return %c0_i32, %c0_i32_0 : i32, i32
  }
  func.func @transform_2(%arg0: i32) -> (i32, i32) {
    %c0_i32 = arith.constant 0 : i32
    %c0_i32_0 = arith.constant 0 : i32
    %c0_i32_1 = arith.constant 0 : i32
    return %c0_i32, %c0_i32_0 : i32, i32
  }
  func.func @transform_3(%arg0: i32) -> (i32, i32, i32) {
    %c0_i32 = arith.constant 0 : i32
    %c0_i32_0 = arith.constant 0 : i32
    %c0_i32_1 = arith.constant 0 : i32
    %c0_i32_2 = arith.constant 0 : i32
    return %c0_i32, %c0_i32_0, %c0_i32_1 : i32, i32, i32
  }
  func.func @transform_4(%arg0: i32) -> (i32, i32, i32) {
    %c0_i32 = arith.constant 0 : i32
    %c0_i32_0 = arith.constant 0 : i32
    %c0_i32_1 = arith.constant 0 : i32
    %c0_i32_2 = arith.constant 0 : i32
    return %c0_i32, %c0_i32_0, %c0_i32_1 : i32, i32, i32
  }
  func.func @transform_5(%arg0: i32) -> (i32, i32, i32) {
    %c0_i32 = arith.constant 0 : i32
    %c0_i32_0 = arith.constant 0 : i32
    %c0_i32_1 = arith.constant 0 : i32
    %c0_i32_2 = arith.constant 0 : i32
    return %c0_i32, %c0_i32_0, %c0_i32_1 : i32, i32, i32
  }
  func.func @transform_6(%arg0: i32) -> (i32, i32, i32) {
    %c0_i32 = arith.constant 0 : i32
    %c0_i32_0 = arith.constant 0 : i32
    %c0_i32_1 = arith.constant 0 : i32
    %c0_i32_2 = arith.constant 0 : i32
    return %c0_i32, %c0_i32_0, %c0_i32_1 : i32, i32, i32
  }
  func.func @transform_7(%arg0: i32) -> (i32, i32) {
    %c0_i32 = arith.constant 0 : i32
    %c0_i32_0 = arith.constant 0 : i32
    %c0_i32_1 = arith.constant 0 : i32
    return %c0_i32, %c0_i32_0 : i32, i32
  }
  func.func @transform_8(%arg0: i32) -> (i32, i32) {
    %c0_i32 = arith.constant 0 : i32
    %c0_i32_0 = arith.constant 0 : i32
    %c0_i32_1 = arith.constant 0 : i32
    return %c0_i32, %c0_i32_0 : i32, i32
  }
  func.func @transform_9(%arg0: i32) -> (i32, i32) {
    %c0_i32 = arith.constant 0 : i32
    %c0_i32_0 = arith.constant 0 : i32
    return %arg0, %c0_i32 : i32, i32
  }
}

</mosaic_0001>

<llo_original>
// kernel: vit_image_encoder.1
$region0: #{vit_image_encoder.1}
  #allocation0 [shape = 'u32[]', space=smem, size = 0x4, offset = 0x4, fixed_abs, tag = 'smem constant byte address 0x4 - core index']
  #allocation1 [shape = 'u32[144,128]{1,0:T(1,128)}', space=vmem, size = 0x12000, scoped, tag = 'internal scratch']
  %s0 = inlined_call_operand.vmem [shape: bf16[64,768], index: 0, kind: input, shape index: {}]
  %s1 = inlined_call_operand.vmem [shape: bf16[768,128], index: 1, kind: input, shape index: {}]
  %s2 = inlined_call_operand.hbm [shape: f32[8,128], index: 2, kind: input, shape index: {}]
  %s3 = inlined_call_operand.vmem [shape: bf16[2,128,768], index: 3, kind: input, shape index: {}]
  %s4 = inlined_call_operand.hbm [shape: bf16[2,128,256], index: 4, kind: input, shape index: {}]
  %s5 = inlined_call_operand.vmem [shape: bf16[2,256,128], index: 5, kind: input, shape index: {}]
  %s6 = inlined_call_operand.vmem [shape: f32[2,8,256], index: 6, kind: input, shape index: {}]
  %s7 = inlined_call_operand.hbm [shape: f32[8,128], index: 7, kind: input, shape index: {}]
  %s8 = inlined_call_operand.hbm [shape: bf16[128,128], index: 8, kind: input, shape index: {}]
  %s9 = inlined_call_operand.vmem [shape: f32[8,128], index: 9, kind: output, shape index: {}]
  %s10 = sld [smem:[#allocation0]]
  $region62: #{vit_image_encoder.1} parent=0
    _
  %s12 = ssub.s32 1, %s10
  %s13 = scalar_select 0, %s12, %s10
  $region1: #{vit_image_encoder.1} parent=0
    #allocation2 [shape = 'u8[4096]{0}', space=vmem, size = 0x1000, scoped, tag = 'input window, operand 2, single buffered']
    #allocation3 [shape = 's32[1]{0}', space=sflag, size = 0x4, scoped, tag = 'scoped memory for vit_image_encoder.1']
    #allocation4 [shape = 'u8[131072]{0}', space=vmem, size = 0x20000, scoped, tag = 'input window, operand 4, single buffered']
    #allocation5 [shape = 's32[1]{0}', space=sflag, size = 0x4, scoped, tag = 'scoped memory for vit_image_encoder.1']
    #allocation6 [shape = 'u8[4096]{0}', space=vmem, size = 0x1000, scoped, tag = 'input window, operand 7, single buffered']
    #allocation7 [shape = 'u8[32768]{0}', space=vmem, size = 0x8000, scoped, tag = 'input window, operand 8, single buffered']
    #allocation8 [shape = 's32[1]{0}', space=sflag, size = 0x4, scoped, tag = 'scoped memory for vit_image_encoder.1']
    %14 = vsyncpa [#allocation3], 0
    %15 = vsyncpa [#allocation5], 0
    %16 = vsyncpa [#allocation8], 0
    // Predicated region
    $region2: #{vit_image_encoder.1} parent=1 // pred_check
      _
    $region3: #{vit_image_encoder.1} parent=1 // pred_check_branch
      %18 = sbr.rel (0) target = $region5
    $region4: #{vit_image_encoder.1} parent=1 // pred_region
      _
    $region5: #{vit_image_encoder.1} parent=1 // pred_fallthru
      _
    // Predicated region
    $region6: #{vit_image_encoder.1} parent=1 // pred_check
      _
    $region7: #{vit_image_encoder.1} parent=1 // pred_check_branch
      %20 = sbr.rel (0) target = $region9
    $region8: #{vit_image_encoder.1} parent=1 // pred_region
      _
    $region9: #{vit_image_encoder.1} parent=1 // pred_fallthru
      _
    // Predicated region
    $region10: #{vit_image_encoder.1} parent=1 // pred_check
      _
    $region11: #{vit_image_encoder.1} parent=1 // pred_check_branch
      %22 = sbr.rel (0) target = $region13
    $region12: #{vit_image_encoder.1} parent=1 // pred_region
      %s24 = ssub.s32 128, 128
      %25 = vsyncadd [#allocation3], %s24
      %s27 = sshll.u32 [#allocation2], 4
      %s28 = int_to_ptr.vmem [resolvable:$true] %s27
      %30 = dma.hbm_to_vmem [thread:$0]  %s2, 128, %s28, [#allocation3]
    $region13: #{vit_image_encoder.1} parent=1 // pred_fallthru
      _
    // Predicated region
    $region14: #{vit_image_encoder.1} parent=1 // pred_check
      _
    $region15: #{vit_image_encoder.1} parent=1 // pred_check_branch
      %32 = sbr.rel (0) target = $region17
    $region16: #{vit_image_encoder.1} parent=1 // pred_region
      _
    $region17: #{vit_image_encoder.1} parent=1 // pred_fallthru
      _
    // Predicated region
    $region18: #{vit_image_encoder.1} parent=1 // pred_check
      _
    $region19: #{vit_image_encoder.1} parent=1 // pred_check_branch
      %34 = sbr.rel (0) target = $region21
    $region20: #{vit_image_encoder.1} parent=1 // pred_region
      %s36 = ssub.s32 4096, 4096
      %37 = vsyncadd [#allocation5], %s36
      %s38 = sshll.u32 [#allocation4], 4
      %s39 = int_to_ptr.vmem [resolvable:$true] %s38
      %44 = dma.hbm_to_vmem [thread:$0]  %s4, 4096, %s39, [#allocation5], 128, 128, 8
    $region21: #{vit_image_encoder.1} parent=1 // pred_fallthru
      _
    // Predicated region
    $region22: #{vit_image_encoder.1} parent=1 // pred_check
      _
    $region23: #{vit_image_encoder.1} parent=1 // pred_check_branch
      %46 = sbr.rel (0) target = $region25
    $region24: #{vit_image_encoder.1} parent=1 // pred_region
      _
    $region25: #{vit_image_encoder.1} parent=1 // pred_fallthru
      _
    // Predicated region
    $region26: #{vit_image_encoder.1} parent=1 // pred_check
      _
    $region27: #{vit_image_encoder.1} parent=1 // pred_check_branch
      %48 = sbr.rel (0) target = $region29
    $region28: #{vit_image_encoder.1} parent=1 // pred_region
      _
    $region29: #{vit_image_encoder.1} parent=1 // pred_fallthru
      _
    // Predicated region
    $region30: #{vit_image_encoder.1} parent=1 // pred_check
      _
    $region31: #{vit_image_encoder.1} parent=1 // pred_check_branch
      %50 = sbr.rel (0) target = $region33
    $region32: #{vit_image_encoder.1} parent=1 // pred_region
      %s52 = ssub.s32 128, 128
      %53 = vsyncadd [#allocation5], %s52
      %s55 = sshll.u32 [#allocation6], 4
      %s56 = int_to_ptr.vmem [resolvable:$true] %s55
      %58 = dma.hbm_to_vmem [thread:$0]  %s7, 128, %s56, [#allocation5]
    $region33: #{vit_image_encoder.1} parent=1 // pred_fallthru
      _
    // Predicated region
    $region34: #{vit_image_encoder.1} parent=1 // pred_check
      _
    $region35: #{vit_image_encoder.1} parent=1 // pred_check_branch
      %60 = sbr.rel (0) target = $region37
    $region36: #{vit_image_encoder.1} parent=1 // pred_region
      %s62 = ssub.s32 1024, 1024
      %63 = vsyncadd [#allocation8], %s62
      %s64 = sshll.u32 [#allocation7], 4
      %s65 = int_to_ptr.vmem [resolvable:$true] %s64
      %70 = dma.hbm_to_vmem [thread:$0]  %s8, 1024, %s65, [#allocation8], 64, 64, 4
    $region37: #{vit_image_encoder.1} parent=1 // pred_fallthru
      _
    // Predicated region
    $region38: #{vit_image_encoder.1} parent=1 // pred_check
      _
    $region39: #{vit_image_encoder.1} parent=1 // pred_check_branch
      %72 = sbr.rel (0) target = $region41
    $region40: #{vit_image_encoder.1} parent=1 // pred_region
      %73 = dma.done [#allocation3], 128
    $region41: #{vit_image_encoder.1} parent=1 // pred_fallthru
      _
    // Predicated region
    $region42: #{vit_image_encoder.1} parent=1 // pred_check
      _
    $region43: #{vit_image_encoder.1} parent=1 // pred_check_branch
      %75 = sbr.rel (0) target = $region45
    $region44: #{vit_image_encoder.1} parent=1 // pred_region
      %76 = dma.done [#allocation5], 4096
    $region45: #{vit_image_encoder.1} parent=1 // pred_fallthru
      _
    // Predicated region
    $region46: #{vit_image_encoder.1} parent=1 // pred_check
      _
    $region47: #{vit_image_encoder.1} parent=1 // pred_check_branch
      %78 = sbr.rel (0) target = $region49
    $region48: #{vit_image_encoder.1} parent=1 // pred_region
      %79 = dma.done [#allocation5], 128
    $region49: #{vit_image_encoder.1} parent=1 // pred_fallthru
      _
    // Predicated region
    $region50: #{vit_image_encoder.1} parent=1 // pred_check
      _
    $region51: #{vit_image_encoder.1} parent=1 // pred_check_branch
      %81 = sbr.rel (0) target = $region53
    $region52: #{vit_image_encoder.1} parent=1 // pred_region
      %82 = dma.done [#allocation8], 1024
    $region53: #{vit_image_encoder.1} parent=1 // pred_fallthru
      _
    %v84 = vld [vmem:[%s0] sm:$0xff]
    %v85 = vld [vmem:[%s0 + $0x8] sm:$0xff]
    %v86 = vld [vmem:[%s0 + $0x10] sm:$0xff]
    %v87 = vld [vmem:[%s0 + $0x18] sm:$0xff]
    %v88 = vld [vmem:[%s0 + $0x20] sm:$0xff]
    %v89 = vld [vmem:[%s0 + $0x28] sm:$0xff]
    %v90 = vld [vmem:[%s0 + $0x30] sm:$0xff]
    %v91 = vld [vmem:[%s0 + $0x38] sm:$0xff]
    %v92 = vld [vmem:[%s0 + $0x40] sm:$0xff]
    %v93 = vld [vmem:[%s0 + $0x48] sm:$0xff]
    %v94 = vld [vmem:[%s0 + $0x50] sm:$0xff]
    %v95 = vld [vmem:[%s0 + $0x58] sm:$0xff]
    %v96 = vld [vmem:[%s0 + $0x60] sm:$0xff]
    %v97 = vld [vmem:[%s0 + $0x68] sm:$0xff]
    %v98 = vld [vmem:[%s0 + $0x70] sm:$0xff]
    %v99 = vld [vmem:[%s0 + $0x78] sm:$0xff]
    %v100 = vld [vmem:[%s0 + $0x80] sm:$0xff]
    %v101 = vld [vmem:[%s0 + $0x88] sm:$0xff]
    %v102 = vld [vmem:[%s0 + $0x90] sm:$0xff]
    %v103 = vld [vmem:[%s0 + $0x98] sm:$0xff]
    %v104 = vld [vmem:[%s0 + $0xa0] sm:$0xff]
    %v105 = vld [vmem:[%s0 + $0xa8] sm:$0xff]
    %v106 = vld [vmem:[%s0 + $0xb0] sm:$0xff]
    %v107 = vld [vmem:[%s0 + $0xb8] sm:$0xff]
    %v108 = vld [vmem:[%s1] sm:$0xf]
    %v109 = vld [vmem:[%s1 + $0x4] sm:$0xf]
    %v110 = vld [vmem:[%s1 + $0x8] sm:$0xf]
    %v111 = vld [vmem:[%s1 + $0xc] sm:$0xf]
    %v112 = vld [vmem:[%s1 + $0x10] sm:$0xf]
    %v113 = vld [vmem:[%s1 + $0x14] sm:$0xf]
    %v114 = vld [vmem:[%s1 + $0x18] sm:$0xf]
    %v115 = vld [vmem:[%s1 + $0x1c] sm:$0xf]
    %v116 = vld [vmem:[%s1 + $0x20] sm:$0xf]
    %v117 = vld [vmem:[%s1 + $0x24] sm:$0xf]
    %v118 = vld [vmem:[%s1 + $0x28] sm:$0xf]
    %v119 = vld [vmem:[%s1 + $0x2c] sm:$0xf]
    %v120 = vld [vmem:[%s1 + $0x30] sm:$0xf]
    %v121 = vld [vmem:[%s1 + $0x34] sm:$0xf]
    %v122 = vld [vmem:[%s1 + $0x38] sm:$0xf]
    %v123 = vld [vmem:[%s1 + $0x3c] sm:$0xf]
    %v124 = vld [vmem:[%s1 + $0x40] sm:$0xf]
    %v125 = vld [vmem:[%s1 + $0x44] sm:$0xf]
    %v126 = vld [vmem:[%s1 + $0x48] sm:$0xf]
    %v127 = vld [vmem:[%s1 + $0x4c] sm:$0xf]
    %v128 = vld [vmem:[%s1 + $0x50] sm:$0xf]
    %v129 = vld [vmem:[%s1 + $0x54] sm:$0xf]
    %v130 = vld [vmem:[%s1 + $0x58] sm:$0xf]
    %v131 = vld [vmem:[%s1 + $0x5c] sm:$0xf]
    %v132 = vld [vmem:[%s1 + $0x60] sm:$0xf]
    %v133 = vld [vmem:[%s1 + $0x64] sm:$0xf]
    %v134 = vld [vmem:[%s1 + $0x68] sm:$0xf]
    %v135 = vld [vmem:[%s1 + $0x6c] sm:$0xf]
    %v136 = vld [vmem:[%s1 + $0x70] sm:$0xf]
    %v137 = vld [vmem:[%s1 + $0x74] sm:$0xf]
    %v138 = vld [vmem:[%s1 + $0x78] sm:$0xf]
    %v139 = vld [vmem:[%s1 + $0x7c] sm:$0xf]
    %v140 = vld [vmem:[%s1 + $0x80] sm:$0xf]
    %v141 = vld [vmem:[%s1 + $0x84] sm:$0xf]
    %v142 = vld [vmem:[%s1 + $0x88] sm:$0xf]
    %v143 = vld [vmem:[%s1 + $0x8c] sm:$0xf]
    %v144 = vld [vmem:[%s1 + $0x90] sm:$0xf]
    %v145 = vld [vmem:[%s1 + $0x94] sm:$0xf]
    %v146 = vld [vmem:[%s1 + $0x98] sm:$0xf]
    %v147 = vld [vmem:[%s1 + $0x9c] sm:$0xf]
    %v148 = vld [vmem:[%s1 + $0xa0] sm:$0xf]
    %v149 = vld [vmem:[%s1 + $0xa4] sm:$0xf]
    %v150 = vld [vmem:[%s1 + $0xa8] sm:$0xf]
    %v151 = vld [vmem:[%s1 + $0xac] sm:$0xf]
    %v152 = vld [vmem:[%s1 + $0xb0] sm:$0xf]
    %v153 = vld [vmem:[%s1 + $0xb4] sm:$0xf]
    %v154 = vld [vmem:[%s1 + $0xb8] sm:$0xf]
    %v155 = vld [vmem:[%s1 + $0xbc] sm:$0xf]
    %v156 = vld [vmem:[%s1 + $0xc0] sm:$0xf]
    %v157 = vld [vmem:[%s1 + $0xc4] sm:$0xf]
    %v158 = vld [vmem:[%s1 + $0xc8] sm:$0xf]
    %v159 = vld [vmem:[%s1 + $0xcc] sm:$0xf]
    %v160 = vld [vmem:[%s1 + $0xd0] sm:$0xf]
    %v161 = vld [vmem:[%s1 + $0xd4] sm:$0xf]
    %v162 = vld [vmem:[%s1 + $0xd8] sm:$0xf]
    %v163 = vld [vmem:[%s1 + $0xdc] sm:$0xf]
    %v164 = vld [vmem:[%s1 + $0xe0] sm:$0xf]
    %v165 = vld [vmem:[%s1 + $0xe4] sm:$0xf]
    %v166 = vld [vmem:[%s1 + $0xe8] sm:$0xf]
    %v167 = vld [vmem:[%s1 + $0xec] sm:$0xf]
    %v168 = vld [vmem:[%s1 + $0xf0] sm:$0xf]
    %v169 = vld [vmem:[%s1 + $0xf4] sm:$0xf]
    %v170 = vld [vmem:[%s1 + $0xf8] sm:$0xf]
    %v171 = vld [vmem:[%s1 + $0xfc] sm:$0xf]
    %v172 = vld [vmem:[%s1 + $0x100] sm:$0xf]
    %v173 = vld [vmem:[%s1 + $0x104] sm:$0xf]
    %v174 = vld [vmem:[%s1 + $0x108] sm:$0xf]
    %v175 = vld [vmem:[%s1 + $0x10c] sm:$0xf]
    %v176 = vld [vmem:[%s1 + $0x110] sm:$0xf]
    %v177 = vld [vmem:[%s1 + $0x114] sm:$0xf]
    %v178 = vld [vmem:[%s1 + $0x118] sm:$0xf]
    %v179 = vld [vmem:[%s1 + $0x11c] sm:$0xf]
    %v180 = vld [vmem:[%s1 + $0x120] sm:$0xf]
    %v181 = vld [vmem:[%s1 + $0x124] sm:$0xf]
    %v182 = vld [vmem:[%s1 + $0x128] sm:$0xf]
    %v183 = vld [vmem:[%s1 + $0x12c] sm:$0xf]
    %v184 = vld [vmem:[%s1 + $0x130] sm:$0xf]
    %v185 = vld [vmem:[%s1 + $0x134] sm:$0xf]
    %v186 = vld [vmem:[%s1 + $0x138] sm:$0xf]
    %v187 = vld [vmem:[%s1 + $0x13c] sm:$0xf]
    %v188 = vld [vmem:[%s1 + $0x140] sm:$0xf]
    %v189 = vld [vmem:[%s1 + $0x144] sm:$0xf]
    %v190 = vld [vmem:[%s1 + $0x148] sm:$0xf]
    %v191 = vld [vmem:[%s1 + $0x14c] sm:$0xf]
    %v192 = vld [vmem:[%s1 + $0x150] sm:$0xf]
    %v193 = vld [vmem:[%s1 + $0x154] sm:$0xf]
    %v194 = vld [vmem:[%s1 + $0x158] sm:$0xf]
    %v195 = vld [vmem:[%s1 + $0x15c] sm:$0xf]
    %v196 = vld [vmem:[%s1 + $0x160] sm:$0xf]
    %v197 = vld [vmem:[%s1 + $0x164] sm:$0xf]
    %v198 = vld [vmem:[%s1 + $0x168] sm:$0xf]
    %v199 = vld [vmem:[%s1 + $0x16c] sm:$0xf]
    %v200 = vld [vmem:[%s1 + $0x170] sm:$0xf]
    %v201 = vld [vmem:[%s1 + $0x174] sm:$0xf]
    %v202 = vld [vmem:[%s1 + $0x178] sm:$0xf]
    %v203 = vld [vmem:[%s1 + $0x17c] sm:$0xf]
    %v228 = vunpack.c.l.b16 %v84
    %v229 = vunpack.c.h.b16 %v84
    %v230 = vunpack.c.l.b16 %v85
    %v231 = vunpack.c.h.b16 %v85
    %v232 = vunpack.c.l.b16 %v86
    %v233 = vunpack.c.h.b16 %v86
    %v234 = vunpack.c.l.b16 %v87
    %v235 = vunpack.c.h.b16 %v87
    %v236 = vunpack.c.l.b16 %v88
    %v237 = vunpack.c.h.b16 %v88
    %v238 = vunpack.c.l.b16 %v89
    %v239 = vunpack.c.h.b16 %v89
    %v240 = vunpack.c.l.b16 %v90
    %v241 = vunpack.c.h.b16 %v90
    %v242 = vunpack.c.l.b16 %v91
    %v243 = vunpack.c.h.b16 %v91
    %v244 = vunpack.c.l.b16 %v92
    %v245 = vunpack.c.h.b16 %v92
    %v246 = vunpack.c.l.b16 %v93
    %v247 = vunpack.c.h.b16 %v93
    %v248 = vunpack.c.l.b16 %v94
    %v249 = vunpack.c.h.b16 %v94
    %v250 = vunpack.c.l.b16 %v95
    %v251 = vunpack.c.h.b16 %v95
    %v252 = vunpack.c.l.b16 %v96
    %v253 = vunpack.c.h.b16 %v96
    %v254 = vunpack.c.l.b16 %v97
    %v255 = vunpack.c.h.b16 %v97
    %v256 = vunpack.c.l.b16 %v98
    %v257 = vunpack.c.h.b16 %v98
    %v258 = vunpack.c.l.b16 %v99
    %v259 = vunpack.c.h.b16 %v99
    %v260 = vunpack.c.l.b16 %v100
    %v261 = vunpack.c.h.b16 %v100
    %v262 = vunpack.c.l.b16 %v101
    %v263 = vunpack.c.h.b16 %v101
    %v264 = vunpack.c.l.b16 %v102
    %v265 = vunpack.c.h.b16 %v102
    %v266 = vunpack.c.l.b16 %v103
    %v267 = vunpack.c.h.b16 %v103
    %v268 = vunpack.c.l.b16 %v104
    %v269 = vunpack.c.h.b16 %v104
    %v270 = vunpack.c.l.b16 %v105
    %v271 = vunpack.c.h.b16 %v105
    %v272 = vunpack.c.l.b16 %v106
    %v273 = vunpack.c.h.b16 %v106
    %v274 = vunpack.c.l.b16 %v107
    %v275 = vunpack.c.h.b16 %v107
    %v276 = vpack.c.b16 %v234, %v228
    %v277 = vpack.c.b16 %v235, %v229
    %v278 = vpack.c.b16 %v236, %v230
    %v279 = vpack.c.b16 %v237, %v231
    %v280 = vpack.c.b16 %v238, %v232
    %v281 = vpack.c.b16 %v239, %v233
    %v282 = vpack.c.b16 %v246, %v240
    %v283 = vpack.c.b16 %v247, %v241
    %v284 = vpack.c.b16 %v248, %v242
    %v285 = vpack.c.b16 %v249, %v243
    %v286 = vpack.c.b16 %v250, %v244
    %v287 = vpack.c.b16 %v251, %v245
    %v288 = vpack.c.b16 %v258, %v252
    %v289 = vpack.c.b16 %v259, %v253
    %v290 = vpack.c.b16 %v260, %v254
    %v291 = vpack.c.b16 %v261, %v255
    %v292 = vpack.c.b16 %v262, %v256
    %v293 = vpack.c.b16 %v263, %v257
    %v294 = vpack.c.b16 %v270, %v264
    %v295 = vpack.c.b16 %v271, %v265
    %v296 = vpack.c.b16 %v272, %v266
    %v297 = vpack.c.b16 %v273, %v267
    %v298 = vpack.c.b16 %v274, %v268
    %v299 = vpack.c.b16 %v275, %v269
    %v420 = vunpack.c.l.b16 %v108
    %v421 = vunpack.c.l.b16 %v109
    %v422 = vunpack.c.l.b16 %v110
    %v423 = vunpack.c.l.b16 %v111
    %v424 = vunpack.c.l.b16 %v112
    %v425 = vunpack.c.l.b16 %v113
    %v426 = vunpack.c.l.b16 %v114
    %v427 = vunpack.c.l.b16 %v115
    %v428 = vunpack.c.l.b16 %v116
    %v429 = vunpack.c.l.b16 %v117
    %v430 = vunpack.c.l.b16 %v118
    %v431 = vunpack.c.l.b16 %v119
    %v432 = vunpack.c.l.b16 %v120
    %v433 = vunpack.c.l.b16 %v121
    %v434 = vunpack.c.l.b16 %v122
    %v435 = vunpack.c.l.b16 %v123
    %v436 = vunpack.c.l.b16 %v124
    %v437 = vunpack.c.l.b16 %v125
    %v438 = vunpack.c.l.b16 %v126
    %v439 = vunpack.c.l.b16 %v127
    %v440 = vunpack.c.l.b16 %v128
    %v441 = vunpack.c.l.b16 %v129
    %v442 = vunpack.c.l.b16 %v130
    %v443 = vunpack.c.l.b16 %v131
    %v444 = vunpack.c.l.b16 %v132
    %v445 = vunpack.c.l.b16 %v133
    %v446 = vunpack.c.l.b16 %v134
    %v447 = vunpack.c.l.b16 %v135
    %v448 = vunpack.c.l.b16 %v136
    %v449 = vunpack.c.l.b16 %v137
    %v450 = vunpack.c.l.b16 %v138
    %v451 = vunpack.c.l.b16 %v139
    %v452 = vunpack.c.l.b16 %v140
    %v453 = vunpack.c.l.b16 %v141
    %v454 = vunpack.c.l.b16 %v142
    %v455 = vunpack.c.l.b16 %v143
    %v456 = vunpack.c.l.b16 %v144
    %v457 = vunpack.c.l.b16 %v145
    %v458 = vunpack.c.l.b16 %v146
    %v459 = vunpack.c.l.b16 %v147
    %v460 = vunpack.c.l.b16 %v148
    %v461 = vunpack.c.l.b16 %v149
    %v462 = vunpack.c.l.b16 %v150
    %v463 = vunpack.c.l.b16 %v151
    %v464 = vunpack.c.l.b16 %v152
    %v465 = vunpack.c.l.b16 %v153
    %v466 = vunpack.c.l.b16 %v154
    %v467 = vunpack.c.l.b16 %v155
    %v468 = vunpack.c.l.b16 %v156
    %v469 = vunpack.c.l.b16 %v157
    %v470 = vunpack.c.l.b16 %v158
    %v471 = vunpack.c.l.b16 %v159
    %v472 = vunpack.c.l.b16 %v160
    %v473 = vunpack.c.l.b16 %v161
    %v474 = vunpack.c.l.b16 %v162
    %v475 = vunpack.c.l.b16 %v163
    %v476 = vunpack.c.l.b16 %v164
    %v477 = vunpack.c.l.b16 %v165
    %v478 = vunpack.c.l.b16 %v166
    %v479 = vunpack.c.l.b16 %v167
    %v480 = vunpack.c.l.b16 %v168
    %v481 = vunpack.c.l.b16 %v169
    %v482 = vunpack.c.l.b16 %v170
    %v483 = vunpack.c.l.b16 %v171
    %v484 = vunpack.c.l.b16 %v172
    %v485 = vunpack.c.l.b16 %v173
    %v486 = vunpack.c.l.b16 %v174
    %v487 = vunpack.c.l.b16 %v175
    %v488 = vunpack.c.l.b16 %v176
    %v489 = vunpack.c.l.b16 %v177
    %v490 = vunpack.c.l.b16 %v178
    %v491 = vunpack.c.l.b16 %v179
    %v492 = vunpack.c.l.b16 %v180
    %v493 = vunpack.c.l.b16 %v181
    %v494 = vunpack.c.l.b16 %v182
    %v495 = vunpack.c.l.b16 %v183
    %v496 = vunpack.c.l.b16 %v184
    %v497 = vunpack.c.l.b16 %v185
    %v498 = vunpack.c.l.b16 %v186
    %v499 = vunpack.c.l.b16 %v187
    %v500 = vunpack.c.l.b16 %v188
    %v501 = vunpack.c.l.b16 %v189
    %v502 = vunpack.c.l.b16 %v190
    %v503 = vunpack.c.l.b16 %v191
    %v504 = vunpack.c.l.b16 %v192
    %v505 = vunpack.c.l.b16 %v193
    %v506 = vunpack.c.l.b16 %v194
    %v507 = vunpack.c.l.b16 %v195
    %v508 = vunpack.c.l.b16 %v196
    %v509 = vunpack.c.l.b16 %v197
    %v510 = vunpack.c.l.b16 %v198
    %v511 = vunpack.c.l.b16 %v199
    %v512 = vunpack.c.l.b16 %v200
    %v513 = vunpack.c.l.b16 %v201
    %v514 = vunpack.c.l.b16 %v202
    %v515 = vunpack.c.l.b16 %v203
    %v516 = vpack.c.b16 %v421, %v420
    %v517 = vpack.c.b16 %v423, %v422
    %v518 = vpack.c.b16 %v425, %v424
    %v519 = vpack.c.b16 %v427, %v426
    %v520 = vpack.c.b16 %v429, %v428
    %v521 = vpack.c.b16 %v431, %v430
    %v522 = vpack.c.b16 %v433, %v432
    %v523 = vpack.c.b16 %v435, %v434
    %v524 = vpack.c.b16 %v437, %v436
    %v525 = vpack.c.b16 %v439, %v438
    %v526 = vpack.c.b16 %v441, %v440
    %v527 = vpack.c.b16 %v443, %v442
    %v528 = vpack.c.b16 %v445, %v444
    %v529 = vpack.c.b16 %v447, %v446
    %v530 = vpack.c.b16 %v449, %v448
    %v531 = vpack.c.b16 %v451, %v450
    %v532 = vpack.c.b16 %v453, %v452
    %v533 = vpack.c.b16 %v455, %v454
    %v534 = vpack.c.b16 %v457, %v456
    %v535 = vpack.c.b16 %v459, %v458
    %v536 = vpack.c.b16 %v461, %v460
    %v537 = vpack.c.b16 %v463, %v462
    %v538 = vpack.c.b16 %v465, %v464
    %v539 = vpack.c.b16 %v467, %v466
    %v540 = vpack.c.b16 %v469, %v468
    %v541 = vpack.c.b16 %v471, %v470
    %v542 = vpack.c.b16 %v473, %v472
    %v543 = vpack.c.b16 %v475, %v474
    %v544 = vpack.c.b16 %v477, %v476
    %v545 = vpack.c.b16 %v479, %v478
    %v546 = vpack.c.b16 %v481, %v480
    %v547 = vpack.c.b16 %v483, %v482
    %v548 = vpack.c.b16 %v485, %v484
    %v549 = vpack.c.b16 %v487, %v486
    %v550 = vpack.c.b16 %v489, %v488
    %v551 = vpack.c.b16 %v491, %v490
    %v552 = vpack.c.b16 %v493, %v492
    %v553 = vpack.c.b16 %v495, %v494
    %v554 = vpack.c.b16 %v497, %v496
    %v555 = vpack.c.b16 %v499, %v498
    %v556 = vpack.c.b16 %v501, %v500
    %v557 = vpack.c.b16 %v503, %v502
    %v558 = vpack.c.b16 %v505, %v504
    %v559 = vpack.c.b16 %v507, %v506
    %v560 = vpack.c.b16 %v509, %v508
    %v561 = vpack.c.b16 %v511, %v510
    %v562 = vpack.c.b16 %v513, %v512
    %v563 = vpack.c.b16 %v515, %v514
    %612 = vmatprep.subr.bf16.mxu0 0
    %613 = vmatpush1.bf16.msra.mxu0 %v523
    %614 = vmatprep.subr.bf16.mxu0 0
    %615 = vmatpush1.bf16.msra.mxu0 %v522
    %616 = vmatprep.subr.bf16.mxu0 0
    %617 = vmatpush1.bf16.msra.mxu0 %v521
    %618 = vmatprep.subr.bf16.mxu0 0
    %619 = vmatpush1.bf16.msra.mxu0 %v520
    %620 = vmatprep.subr.bf16.mxu0 0
    %621 = vmatpush1.bf16.msra.mxu0 %v519
    %622 = vmatprep.subr.bf16.mxu0 0
    %623 = vmatpush1.bf16.msra.mxu0 %v518
    %624 = vmatprep.subr.bf16.mxu0 0
    %625 = vmatpush1.bf16.msra.mxu0 %v517
    %626 = vmatprep.subr.bf16.mxu0 0
    %627 = vmatpush1.bf16.msra.mxu0 %v516
    %628 = vmatprep.subr.bf16.mxu0 0
    %629 = vmatpush2.bf16.msra.mxu0 %v531
    %630 = vmatprep.subr.bf16.mxu0 0
    %631 = vmatpush2.bf16.msra.mxu0 %v530
    %632 = vmatprep.subr.bf16.mxu0 0
    %633 = vmatpush2.bf16.msra.mxu0 %v529
    %634 = vmatprep.subr.bf16.mxu0 0
    %635 = vmatpush2.bf16.msra.mxu0 %v528
    %636 = vmatprep.subr.bf16.mxu0 0
    %637 = vmatpush2.bf16.msra.mxu0 %v527
    %638 = vmatprep.subr.bf16.mxu0 0
    %639 = vmatpush2.bf16.msra.mxu0 %v526
    %640 = vmatprep.subr.bf16.mxu0 0
    %641 = vmatpush2.bf16.msra.mxu0 %v525
    %642 = vmatprep.subr.bf16.mxu0 0
    %643 = vmatpush2.bf16.msra.mxu0 %v524
    %644 = vmatprep.mubr.bf16.mxu0 %v277
    %645 = vmatmul.mubr.bf16.gmra.mxu0 %v276
    %v646 = vpop.f32.mrf.mxu0
    %v647 = vadd.f32 0.0, %v646
    %v648 = vpop.f32.mrf.mxu0
    %v649 = vpop.f32.mrf.mxu0
    %v650 = vadd.f32 0.0, %v649
    %v651 = vpop.f32.mrf.mxu0
    %652 = vmatprep.mubr.bf16.mxu0 %v283
    %653 = vmatmul.mubr.bf16.gmra.mxu0 %v282
    %v654 = vpop.f32.mrf.mxu0
    %v655 = vadd.f32 0.0, %v654
    %v656 = vpop.f32.mrf.mxu0
    %v657 = vpop.f32.mrf.mxu0
    %v658 = vadd.f32 0.0, %v657
    %v659 = vpop.f32.mrf.mxu0
    %660 = vmatprep.mubr.bf16.mxu0 %v289
    %661 = vmatmul.mubr.bf16.gmra.mxu0 %v288
    %v662 = vpop.f32.mrf.mxu0
    %v663 = vadd.f32 0.0, %v662
    %v664 = vpop.f32.mrf.mxu0
    %v665 = vpop.f32.mrf.mxu0
    %v666 = vadd.f32 0.0, %v665
    %v667 = vpop.f32.mrf.mxu0
    %668 = vmatprep.mubr.bf16.mxu0 %v295
    %669 = vmatmul.mubr.bf16.gmra.mxu0 %v294
    %v670 = vpop.f32.mrf.mxu0
    %v671 = vadd.f32 0.0, %v670
    %v672 = vpop.f32.mrf.mxu0
    %v673 = vpop.f32.mrf.mxu0
    %v674 = vadd.f32 0.0, %v673
    %v675 = vpop.f32.mrf.mxu0
    %676 = vdwg.mxu0
    %677 = vmatprep.subr.bf16.mxu0 0
    %678 = vmatpush1.bf16.msra.mxu0 %v539
    %679 = vmatprep.subr.bf16.mxu0 0
    %680 = vmatpush1.bf16.msra.mxu0 %v538
    %681 = vmatprep.subr.bf16.mxu0 0
    %682 = vmatpush1.bf16.msra.mxu0 %v537
    %683 = vmatprep.subr.bf16.mxu0 0
    %684 = vmatpush1.bf16.msra.mxu0 %v536
    %685 = vmatprep.subr.bf16.mxu0 0
    %686 = vmatpush1.bf16.msra.mxu0 %v535
    %687 = vmatprep.subr.bf16.mxu0 0
    %688 = vmatpush1.bf16.msra.mxu0 %v534
    %689 = vmatprep.subr.bf16.mxu0 0
    %690 = vmatpush1.bf16.msra.mxu0 %v533
    %691 = vmatprep.subr.bf16.mxu0 0
    %692 = vmatpush1.bf16.msra.mxu0 %v532
    %693 = vmatprep.subr.bf16.mxu0 0
    %694 = vmatpush2.bf16.msra.mxu0 %v547
    %695 = vmatprep.subr.bf16.mxu0 0
    %696 = vmatpush2.bf16.msra.mxu0 %v546
    %697 = vmatprep.subr.bf16.mxu0 0
    %698 = vmatpush2.bf16.msra.mxu0 %v545
    %699 = vmatprep.subr.bf16.mxu0 0
    %700 = vmatpush2.bf16.msra.mxu0 %v544
    %701 = vmatprep.subr.bf16.mxu0 0
    %702 = vmatpush2.bf16.msra.mxu0 %v543
    %703 = vmatprep.subr.bf16.mxu0 0
    %704 = vmatpush2.bf16.msra.mxu0 %v542
    %705 = vmatprep.subr.bf16.mxu0 0
    %706 = vmatpush2.bf16.msra.mxu0 %v541
    %707 = vmatprep.subr.bf16.mxu0 0
    %708 = vmatpush2.bf16.msra.mxu0 %v540
    %709 = vmatprep.mubr.bf16.mxu0 %v279
    %710 = vmatmul.mubr.bf16.gmra.mxu0 %v278
    %v711 = vpop.f32.mrf.mxu0
    %v712 = vadd.f32 %v647, %v711
    %v713 = vpop.f32.mrf.mxu0
    %v714 = vpop.f32.mrf.mxu0
    %v715 = vadd.f32 %v650, %v714
    %v716 = vpop.f32.mrf.mxu0
    %717 = vmatprep.mubr.bf16.mxu0 %v285
    %718 = vmatmul.mubr.bf16.gmra.mxu0 %v284
    %v719 = vpop.f32.mrf.mxu0
    %v720 = vadd.f32 %v655, %v719
    %v721 = vpop.f32.mrf.mxu0
    %v722 = vpop.f32.mrf.mxu0
    %v723 = vadd.f32 %v658, %v722
    %v724 = vpop.f32.mrf.mxu0
    %725 = vmatprep.mubr.bf16.mxu0 %v291
    %726 = vmatmul.mubr.bf16.gmra.mxu0 %v290
    %v727 = vpop.f32.mrf.mxu0
    %v728 = vadd.f32 %v663, %v727
    %v729 = vpop.f32.mrf.mxu0
    %v730 = vpop.f32.mrf.mxu0
    %v731 = vadd.f32 %v666, %v730
    %v732 = vpop.f32.mrf.mxu0
    %733 = vmatprep.mubr.bf16.mxu0 %v297
    %734 = vmatmul.mubr.bf16.gmra.mxu0 %v296
    %v735 = vpop.f32.mrf.mxu0
    %v736 = vadd.f32 %v671, %v735
    %v737 = vpop.f32.mrf.mxu0
    %v738 = vpop.f32.mrf.mxu0
    %v739 = vadd.f32 %v674, %v738
    %v740 = vpop.f32.mrf.mxu0
    %741 = vdwg.mxu0
    %742 = vmatprep.subr.bf16.mxu0 0
    %743 = vmatpush1.bf16.msra.mxu0 %v555
    %744 = vmatprep.subr.bf16.mxu0 0
    %745 = vmatpush1.bf16.msra.mxu0 %v554
    %746 = vmatprep.subr.bf16.mxu0 0
    %747 = vmatpush1.bf16.msra.mxu0 %v553
    %748 = vmatprep.subr.bf16.mxu0 0
    %749 = vmatpush1.bf16.msra.mxu0 %v552
    %750 = vmatprep.subr.bf16.mxu0 0
    %751 = vmatpush1.bf16.msra.mxu0 %v551
    %752 = vmatprep.subr.bf16.mxu0 0
    %753 = vmatpush1.bf16.msra.mxu0 %v550
    %754 = vmatprep.subr.bf16.mxu0 0
    %755 = vmatpush1.bf16.msra.mxu0 %v549
    %756 = vmatprep.subr.bf16.mxu0 0
    %757 = vmatpush1.bf16.msra.mxu0 %v548
    %758 = vmatprep.subr.bf16.mxu0 0
    %759 = vmatpush2.bf16.msra.mxu0 %v563
    %760 = vmatprep.subr.bf16.mxu0 0
    %761 = vmatpush2.bf16.msra.mxu0 %v562
    %762 = vmatprep.subr.bf16.mxu0 0
    %763 = vmatpush2.bf16.msra.mxu0 %v561
    %764 = vmatprep.subr.bf16.mxu0 0
    %765 = vmatpush2.bf16.msra.mxu0 %v560
    %766 = vmatprep.subr.bf16.mxu0 0
    %767 = vmatpush2.bf16.msra.mxu0 %v559
    %768 = vmatprep.subr.bf16.mxu0 0
    %769 = vmatpush2.bf16.msra.mxu0 %v558
    %770 = vmatprep.subr.bf16.mxu0 0
    %771 = vmatpush2.bf16.msra.mxu0 %v557
    %772 = vmatprep.subr.bf16.mxu0 0
    %773 = vmatpush2.bf16.msra.mxu0 %v556
    %774 = vmatprep.mubr.bf16.mxu0 %v281
    %775 = vmatmul.mubr.bf16.gmra.mxu0 %v280
    %v776 = vpop.f32.mrf.mxu0
    %v777 = vadd.f32 %v712, %v776
    %v778 = vpop.f32.mrf.mxu0
    %v779 = vpop.f32.mrf.mxu0
    %v780 = vadd.f32 %v715, %v779
    %v781 = vpop.f32.mrf.mxu0
    %782 = vmatprep.mubr.bf16.mxu0 %v287
    %783 = vmatmul.mubr.bf16.gmra.mxu0 %v286
    %v784 = vpop.f32.mrf.mxu0
    %v785 = vadd.f32 %v720, %v784
    %v786 = vpop.f32.mrf.mxu0
    %v787 = vpop.f32.mrf.mxu0
    %v788 = vadd.f32 %v723, %v787
    %v789 = vpop.f32.mrf.mxu0
    %790 = vmatprep.mubr.bf16.mxu0 %v293
    %791 = vmatmul.mubr.bf16.gmra.mxu0 %v292
    %v792 = vpop.f32.mrf.mxu0
    %v793 = vadd.f32 %v728, %v792
    %v794 = vpop.f32.mrf.mxu0
    %v795 = vpop.f32.mrf.mxu0
    %v796 = vadd.f32 %v731, %v795
    %v797 = vpop.f32.mrf.mxu0
    %798 = vmatprep.mubr.bf16.mxu0 %v299
    %799 = vmatmul.mubr.bf16.gmra.mxu0 %v298
    %v800 = vpop.f32.mrf.mxu0
    %v801 = vadd.f32 %v736, %v800
    %v802 = vpop.f32.mrf.mxu0
    %v803 = vpop.f32.mrf.mxu0
    %v804 = vadd.f32 %v739, %v803
    %v805 = vpop.f32.mrf.mxu0
    %806 = vdwg.mxu0
    %v807 = vld [vmem:[#allocation2] sm:$0xff]
    %v808 = vadd.f32 %v777, %v807
    %v809 = vadd.f32 %v780, %v807
    %v810 = vadd.f32 %v785, %v807
    %v811 = vadd.f32 %v788, %v807
    %v812 = vadd.f32 %v793, %v807
    %v813 = vadd.f32 %v796, %v807
    %v814 = vadd.f32 %v801, %v807
    %v815 = vadd.f32 %v804, %v807
    %v816 = vlaneseq
    %v817 = vand.u32 %v816, 127
    %vm818 = vcmp.lt.s32.totalorder %v817, 5
    %v819 = vsel %vm818, 0.0, -1e+30
    %v820 = vld [vmem:[%s6] sm:$0xff]
    %v821 = vld [vmem:[%s6 + $0x8] sm:$0xff]
    %822 = vadd.xlane.f32.xlu0 %v808
    %v823 = vpop.xlane.xlu0 %822
    %824 = vadd.xlane.f32.xlu0 %v809
    %v825 = vpop.xlane.xlu0 %824
    %826 = vadd.xlane.f32.xlu0 %v810
    %v827 = vpop.xlane.xlu0 %826
    %828 = vadd.xlane.f32.xlu0 %v811
    %v829 = vpop.xlane.xlu0 %828
    %830 = vadd.xlane.f32.xlu0 %v812
    %v831 = vpop.xlane.xlu0 %830
    %832 = vadd.xlane.f32.xlu0 %v813
    %v833 = vpop.xlane.xlu0 %832
    %834 = vadd.xlane.f32.xlu0 %v814
    %v835 = vpop.xlane.xlu0 %834
    %836 = vadd.xlane.f32.xlu0 %v815
    %v837 = vpop.xlane.xlu0 %836
    %v838 = vrcp.pop 128.0
    %v839 = vmul.f32 %v823, %v838
    %v840 = vmul.f32 %v825, %v838
    %v841 = vmul.f32 %v827, %v838
    %v842 = vmul.f32 %v829, %v838
    %v843 = vmul.f32 %v831, %v838
    %v844 = vmul.f32 %v833, %v838
    %v845 = vmul.f32 %v835, %v838
    %v846 = vmul.f32 %v837, %v838
    %v847 = vsub.f32 %v808, %v839
    %v848 = vsub.f32 %v809, %v840
    %v849 = vsub.f32 %v810, %v841
    %v850 = vsub.f32 %v811, %v842
    %v851 = vsub.f32 %v812, %v843
    %v852 = vsub.f32 %v813, %v844
    %v853 = vsub.f32 %v814, %v845
    %v854 = vsub.f32 %v815, %v846
    %v855 = vmul.f32 %v847, %v847
    %v856 = vmul.f32 %v848, %v848
    %v857 = vmul.f32 %v849, %v849
    %v858 = vmul.f32 %v850, %v850
    %v859 = vmul.f32 %v851, %v851
    %v860 = vmul.f32 %v852, %v852
    %v861 = vmul.f32 %v853, %v853
    %v862 = vmul.f32 %v854, %v854
    %863 = vadd.xlane.f32.xlu0 %v855
    %v864 = vpop.xlane.xlu0 %863
    %865 = vadd.xlane.f32.xlu0 %v856
    %v866 = vpop.xlane.xlu0 %865
    %867 = vadd.xlane.f32.xlu0 %v857
    %v868 = vpop.xlane.xlu0 %867
    %869 = vadd.xlane.f32.xlu0 %v858
    %v870 = vpop.xlane.xlu0 %869
    %871 = vadd.xlane.f32.xlu0 %v859
    %v872 = vpop.xlane.xlu0 %871
    %873 = vadd.xlane.f32.xlu0 %v860
    %v874 = vpop.xlane.xlu0 %873
    %875 = vadd.xlane.f32.xlu0 %v861
    %v876 = vpop.xlane.xlu0 %875
    %877 = vadd.xlane.f32.xlu0 %v862
    %v878 = vpop.xlane.xlu0 %877
    %v879 = vmul.f32 %v864, %v838
    %v880 = vmul.f32 %v866, %v838
    %v881 = vmul.f32 %v868, %v838
    %v882 = vmul.f32 %v870, %v838
    %v883 = vmul.f32 %v872, %v838
    %v884 = vmul.f32 %v874, %v838
    %v885 = vmul.f32 %v876, %v838
    %v886 = vmul.f32 %v878, %v838
    %v887 = vadd.f32 %v879, 1e-12
    %v888 = vadd.f32 %v880, 1e-12
    %v889 = vadd.f32 %v881, 1e-12
    %v890 = vadd.f32 %v882, 1e-12
    %v891 = vadd.f32 %v883, 1e-12
    %v892 = vadd.f32 %v884, 1e-12
    %v893 = vadd.f32 %v885, 1e-12
    %v894 = vadd.f32 %v886, 1e-12
    %v895 = vrsqrt.pop %v887
    %v896 = vrsqrt.pop %v888
    %v897 = vrsqrt.pop %v889
    %v898 = vrsqrt.pop %v890
    %v899 = vrsqrt.pop %v891
    %v900 = vrsqrt.pop %v892
    %v901 = vrsqrt.pop %v893
    %v902 = vrsqrt.pop %v894
    %v903 = vmul.f32 %v847, %v895
    %v904 = vmul.f32 %v848, %v896
    %v905 = vmul.f32 %v849, %v897
    %v906 = vmul.f32 %v850, %v898
    %v907 = vmul.f32 %v851, %v899
    %v908 = vmul.f32 %v852, %v900
    %v909 = vmul.f32 %v853, %v901
    %v910 = vmul.f32 %v854, %v902
    %v911 = vlaneseq
    %v912 = vshrl.u32 %v911, 7
    %v913 = vsub.s32 0, %v912
    %v914 = vrot.slane %v820, %v913
    %v915 = vmul.f32 %v903, %v914
    %v916 = vmul.f32 %v904, %v914
    %v917 = vmul.f32 %v905, %v914
    %v918 = vmul.f32 %v906, %v914
    %v919 = vmul.f32 %v907, %v914
    %v920 = vmul.f32 %v908, %v914
    %v921 = vmul.f32 %v909, %v914
    %v922 = vmul.f32 %v910, %v914
    %v923 = vlaneseq
    %v924 = vshrl.u32 %v923, 7
    %v925 = vsub.s32 1, %v924
    %v926 = vrot.slane %v820, %v925
    %v927 = vadd.f32 %v915, %v926
    %v928 = vadd.f32 %v916, %v926
    %v929 = vadd.f32 %v917, %v926
    %v930 = vadd.f32 %v918, %v926
    %v931 = vadd.f32 %v919, %v926
    %v932 = vadd.f32 %v920, %v926
    %v933 = vadd.f32 %v921, %v926
    %v934 = vadd.f32 %v922, %v926
    %v935 = vld [vmem:[%s3] sm:$0xff]
    %v936 = vld [vmem:[%s3 + $0x8] sm:$0xff]
    %v937 = vld [vmem:[%s3 + $0x10] sm:$0xff]
    %v938 = vld [vmem:[%s3 + $0x18] sm:$0xff]
    %v939 = vld [vmem:[%s3 + $0x20] sm:$0xff]
    %v940 = vld [vmem:[%s3 + $0x28] sm:$0xff]
    %v941 = vld [vmem:[%s3 + $0x30] sm:$0xff]
    %v942 = vld [vmem:[%s3 + $0x38] sm:$0xff]
    %v943 = vld [vmem:[%s3 + $0x40] sm:$0xff]
    %v944 = vld [vmem:[%s3 + $0x48] sm:$0xff]
    %v945 = vld [vmem:[%s3 + $0x50] sm:$0xff]
    %v946 = vld [vmem:[%s3 + $0x58] sm:$0xff]
    %v947 = vld [vmem:[%s3 + $0x60] sm:$0xff]
    %v948 = vld [vmem:[%s3 + $0x68] sm:$0xff]
    %v949 = vld [vmem:[%s3 + $0x70] sm:$0xff]
    %v950 = vld [vmem:[%s3 + $0x78] sm:$0xff]
    %v951 = vld [vmem:[%s3 + $0x80] sm:$0xff]
    %v952 = vld [vmem:[%s3 + $0x88] sm:$0xff]
    %v953 = vld [vmem:[%s3 + $0x90] sm:$0xff]
    %v954 = vld [vmem:[%s3 + $0x98] sm:$0xff]
    %v955 = vld [vmem:[%s3 + $0xa0] sm:$0xff]
    %v956 = vld [vmem:[%s3 + $0xa8] sm:$0xff]
    %v957 = vld [vmem:[%s3 + $0xb0] sm:$0xff]
    %v958 = vld [vmem:[%s3 + $0xb8] sm:$0xff]
    %v959 = vld [vmem:[%s3 + $0xc0] sm:$0xff]
    %v960 = vld [vmem:[%s3 + $0xc8] sm:$0xff]
    %v961 = vld [vmem:[%s3 + $0xd0] sm:$0xff]
    %v962 = vld [vmem:[%s3 + $0xd8] sm:$0xff]
    %v963 = vld [vmem:[%s3 + $0xe0] sm:$0xff]
    %v964 = vld [vmem:[%s3 + $0xe8] sm:$0xff]
    %v965 = vld [vmem:[%s3 + $0xf0] sm:$0xff]
    %v966 = vld [vmem:[%s3 + $0xf8] sm:$0xff]
    %v967 = vld [vmem:[%s3 + $0x100] sm:$0xff]
    %v968 = vld [vmem:[%s3 + $0x108] sm:$0xff]
    %v969 = vld [vmem:[%s3 + $0x110] sm:$0xff]
    %v970 = vld [vmem:[%s3 + $0x118] sm:$0xff]
    %v971 = vld [vmem:[%s3 + $0x120] sm:$0xff]
    %v972 = vld [vmem:[%s3 + $0x128] sm:$0xff]
    %v973 = vld [vmem:[%s3 + $0x130] sm:$0xff]
    %v974 = vld [vmem:[%s3 + $0x138] sm:$0xff]
    %v975 = vld [vmem:[%s3 + $0x140] sm:$0xff]
    %v976 = vld [vmem:[%s3 + $0x148] sm:$0xff]
    %v977 = vld [vmem:[%s3 + $0x150] sm:$0xff]
    %v978 = vld [vmem:[%s3 + $0x158] sm:$0xff]
    %v979 = vld [vmem:[%s3 + $0x160] sm:$0xff]
    %v980 = vld [vmem:[%s3 + $0x168] sm:$0xff]
    %v981 = vld [vmem:[%s3 + $0x170] sm:$0xff]
    %v982 = vld [vmem:[%s3 + $0x178] sm:$0xff]
    %v983 = vpack.c.bf16 %v928, %v927
    %v984 = vpack.c.bf16 %v930, %v929
    %v985 = vpack.c.bf16 %v932, %v931
    %v986 = vpack.c.bf16 %v934, %v933
    %v1035 = vunpack.c.l.b16 %v935
    %v1036 = vunpack.c.h.b16 %v935
    %v1037 = vunpack.c.l.b16 %v936
    %v1038 = vunpack.c.h.b16 %v936
    %v1039 = vunpack.c.l.b16 %v937
    %v1040 = vunpack.c.h.b16 %v937
    %v1041 = vunpack.c.l.b16 %v938
    %v1042 = vunpack.c.h.b16 %v938
    %v1043 = vunpack.c.l.b16 %v939
    %v1044 = vunpack.c.h.b16 %v939
    %v1045 = vunpack.c.l.b16 %v940
    %v1046 = vunpack.c.h.b16 %v940
    %v1047 = vunpack.c.l.b16 %v941
    %v1048 = vunpack.c.h.b16 %v941
    %v1049 = vunpack.c.l.b16 %v942
    %v1050 = vunpack.c.h.b16 %v942
    %v1051 = vunpack.c.l.b16 %v943
    %v1052 = vunpack.c.h.b16 %v943
    %v1053 = vunpack.c.l.b16 %v944
    %v1054 = vunpack.c.h.b16 %v944
    %v1055 = vunpack.c.l.b16 %v945
    %v1056 = vunpack.c.h.b16 %v945
    %v1057 = vunpack.c.l.b16 %v946
    %v1058 = vunpack.c.h.b16 %v946
    %v1059 = vunpack.c.l.b16 %v947
    %v1060 = vunpack.c.h.b16 %v947
    %v1061 = vunpack.c.l.b16 %v948
    %v1062 = vunpack.c.h.b16 %v948
    %v1063 = vunpack.c.l.b16 %v949
    %v1064 = vunpack.c.h.b16 %v949
    %v1065 = vunpack.c.l.b16 %v950
    %v1066 = vunpack.c.h.b16 %v950
    %v1067 = vunpack.c.l.b16 %v951
    %v1068 = vunpack.c.h.b16 %v951
    %v1069 = vunpack.c.l.b16 %v952
    %v1070 = vunpack.c.h.b16 %v952
    %v1071 = vunpack.c.l.b16 %v953
    %v1072 = vunpack.c.h.b16 %v953
    %v1073 = vunpack.c.l.b16 %v954
    %v1074 = vunpack.c.h.b16 %v954
    %v1075 = vunpack.c.l.b16 %v955
    %v1076 = vunpack.c.h.b16 %v955
    %v1077 = vunpack.c.l.b16 %v956
    %v1078 = vunpack.c.h.b16 %v956
    %v1079 = vunpack.c.l.b16 %v957
    %v1080 = vunpack.c.h.b16 %v957
    %v1081 = vunpack.c.l.b16 %v958
    %v1082 = vunpack.c.h.b16 %v958
    %v1083 = vunpack.c.l.b16 %v959
    %v1084 = vunpack.c.h.b16 %v959
    %v1085 = vunpack.c.l.b16 %v960
    %v1086 = vunpack.c.h.b16 %v960
    %v1087 = vunpack.c.l.b16 %v961
    %v1088 = vunpack.c.h.b16 %v961
    %v1089 = vunpack.c.l.b16 %v962
    %v1090 = vunpack.c.h.b16 %v962
    %v1091 = vunpack.c.l.b16 %v963
    %v1092 = vunpack.c.h.b16 %v963
    %v1093 = vunpack.c.l.b16 %v964
    %v1094 = vunpack.c.h.b16 %v964
    %v1095 = vunpack.c.l.b16 %v965
    %v1096 = vunpack.c.h.b16 %v965
    %v1097 = vunpack.c.l.b16 %v966
    %v1098 = vunpack.c.h.b16 %v966
    %v1099 = vunpack.c.l.b16 %v967
    %v1100 = vunpack.c.h.b16 %v967
    %v1101 = vunpack.c.l.b16 %v968
    %v1102 = vunpack.c.h.b16 %v968
    %v1103 = vunpack.c.l.b16 %v969
    %v1104 = vunpack.c.h.b16 %v969
    %v1105 = vunpack.c.l.b16 %v970
    %v1106 = vunpack.c.h.b16 %v970
    %v1107 = vunpack.c.l.b16 %v971
    %v1108 = vunpack.c.h.b16 %v971
    %v1109 = vunpack.c.l.b16 %v972
    %v1110 = vunpack.c.h.b16 %v972
    %v1111 = vunpack.c.l.b16 %v973
    %v1112 = vunpack.c.h.b16 %v973
    %v1113 = vunpack.c.l.b16 %v974
    %v1114 = vunpack.c.h.b16 %v974
    %v1115 = vunpack.c.l.b16 %v975
    %v1116 = vunpack.c.h.b16 %v975
    %v1117 = vunpack.c.l.b16 %v976
    %v1118 = vunpack.c.h.b16 %v976
    %v1119 = vunpack.c.l.b16 %v977
    %v1120 = vunpack.c.h.b16 %v977
    %v1121 = vunpack.c.l.b16 %v978
    %v1122 = vunpack.c.h.b16 %v978
    %v1123 = vunpack.c.l.b16 %v979
    %v1124 = vunpack.c.h.b16 %v979
    %v1125 = vunpack.c.l.b16 %v980
    %v1126 = vunpack.c.h.b16 %v980
    %v1127 = vunpack.c.l.b16 %v981
    %v1128 = vunpack.c.h.b16 %v981
    %v1129 = vunpack.c.l.b16 %v982
    %v1130 = vunpack.c.h.b16 %v982
    %v1131 = vpack.c.b16 %v1041, %v1035
    %v1132 = vpack.c.b16 %v1042, %v1036
    %v1133 = vpack.c.b16 %v1043, %v1037
    %v1134 = vpack.c.b16 %v1044, %v1038
    %v1135 = vpack.c.b16 %v1045, %v1039
    %v1136 = vpack.c.b16 %v1046, %v1040
    %v1137 = vpack.c.b16 %v1053, %v1047
    %v1138 = vpack.c.b16 %v1054, %v1048
    %v1139 = vpack.c.b16 %v1055, %v1049
    %v1140 = vpack.c.b16 %v1056, %v1050
    %v1141 = vpack.c.b16 %v1057, %v1051
    %v1142 = vpack.c.b16 %v1058, %v1052
    %v1143 = vpack.c.b16 %v1065, %v1059
    %v1144 = vpack.c.b16 %v1066, %v1060
    %v1145 = vpack.c.b16 %v1067, %v1061
    %v1146 = vpack.c.b16 %v1068, %v1062
    %v1147 = vpack.c.b16 %v1069, %v1063
    %v1148 = vpack.c.b16 %v1070, %v1064
    %v1149 = vpack.c.b16 %v1077, %v1071
    %v1150 = vpack.c.b16 %v1078, %v1072
    %v1151 = vpack.c.b16 %v1079, %v1073
    %v1152 = vpack.c.b16 %v1080, %v1074
    %v1153 = vpack.c.b16 %v1081, %v1075
    %v1154 = vpack.c.b16 %v1082, %v1076
    %v1155 = vpack.c.b16 %v1089, %v1083
    %v1156 = vpack.c.b16 %v1090, %v1084
    %v1157 = vpack.c.b16 %v1091, %v1085
    %v1158 = vpack.c.b16 %v1092, %v1086
    %v1159 = vpack.c.b16 %v1093, %v1087
    %v1160 = vpack.c.b16 %v1094, %v1088
    %v1161 = vpack.c.b16 %v1101, %v1095
    %v1162 = vpack.c.b16 %v1102, %v1096
    %v1163 = vpack.c.b16 %v1103, %v1097
    %v1164 = vpack.c.b16 %v1104, %v1098
    %v1165 = vpack.c.b16 %v1105, %v1099
    %v1166 = vpack.c.b16 %v1106, %v1100
    %v1167 = vpack.c.b16 %v1113, %v1107
    %v1168 = vpack.c.b16 %v1114, %v1108
    %v1169 = vpack.c.b16 %v1115, %v1109
    %v1170 = vpack.c.b16 %v1116, %v1110
    %v1171 = vpack.c.b16 %v1117, %v1111
    %v1172 = vpack.c.b16 %v1118, %v1112
    %v1173 = vpack.c.b16 %v1125, %v1119
    %v1174 = vpack.c.b16 %v1126, %v1120
    %v1175 = vpack.c.b16 %v1127, %v1121
    %v1176 = vpack.c.b16 %v1128, %v1122
    %v1177 = vpack.c.b16 %v1129, %v1123
    %v1178 = vpack.c.b16 %v1130, %v1124
    %1227 = vmatprep.subr.bf16.mxu0 %v1174
    %1228 = vmatpush1.bf16.msra.mxu0 %v1173
    %1229 = vmatprep.subr.bf16.mxu0 %v1168
    %1230 = vmatpush1.bf16.msra.mxu0 %v1167
    %1231 = vmatprep.subr.bf16.mxu0 %v1162
    %1232 = vmatpush1.bf16.msra.mxu0 %v1161
    %1233 = vmatprep.subr.bf16.mxu0 %v1156
    %1234 = vmatpush1.bf16.msra.mxu0 %v1155
    %1235 = vmatprep.subr.bf16.mxu0 %v1150
    %1236 = vmatpush1.bf16.msra.mxu0 %v1149
    %1237 = vmatprep.subr.bf16.mxu0 %v1144
    %1238 = vmatpush1.bf16.msra.mxu0 %v1143
    %1239 = vmatprep.subr.bf16.mxu0 %v1138
    %1240 = vmatpush1.bf16.msra.mxu0 %v1137
    %1241 = vmatprep.subr.bf16.mxu0 %v1132
    %1242 = vmatpush1.bf16.msra.mxu0 %v1131
    %1243 = vmatprep.subr.bf16.mxu0 0
    %1244 = vmatpush2.bf16.msra.mxu0 0
    %1245 = vmatprep.subr.bf16.mxu0 0
    %1246 = vmatpush2.bf16.msra.mxu0 0
    %1247 = vmatprep.subr.bf16.mxu0 0
    %1248 = vmatpush2.bf16.msra.mxu0 0
    %1249 = vmatprep.subr.bf16.mxu0 0
    %1250 = vmatpush2.bf16.msra.mxu0 0
    %1251 = vmatprep.subr.bf16.mxu0 0
    %1252 = vmatpush2.bf16.msra.mxu0 0
    %1253 = vmatprep.subr.bf16.mxu0 0
    %1254 = vmatpush2.bf16.msra.mxu0 0
    %1255 = vmatprep.subr.bf16.mxu0 0
    %1256 = vmatpush2.bf16.msra.mxu0 0
    %1257 = vmatprep.subr.bf16.mxu0 0
    %1258 = vmatpush2.bf16.msra.mxu0 0
    %1259 = vmatprep.mubr.bf16.mxu0 0
    %1260 = vmatmul.mubr.bf16.gmra.mxu0 %v983
    %v1261 = vpop.f32.mrf.mxu0
    %v1262 = vadd.f32 0.0, %v1261
    %v1263 = vpop.f32.mrf.mxu0
    %v1264 = vadd.f32 0.0, %v1263
    %v1265 = vpop.f32.mrf.mxu0
    %v1266 = vadd.f32 0.0, %v1265
    %v1267 = vpop.f32.mrf.mxu0
    %v1268 = vadd.f32 0.0, %v1267
    %1269 = vmatprep.mubr.bf16.mxu0 0
    %1270 = vmatmul.mubr.bf16.gmra.mxu0 %v984
    %v1271 = vpop.f32.mrf.mxu0
    %v1272 = vadd.f32 0.0, %v1271
    %v1273 = vpop.f32.mrf.mxu0
    %v1274 = vadd.f32 0.0, %v1273
    %v1275 = vpop.f32.mrf.mxu0
    %v1276 = vadd.f32 0.0, %v1275
    %v1277 = vpop.f32.mrf.mxu0
    %v1278 = vadd.f32 0.0, %v1277
    %1279 = vmatprep.mubr.bf16.mxu0 0
    %1280 = vmatmul.mubr.bf16.gmra.mxu0 %v985
    %v1281 = vpop.f32.mrf.mxu0
    %v1282 = vadd.f32 0.0, %v1281
    %v1283 = vpop.f32.mrf.mxu0
    %v1284 = vadd.f32 0.0, %v1283
    %v1285 = vpop.f32.mrf.mxu0
    %v1286 = vadd.f32 0.0, %v1285
    %v1287 = vpop.f32.mrf.mxu0
    %v1288 = vadd.f32 0.0, %v1287
    %1289 = vmatprep.mubr.bf16.mxu0 0
    %1290 = vmatmul.mubr.bf16.gmra.mxu0 %v986
    %v1291 = vpop.f32.mrf.mxu0
    %v1292 = vadd.f32 0.0, %v1291
    %v1293 = vpop.f32.mrf.mxu0
    %v1294 = vadd.f32 0.0, %v1293
    %v1295 = vpop.f32.mrf.mxu0
    %v1296 = vadd.f32 0.0, %v1295
    %v1297 = vpop.f32.mrf.mxu0
    %v1298 = vadd.f32 0.0, %v1297
    %1299 = vdwg.mxu0
    %1300 = vmatprep.subr.bf16.mxu0 %v1176
    %1301 = vmatpush1.bf16.msra.mxu0 %v1175
    %1302 = vmatprep.subr.bf16.mxu0 %v1170
    %1303 = vmatpush1.bf16.msra.mxu0 %v1169
    %1304 = vmatprep.subr.bf16.mxu0 %v1164
    %1305 = vmatpush1.bf16.msra.mxu0 %v1163
    %1306 = vmatprep.subr.bf16.mxu0 %v1158
    %1307 = vmatpush1.bf16.msra.mxu0 %v1157
    %1308 = vmatprep.subr.bf16.mxu0 %v1152
    %1309 = vmatpush1.bf16.msra.mxu0 %v1151
    %1310 = vmatprep.subr.bf16.mxu0 %v1146
    %1311 = vmatpush1.bf16.msra.mxu0 %v1145
    %1312 = vmatprep.subr.bf16.mxu0 %v1140
    %1313 = vmatpush1.bf16.msra.mxu0 %v1139
    %1314 = vmatprep.subr.bf16.mxu0 %v1134
    %1315 = vmatpush1.bf16.msra.mxu0 %v1133
    %1316 = vmatprep.subr.bf16.mxu0 0
    %1317 = vmatpush2.bf16.msra.mxu0 0
    %1318 = vmatprep.subr.bf16.mxu0 0
    %1319 = vmatpush2.bf16.msra.mxu0 0
    %1320 = vmatprep.subr.bf16.mxu0 0
    %1321 = vmatpush2.bf16.msra.mxu0 0
    %1322 = vmatprep.subr.bf16.mxu0 0
    %1323 = vmatpush2.bf16.msra.mxu0 0
    %1324 = vmatprep.subr.bf16.mxu0 0
    %1325 = vmatpush2.bf16.msra.mxu0 0
    %1326 = vmatprep.subr.bf16.mxu0 0
    %1327 = vmatpush2.bf16.msra.mxu0 0
    %1328 = vmatprep.subr.bf16.mxu0 0
    %1329 = vmatpush2.bf16.msra.mxu0 0
    %1330 = vmatprep.subr.bf16.mxu0 0
    %1331 = vmatpush2.bf16.msra.mxu0 0
    %1332 = vmatprep.mubr.bf16.mxu0 0
    %1333 = vmatmul.mubr.bf16.gmra.mxu0 %v983
    %v1334 = vpop.f32.mrf.mxu0
    %v1335 = vadd.f32 0.0, %v1334
    %v1336 = vpop.f32.mrf.mxu0
    %v1337 = vadd.f32 0.0, %v1336
    %v1338 = vpop.f32.mrf.mxu0
    %v1339 = vadd.f32 0.0, %v1338
    %v1340 = vpop.f32.mrf.mxu0
    %v1341 = vadd.f32 0.0, %v1340
    %1342 = vmatprep.mubr.bf16.mxu0 0
    %1343 = vmatmul.mubr.bf16.gmra.mxu0 %v984
    %v1344 = vpop.f32.mrf.mxu0
    %v1345 = vadd.f32 0.0, %v1344
    %v1346 = vpop.f32.mrf.mxu0
    %v1347 = vadd.f32 0.0, %v1346
    %v1348 = vpop.f32.mrf.mxu0
    %v1349 = vadd.f32 0.0, %v1348
    %v1350 = vpop.f32.mrf.mxu0
    %v1351 = vadd.f32 0.0, %v1350
    %1352 = vmatprep.mubr.bf16.mxu0 0
    %1353 = vmatmul.mubr.bf16.gmra.mxu0 %v985
    %v1354 = vpop.f32.mrf.mxu0
    %v1355 = vadd.f32 0.0, %v1354
    %v1356 = vpop.f32.mrf.mxu0
    %v1357 = vadd.f32 0.0, %v1356
    %v1358 = vpop.f32.mrf.mxu0
    %v1359 = vadd.f32 0.0, %v1358
    %v1360 = vpop.f32.mrf.mxu0
    %v1361 = vadd.f32 0.0, %v1360
    %1362 = vmatprep.mubr.bf16.mxu0 0
    %1363 = vmatmul.mubr.bf16.gmra.mxu0 %v986
    %v1364 = vpop.f32.mrf.mxu0
    %v1365 = vadd.f32 0.0, %v1364
    %v1366 = vpop.f32.mrf.mxu0
    %v1367 = vadd.f32 0.0, %v1366
    %v1368 = vpop.f32.mrf.mxu0
    %v1369 = vadd.f32 0.0, %v1368
    %v1370 = vpop.f32.mrf.mxu0
    %v1371 = vadd.f32 0.0, %v1370
    %1372 = vdwg.mxu0
    %1373 = vmatprep.subr.bf16.mxu0 %v1178
    %1374 = vmatpush1.bf16.msra.mxu0 %v1177
    %1375 = vmatprep.subr.bf16.mxu0 %v1172
    %1376 = vmatpush1.bf16.msra.mxu0 %v1171
    %1377 = vmatprep.subr.bf16.mxu0 %v1166
    %1378 = vmatpush1.bf16.msra.mxu0 %v1165
    %1379 = vmatprep.subr.bf16.mxu0 %v1160
    %1380 = vmatpush1.bf16.msra.mxu0 %v1159
    %1381 = vmatprep.subr.bf16.mxu0 %v1154
    %1382 = vmatpush1.bf16.msra.mxu0 %v1153
    %1383 = vmatprep.subr.bf16.mxu0 %v1148
    %1384 = vmatpush1.bf16.msra.mxu0 %v1147
    %1385 = vmatprep.subr.bf16.mxu0 %v1142
    %1386 = vmatpush1.bf16.msra.mxu0 %v1141
    %1387 = vmatprep.subr.bf16.mxu0 %v1136
    %1388 = vmatpush1.bf16.msra.mxu0 %v1135
    %1389 = vmatprep.subr.bf16.mxu0 0
    %1390 = vmatpush2.bf16.msra.mxu0 0
    %1391 = vmatprep.subr.bf16.mxu0 0
    %1392 = vmatpush2.bf16.msra.mxu0 0
    %1393 = vmatprep.subr.bf16.mxu0 0
    %1394 = vmatpush2.bf16.msra.mxu0 0
    %1395 = vmatprep.subr.bf16.mxu0 0
    %1396 = vmatpush2.bf16.msra.mxu0 0
    %1397 = vmatprep.subr.bf16.mxu0 0
    %1398 = vmatpush2.bf16.msra.mxu0 0
    %1399 = vmatprep.subr.bf16.mxu0 0
    %1400 = vmatpush2.bf16.msra.mxu0 0
    %1401 = vmatprep.subr.bf16.mxu0 0
    %1402 = vmatpush2.bf16.msra.mxu0 0
    %1403 = vmatprep.subr.bf16.mxu0 0
    %1404 = vmatpush2.bf16.msra.mxu0 0
    %1405 = vmatprep.mubr.bf16.mxu0 0
    %1406 = vmatmul.mubr.bf16.gmra.mxu0 %v983
    %v1407 = vpop.f32.mrf.mxu0
    %v1408 = vadd.f32 0.0, %v1407
    %v1409 = vpop.f32.mrf.mxu0
    %v1410 = vadd.f32 0.0, %v1409
    %v1411 = vpop.f32.mrf.mxu0
    %v1412 = vadd.f32 0.0, %v1411
    %v1413 = vpop.f32.mrf.mxu0
    %v1414 = vadd.f32 0.0, %v1413
    %1415 = vmatprep.mubr.bf16.mxu0 0
    %1416 = vmatmul.mubr.bf16.gmra.mxu0 %v984
    %v1417 = vpop.f32.mrf.mxu0
    %v1418 = vadd.f32 0.0, %v1417
    %v1419 = vpop.f32.mrf.mxu0
    %v1420 = vadd.f32 0.0, %v1419
    %v1421 = vpop.f32.mrf.mxu0
    %v1422 = vadd.f32 0.0, %v1421
    %v1423 = vpop.f32.mrf.mxu0
    %v1424 = vadd.f32 0.0, %v1423
    %1425 = vmatprep.mubr.bf16.mxu0 0
    %1426 = vmatmul.mubr.bf16.gmra.mxu0 %v985
    %v1427 = vpop.f32.mrf.mxu0
    %v1428 = vadd.f32 0.0, %v1427
    %v1429 = vpop.f32.mrf.mxu0
    %v1430 = vadd.f32 0.0, %v1429
    %v1431 = vpop.f32.mrf.mxu0
    %v1432 = vadd.f32 0.0, %v1431
    %v1433 = vpop.f32.mrf.mxu0
    %v1434 = vadd.f32 0.0, %v1433
    %1435 = vmatprep.mubr.bf16.mxu0 0
    %1436 = vmatmul.mubr.bf16.gmra.mxu0 %v986
    %v1437 = vpop.f32.mrf.mxu0
    %v1438 = vadd.f32 0.0, %v1437
    %v1439 = vpop.f32.mrf.mxu0
    %v1440 = vadd.f32 0.0, %v1439
    %v1441 = vpop.f32.mrf.mxu0
    %v1442 = vadd.f32 0.0, %v1441
    %v1443 = vpop.f32.mrf.mxu0
    %v1444 = vadd.f32 0.0, %v1443
    %1445 = vdwg.mxu0
    %v1446 = vlaneseq
    %v1447 = vshrl.u32 %v1446, 7
    %v1448 = vsub.s32 2, %v1447
    %v1449 = vrot.slane %v820, %v1448
    %v1450 = vadd.f32 %v1262, %v1449
    %v1451 = vadd.f32 %v1266, %v1449
    %v1452 = vadd.f32 %v1272, %v1449
    %v1453 = vadd.f32 %v1276, %v1449
    %v1454 = vadd.f32 %v1282, %v1449
    %v1455 = vadd.f32 %v1286, %v1449
    %v1456 = vadd.f32 %v1292, %v1449
    %v1457 = vadd.f32 %v1296, %v1449
    %v1458 = vlaneseq
    %v1459 = vshrl.u32 %v1458, 7
    %v1460 = vsub.s32 2, %v1459
    %v1461 = vrot.slane %v821, %v1460
    %v1462 = vadd.f32 %v1264, %v1461
    %v1463 = vadd.f32 %v1268, %v1461
    %v1464 = vadd.f32 %v1274, %v1461
    %v1465 = vadd.f32 %v1278, %v1461
    %v1466 = vadd.f32 %v1284, %v1461
    %v1467 = vadd.f32 %v1288, %v1461
    %v1468 = vadd.f32 %v1294, %v1461
    %v1469 = vadd.f32 %v1298, %v1461
    %v1470 = vpack.c.bf16 %v1450, %v1450
    %v1471 = vpack.c.bf16 %v1451, %v1451
    %v1472 = vpack.c.bf16 %v1452, %v1452
    %v1473 = vpack.c.bf16 %v1453, %v1453
    %v1474 = vpack.c.bf16 %v1454, %v1454
    %v1475 = vpack.c.bf16 %v1455, %v1455
    %v1476 = vpack.c.bf16 %v1456, %v1456
    %v1477 = vpack.c.bf16 %v1457, %v1457
    %v1478 = vpack.c.bf16 %v1462, %v1462
    %v1479 = vpack.c.bf16 %v1463, %v1463
    %v1480 = vpack.c.bf16 %v1464, %v1464
    %v1481 = vpack.c.bf16 %v1465, %v1465
    %v1482 = vpack.c.bf16 %v1466, %v1466
    %v1483 = vpack.c.bf16 %v1467, %v1467
    %v1484 = vpack.c.bf16 %v1468, %v1468
    %v1485 = vpack.c.bf16 %v1469, %v1469
    %vm1486 = vcmask 261120
    %v1488 = vsel %vm1486, %v1470, 0
    %v1491 = vsel %vm1486, %v1478, 0
    %1493 = vmatprep.subr.bf16.mxu0 0
    %1494 = vmatpush1.bf16.xpose.msra.mxu0 0
    %1495 = vmatprep.subr.bf16.mxu0 0
    %1496 = vmatpush1.bf16.xpose.msra.mxu0 0
    %1497 = vmatprep.subr.bf16.mxu0 0
    %1498 = vmatpush1.bf16.xpose.msra.mxu0 0
    %1499 = vmatprep.subr.bf16.mxu0 0
    %1500 = vmatpush1.bf16.xpose.msra.mxu0 0
    %1501 = vmatprep.subr.bf16.mxu0 0
    %1502 = vmatpush1.bf16.xpose.msra.mxu0 0
    %1503 = vmatprep.subr.bf16.mxu0 0
    %1504 = vmatpush1.bf16.xpose.msra.mxu0 0
    %1505 = vmatprep.subr.bf16.mxu0 0
    %1506 = vmatpush1.bf16.xpose.msra.mxu0 0
    %1507 = vmatprep.subr.bf16.mxu0 0
    %1508 = vmatpush1.bf16.xpose.msra.mxu0 %v1491
    %1509 = vmatprep.subr.bf16.mxu0 0
    %1510 = vmatpush2.bf16.xpose.msra.mxu0 0
    %1511 = vmatprep.subr.bf16.mxu0 0
    %1512 = vmatpush2.bf16.xpose.msra.mxu0 0
    %1513 = vmatprep.subr.bf16.mxu0 0
    %1514 = vmatpush2.bf16.xpose.msra.mxu0 0
    %1515 = vmatprep.subr.bf16.mxu0 0
    %1516 = vmatpush2.bf16.xpose.msra.mxu0 0
    %1517 = vmatprep.subr.bf16.mxu0 0
    %1518 = vmatpush2.bf16.xpose.msra.mxu0 0
    %1519 = vmatprep.subr.bf16.mxu0 0
    %1520 = vmatpush2.bf16.xpose.msra.mxu0 0
    %1521 = vmatprep.subr.bf16.mxu0 0
    %1522 = vmatpush2.bf16.xpose.msra.mxu0 0
    %1523 = vmatprep.subr.bf16.mxu0 0
    %1524 = vmatpush2.bf16.xpose.msra.mxu0 0
    %1525 = vmatprep.mubr.bf16.mxu0 0
    %1526 = vmatmul.mubr.bf16.gmra.mxu0 %v1488
    %v1527 = vpop.f32.mrf.mxu0
    %v1528 = vadd.f32 0.0, %v1527
    %v1529 = vpop.f32.mrf.mxu0
    %v1530 = vpop.f32.mrf.mxu0
    %v1531 = vpop.f32.mrf.mxu0
    %1532 = vdwg.mxu0
    %v1534 = vsel %vm1486, %v1471, 0
    %v1537 = vsel %vm1486, %v1479, 0
    %1539 = vmatprep.subr.bf16.mxu0 0
    %1540 = vmatpush1.bf16.xpose.msra.mxu0 0
    %1541 = vmatprep.subr.bf16.mxu0 0
    %1542 = vmatpush1.bf16.xpose.msra.mxu0 0
    %1543 = vmatprep.subr.bf16.mxu0 0
    %1544 = vmatpush1.bf16.xpose.msra.mxu0 0
    %1545 = vmatprep.subr.bf16.mxu0 0
    %1546 = vmatpush1.bf16.xpose.msra.mxu0 0
    %1547 = vmatprep.subr.bf16.mxu0 0
    %1548 = vmatpush1.bf16.xpose.msra.mxu0 0
    %1549 = vmatprep.subr.bf16.mxu0 0
    %1550 = vmatpush1.bf16.xpose.msra.mxu0 0
    %1551 = vmatprep.subr.bf16.mxu0 0
    %1552 = vmatpush1.bf16.xpose.msra.mxu0 0
    %1553 = vmatprep.subr.bf16.mxu0 0
    %1554 = vmatpush1.bf16.xpose.msra.mxu0 %v1537
    %1555 = vmatprep.subr.bf16.mxu0 0
    %1556 = vmatpush2.bf16.xpose.msra.mxu0 0
    %1557 = vmatprep.subr.bf16.mxu0 0
    %1558 = vmatpush2.bf16.xpose.msra.mxu0 0
    %1559 = vmatprep.subr.bf16.mxu0 0
    %1560 = vmatpush2.bf16.xpose.msra.mxu0 0
    %1561 = vmatprep.subr.bf16.mxu0 0
    %1562 = vmatpush2.bf16.xpose.msra.mxu0 0
    %1563 = vmatprep.subr.bf16.mxu0 0
    %1564 = vmatpush2.bf16.xpose.msra.mxu0 0
    %1565 = vmatprep.subr.bf16.mxu0 0
    %1566 = vmatpush2.bf16.xpose.msra.mxu0 0
    %1567 = vmatprep.subr.bf16.mxu0 0
    %1568 = vmatpush2.bf16.xpose.msra.mxu0 0
    %1569 = vmatprep.subr.bf16.mxu0 0
    %1570 = vmatpush2.bf16.xpose.msra.mxu0 0
    %1571 = vmatprep.mubr.bf16.mxu0 0
    %1572 = vmatmul.mubr.bf16.gmra.mxu0 %v1534
    %v1573 = vpop.f32.mrf.mxu0
    %v1574 = vadd.f32 0.0, %v1573
    %v1575 = vpop.f32.mrf.mxu0
    %v1576 = vpop.f32.mrf.mxu0
    %v1577 = vpop.f32.mrf.mxu0
    %1578 = vdwg.mxu0
    %v1580 = vsel %vm1486, %v1472, 0
    %v1583 = vsel %vm1486, %v1480, 0
    %1585 = vmatprep.subr.bf16.mxu0 0
    %1586 = vmatpush1.bf16.xpose.msra.mxu0 0
    %1587 = vmatprep.subr.bf16.mxu0 0
    %1588 = vmatpush1.bf16.xpose.msra.mxu0 0
    %1589 = vmatprep.subr.bf16.mxu0 0
    %1590 = vmatpush1.bf16.xpose.msra.mxu0 0
    %1591 = vmatprep.subr.bf16.mxu0 0
    %1592 = vmatpush1.bf16.xpose.msra.mxu0 0
    %1593 = vmatprep.subr.bf16.mxu0 0
    %1594 = vmatpush1.bf16.xpose.msra.mxu0 0
    %1595 = vmatprep.subr.bf16.mxu0 0
    %1596 = vmatpush1.bf16.xpose.msra.mxu0 0
    %1597 = vmatprep.subr.bf16.mxu0 0
    %1598 = vmatpush1.bf16.xpose.msra.mxu0 0
    %1599 = vmatprep.subr.bf16.mxu0 0
    %1600 = vmatpush1.bf16.xpose.msra.mxu0 %v1583
    %1601 = vmatprep.subr.bf16.mxu0 0
    %1602 = vmatpush2.bf16.xpose.msra.mxu0 0
    %1603 = vmatprep.subr.bf16.mxu0 0
    %1604 = vmatpush2.bf16.xpose.msra.mxu0 0
    %1605 = vmatprep.subr.bf16.mxu0 0
    %1606 = vmatpush2.bf16.xpose.msra.mxu0 0
    %1607 = vmatprep.subr.bf16.mxu0 0
    %1608 = vmatpush2.bf16.xpose.msra.mxu0 0
    %1609 = vmatprep.subr.bf16.mxu0 0
    %1610 = vmatpush2.bf16.xpose.msra.mxu0 0
    %1611 = vmatprep.subr.bf16.mxu0 0
    %1612 = vmatpush2.bf16.xpose.msra.mxu0 0
    %1613 = vmatprep.subr.bf16.mxu0 0
    %1614 = vmatpush2.bf16.xpose.msra.mxu0 0
    %1615 = vmatprep.subr.bf16.mxu0 0
    %1616 = vmatpush2.bf16.xpose.msra.mxu0 0
    %1617 = vmatprep.mubr.bf16.mxu0 0
    %1618 = vmatmul.mubr.bf16.gmra.mxu0 %v1580
    %v1619 = vpop.f32.mrf.mxu0
    %v1620 = vadd.f32 0.0, %v1619
    %v1621 = vpop.f32.mrf.mxu0
    %v1622 = vpop.f32.mrf.mxu0
    %v1623 = vpop.f32.mrf.mxu0
    %1624 = vdwg.mxu0
    %v1626 = vsel %vm1486, %v1473, 0
    %v1629 = vsel %vm1486, %v1481, 0
    %1631 = vmatprep.subr.bf16.mxu0 0
    %1632 = vmatpush1.bf16.xpose.msra.mxu0 0
    %1633 = vmatprep.subr.bf16.mxu0 0
    %1634 = vmatpush1.bf16.xpose.msra.mxu0 0
    %1635 = vmatprep.subr.bf16.mxu0 0
    %1636 = vmatpush1.bf16.xpose.msra.mxu0 0
    %1637 = vmatprep.subr.bf16.mxu0 0
    %1638 = vmatpush1.bf16.xpose.msra.mxu0 0
    %1639 = vmatprep.subr.bf16.mxu0 0
    %1640 = vmatpush1.bf16.xpose.msra.mxu0 0
    %1641 = vmatprep.subr.bf16.mxu0 0
    %1642 = vmatpush1.bf16.xpose.msra.mxu0 0
    %1643 = vmatprep.subr.bf16.mxu0 0
    %1644 = vmatpush1.bf16.xpose.msra.mxu0 0
    %1645 = vmatprep.subr.bf16.mxu0 0
    %1646 = vmatpush1.bf16.xpose.msra.mxu0 %v1629
    %1647 = vmatprep.subr.bf16.mxu0 0
    %1648 = vmatpush2.bf16.xpose.msra.mxu0 0
    %1649 = vmatprep.subr.bf16.mxu0 0
    %1650 = vmatpush2.bf16.xpose.msra.mxu0 0
    %1651 = vmatprep.subr.bf16.mxu0 0
    %1652 = vmatpush2.bf16.xpose.msra.mxu0 0
    %1653 = vmatprep.subr.bf16.mxu0 0
    %1654 = vmatpush2.bf16.xpose.msra.mxu0 0
    %1655 = vmatprep.subr.bf16.mxu0 0
    %1656 = vmatpush2.bf16.xpose.msra.mxu0 0
    %1657 = vmatprep.subr.bf16.mxu0 0
    %1658 = vmatpush2.bf16.xpose.msra.mxu0 0
    %1659 = vmatprep.subr.bf16.mxu0 0
    %1660 = vmatpush2.bf16.xpose.msra.mxu0 0
    %1661 = vmatprep.subr.bf16.mxu0 0
    %1662 = vmatpush2.bf16.xpose.msra.mxu0 0
    %1663 = vmatprep.mubr.bf16.mxu0 0
    %1664 = vmatmul.mubr.bf16.gmra.mxu0 %v1626
    %v1665 = vpop.f32.mrf.mxu0
    %v1666 = vadd.f32 0.0, %v1665
    %v1667 = vpop.f32.mrf.mxu0
    %v1668 = vpop.f32.mrf.mxu0
    %v1669 = vpop.f32.mrf.mxu0
    %1670 = vdwg.mxu0
    %v1672 = vsel %vm1486, %v1474, 0
    %v1675 = vsel %vm1486, %v1482, 0
    %1677 = vmatprep.subr.bf16.mxu0 0
    %1678 = vmatpush1.bf16.xpose.msra.mxu0 0
    %1679 = vmatprep.subr.bf16.mxu0 0
    %1680 = vmatpush1.bf16.xpose.msra.mxu0 0
    %1681 = vmatprep.subr.bf16.mxu0 0
    %1682 = vmatpush1.bf16.xpose.msra.mxu0 0
    %1683 = vmatprep.subr.bf16.mxu0 0
    %1684 = vmatpush1.bf16.xpose.msra.mxu0 0
    %1685 = vmatprep.subr.bf16.mxu0 0
    %1686 = vmatpush1.bf16.xpose.msra.mxu0 0
    %1687 = vmatprep.subr.bf16.mxu0 0
    %1688 = vmatpush1.bf16.xpose.msra.mxu0 0
    %1689 = vmatprep.subr.bf16.mxu0 0
    %1690 = vmatpush1.bf16.xpose.msra.mxu0 0
    %1691 = vmatprep.subr.bf16.mxu0 0
    %1692 = vmatpush1.bf16.xpose.msra.mxu0 %v1675
    %1693 = vmatprep.subr.bf16.mxu0 0
    %1694 = vmatpush2.bf16.xpose.msra.mxu0 0
    %1695 = vmatprep.subr.bf16.mxu0 0
    %1696 = vmatpush2.bf16.xpose.msra.mxu0 0
    %1697 = vmatprep.subr.bf16.mxu0 0
    %1698 = vmatpush2.bf16.xpose.msra.mxu0 0
    %1699 = vmatprep.subr.bf16.mxu0 0
    %1700 = vmatpush2.bf16.xpose.msra.mxu0 0
    %1701 = vmatprep.subr.bf16.mxu0 0
    %1702 = vmatpush2.bf16.xpose.msra.mxu0 0
    %1703 = vmatprep.subr.bf16.mxu0 0
    %1704 = vmatpush2.bf16.xpose.msra.mxu0 0
    %1705 = vmatprep.subr.bf16.mxu0 0
    %1706 = vmatpush2.bf16.xpose.msra.mxu0 0
    %1707 = vmatprep.subr.bf16.mxu0 0
    %1708 = vmatpush2.bf16.xpose.msra.mxu0 0
    %1709 = vmatprep.mubr.bf16.mxu0 0
    %1710 = vmatmul.mubr.bf16.gmra.mxu0 %v1672
    %v1711 = vpop.f32.mrf.mxu0
    %v1712 = vadd.f32 0.0, %v1711
    %v1713 = vpop.f32.mrf.mxu0
    %v1714 = vpop.f32.mrf.mxu0
    %v1715 = vpop.f32.mrf.mxu0
    %1716 = vdwg.mxu0
    %v1718 = vsel %vm1486, %v1475, 0
    %v1721 = vsel %vm1486, %v1483, 0
    %1723 = vmatprep.subr.bf16.mxu0 0
    %1724 = vmatpush1.bf16.xpose.msra.mxu0 0
    %1725 = vmatprep.subr.bf16.mxu0 0
    %1726 = vmatpush1.bf16.xpose.msra.mxu0 0
    %1727 = vmatprep.subr.bf16.mxu0 0
    %1728 = vmatpush1.bf16.xpose.msra.mxu0 0
    %1729 = vmatprep.subr.bf16.mxu0 0
    %1730 = vmatpush1.bf16.xpose.msra.mxu0 0
    %1731 = vmatprep.subr.bf16.mxu0 0
    %1732 = vmatpush1.bf16.xpose.msra.mxu0 0
    %1733 = vmatprep.subr.bf16.mxu0 0
    %1734 = vmatpush1.bf16.xpose.msra.mxu0 0
    %1735 = vmatprep.subr.bf16.mxu0 0
    %1736 = vmatpush1.bf16.xpose.msra.mxu0 0
    %1737 = vmatprep.subr.bf16.mxu0 0
    %1738 = vmatpush1.bf16.xpose.msra.mxu0 %v1721
    %1739 = vmatprep.subr.bf16.mxu0 0
    %1740 = vmatpush2.bf16.xpose.msra.mxu0 0
    %1741 = vmatprep.subr.bf16.mxu0 0
    %1742 = vmatpush2.bf16.xpose.msra.mxu0 0
    %1743 = vmatprep.subr.bf16.mxu0 0
    %1744 = vmatpush2.bf16.xpose.msra.mxu0 0
    %1745 = vmatprep.subr.bf16.mxu0 0
    %1746 = vmatpush2.bf16.xpose.msra.mxu0 0
    %1747 = vmatprep.subr.bf16.mxu0 0
    %1748 = vmatpush2.bf16.xpose.msra.mxu0 0
    %1749 = vmatprep.subr.bf16.mxu0 0
    %1750 = vmatpush2.bf16.xpose.msra.mxu0 0
    %1751 = vmatprep.subr.bf16.mxu0 0
    %1752 = vmatpush2.bf16.xpose.msra.mxu0 0
    %1753 = vmatprep.subr.bf16.mxu0 0
    %1754 = vmatpush2.bf16.xpose.msra.mxu0 0
    %1755 = vmatprep.mubr.bf16.mxu0 0
    %1756 = vmatmul.mubr.bf16.gmra.mxu0 %v1718
    %v1757 = vpop.f32.mrf.mxu0
    %v1758 = vadd.f32 0.0, %v1757
    %v1759 = vpop.f32.mrf.mxu0
    %v1760 = vpop.f32.mrf.mxu0
    %v1761 = vpop.f32.mrf.mxu0
    %1762 = vdwg.mxu0
    %v1764 = vsel %vm1486, %v1476, 0
    %v1767 = vsel %vm1486, %v1484, 0
    %1769 = vmatprep.subr.bf16.mxu0 0
    %1770 = vmatpush1.bf16.xpose.msra.mxu0 0
    %1771 = vmatprep.subr.bf16.mxu0 0
    %1772 = vmatpush1.bf16.xpose.msra.mxu0 0
    %1773 = vmatprep.subr.bf16.mxu0 0
    %1774 = vmatpush1.bf16.xpose.msra.mxu0 0
    %1775 = vmatprep.subr.bf16.mxu0 0
    %1776 = vmatpush1.bf16.xpose.msra.mxu0 0
    %1777 = vmatprep.subr.bf16.mxu0 0
    %1778 = vmatpush1.bf16.xpose.msra.mxu0 0
    %1779 = vmatprep.subr.bf16.mxu0 0
    %1780 = vmatpush1.bf16.xpose.msra.mxu0 0
    %1781 = vmatprep.subr.bf16.mxu0 0
    %1782 = vmatpush1.bf16.xpose.msra.mxu0 0
    %1783 = vmatprep.subr.bf16.mxu0 0
    %1784 = vmatpush1.bf16.xpose.msra.mxu0 %v1767
    %1785 = vmatprep.subr.bf16.mxu0 0
    %1786 = vmatpush2.bf16.xpose.msra.mxu0 0
    %1787 = vmatprep.subr.bf16.mxu0 0
    %1788 = vmatpush2.bf16.xpose.msra.mxu0 0
    %1789 = vmatprep.subr.bf16.mxu0 0
    %1790 = vmatpush2.bf16.xpose.msra.mxu0 0
    %1791 = vmatprep.subr.bf16.mxu0 0
    %1792 = vmatpush2.bf16.xpose.msra.mxu0 0
    %1793 = vmatprep.subr.bf16.mxu0 0
    %1794 = vmatpush2.bf16.xpose.msra.mxu0 0
    %1795 = vmatprep.subr.bf16.mxu0 0
    %1796 = vmatpush2.bf16.xpose.msra.mxu0 0
    %1797 = vmatprep.subr.bf16.mxu0 0
    %1798 = vmatpush2.bf16.xpose.msra.mxu0 0
    %1799 = vmatprep.subr.bf16.mxu0 0
    %1800 = vmatpush2.bf16.xpose.msra.mxu0 0
    %1801 = vmatprep.mubr.bf16.mxu0 0
    %1802 = vmatmul.mubr.bf16.gmra.mxu0 %v1764
    %v1803 = vpop.f32.mrf.mxu0
    %v1804 = vadd.f32 0.0, %v1803
    %v1805 = vpop.f32.mrf.mxu0
    %v1806 = vpop.f32.mrf.mxu0
    %v1807 = vpop.f32.mrf.mxu0
    %1808 = vdwg.mxu0
    %v1810 = vsel %vm1486, %v1477, 0
    %v1813 = vsel %vm1486, %v1485, 0
    %1815 = vmatprep.subr.bf16.mxu0 0
    %1816 = vmatpush1.bf16.xpose.msra.mxu0 0
    %1817 = vmatprep.subr.bf16.mxu0 0
    %1818 = vmatpush1.bf16.xpose.msra.mxu0 0
    %1819 = vmatprep.subr.bf16.mxu0 0
    %1820 = vmatpush1.bf16.xpose.msra.mxu0 0
    %1821 = vmatprep.subr.bf16.mxu0 0
    %1822 = vmatpush1.bf16.xpose.msra.mxu0 0
    %1823 = vmatprep.subr.bf16.mxu0 0
    %1824 = vmatpush1.bf16.xpose.msra.mxu0 0
    %1825 = vmatprep.subr.bf16.mxu0 0
    %1826 = vmatpush1.bf16.xpose.msra.mxu0 0
    %1827 = vmatprep.subr.bf16.mxu0 0
    %1828 = vmatpush1.bf16.xpose.msra.mxu0 0
    %1829 = vmatprep.subr.bf16.mxu0 0
    %1830 = vmatpush1.bf16.xpose.msra.mxu0 %v1813
    %1831 = vmatprep.subr.bf16.mxu0 0
    %1832 = vmatpush2.bf16.xpose.msra.mxu0 0
    %1833 = vmatprep.subr.bf16.mxu0 0
    %1834 = vmatpush2.bf16.xpose.msra.mxu0 0
    %1835 = vmatprep.subr.bf16.mxu0 0
    %1836 = vmatpush2.bf16.xpose.msra.mxu0 0
    %1837 = vmatprep.subr.bf16.mxu0 0
    %1838 = vmatpush2.bf16.xpose.msra.mxu0 0
    %1839 = vmatprep.subr.bf16.mxu0 0
    %1840 = vmatpush2.bf16.xpose.msra.mxu0 0
    %1841 = vmatprep.subr.bf16.mxu0 0
    %1842 = vmatpush2.bf16.xpose.msra.mxu0 0
    %1843 = vmatprep.subr.bf16.mxu0 0
    %1844 = vmatpush2.bf16.xpose.msra.mxu0 0
    %1845 = vmatprep.subr.bf16.mxu0 0
    %1846 = vmatpush2.bf16.xpose.msra.mxu0 0
    %1847 = vmatprep.mubr.bf16.mxu0 0
    %1848 = vmatmul.mubr.bf16.gmra.mxu0 %v1810
    %v1849 = vpop.f32.mrf.mxu0
    %v1850 = vadd.f32 0.0, %v1849
    %v1851 = vpop.f32.mrf.mxu0
    %v1852 = vpop.f32.mrf.mxu0
    %v1853 = vpop.f32.mrf.mxu0
    %1854 = vdwg.mxu0
    %1856 = vrot.lane.b32.xlu0 %v1470, 96
    %v1857 = vpop.permute.xlu0 %1856
    %1859 = vrot.lane.b32.xlu0 %v1478, 96
    %v1860 = vpop.permute.xlu0 %1859
    %v1862 = vsel %vm1486, %v1857, 0
    %v1865 = vsel %vm1486, %v1860, 0
    %1867 = vmatprep.subr.bf16.mxu0 0
    %1868 = vmatpush1.bf16.xpose.msra.mxu0 0
    %1869 = vmatprep.subr.bf16.mxu0 0
    %1870 = vmatpush1.bf16.xpose.msra.mxu0 0
    %1871 = vmatprep.subr.bf16.mxu0 0
    %1872 = vmatpush1.bf16.xpose.msra.mxu0 0
    %1873 = vmatprep.subr.bf16.mxu0 0
    %1874 = vmatpush1.bf16.xpose.msra.mxu0 0
    %1875 = vmatprep.subr.bf16.mxu0 0
    %1876 = vmatpush1.bf16.xpose.msra.mxu0 0
    %1877 = vmatprep.subr.bf16.mxu0 0
    %1878 = vmatpush1.bf16.xpose.msra.mxu0 0
    %1879 = vmatprep.subr.bf16.mxu0 0
    %1880 = vmatpush1.bf16.xpose.msra.mxu0 0
    %1881 = vmatprep.subr.bf16.mxu0 0
    %1882 = vmatpush1.bf16.xpose.msra.mxu0 %v1865
    %1883 = vmatprep.subr.bf16.mxu0 0
    %1884 = vmatpush2.bf16.xpose.msra.mxu0 0
    %1885 = vmatprep.subr.bf16.mxu0 0
    %1886 = vmatpush2.bf16.xpose.msra.mxu0 0
    %1887 = vmatprep.subr.bf16.mxu0 0
    %1888 = vmatpush2.bf16.xpose.msra.mxu0 0
    %1889 = vmatprep.subr.bf16.mxu0 0
    %1890 = vmatpush2.bf16.xpose.msra.mxu0 0
    %1891 = vmatprep.subr.bf16.mxu0 0
    %1892 = vmatpush2.bf16.xpose.msra.mxu0 0
    %1893 = vmatprep.subr.bf16.mxu0 0
    %1894 = vmatpush2.bf16.xpose.msra.mxu0 0
    %1895 = vmatprep.subr.bf16.mxu0 0
    %1896 = vmatpush2.bf16.xpose.msra.mxu0 0
    %1897 = vmatprep.subr.bf16.mxu0 0
    %1898 = vmatpush2.bf16.xpose.msra.mxu0 0
    %1899 = vmatprep.mubr.bf16.mxu0 0
    %1900 = vmatmul.mubr.bf16.gmra.mxu0 %v1862
    %v1901 = vpop.f32.mrf.mxu0
    %v1902 = vadd.f32 0.0, %v1901
    %v1903 = vpop.f32.mrf.mxu0
    %v1904 = vpop.f32.mrf.mxu0
    %v1905 = vpop.f32.mrf.mxu0
    %1906 = vdwg.mxu0
    %1908 = vrot.lane.b32.xlu0 %v1471, 96
    %v1909 = vpop.permute.xlu0 %1908
    %1911 = vrot.lane.b32.xlu0 %v1479, 96
    %v1912 = vpop.permute.xlu0 %1911
    %v1914 = vsel %vm1486, %v1909, 0
    %v1917 = vsel %vm1486, %v1912, 0
    %1919 = vmatprep.subr.bf16.mxu0 0
    %1920 = vmatpush1.bf16.xpose.msra.mxu0 0
    %1921 = vmatprep.subr.bf16.mxu0 0
    %1922 = vmatpush1.bf16.xpose.msra.mxu0 0
    %1923 = vmatprep.subr.bf16.mxu0 0
    %1924 = vmatpush1.bf16.xpose.msra.mxu0 0
    %1925 = vmatprep.subr.bf16.mxu0 0
    %1926 = vmatpush1.bf16.xpose.msra.mxu0 0
    %1927 = vmatprep.subr.bf16.mxu0 0
    %1928 = vmatpush1.bf16.xpose.msra.mxu0 0
    %1929 = vmatprep.subr.bf16.mxu0 0
    %1930 = vmatpush1.bf16.xpose.msra.mxu0 0
    %1931 = vmatprep.subr.bf16.mxu0 0
    %1932 = vmatpush1.bf16.xpose.msra.mxu0 0
    %1933 = vmatprep.subr.bf16.mxu0 0
    %1934 = vmatpush1.bf16.xpose.msra.mxu0 %v1917
    %1935 = vmatprep.subr.bf16.mxu0 0
    %1936 = vmatpush2.bf16.xpose.msra.mxu0 0
    %1937 = vmatprep.subr.bf16.mxu0 0
    %1938 = vmatpush2.bf16.xpose.msra.mxu0 0
    %1939 = vmatprep.subr.bf16.mxu0 0
    %1940 = vmatpush2.bf16.xpose.msra.mxu0 0
    %1941 = vmatprep.subr.bf16.mxu0 0
    %1942 = vmatpush2.bf16.xpose.msra.mxu0 0
    %1943 = vmatprep.subr.bf16.mxu0 0
    %1944 = vmatpush2.bf16.xpose.msra.mxu0 0
    %1945 = vmatprep.subr.bf16.mxu0 0
    %1946 = vmatpush2.bf16.xpose.msra.mxu0 0
    %1947 = vmatprep.subr.bf16.mxu0 0
    %1948 = vmatpush2.bf16.xpose.msra.mxu0 0
    %1949 = vmatprep.subr.bf16.mxu0 0
    %1950 = vmatpush2.bf16.xpose.msra.mxu0 0
    %1951 = vmatprep.mubr.bf16.mxu0 0
    %1952 = vmatmul.mubr.bf16.gmra.mxu0 %v1914
    %v1953 = vpop.f32.mrf.mxu0
    %v1954 = vadd.f32 0.0, %v1953
    %v1955 = vpop.f32.mrf.mxu0
    %v1956 = vpop.f32.mrf.mxu0
    %v1957 = vpop.f32.mrf.mxu0
    %1958 = vdwg.mxu0
    %1960 = vrot.lane.b32.xlu0 %v1472, 96
    %v1961 = vpop.permute.xlu0 %1960
    %1963 = vrot.lane.b32.xlu0 %v1480, 96
    %v1964 = vpop.permute.xlu0 %1963
    %v1966 = vsel %vm1486, %v1961, 0
    %v1969 = vsel %vm1486, %v1964, 0
    %1971 = vmatprep.subr.bf16.mxu0 0
    %1972 = vmatpush1.bf16.xpose.msra.mxu0 0
    %1973 = vmatprep.subr.bf16.mxu0 0
    %1974 = vmatpush1.bf16.xpose.msra.mxu0 0
    %1975 = vmatprep.subr.bf16.mxu0 0
    %1976 = vmatpush1.bf16.xpose.msra.mxu0 0
    %1977 = vmatprep.subr.bf16.mxu0 0
    %1978 = vmatpush1.bf16.xpose.msra.mxu0 0
    %1979 = vmatprep.subr.bf16.mxu0 0
    %1980 = vmatpush1.bf16.xpose.msra.mxu0 0
    %1981 = vmatprep.subr.bf16.mxu0 0
    %1982 = vmatpush1.bf16.xpose.msra.mxu0 0
    %1983 = vmatprep.subr.bf16.mxu0 0
    %1984 = vmatpush1.bf16.xpose.msra.mxu0 0
    %1985 = vmatprep.subr.bf16.mxu0 0
    %1986 = vmatpush1.bf16.xpose.msra.mxu0 %v1969
    %1987 = vmatprep.subr.bf16.mxu0 0
    %1988 = vmatpush2.bf16.xpose.msra.mxu0 0
    %1989 = vmatprep.subr.bf16.mxu0 0
    %1990 = vmatpush2.bf16.xpose.msra.mxu0 0
    %1991 = vmatprep.subr.bf16.mxu0 0
    %1992 = vmatpush2.bf16.xpose.msra.mxu0 0
    %1993 = vmatprep.subr.bf16.mxu0 0
    %1994 = vmatpush2.bf16.xpose.msra.mxu0 0
    %1995 = vmatprep.subr.bf16.mxu0 0
    %1996 = vmatpush2.bf16.xpose.msra.mxu0 0
    %1997 = vmatprep.subr.bf16.mxu0 0
    %1998 = vmatpush2.bf16.xpose.msra.mxu0 0
    %1999 = vmatprep.subr.bf16.mxu0 0
    %2000 = vmatpush2.bf16.xpose.msra.mxu0 0
    %2001 = vmatprep.subr.bf16.mxu0 0
    %2002 = vmatpush2.bf16.xpose.msra.mxu0 0
    %2003 = vmatprep.mubr.bf16.mxu0 0
    %2004 = vmatmul.mubr.bf16.gmra.mxu0 %v1966
    %v2005 = vpop.f32.mrf.mxu0
    %v2006 = vadd.f32 0.0, %v2005
    %v2007 = vpop.f32.mrf.mxu0
    %v2008 = vpop.f32.mrf.mxu0
    %v2009 = vpop.f32.mrf.mxu0
    %2010 = vdwg.mxu0
    %2012 = vrot.lane.b32.xlu0 %v1473, 96
    %v2013 = vpop.permute.xlu0 %2012
    %2015 = vrot.lane.b32.xlu0 %v1481, 96
    %v2016 = vpop.permute.xlu0 %2015
    %v2018 = vsel %vm1486, %v2013, 0
    %v2021 = vsel %vm1486, %v2016, 0
    %2023 = vmatprep.subr.bf16.mxu0 0
    %2024 = vmatpush1.bf16.xpose.msra.mxu0 0
    %2025 = vmatprep.subr.bf16.mxu0 0
    %2026 = vmatpush1.bf16.xpose.msra.mxu0 0
    %2027 = vmatprep.subr.bf16.mxu0 0
    %2028 = vmatpush1.bf16.xpose.msra.mxu0 0
    %2029 = vmatprep.subr.bf16.mxu0 0
    %2030 = vmatpush1.bf16.xpose.msra.mxu0 0
    %2031 = vmatprep.subr.bf16.mxu0 0
    %2032 = vmatpush1.bf16.xpose.msra.mxu0 0
    %2033 = vmatprep.subr.bf16.mxu0 0
    %2034 = vmatpush1.bf16.xpose.msra.mxu0 0
    %2035 = vmatprep.subr.bf16.mxu0 0
    %2036 = vmatpush1.bf16.xpose.msra.mxu0 0
    %2037 = vmatprep.subr.bf16.mxu0 0
    %2038 = vmatpush1.bf16.xpose.msra.mxu0 %v2021
    %2039 = vmatprep.subr.bf16.mxu0 0
    %2040 = vmatpush2.bf16.xpose.msra.mxu0 0
    %2041 = vmatprep.subr.bf16.mxu0 0
    %2042 = vmatpush2.bf16.xpose.msra.mxu0 0
    %2043 = vmatprep.subr.bf16.mxu0 0
    %2044 = vmatpush2.bf16.xpose.msra.mxu0 0
    %2045 = vmatprep.subr.bf16.mxu0 0
    %2046 = vmatpush2.bf16.xpose.msra.mxu0 0
    %2047 = vmatprep.subr.bf16.mxu0 0
    %2048 = vmatpush2.bf16.xpose.msra.mxu0 0
    %2049 = vmatprep.subr.bf16.mxu0 0
    %2050 = vmatpush2.bf16.xpose.msra.mxu0 0
    %2051 = vmatprep.subr.bf16.mxu0 0
    %2052 = vmatpush2.bf16.xpose.msra.mxu0 0
    %2053 = vmatprep.subr.bf16.mxu0 0
    %2054 = vmatpush2.bf16.xpose.msra.mxu0 0
    %2055 = vmatprep.mubr.bf16.mxu0 0
    %2056 = vmatmul.mubr.bf16.gmra.mxu0 %v2018
    %v2057 = vpop.f32.mrf.mxu0
    %v2058 = vadd.f32 0.0, %v2057
    %v2059 = vpop.f32.mrf.mxu0
    %v2060 = vpop.f32.mrf.mxu0
    %v2061 = vpop.f32.mrf.mxu0
    %2062 = vdwg.mxu0
    %2064 = vrot.lane.b32.xlu0 %v1474, 96
    %v2065 = vpop.permute.xlu0 %2064
    %2067 = vrot.lane.b32.xlu0 %v1482, 96
    %v2068 = vpop.permute.xlu0 %2067
    %v2070 = vsel %vm1486, %v2065, 0
    %v2073 = vsel %vm1486, %v2068, 0
    %2075 = vmatprep.subr.bf16.mxu0 0
    %2076 = vmatpush1.bf16.xpose.msra.mxu0 0
    %2077 = vmatprep.subr.bf16.mxu0 0
    %2078 = vmatpush1.bf16.xpose.msra.mxu0 0
    %2079 = vmatprep.subr.bf16.mxu0 0
    %2080 = vmatpush1.bf16.xpose.msra.mxu0 0
    %2081 = vmatprep.subr.bf16.mxu0 0
    %2082 = vmatpush1.bf16.xpose.msra.mxu0 0
    %2083 = vmatprep.subr.bf16.mxu0 0
    %2084 = vmatpush1.bf16.xpose.msra.mxu0 0
    %2085 = vmatprep.subr.bf16.mxu0 0
    %2086 = vmatpush1.bf16.xpose.msra.mxu0 0
    %2087 = vmatprep.subr.bf16.mxu0 0
    %2088 = vmatpush1.bf16.xpose.msra.mxu0 0
    %2089 = vmatprep.subr.bf16.mxu0 0
    %2090 = vmatpush1.bf16.xpose.msra.mxu0 %v2073
    %2091 = vmatprep.subr.bf16.mxu0 0
    %2092 = vmatpush2.bf16.xpose.msra.mxu0 0
    %2093 = vmatprep.subr.bf16.mxu0 0
    %2094 = vmatpush2.bf16.xpose.msra.mxu0 0
    %2095 = vmatprep.subr.bf16.mxu0 0
    %2096 = vmatpush2.bf16.xpose.msra.mxu0 0
    %2097 = vmatprep.subr.bf16.mxu0 0
    %2098 = vmatpush2.bf16.xpose.msra.mxu0 0
    %2099 = vmatprep.subr.bf16.mxu0 0
    %2100 = vmatpush2.bf16.xpose.msra.mxu0 0
    %2101 = vmatprep.subr.bf16.mxu0 0
    %2102 = vmatpush2.bf16.xpose.msra.mxu0 0
    %2103 = vmatprep.subr.bf16.mxu0 0
    %2104 = vmatpush2.bf16.xpose.msra.mxu0 0
    %2105 = vmatprep.subr.bf16.mxu0 0
    %2106 = vmatpush2.bf16.xpose.msra.mxu0 0
    %2107 = vmatprep.mubr.bf16.mxu0 0
    %2108 = vmatmul.mubr.bf16.gmra.mxu0 %v2070
    %v2109 = vpop.f32.mrf.mxu0
    %v2110 = vadd.f32 0.0, %v2109
    %v2111 = vpop.f32.mrf.mxu0
    %v2112 = vpop.f32.mrf.mxu0
    %v2113 = vpop.f32.mrf.mxu0
    %2114 = vdwg.mxu0
    %2116 = vrot.lane.b32.xlu0 %v1475, 96
    %v2117 = vpop.permute.xlu0 %2116
    %2119 = vrot.lane.b32.xlu0 %v1483, 96
    %v2120 = vpop.permute.xlu0 %2119
    %v2122 = vsel %vm1486, %v2117, 0
    %v2125 = vsel %vm1486, %v2120, 0
    %2127 = vmatprep.subr.bf16.mxu0 0
    %2128 = vmatpush1.bf16.xpose.msra.mxu0 0
    %2129 = vmatprep.subr.bf16.mxu0 0
    %2130 = vmatpush1.bf16.xpose.msra.mxu0 0
    %2131 = vmatprep.subr.bf16.mxu0 0
    %2132 = vmatpush1.bf16.xpose.msra.mxu0 0
    %2133 = vmatprep.subr.bf16.mxu0 0
    %2134 = vmatpush1.bf16.xpose.msra.mxu0 0
    %2135 = vmatprep.subr.bf16.mxu0 0
    %2136 = vmatpush1.bf16.xpose.msra.mxu0 0
    %2137 = vmatprep.subr.bf16.mxu0 0
    %2138 = vmatpush1.bf16.xpose.msra.mxu0 0
    %2139 = vmatprep.subr.bf16.mxu0 0
    %2140 = vmatpush1.bf16.xpose.msra.mxu0 0
    %2141 = vmatprep.subr.bf16.mxu0 0
    %2142 = vmatpush1.bf16.xpose.msra.mxu0 %v2125
    %2143 = vmatprep.subr.bf16.mxu0 0
    %2144 = vmatpush2.bf16.xpose.msra.mxu0 0
    %2145 = vmatprep.subr.bf16.mxu0 0
    %2146 = vmatpush2.bf16.xpose.msra.mxu0 0
    %2147 = vmatprep.subr.bf16.mxu0 0
    %2148 = vmatpush2.bf16.xpose.msra.mxu0 0
    %2149 = vmatprep.subr.bf16.mxu0 0
    %2150 = vmatpush2.bf16.xpose.msra.mxu0 0
    %2151 = vmatprep.subr.bf16.mxu0 0
    %2152 = vmatpush2.bf16.xpose.msra.mxu0 0
    %2153 = vmatprep.subr.bf16.mxu0 0
    %2154 = vmatpush2.bf16.xpose.msra.mxu0 0
    %2155 = vmatprep.subr.bf16.mxu0 0
    %2156 = vmatpush2.bf16.xpose.msra.mxu0 0
    %2157 = vmatprep.subr.bf16.mxu0 0
    %2158 = vmatpush2.bf16.xpose.msra.mxu0 0
    %2159 = vmatprep.mubr.bf16.mxu0 0
    %2160 = vmatmul.mubr.bf16.gmra.mxu0 %v2122
    %v2161 = vpop.f32.mrf.mxu0
    %v2162 = vadd.f32 0.0, %v2161
    %v2163 = vpop.f32.mrf.mxu0
    %v2164 = vpop.f32.mrf.mxu0
    %v2165 = vpop.f32.mrf.mxu0
    %2166 = vdwg.mxu0
    %2168 = vrot.lane.b32.xlu0 %v1476, 96
    %v2169 = vpop.permute.xlu0 %2168
    %2171 = vrot.lane.b32.xlu0 %v1484, 96
    %v2172 = vpop.permute.xlu0 %2171
    %v2174 = vsel %vm1486, %v2169, 0
    %v2177 = vsel %vm1486, %v2172, 0
    %2179 = vmatprep.subr.bf16.mxu0 0
    %2180 = vmatpush1.bf16.xpose.msra.mxu0 0
    %2181 = vmatprep.subr.bf16.mxu0 0
    %2182 = vmatpush1.bf16.xpose.msra.mxu0 0
    %2183 = vmatprep.subr.bf16.mxu0 0
    %2184 = vmatpush1.bf16.xpose.msra.mxu0 0
    %2185 = vmatprep.subr.bf16.mxu0 0
    %2186 = vmatpush1.bf16.xpose.msra.mxu0 0
    %2187 = vmatprep.subr.bf16.mxu0 0
    %2188 = vmatpush1.bf16.xpose.msra.mxu0 0
    %2189 = vmatprep.subr.bf16.mxu0 0
    %2190 = vmatpush1.bf16.xpose.msra.mxu0 0
    %2191 = vmatprep.subr.bf16.mxu0 0
    %2192 = vmatpush1.bf16.xpose.msra.mxu0 0
    %2193 = vmatprep.subr.bf16.mxu0 0
    %2194 = vmatpush1.bf16.xpose.msra.mxu0 %v2177
    %2195 = vmatprep.subr.bf16.mxu0 0
    %2196 = vmatpush2.bf16.xpose.msra.mxu0 0
    %2197 = vmatprep.subr.bf16.mxu0 0
    %2198 = vmatpush2.bf16.xpose.msra.mxu0 0
    %2199 = vmatprep.subr.bf16.mxu0 0
    %2200 = vmatpush2.bf16.xpose.msra.mxu0 0
    %2201 = vmatprep.subr.bf16.mxu0 0
    %2202 = vmatpush2.bf16.xpose.msra.mxu0 0
    %2203 = vmatprep.subr.bf16.mxu0 0
    %2204 = vmatpush2.bf16.xpose.msra.mxu0 0
    %2205 = vmatprep.subr.bf16.mxu0 0
    %2206 = vmatpush2.bf16.xpose.msra.mxu0 0
    %2207 = vmatprep.subr.bf16.mxu0 0
    %2208 = vmatpush2.bf16.xpose.msra.mxu0 0
    %2209 = vmatprep.subr.bf16.mxu0 0
    %2210 = vmatpush2.bf16.xpose.msra.mxu0 0
    %2211 = vmatprep.mubr.bf16.mxu0 0
    %2212 = vmatmul.mubr.bf16.gmra.mxu0 %v2174
    %v2213 = vpop.f32.mrf.mxu0
    %v2214 = vadd.f32 0.0, %v2213
    %v2215 = vpop.f32.mrf.mxu0
    %v2216 = vpop.f32.mrf.mxu0
    %v2217 = vpop.f32.mrf.mxu0
    %2218 = vdwg.mxu0
    %2220 = vrot.lane.b32.xlu0 %v1477, 96
    %v2221 = vpop.permute.xlu0 %2220
    %2223 = vrot.lane.b32.xlu0 %v1485, 96
    %v2224 = vpop.permute.xlu0 %2223
    %v2226 = vsel %vm1486, %v2221, 0
    %v2229 = vsel %vm1486, %v2224, 0
    %2231 = vmatprep.subr.bf16.mxu0 0
    %2232 = vmatpush1.bf16.xpose.msra.mxu0 0
    %2233 = vmatprep.subr.bf16.mxu0 0
    %2234 = vmatpush1.bf16.xpose.msra.mxu0 0
    %2235 = vmatprep.subr.bf16.mxu0 0
    %2236 = vmatpush1.bf16.xpose.msra.mxu0 0
    %2237 = vmatprep.subr.bf16.mxu0 0
    %2238 = vmatpush1.bf16.xpose.msra.mxu0 0
    %2239 = vmatprep.subr.bf16.mxu0 0
    %2240 = vmatpush1.bf16.xpose.msra.mxu0 0
    %2241 = vmatprep.subr.bf16.mxu0 0
    %2242 = vmatpush1.bf16.xpose.msra.mxu0 0
    %2243 = vmatprep.subr.bf16.mxu0 0
    %2244 = vmatpush1.bf16.xpose.msra.mxu0 0
    %2245 = vmatprep.subr.bf16.mxu0 0
    %2246 = vmatpush1.bf16.xpose.msra.mxu0 %v2229
    %2247 = vmatprep.subr.bf16.mxu0 0
    %2248 = vmatpush2.bf16.xpose.msra.mxu0 0
    %2249 = vmatprep.subr.bf16.mxu0 0
    %2250 = vmatpush2.bf16.xpose.msra.mxu0 0
    %2251 = vmatprep.subr.bf16.mxu0 0
    %2252 = vmatpush2.bf16.xpose.msra.mxu0 0
    %2253 = vmatprep.subr.bf16.mxu0 0
    %2254 = vmatpush2.bf16.xpose.msra.mxu0 0
    %2255 = vmatprep.subr.bf16.mxu0 0
    %2256 = vmatpush2.bf16.xpose.msra.mxu0 0
    %2257 = vmatprep.subr.bf16.mxu0 0
    %2258 = vmatpush2.bf16.xpose.msra.mxu0 0
    %2259 = vmatprep.subr.bf16.mxu0 0
    %2260 = vmatpush2.bf16.xpose.msra.mxu0 0
    %2261 = vmatprep.subr.bf16.mxu0 0
    %2262 = vmatpush2.bf16.xpose.msra.mxu0 0
    %2263 = vmatprep.mubr.bf16.mxu0 0
    %2264 = vmatmul.mubr.bf16.gmra.mxu0 %v2226
    %v2265 = vpop.f32.mrf.mxu0
    %v2266 = vadd.f32 0.0, %v2265
    %v2267 = vpop.f32.mrf.mxu0
    %v2268 = vpop.f32.mrf.mxu0
    %v2269 = vpop.f32.mrf.mxu0
    %2270 = vdwg.mxu0
    %2271 = vrot.lane.b32.xlu0 %v1470, 64
    %v2272 = vpop.permute.xlu0 %2271
    %2273 = vrot.lane.b32.xlu0 %v1478, 64
    %v2274 = vpop.permute.xlu0 %2273
    %v2276 = vsel %vm1486, %v2272, 0
    %v2279 = vsel %vm1486, %v2274, 0
    %2281 = vmatprep.subr.bf16.mxu0 0
    %2282 = vmatpush1.bf16.xpose.msra.mxu0 0
    %2283 = vmatprep.subr.bf16.mxu0 0
    %2284 = vmatpush1.bf16.xpose.msra.mxu0 0
    %2285 = vmatprep.subr.bf16.mxu0 0
    %2286 = vmatpush1.bf16.xpose.msra.mxu0 0
    %2287 = vmatprep.subr.bf16.mxu0 0
    %2288 = vmatpush1.bf16.xpose.msra.mxu0 0
    %2289 = vmatprep.subr.bf16.mxu0 0
    %2290 = vmatpush1.bf16.xpose.msra.mxu0 0
    %2291 = vmatprep.subr.bf16.mxu0 0
    %2292 = vmatpush1.bf16.xpose.msra.mxu0 0
    %2293 = vmatprep.subr.bf16.mxu0 0
    %2294 = vmatpush1.bf16.xpose.msra.mxu0 0
    %2295 = vmatprep.subr.bf16.mxu0 0
    %2296 = vmatpush1.bf16.xpose.msra.mxu0 %v2279
    %2297 = vmatprep.subr.bf16.mxu0 0
    %2298 = vmatpush2.bf16.xpose.msra.mxu0 0
    %2299 = vmatprep.subr.bf16.mxu0 0
    %2300 = vmatpush2.bf16.xpose.msra.mxu0 0
    %2301 = vmatprep.subr.bf16.mxu0 0
    %2302 = vmatpush2.bf16.xpose.msra.mxu0 0
    %2303 = vmatprep.subr.bf16.mxu0 0
    %2304 = vmatpush2.bf16.xpose.msra.mxu0 0
    %2305 = vmatprep.subr.bf16.mxu0 0
    %2306 = vmatpush2.bf16.xpose.msra.mxu0 0
    %2307 = vmatprep.subr.bf16.mxu0 0
    %2308 = vmatpush2.bf16.xpose.msra.mxu0 0
    %2309 = vmatprep.subr.bf16.mxu0 0
    %2310 = vmatpush2.bf16.xpose.msra.mxu0 0
    %2311 = vmatprep.subr.bf16.mxu0 0
    %2312 = vmatpush2.bf16.xpose.msra.mxu0 0
    %2313 = vmatprep.mubr.bf16.mxu0 0
    %2314 = vmatmul.mubr.bf16.gmra.mxu0 %v2276
    %v2315 = vpop.f32.mrf.mxu0
    %v2316 = vadd.f32 0.0, %v2315
    %v2317 = vpop.f32.mrf.mxu0
    %v2318 = vpop.f32.mrf.mxu0
    %v2319 = vpop.f32.mrf.mxu0
    %2320 = vdwg.mxu0
    %2321 = vrot.lane.b32.xlu0 %v1471, 64
    %v2322 = vpop.permute.xlu0 %2321
    %2323 = vrot.lane.b32.xlu0 %v1479, 64
    %v2324 = vpop.permute.xlu0 %2323
    %v2326 = vsel %vm1486, %v2322, 0
    %v2329 = vsel %vm1486, %v2324, 0
    %2331 = vmatprep.subr.bf16.mxu0 0
    %2332 = vmatpush1.bf16.xpose.msra.mxu0 0
    %2333 = vmatprep.subr.bf16.mxu0 0
    %2334 = vmatpush1.bf16.xpose.msra.mxu0 0
    %2335 = vmatprep.subr.bf16.mxu0 0
    %2336 = vmatpush1.bf16.xpose.msra.mxu0 0
    %2337 = vmatprep.subr.bf16.mxu0 0
    %2338 = vmatpush1.bf16.xpose.msra.mxu0 0
    %2339 = vmatprep.subr.bf16.mxu0 0
    %2340 = vmatpush1.bf16.xpose.msra.mxu0 0
    %2341 = vmatprep.subr.bf16.mxu0 0
    %2342 = vmatpush1.bf16.xpose.msra.mxu0 0
    %2343 = vmatprep.subr.bf16.mxu0 0
    %2344 = vmatpush1.bf16.xpose.msra.mxu0 0
    %2345 = vmatprep.subr.bf16.mxu0 0
    %2346 = vmatpush1.bf16.xpose.msra.mxu0 %v2329
    %2347 = vmatprep.subr.bf16.mxu0 0
    %2348 = vmatpush2.bf16.xpose.msra.mxu0 0
    %2349 = vmatprep.subr.bf16.mxu0 0
    %2350 = vmatpush2.bf16.xpose.msra.mxu0 0
    %2351 = vmatprep.subr.bf16.mxu0 0
    %2352 = vmatpush2.bf16.xpose.msra.mxu0 0
    %2353 = vmatprep.subr.bf16.mxu0 0
    %2354 = vmatpush2.bf16.xpose.msra.mxu0 0
    %2355 = vmatprep.subr.bf16.mxu0 0
    %2356 = vmatpush2.bf16.xpose.msra.mxu0 0
    %2357 = vmatprep.subr.bf16.mxu0 0
    %2358 = vmatpush2.bf16.xpose.msra.mxu0 0
    %2359 = vmatprep.subr.bf16.mxu0 0
    %2360 = vmatpush2.bf16.xpose.msra.mxu0 0
    %2361 = vmatprep.subr.bf16.mxu0 0
    %2362 = vmatpush2.bf16.xpose.msra.mxu0 0
    %2363 = vmatprep.mubr.bf16.mxu0 0
    %2364 = vmatmul.mubr.bf16.gmra.mxu0 %v2326
    %v2365 = vpop.f32.mrf.mxu0
    %v2366 = vadd.f32 0.0, %v2365
    %v2367 = vpop.f32.mrf.mxu0
    %v2368 = vpop.f32.mrf.mxu0
    %v2369 = vpop.f32.mrf.mxu0
    %2370 = vdwg.mxu0
    %2371 = vrot.lane.b32.xlu0 %v1472, 64
    %v2372 = vpop.permute.xlu0 %2371
    %2373 = vrot.lane.b32.xlu0 %v1480, 64
    %v2374 = vpop.permute.xlu0 %2373
    %v2376 = vsel %vm1486, %v2372, 0
    %v2379 = vsel %vm1486, %v2374, 0
    %2381 = vmatprep.subr.bf16.mxu0 0
    %2382 = vmatpush1.bf16.xpose.msra.mxu0 0
    %2383 = vmatprep.subr.bf16.mxu0 0
    %2384 = vmatpush1.bf16.xpose.msra.mxu0 0
    %2385 = vmatprep.subr.bf16.mxu0 0
    %2386 = vmatpush1.bf16.xpose.msra.mxu0 0
    %2387 = vmatprep.subr.bf16.mxu0 0
    %2388 = vmatpush1.bf16.xpose.msra.mxu0 0
    %2389 = vmatprep.subr.bf16.mxu0 0
    %2390 = vmatpush1.bf16.xpose.msra.mxu0 0
    %2391 = vmatprep.subr.bf16.mxu0 0
    %2392 = vmatpush1.bf16.xpose.msra.mxu0 0
    %2393 = vmatprep.subr.bf16.mxu0 0
    %2394 = vmatpush1.bf16.xpose.msra.mxu0 0
    %2395 = vmatprep.subr.bf16.mxu0 0
    %2396 = vmatpush1.bf16.xpose.msra.mxu0 %v2379
    %2397 = vmatprep.subr.bf16.mxu0 0
    %2398 = vmatpush2.bf16.xpose.msra.mxu0 0
    %2399 = vmatprep.subr.bf16.mxu0 0
    %2400 = vmatpush2.bf16.xpose.msra.mxu0 0
    %2401 = vmatprep.subr.bf16.mxu0 0
    %2402 = vmatpush2.bf16.xpose.msra.mxu0 0
    %2403 = vmatprep.subr.bf16.mxu0 0
    %2404 = vmatpush2.bf16.xpose.msra.mxu0 0
    %2405 = vmatprep.subr.bf16.mxu0 0
    %2406 = vmatpush2.bf16.xpose.msra.mxu0 0
    %2407 = vmatprep.subr.bf16.mxu0 0
    %2408 = vmatpush2.bf16.xpose.msra.mxu0 0
    %2409 = vmatprep.subr.bf16.mxu0 0
    %2410 = vmatpush2.bf16.xpose.msra.mxu0 0
    %2411 = vmatprep.subr.bf16.mxu0 0
    %2412 = vmatpush2.bf16.xpose.msra.mxu0 0
    %2413 = vmatprep.mubr.bf16.mxu0 0
    %2414 = vmatmul.mubr.bf16.gmra.mxu0 %v2376
    %v2415 = vpop.f32.mrf.mxu0
    %v2416 = vadd.f32 0.0, %v2415
    %v2417 = vpop.f32.mrf.mxu0
    %v2418 = vpop.f32.mrf.mxu0
    %v2419 = vpop.f32.mrf.mxu0
    %2420 = vdwg.mxu0
    %2421 = vrot.lane.b32.xlu0 %v1473, 64
    %v2422 = vpop.permute.xlu0 %2421
    %2423 = vrot.lane.b32.xlu0 %v1481, 64
    %v2424 = vpop.permute.xlu0 %2423
    %v2426 = vsel %vm1486, %v2422, 0
    %v2429 = vsel %vm1486, %v2424, 0
    %2431 = vmatprep.subr.bf16.mxu0 0
    %2432 = vmatpush1.bf16.xpose.msra.mxu0 0
    %2433 = vmatprep.subr.bf16.mxu0 0
    %2434 = vmatpush1.bf16.xpose.msra.mxu0 0
    %2435 = vmatprep.subr.bf16.mxu0 0
    %2436 = vmatpush1.bf16.xpose.msra.mxu0 0
    %2437 = vmatprep.subr.bf16.mxu0 0
    %2438 = vmatpush1.bf16.xpose.msra.mxu0 0
    %2439 = vmatprep.subr.bf16.mxu0 0
    %2440 = vmatpush1.bf16.xpose.msra.mxu0 0
    %2441 = vmatprep.subr.bf16.mxu0 0
    %2442 = vmatpush1.bf16.xpose.msra.mxu0 0
    %2443 = vmatprep.subr.bf16.mxu0 0
    %2444 = vmatpush1.bf16.xpose.msra.mxu0 0
    %2445 = vmatprep.subr.bf16.mxu0 0
    %2446 = vmatpush1.bf16.xpose.msra.mxu0 %v2429
    %2447 = vmatprep.subr.bf16.mxu0 0
    %2448 = vmatpush2.bf16.xpose.msra.mxu0 0
    %2449 = vmatprep.subr.bf16.mxu0 0
    %2450 = vmatpush2.bf16.xpose.msra.mxu0 0
    %2451 = vmatprep.subr.bf16.mxu0 0
    %2452 = vmatpush2.bf16.xpose.msra.mxu0 0
    %2453 = vmatprep.subr.bf16.mxu0 0
    %2454 = vmatpush2.bf16.xpose.msra.mxu0 0
    %2455 = vmatprep.subr.bf16.mxu0 0
    %2456 = vmatpush2.bf16.xpose.msra.mxu0 0
    %2457 = vmatprep.subr.bf16.mxu0 0
    %2458 = vmatpush2.bf16.xpose.msra.mxu0 0
    %2459 = vmatprep.subr.bf16.mxu0 0
    %2460 = vmatpush2.bf16.xpose.msra.mxu0 0
    %2461 = vmatprep.subr.bf16.mxu0 0
    %2462 = vmatpush2.bf16.xpose.msra.mxu0 0
    %2463 = vmatprep.mubr.bf16.mxu0 0
    %2464 = vmatmul.mubr.bf16.gmra.mxu0 %v2426
    %v2465 = vpop.f32.mrf.mxu0
    %v2466 = vadd.f32 0.0, %v2465
    %v2467 = vpop.f32.mrf.mxu0
    %v2468 = vpop.f32.mrf.mxu0
    %v2469 = vpop.f32.mrf.mxu0
    %2470 = vdwg.mxu0
    %2471 = vrot.lane.b32.xlu0 %v1474, 64
    %v2472 = vpop.permute.xlu0 %2471
    %2473 = vrot.lane.b32.xlu0 %v1482, 64
    %v2474 = vpop.permute.xlu0 %2473
    %v2476 = vsel %vm1486, %v2472, 0
    %v2479 = vsel %vm1486, %v2474, 0
    %2481 = vmatprep.subr.bf16.mxu0 0
    %2482 = vmatpush1.bf16.xpose.msra.mxu0 0
    %2483 = vmatprep.subr.bf16.mxu0 0
    %2484 = vmatpush1.bf16.xpose.msra.mxu0 0
    %2485 = vmatprep.subr.bf16.mxu0 0
    %2486 = vmatpush1.bf16.xpose.msra.mxu0 0
    %2487 = vmatprep.subr.bf16.mxu0 0
    %2488 = vmatpush1.bf16.xpose.msra.mxu0 0
    %2489 = vmatprep.subr.bf16.mxu0 0
    %2490 = vmatpush1.bf16.xpose.msra.mxu0 0
    %2491 = vmatprep.subr.bf16.mxu0 0
    %2492 = vmatpush1.bf16.xpose.msra.mxu0 0
    %2493 = vmatprep.subr.bf16.mxu0 0
    %2494 = vmatpush1.bf16.xpose.msra.mxu0 0
    %2495 = vmatprep.subr.bf16.mxu0 0
    %2496 = vmatpush1.bf16.xpose.msra.mxu0 %v2479
    %2497 = vmatprep.subr.bf16.mxu0 0
    %2498 = vmatpush2.bf16.xpose.msra.mxu0 0
    %2499 = vmatprep.subr.bf16.mxu0 0
    %2500 = vmatpush2.bf16.xpose.msra.mxu0 0
    %2501 = vmatprep.subr.bf16.mxu0 0
    %2502 = vmatpush2.bf16.xpose.msra.mxu0 0
    %2503 = vmatprep.subr.bf16.mxu0 0
    %2504 = vmatpush2.bf16.xpose.msra.mxu0 0
    %2505 = vmatprep.subr.bf16.mxu0 0
    %2506 = vmatpush2.bf16.xpose.msra.mxu0 0
    %2507 = vmatprep.subr.bf16.mxu0 0
    %2508 = vmatpush2.bf16.xpose.msra.mxu0 0
    %2509 = vmatprep.subr.bf16.mxu0 0
    %2510 = vmatpush2.bf16.xpose.msra.mxu0 0
    %2511 = vmatprep.subr.bf16.mxu0 0
    %2512 = vmatpush2.bf16.xpose.msra.mxu0 0
    %2513 = vmatprep.mubr.bf16.mxu0 0
    %2514 = vmatmul.mubr.bf16.gmra.mxu0 %v2476
    %v2515 = vpop.f32.mrf.mxu0
    %v2516 = vadd.f32 0.0, %v2515
    %v2517 = vpop.f32.mrf.mxu0
    %v2518 = vpop.f32.mrf.mxu0
    %v2519 = vpop.f32.mrf.mxu0
    %2520 = vdwg.mxu0
    %2521 = vrot.lane.b32.xlu0 %v1475, 64
    %v2522 = vpop.permute.xlu0 %2521
    %2523 = vrot.lane.b32.xlu0 %v1483, 64
    %v2524 = vpop.permute.xlu0 %2523
    %v2526 = vsel %vm1486, %v2522, 0
    %v2529 = vsel %vm1486, %v2524, 0
    %2531 = vmatprep.subr.bf16.mxu0 0
    %2532 = vmatpush1.bf16.xpose.msra.mxu0 0
    %2533 = vmatprep.subr.bf16.mxu0 0
    %2534 = vmatpush1.bf16.xpose.msra.mxu0 0
    %2535 = vmatprep.subr.bf16.mxu0 0
    %2536 = vmatpush1.bf16.xpose.msra.mxu0 0
    %2537 = vmatprep.subr.bf16.mxu0 0
    %2538 = vmatpush1.bf16.xpose.msra.mxu0 0
    %2539 = vmatprep.subr.bf16.mxu0 0
    %2540 = vmatpush1.bf16.xpose.msra.mxu0 0
    %2541 = vmatprep.subr.bf16.mxu0 0
    %2542 = vmatpush1.bf16.xpose.msra.mxu0 0
    %2543 = vmatprep.subr.bf16.mxu0 0
    %2544 = vmatpush1.bf16.xpose.msra.mxu0 0
    %2545 = vmatprep.subr.bf16.mxu0 0
    %2546 = vmatpush1.bf16.xpose.msra.mxu0 %v2529
    %2547 = vmatprep.subr.bf16.mxu0 0
    %2548 = vmatpush2.bf16.xpose.msra.mxu0 0
    %2549 = vmatprep.subr.bf16.mxu0 0
    %2550 = vmatpush2.bf16.xpose.msra.mxu0 0
    %2551 = vmatprep.subr.bf16.mxu0 0
    %2552 = vmatpush2.bf16.xpose.msra.mxu0 0
    %2553 = vmatprep.subr.bf16.mxu0 0
    %2554 = vmatpush2.bf16.xpose.msra.mxu0 0
    %2555 = vmatprep.subr.bf16.mxu0 0
    %2556 = vmatpush2.bf16.xpose.msra.mxu0 0
    %2557 = vmatprep.subr.bf16.mxu0 0
    %2558 = vmatpush2.bf16.xpose.msra.mxu0 0
    %2559 = vmatprep.subr.bf16.mxu0 0
    %2560 = vmatpush2.bf16.xpose.msra.mxu0 0
    %2561 = vmatprep.subr.bf16.mxu0 0
    %2562 = vmatpush2.bf16.xpose.msra.mxu0 0
    %2563 = vmatprep.mubr.bf16.mxu0 0
    %2564 = vmatmul.mubr.bf16.gmra.mxu0 %v2526
    %v2565 = vpop.f32.mrf.mxu0
    %v2566 = vadd.f32 0.0, %v2565
    %v2567 = vpop.f32.mrf.mxu0
    %v2568 = vpop.f32.mrf.mxu0
    %v2569 = vpop.f32.mrf.mxu0
    %2570 = vdwg.mxu0
    %2571 = vrot.lane.b32.xlu0 %v1476, 64
    %v2572 = vpop.permute.xlu0 %2571
    %2573 = vrot.lane.b32.xlu0 %v1484, 64
    %v2574 = vpop.permute.xlu0 %2573
    %v2576 = vsel %vm1486, %v2572, 0
    %v2579 = vsel %vm1486, %v2574, 0
    %2581 = vmatprep.subr.bf16.mxu0 0
    %2582 = vmatpush1.bf16.xpose.msra.mxu0 0
    %2583 = vmatprep.subr.bf16.mxu0 0
    %2584 = vmatpush1.bf16.xpose.msra.mxu0 0
    %2585 = vmatprep.subr.bf16.mxu0 0
    %2586 = vmatpush1.bf16.xpose.msra.mxu0 0
    %2587 = vmatprep.subr.bf16.mxu0 0
    %2588 = vmatpush1.bf16.xpose.msra.mxu0 0
    %2589 = vmatprep.subr.bf16.mxu0 0
    %2590 = vmatpush1.bf16.xpose.msra.mxu0 0
    %2591 = vmatprep.subr.bf16.mxu0 0
    %2592 = vmatpush1.bf16.xpose.msra.mxu0 0
    %2593 = vmatprep.subr.bf16.mxu0 0
    %2594 = vmatpush1.bf16.xpose.msra.mxu0 0
    %2595 = vmatprep.subr.bf16.mxu0 0
    %2596 = vmatpush1.bf16.xpose.msra.mxu0 %v2579
    %2597 = vmatprep.subr.bf16.mxu0 0
    %2598 = vmatpush2.bf16.xpose.msra.mxu0 0
    %2599 = vmatprep.subr.bf16.mxu0 0
    %2600 = vmatpush2.bf16.xpose.msra.mxu0 0
    %2601 = vmatprep.subr.bf16.mxu0 0
    %2602 = vmatpush2.bf16.xpose.msra.mxu0 0
    %2603 = vmatprep.subr.bf16.mxu0 0
    %2604 = vmatpush2.bf16.xpose.msra.mxu0 0
    %2605 = vmatprep.subr.bf16.mxu0 0
    %2606 = vmatpush2.bf16.xpose.msra.mxu0 0
    %2607 = vmatprep.subr.bf16.mxu0 0
    %2608 = vmatpush2.bf16.xpose.msra.mxu0 0
    %2609 = vmatprep.subr.bf16.mxu0 0
    %2610 = vmatpush2.bf16.xpose.msra.mxu0 0
    %2611 = vmatprep.subr.bf16.mxu0 0
    %2612 = vmatpush2.bf16.xpose.msra.mxu0 0
    %2613 = vmatprep.mubr.bf16.mxu0 0
    %2614 = vmatmul.mubr.bf16.gmra.mxu0 %v2576
    %v2615 = vpop.f32.mrf.mxu0
    %v2616 = vadd.f32 0.0, %v2615
    %v2617 = vpop.f32.mrf.mxu0
    %v2618 = vpop.f32.mrf.mxu0
    %v2619 = vpop.f32.mrf.mxu0
    %2620 = vdwg.mxu0
    %2621 = vrot.lane.b32.xlu0 %v1477, 64
    %v2622 = vpop.permute.xlu0 %2621
    %2623 = vrot.lane.b32.xlu0 %v1485, 64
    %v2624 = vpop.permute.xlu0 %2623
    %v2626 = vsel %vm1486, %v2622, 0
    %v2629 = vsel %vm1486, %v2624, 0
    %2631 = vmatprep.subr.bf16.mxu0 0
    %2632 = vmatpush1.bf16.xpose.msra.mxu0 0
    %2633 = vmatprep.subr.bf16.mxu0 0
    %2634 = vmatpush1.bf16.xpose.msra.mxu0 0
    %2635 = vmatprep.subr.bf16.mxu0 0
    %2636 = vmatpush1.bf16.xpose.msra.mxu0 0
    %2637 = vmatprep.subr.bf16.mxu0 0
    %2638 = vmatpush1.bf16.xpose.msra.mxu0 0
    %2639 = vmatprep.subr.bf16.mxu0 0
    %2640 = vmatpush1.bf16.xpose.msra.mxu0 0
    %2641 = vmatprep.subr.bf16.mxu0 0
    %2642 = vmatpush1.bf16.xpose.msra.mxu0 0
    %2643 = vmatprep.subr.bf16.mxu0 0
    %2644 = vmatpush1.bf16.xpose.msra.mxu0 0
    %2645 = vmatprep.subr.bf16.mxu0 0
    %2646 = vmatpush1.bf16.xpose.msra.mxu0 %v2629
    %2647 = vmatprep.subr.bf16.mxu0 0
    %2648 = vmatpush2.bf16.xpose.msra.mxu0 0
    %2649 = vmatprep.subr.bf16.mxu0 0
    %2650 = vmatpush2.bf16.xpose.msra.mxu0 0
    %2651 = vmatprep.subr.bf16.mxu0 0
    %2652 = vmatpush2.bf16.xpose.msra.mxu0 0
    %2653 = vmatprep.subr.bf16.mxu0 0
    %2654 = vmatpush2.bf16.xpose.msra.mxu0 0
    %2655 = vmatprep.subr.bf16.mxu0 0
    %2656 = vmatpush2.bf16.xpose.msra.mxu0 0
    %2657 = vmatprep.subr.bf16.mxu0 0
    %2658 = vmatpush2.bf16.xpose.msra.mxu0 0
    %2659 = vmatprep.subr.bf16.mxu0 0
    %2660 = vmatpush2.bf16.xpose.msra.mxu0 0
    %2661 = vmatprep.subr.bf16.mxu0 0
    %2662 = vmatpush2.bf16.xpose.msra.mxu0 0
    %2663 = vmatprep.mubr.bf16.mxu0 0
    %2664 = vmatmul.mubr.bf16.gmra.mxu0 %v2626
    %v2665 = vpop.f32.mrf.mxu0
    %v2666 = vadd.f32 0.0, %v2665
    %v2667 = vpop.f32.mrf.mxu0
    %v2668 = vpop.f32.mrf.mxu0
    %v2669 = vpop.f32.mrf.mxu0
    %2670 = vdwg.mxu0
    %2671 = vrot.lane.b32.xlu0 %v1470, 32
    %v2672 = vpop.permute.xlu0 %2671
    %2673 = vrot.lane.b32.xlu0 %v1478, 32
    %v2674 = vpop.permute.xlu0 %2673
    %v2676 = vsel %vm1486, %v2672, 0
    %v2679 = vsel %vm1486, %v2674, 0
    %2681 = vmatprep.subr.bf16.mxu0 0
    %2682 = vmatpush1.bf16.xpose.msra.mxu0 0
    %2683 = vmatprep.subr.bf16.mxu0 0
    %2684 = vmatpush1.bf16.xpose.msra.mxu0 0
    %2685 = vmatprep.subr.bf16.mxu0 0
    %2686 = vmatpush1.bf16.xpose.msra.mxu0 0
    %2687 = vmatprep.subr.bf16.mxu0 0
    %2688 = vmatpush1.bf16.xpose.msra.mxu0 0
    %2689 = vmatprep.subr.bf16.mxu0 0
    %2690 = vmatpush1.bf16.xpose.msra.mxu0 0
    %2691 = vmatprep.subr.bf16.mxu0 0
    %2692 = vmatpush1.bf16.xpose.msra.mxu0 0
    %2693 = vmatprep.subr.bf16.mxu0 0
    %2694 = vmatpush1.bf16.xpose.msra.mxu0 0
    %2695 = vmatprep.subr.bf16.mxu0 0
    %2696 = vmatpush1.bf16.xpose.msra.mxu0 %v2679
    %2697 = vmatprep.subr.bf16.mxu0 0
    %2698 = vmatpush2.bf16.xpose.msra.mxu0 0
    %2699 = vmatprep.subr.bf16.mxu0 0
    %2700 = vmatpush2.bf16.xpose.msra.mxu0 0
    %2701 = vmatprep.subr.bf16.mxu0 0
    %2702 = vmatpush2.bf16.xpose.msra.mxu0 0
    %2703 = vmatprep.subr.bf16.mxu0 0
    %2704 = vmatpush2.bf16.xpose.msra.mxu0 0
    %2705 = vmatprep.subr.bf16.mxu0 0
    %2706 = vmatpush2.bf16.xpose.msra.mxu0 0
    %2707 = vmatprep.subr.bf16.mxu0 0
    %2708 = vmatpush2.bf16.xpose.msra.mxu0 0
    %2709 = vmatprep.subr.bf16.mxu0 0
    %2710 = vmatpush2.bf16.xpose.msra.mxu0 0
    %2711 = vmatprep.subr.bf16.mxu0 0
    %2712 = vmatpush2.bf16.xpose.msra.mxu0 0
    %2713 = vmatprep.mubr.bf16.mxu0 0
    %2714 = vmatmul.mubr.bf16.gmra.mxu0 %v2676
    %v2715 = vpop.f32.mrf.mxu0
    %v2716 = vadd.f32 0.0, %v2715
    %v2717 = vpop.f32.mrf.mxu0
    %v2718 = vpop.f32.mrf.mxu0
    %v2719 = vpop.f32.mrf.mxu0
    %2720 = vdwg.mxu0
    %2721 = vrot.lane.b32.xlu0 %v1471, 32
    %v2722 = vpop.permute.xlu0 %2721
    %2723 = vrot.lane.b32.xlu0 %v1479, 32
    %v2724 = vpop.permute.xlu0 %2723
    %v2726 = vsel %vm1486, %v2722, 0
    %v2729 = vsel %vm1486, %v2724, 0
    %2731 = vmatprep.subr.bf16.mxu0 0
    %2732 = vmatpush1.bf16.xpose.msra.mxu0 0
    %2733 = vmatprep.subr.bf16.mxu0 0
    %2734 = vmatpush1.bf16.xpose.msra.mxu0 0
    %2735 = vmatprep.subr.bf16.mxu0 0
    %2736 = vmatpush1.bf16.xpose.msra.mxu0 0
    %2737 = vmatprep.subr.bf16.mxu0 0
    %2738 = vmatpush1.bf16.xpose.msra.mxu0 0
    %2739 = vmatprep.subr.bf16.mxu0 0
    %2740 = vmatpush1.bf16.xpose.msra.mxu0 0
    %2741 = vmatprep.subr.bf16.mxu0 0
    %2742 = vmatpush1.bf16.xpose.msra.mxu0 0
    %2743 = vmatprep.subr.bf16.mxu0 0
    %2744 = vmatpush1.bf16.xpose.msra.mxu0 0
    %2745 = vmatprep.subr.bf16.mxu0 0
    %2746 = vmatpush1.bf16.xpose.msra.mxu0 %v2729
    %2747 = vmatprep.subr.bf16.mxu0 0
    %2748 = vmatpush2.bf16.xpose.msra.mxu0 0
    %2749 = vmatprep.subr.bf16.mxu0 0
    %2750 = vmatpush2.bf16.xpose.msra.mxu0 0
    %2751 = vmatprep.subr.bf16.mxu0 0
    %2752 = vmatpush2.bf16.xpose.msra.mxu0 0
    %2753 = vmatprep.subr.bf16.mxu0 0
    %2754 = vmatpush2.bf16.xpose.msra.mxu0 0
    %2755 = vmatprep.subr.bf16.mxu0 0
    %2756 = vmatpush2.bf16.xpose.msra.mxu0 0
    %2757 = vmatprep.subr.bf16.mxu0 0
    %2758 = vmatpush2.bf16.xpose.msra.mxu0 0
    %2759 = vmatprep.subr.bf16.mxu0 0
    %2760 = vmatpush2.bf16.xpose.msra.mxu0 0
    %2761 = vmatprep.subr.bf16.mxu0 0
    %2762 = vmatpush2.bf16.xpose.msra.mxu0 0
    %2763 = vmatprep.mubr.bf16.mxu0 0
    %2764 = vmatmul.mubr.bf16.gmra.mxu0 %v2726
    %v2765 = vpop.f32.mrf.mxu0
    %v2766 = vadd.f32 0.0, %v2765
    %v2767 = vpop.f32.mrf.mxu0
    %v2768 = vpop.f32.mrf.mxu0
    %v2769 = vpop.f32.mrf.mxu0
    %2770 = vdwg.mxu0
    %2771 = vrot.lane.b32.xlu0 %v1472, 32
    %v2772 = vpop.permute.xlu0 %2771
    %2773 = vrot.lane.b32.xlu0 %v1480, 32
    %v2774 = vpop.permute.xlu0 %2773
    %v2776 = vsel %vm1486, %v2772, 0
    %v2779 = vsel %vm1486, %v2774, 0
    %2781 = vmatprep.subr.bf16.mxu0 0
    %2782 = vmatpush1.bf16.xpose.msra.mxu0 0
    %2783 = vmatprep.subr.bf16.mxu0 0
    %2784 = vmatpush1.bf16.xpose.msra.mxu0 0
    %2785 = vmatprep.subr.bf16.mxu0 0
    %2786 = vmatpush1.bf16.xpose.msra.mxu0 0
    %2787 = vmatprep.subr.bf16.mxu0 0
    %2788 = vmatpush1.bf16.xpose.msra.mxu0 0
    %2789 = vmatprep.subr.bf16.mxu0 0
    %2790 = vmatpush1.bf16.xpose.msra.mxu0 0
    %2791 = vmatprep.subr.bf16.mxu0 0
    %2792 = vmatpush1.bf16.xpose.msra.mxu0 0
    %2793 = vmatprep.subr.bf16.mxu0 0
    %2794 = vmatpush1.bf16.xpose.msra.mxu0 0
    %2795 = vmatprep.subr.bf16.mxu0 0
    %2796 = vmatpush1.bf16.xpose.msra.mxu0 %v2779
    %2797 = vmatprep.subr.bf16.mxu0 0
    %2798 = vmatpush2.bf16.xpose.msra.mxu0 0
    %2799 = vmatprep.subr.bf16.mxu0 0
    %2800 = vmatpush2.bf16.xpose.msra.mxu0 0
    %2801 = vmatprep.subr.bf16.mxu0 0
    %2802 = vmatpush2.bf16.xpose.msra.mxu0 0
    %2803 = vmatprep.subr.bf16.mxu0 0
    %2804 = vmatpush2.bf16.xpose.msra.mxu0 0
    %2805 = vmatprep.subr.bf16.mxu0 0
    %2806 = vmatpush2.bf16.xpose.msra.mxu0 0
    %2807 = vmatprep.subr.bf16.mxu0 0
    %2808 = vmatpush2.bf16.xpose.msra.mxu0 0
    %2809 = vmatprep.subr.bf16.mxu0 0
    %2810 = vmatpush2.bf16.xpose.msra.mxu0 0
    %2811 = vmatprep.subr.bf16.mxu0 0
    %2812 = vmatpush2.bf16.xpose.msra.mxu0 0
    %2813 = vmatprep.mubr.bf16.mxu0 0
    %2814 = vmatmul.mubr.bf16.gmra.mxu0 %v2776
    %v2815 = vpop.f32.mrf.mxu0
    %v2816 = vadd.f32 0.0, %v2815
    %v2817 = vpop.f32.mrf.mxu0
    %v2818 = vpop.f32.mrf.mxu0
    %v2819 = vpop.f32.mrf.mxu0
    %2820 = vdwg.mxu0
    %2821 = vrot.lane.b32.xlu0 %v1473, 32
    %v2822 = vpop.permute.xlu0 %2821
    %2823 = vrot.lane.b32.xlu0 %v1481, 32
    %v2824 = vpop.permute.xlu0 %2823
    %v2826 = vsel %vm1486, %v2822, 0
    %v2829 = vsel %vm1486, %v2824, 0
    %2831 = vmatprep.subr.bf16.mxu0 0
    %2832 = vmatpush1.bf16.xpose.msra.mxu0 0
    %2833 = vmatprep.subr.bf16.mxu0 0
    %2834 = vmatpush1.bf16.xpose.msra.mxu0 0
    %2835 = vmatprep.subr.bf16.mxu0 0
    %2836 = vmatpush1.bf16.xpose.msra.mxu0 0
    %2837 = vmatprep.subr.bf16.mxu0 0
    %2838 = vmatpush1.bf16.xpose.msra.mxu0 0
    %2839 = vmatprep.subr.bf16.mxu0 0
    %2840 = vmatpush1.bf16.xpose.msra.mxu0 0
    %2841 = vmatprep.subr.bf16.mxu0 0
    %2842 = vmatpush1.bf16.xpose.msra.mxu0 0
    %2843 = vmatprep.subr.bf16.mxu0 0
    %2844 = vmatpush1.bf16.xpose.msra.mxu0 0
    %2845 = vmatprep.subr.bf16.mxu0 0
    %2846 = vmatpush1.bf16.xpose.msra.mxu0 %v2829
    %2847 = vmatprep.subr.bf16.mxu0 0
    %2848 = vmatpush2.bf16.xpose.msra.mxu0 0
    %2849 = vmatprep.subr.bf16.mxu0 0
    %2850 = vmatpush2.bf16.xpose.msra.mxu0 0
    %2851 = vmatprep.subr.bf16.mxu0 0
    %2852 = vmatpush2.bf16.xpose.msra.mxu0 0
    %2853 = vmatprep.subr.bf16.mxu0 0
    %2854 = vmatpush2.bf16.xpose.msra.mxu0 0
    %2855 = vmatprep.subr.bf16.mxu0 0
    %2856 = vmatpush2.bf16.xpose.msra.mxu0 0
    %2857 = vmatprep.subr.bf16.mxu0 0
    %2858 = vmatpush2.bf16.xpose.msra.mxu0 0
    %2859 = vmatprep.subr.bf16.mxu0 0
    %2860 = vmatpush2.bf16.xpose.msra.mxu0 0
    %2861 = vmatprep.subr.bf16.mxu0 0
    %2862 = vmatpush2.bf16.xpose.msra.mxu0 0
    %2863 = vmatprep.mubr.bf16.mxu0 0
    %2864 = vmatmul.mubr.bf16.gmra.mxu0 %v2826
    %v2865 = vpop.f32.mrf.mxu0
    %v2866 = vadd.f32 0.0, %v2865
    %v2867 = vpop.f32.mrf.mxu0
    %v2868 = vpop.f32.mrf.mxu0
    %v2869 = vpop.f32.mrf.mxu0
    %2870 = vdwg.mxu0
    %2871 = vrot.lane.b32.xlu0 %v1474, 32
    %v2872 = vpop.permute.xlu0 %2871
    %2873 = vrot.lane.b32.xlu0 %v1482, 32
    %v2874 = vpop.permute.xlu0 %2873
    %v2876 = vsel %vm1486, %v2872, 0
    %v2879 = vsel %vm1486, %v2874, 0
    %2881 = vmatprep.subr.bf16.mxu0 0
    %2882 = vmatpush1.bf16.xpose.msra.mxu0 0
    %2883 = vmatprep.subr.bf16.mxu0 0
    %2884 = vmatpush1.bf16.xpose.msra.mxu0 0
    %2885 = vmatprep.subr.bf16.mxu0 0
    %2886 = vmatpush1.bf16.xpose.msra.mxu0 0
    %2887 = vmatprep.subr.bf16.mxu0 0
    %2888 = vmatpush1.bf16.xpose.msra.mxu0 0
    %2889 = vmatprep.subr.bf16.mxu0 0
    %2890 = vmatpush1.bf16.xpose.msra.mxu0 0
    %2891 = vmatprep.subr.bf16.mxu0 0
    %2892 = vmatpush1.bf16.xpose.msra.mxu0 0
    %2893 = vmatprep.subr.bf16.mxu0 0
    %2894 = vmatpush1.bf16.xpose.msra.mxu0 0
    %2895 = vmatprep.subr.bf16.mxu0 0
    %2896 = vmatpush1.bf16.xpose.msra.mxu0 %v2879
    %2897 = vmatprep.subr.bf16.mxu0 0
    %2898 = vmatpush2.bf16.xpose.msra.mxu0 0
    %2899 = vmatprep.subr.bf16.mxu0 0
    %2900 = vmatpush2.bf16.xpose.msra.mxu0 0
    %2901 = vmatprep.subr.bf16.mxu0 0
    %2902 = vmatpush2.bf16.xpose.msra.mxu0 0
    %2903 = vmatprep.subr.bf16.mxu0 0
    %2904 = vmatpush2.bf16.xpose.msra.mxu0 0
    %2905 = vmatprep.subr.bf16.mxu0 0
    %2906 = vmatpush2.bf16.xpose.msra.mxu0 0
    %2907 = vmatprep.subr.bf16.mxu0 0
    %2908 = vmatpush2.bf16.xpose.msra.mxu0 0
    %2909 = vmatprep.subr.bf16.mxu0 0
    %2910 = vmatpush2.bf16.xpose.msra.mxu0 0
    %2911 = vmatprep.subr.bf16.mxu0 0
    %2912 = vmatpush2.bf16.xpose.msra.mxu0 0
    %2913 = vmatprep.mubr.bf16.mxu0 0
    %2914 = vmatmul.mubr.bf16.gmra.mxu0 %v2876
    %v2915 = vpop.f32.mrf.mxu0
    %v2916 = vadd.f32 0.0, %v2915
    %v2917 = vpop.f32.mrf.mxu0
    %v2918 = vpop.f32.mrf.mxu0
    %v2919 = vpop.f32.mrf.mxu0
    %2920 = vdwg.mxu0
    %2921 = vrot.lane.b32.xlu0 %v1475, 32
    %v2922 = vpop.permute.xlu0 %2921
    %2923 = vrot.lane.b32.xlu0 %v1483, 32
    %v2924 = vpop.permute.xlu0 %2923
    %v2926 = vsel %vm1486, %v2922, 0
    %v2929 = vsel %vm1486, %v2924, 0
    %2931 = vmatprep.subr.bf16.mxu0 0
    %2932 = vmatpush1.bf16.xpose.msra.mxu0 0
    %2933 = vmatprep.subr.bf16.mxu0 0
    %2934 = vmatpush1.bf16.xpose.msra.mxu0 0
    %2935 = vmatprep.subr.bf16.mxu0 0
    %2936 = vmatpush1.bf16.xpose.msra.mxu0 0
    %2937 = vmatprep.subr.bf16.mxu0 0
    %2938 = vmatpush1.bf16.xpose.msra.mxu0 0
    %2939 = vmatprep.subr.bf16.mxu0 0
    %2940 = vmatpush1.bf16.xpose.msra.mxu0 0
    %2941 = vmatprep.subr.bf16.mxu0 0
    %2942 = vmatpush1.bf16.xpose.msra.mxu0 0
    %2943 = vmatprep.subr.bf16.mxu0 0
    %2944 = vmatpush1.bf16.xpose.msra.mxu0 0
    %2945 = vmatprep.subr.bf16.mxu0 0
    %2946 = vmatpush1.bf16.xpose.msra.mxu0 %v2929
    %2947 = vmatprep.subr.bf16.mxu0 0
    %2948 = vmatpush2.bf16.xpose.msra.mxu0 0
    %2949 = vmatprep.subr.bf16.mxu0 0
    %2950 = vmatpush2.bf16.xpose.msra.mxu0 0
    %2951 = vmatprep.subr.bf16.mxu0 0
    %2952 = vmatpush2.bf16.xpose.msra.mxu0 0
    %2953 = vmatprep.subr.bf16.mxu0 0
    %2954 = vmatpush2.bf16.xpose.msra.mxu0 0
    %2955 = vmatprep.subr.bf16.mxu0 0
    %2956 = vmatpush2.bf16.xpose.msra.mxu0 0
    %2957 = vmatprep.subr.bf16.mxu0 0
    %2958 = vmatpush2.bf16.xpose.msra.mxu0 0
    %2959 = vmatprep.subr.bf16.mxu0 0
    %2960 = vmatpush2.bf16.xpose.msra.mxu0 0
    %2961 = vmatprep.subr.bf16.mxu0 0
    %2962 = vmatpush2.bf16.xpose.msra.mxu0 0
    %2963 = vmatprep.mubr.bf16.mxu0 0
    %2964 = vmatmul.mubr.bf16.gmra.mxu0 %v2926
    %v2965 = vpop.f32.mrf.mxu0
    %v2966 = vadd.f32 0.0, %v2965
    %v2967 = vpop.f32.mrf.mxu0
    %v2968 = vpop.f32.mrf.mxu0
    %v2969 = vpop.f32.mrf.mxu0
    %2970 = vdwg.mxu0
    %2971 = vrot.lane.b32.xlu0 %v1476, 32
    %v2972 = vpop.permute.xlu0 %2971
    %2973 = vrot.lane.b32.xlu0 %v1484, 32
    %v2974 = vpop.permute.xlu0 %2973
    %v2976 = vsel %vm1486, %v2972, 0
    %v2979 = vsel %vm1486, %v2974, 0
    %2981 = vmatprep.subr.bf16.mxu0 0
    %2982 = vmatpush1.bf16.xpose.msra.mxu0 0
    %2983 = vmatprep.subr.bf16.mxu0 0
    %2984 = vmatpush1.bf16.xpose.msra.mxu0 0
    %2985 = vmatprep.subr.bf16.mxu0 0
    %2986 = vmatpush1.bf16.xpose.msra.mxu0 0
    %2987 = vmatprep.subr.bf16.mxu0 0
    %2988 = vmatpush1.bf16.xpose.msra.mxu0 0
    %2989 = vmatprep.subr.bf16.mxu0 0
    %2990 = vmatpush1.bf16.xpose.msra.mxu0 0
    %2991 = vmatprep.subr.bf16.mxu0 0
    %2992 = vmatpush1.bf16.xpose.msra.mxu0 0
    %2993 = vmatprep.subr.bf16.mxu0 0
    %2994 = vmatpush1.bf16.xpose.msra.mxu0 0
    %2995 = vmatprep.subr.bf16.mxu0 0
    %2996 = vmatpush1.bf16.xpose.msra.mxu0 %v2979
    %2997 = vmatprep.subr.bf16.mxu0 0
    %2998 = vmatpush2.bf16.xpose.msra.mxu0 0
    %2999 = vmatprep.subr.bf16.mxu0 0
    %3000 = vmatpush2.bf16.xpose.msra.mxu0 0
    %3001 = vmatprep.subr.bf16.mxu0 0
    %3002 = vmatpush2.bf16.xpose.msra.mxu0 0
    %3003 = vmatprep.subr.bf16.mxu0 0
    %3004 = vmatpush2.bf16.xpose.msra.mxu0 0
    %3005 = vmatprep.subr.bf16.mxu0 0
    %3006 = vmatpush2.bf16.xpose.msra.mxu0 0
    %3007 = vmatprep.subr.bf16.mxu0 0
    %3008 = vmatpush2.bf16.xpose.msra.mxu0 0
    %3009 = vmatprep.subr.bf16.mxu0 0
    %3010 = vmatpush2.bf16.xpose.msra.mxu0 0
    %3011 = vmatprep.subr.bf16.mxu0 0
    %3012 = vmatpush2.bf16.xpose.msra.mxu0 0
    %3013 = vmatprep.mubr.bf16.mxu0 0
    %3014 = vmatmul.mubr.bf16.gmra.mxu0 %v2976
    %v3015 = vpop.f32.mrf.mxu0
    %v3016 = vadd.f32 0.0, %v3015
    %v3017 = vpop.f32.mrf.mxu0
    %v3018 = vpop.f32.mrf.mxu0
    %v3019 = vpop.f32.mrf.mxu0
    %3020 = vdwg.mxu0
    %3021 = vrot.lane.b32.xlu0 %v1477, 32
    %v3022 = vpop.permute.xlu0 %3021
    %3023 = vrot.lane.b32.xlu0 %v1485, 32
    %v3024 = vpop.permute.xlu0 %3023
    %v3026 = vsel %vm1486, %v3022, 0
    %v3029 = vsel %vm1486, %v3024, 0
    %3031 = vmatprep.subr.bf16.mxu0 0
    %3032 = vmatpush1.bf16.xpose.msra.mxu0 0
    %3033 = vmatprep.subr.bf16.mxu0 0
    %3034 = vmatpush1.bf16.xpose.msra.mxu0 0
    %3035 = vmatprep.subr.bf16.mxu0 0
    %3036 = vmatpush1.bf16.xpose.msra.mxu0 0
    %3037 = vmatprep.subr.bf16.mxu0 0
    %3038 = vmatpush1.bf16.xpose.msra.mxu0 0
    %3039 = vmatprep.subr.bf16.mxu0 0
    %3040 = vmatpush1.bf16.xpose.msra.mxu0 0
    %3041 = vmatprep.subr.bf16.mxu0 0
    %3042 = vmatpush1.bf16.xpose.msra.mxu0 0
    %3043 = vmatprep.subr.bf16.mxu0 0
    %3044 = vmatpush1.bf16.xpose.msra.mxu0 0
    %3045 = vmatprep.subr.bf16.mxu0 0
    %3046 = vmatpush1.bf16.xpose.msra.mxu0 %v3029
    %3047 = vmatprep.subr.bf16.mxu0 0
    %3048 = vmatpush2.bf16.xpose.msra.mxu0 0
    %3049 = vmatprep.subr.bf16.mxu0 0
    %3050 = vmatpush2.bf16.xpose.msra.mxu0 0
    %3051 = vmatprep.subr.bf16.mxu0 0
    %3052 = vmatpush2.bf16.xpose.msra.mxu0 0
    %3053 = vmatprep.subr.bf16.mxu0 0
    %3054 = vmatpush2.bf16.xpose.msra.mxu0 0
    %3055 = vmatprep.subr.bf16.mxu0 0
    %3056 = vmatpush2.bf16.xpose.msra.mxu0 0
    %3057 = vmatprep.subr.bf16.mxu0 0
    %3058 = vmatpush2.bf16.xpose.msra.mxu0 0
    %3059 = vmatprep.subr.bf16.mxu0 0
    %3060 = vmatpush2.bf16.xpose.msra.mxu0 0
    %3061 = vmatprep.subr.bf16.mxu0 0
    %3062 = vmatpush2.bf16.xpose.msra.mxu0 0
    %3063 = vmatprep.mubr.bf16.mxu0 0
    %3064 = vmatmul.mubr.bf16.gmra.mxu0 %v3026
    %v3065 = vpop.f32.mrf.mxu0
    %v3066 = vadd.f32 0.0, %v3065
    %v3067 = vpop.f32.mrf.mxu0
    %v3068 = vpop.f32.mrf.mxu0
    %v3069 = vpop.f32.mrf.mxu0
    %3070 = vdwg.mxu0
    %v3071 = vmul.f32 %v1528, 0.17677669
    %v3072 = vmul.f32 %v1574, 0.17677669
    %v3073 = vmul.f32 %v1620, 0.17677669
    %v3074 = vmul.f32 %v1666, 0.17677669
    %v3075 = vmul.f32 %v1712, 0.17677669
    %v3076 = vmul.f32 %v1758, 0.17677669
    %v3077 = vmul.f32 %v1804, 0.17677669
    %v3078 = vmul.f32 %v1850, 0.17677669
    %v3079 = vmul.f32 %v1902, 0.17677669
    %v3080 = vmul.f32 %v1954, 0.17677669
    %v3081 = vmul.f32 %v2006, 0.17677669
    %v3082 = vmul.f32 %v2058, 0.17677669
    %v3083 = vmul.f32 %v2110, 0.17677669
    %v3084 = vmul.f32 %v2162, 0.17677669
    %v3085 = vmul.f32 %v2214, 0.17677669
    %v3086 = vmul.f32 %v2266, 0.17677669
    %v3087 = vmul.f32 %v2316, 0.17677669
    %v3088 = vmul.f32 %v2366, 0.17677669
    %v3089 = vmul.f32 %v2416, 0.17677669
    %v3090 = vmul.f32 %v2466, 0.17677669
    %v3091 = vmul.f32 %v2516, 0.17677669
    %v3092 = vmul.f32 %v2566, 0.17677669
    %v3093 = vmul.f32 %v2616, 0.17677669
    %v3094 = vmul.f32 %v2666, 0.17677669
    %v3095 = vmul.f32 %v2716, 0.17677669
    %v3096 = vmul.f32 %v2766, 0.17677669
    %v3097 = vmul.f32 %v2816, 0.17677669
    %v3098 = vmul.f32 %v2866, 0.17677669
    %v3099 = vmul.f32 %v2916, 0.17677669
    %v3100 = vmul.f32 %v2966, 0.17677669
    %v3101 = vmul.f32 %v3016, 0.17677669
    %v3102 = vmul.f32 %v3066, 0.17677669
    %v3103 = vadd.f32 %v3071, %v819
    %v3104 = vadd.f32 %v3072, %v819
    %v3105 = vadd.f32 %v3073, %v819
    %v3106 = vadd.f32 %v3074, %v819
    %v3107 = vadd.f32 %v3075, %v819
    %v3108 = vadd.f32 %v3076, %v819
    %v3109 = vadd.f32 %v3077, %v819
    %v3110 = vadd.f32 %v3078, %v819
    %v3111 = vadd.f32 %v3079, %v819
    %v3112 = vadd.f32 %v3080, %v819
    %v3113 = vadd.f32 %v3081, %v819
    %v3114 = vadd.f32 %v3082, %v819
    %v3115 = vadd.f32 %v3083, %v819
    %v3116 = vadd.f32 %v3084, %v819
    %v3117 = vadd.f32 %v3085, %v819
    %v3118 = vadd.f32 %v3086, %v819
    %v3119 = vadd.f32 %v3087, %v819
    %v3120 = vadd.f32 %v3088, %v819
    %v3121 = vadd.f32 %v3089, %v819
    %v3122 = vadd.f32 %v3090, %v819
    %v3123 = vadd.f32 %v3091, %v819
    %v3124 = vadd.f32 %v3092, %v819
    %v3125 = vadd.f32 %v3093, %v819
    %v3126 = vadd.f32 %v3094, %v819
    %v3127 = vadd.f32 %v3095, %v819
    %v3128 = vadd.f32 %v3096, %v819
    %v3129 = vadd.f32 %v3097, %v819
    %v3130 = vadd.f32 %v3098, %v819
    %v3131 = vadd.f32 %v3099, %v819
    %v3132 = vadd.f32 %v3100, %v819
    %v3133 = vadd.f32 %v3101, %v819
    %v3134 = vadd.f32 %v3102, %v819
    %vm3135 = vcmask 64512
    %v3136 = vsel %vm3135, %v3103, -inf
    %3137 = vmax.xlane.f32.xlu0 %v3136
    %v3138 = vpop.xlane.xlu0 %3137
    %v3139 = vsel %vm3135, %v3104, -inf
    %3140 = vmax.xlane.f32.xlu0 %v3139
    %v3141 = vpop.xlane.xlu0 %3140
    %v3142 = vsel %vm3135, %v3105, -inf
    %3143 = vmax.xlane.f32.xlu0 %v3142
    %v3144 = vpop.xlane.xlu0 %3143
    %v3145 = vsel %vm3135, %v3106, -inf
    %3146 = vmax.xlane.f32.xlu0 %v3145
    %v3147 = vpop.xlane.xlu0 %3146
    %v3148 = vsel %vm3135, %v3107, -inf
    %3149 = vmax.xlane.f32.xlu0 %v3148
    %v3150 = vpop.xlane.xlu0 %3149
    %v3151 = vsel %vm3135, %v3108, -inf
    %3152 = vmax.xlane.f32.xlu0 %v3151
    %v3153 = vpop.xlane.xlu0 %3152
    %v3154 = vsel %vm3135, %v3109, -inf
    %3155 = vmax.xlane.f32.xlu0 %v3154
    %v3156 = vpop.xlane.xlu0 %3155
    %v3157 = vsel %vm3135, %v3110, -inf
    %3158 = vmax.xlane.f32.xlu0 %v3157
    %v3159 = vpop.xlane.xlu0 %3158
    %v3160 = vsel %vm3135, %v3111, -inf
    %3161 = vmax.xlane.f32.xlu0 %v3160
    %v3162 = vpop.xlane.xlu0 %3161
    %v3163 = vsel %vm3135, %v3112, -inf
    %3164 = vmax.xlane.f32.xlu0 %v3163
    %v3165 = vpop.xlane.xlu0 %3164
    %v3166 = vsel %vm3135, %v3113, -inf
    %3167 = vmax.xlane.f32.xlu0 %v3166
    %v3168 = vpop.xlane.xlu0 %3167
    %v3169 = vsel %vm3135, %v3114, -inf
    %3170 = vmax.xlane.f32.xlu0 %v3169
    %v3171 = vpop.xlane.xlu0 %3170
    %v3172 = vsel %vm3135, %v3115, -inf
    %3173 = vmax.xlane.f32.xlu0 %v3172
    %v3174 = vpop.xlane.xlu0 %3173
    %v3175 = vsel %vm3135, %v3116, -inf
    %3176 = vmax.xlane.f32.xlu0 %v3175
    %v3177 = vpop.xlane.xlu0 %3176
    %v3178 = vsel %vm3135, %v3117, -inf
    %3179 = vmax.xlane.f32.xlu0 %v3178
    %v3180 = vpop.xlane.xlu0 %3179
    %v3181 = vsel %vm3135, %v3118, -inf
    %3182 = vmax.xlane.f32.xlu0 %v3181
    %v3183 = vpop.xlane.xlu0 %3182
    %v3184 = vsel %vm3135, %v3119, -inf
    %3185 = vmax.xlane.f32.xlu0 %v3184
    %v3186 = vpop.xlane.xlu0 %3185
    %v3187 = vsel %vm3135, %v3120, -inf
    %3188 = vmax.xlane.f32.xlu0 %v3187
    %v3189 = vpop.xlane.xlu0 %3188
    %v3190 = vsel %vm3135, %v3121, -inf
    %3191 = vmax.xlane.f32.xlu0 %v3190
    %v3192 = vpop.xlane.xlu0 %3191
    %v3193 = vsel %vm3135, %v3122, -inf
    %3194 = vmax.xlane.f32.xlu0 %v3193
    %v3195 = vpop.xlane.xlu0 %3194
    %v3196 = vsel %vm3135, %v3123, -inf
    %3197 = vmax.xlane.f32.xlu0 %v3196
    %v3198 = vpop.xlane.xlu0 %3197
    %v3199 = vsel %vm3135, %v3124, -inf
    %3200 = vmax.xlane.f32.xlu0 %v3199
    %v3201 = vpop.xlane.xlu0 %3200
    %v3202 = vsel %vm3135, %v3125, -inf
    %3203 = vmax.xlane.f32.xlu0 %v3202
    %v3204 = vpop.xlane.xlu0 %3203
    %v3205 = vsel %vm3135, %v3126, -inf
    %3206 = vmax.xlane.f32.xlu0 %v3205
    %v3207 = vpop.xlane.xlu0 %3206
    %v3208 = vsel %vm3135, %v3127, -inf
    %3209 = vmax.xlane.f32.xlu0 %v3208
    %v3210 = vpop.xlane.xlu0 %3209
    %v3211 = vsel %vm3135, %v3128, -inf
    %3212 = vmax.xlane.f32.xlu0 %v3211
    %v3213 = vpop.xlane.xlu0 %3212
    %v3214 = vsel %vm3135, %v3129, -inf
    %3215 = vmax.xlane.f32.xlu0 %v3214
    %v3216 = vpop.xlane.xlu0 %3215
    %v3217 = vsel %vm3135, %v3130, -inf
    %3218 = vmax.xlane.f32.xlu0 %v3217
    %v3219 = vpop.xlane.xlu0 %3218
    %v3220 = vsel %vm3135, %v3131, -inf
    %3221 = vmax.xlane.f32.xlu0 %v3220
    %v3222 = vpop.xlane.xlu0 %3221
    %v3223 = vsel %vm3135, %v3132, -inf
    %3224 = vmax.xlane.f32.xlu0 %v3223
    %v3225 = vpop.xlane.xlu0 %3224
    %v3226 = vsel %vm3135, %v3133, -inf
    %3227 = vmax.xlane.f32.xlu0 %v3226
    %v3228 = vpop.xlane.xlu0 %3227
    %v3229 = vsel %vm3135, %v3134, -inf
    %3230 = vmax.xlane.f32.xlu0 %v3229
    %v3231 = vpop.xlane.xlu0 %3230
    %v3232 = vsub.f32 %v3103, %v3138
    %v3233 = vsub.f32 %v3104, %v3141
    %v3234 = vsub.f32 %v3105, %v3144
    %v3235 = vsub.f32 %v3106, %v3147
    %v3236 = vsub.f32 %v3107, %v3150
    %v3237 = vsub.f32 %v3108, %v3153
    %v3238 = vsub.f32 %v3109, %v3156
    %v3239 = vsub.f32 %v3110, %v3159
    %v3240 = vsub.f32 %v3111, %v3162
    %v3241 = vsub.f32 %v3112, %v3165
    %v3242 = vsub.f32 %v3113, %v3168
    %v3243 = vsub.f32 %v3114, %v3171
    %v3244 = vsub.f32 %v3115, %v3174
    %v3245 = vsub.f32 %v3116, %v3177
    %v3246 = vsub.f32 %v3117, %v3180
    %v3247 = vsub.f32 %v3118, %v3183
    %v3248 = vsub.f32 %v3119, %v3186
    %v3249 = vsub.f32 %v3120, %v3189
    %v3250 = vsub.f32 %v3121, %v3192
    %v3251 = vsub.f32 %v3122, %v3195
    %v3252 = vsub.f32 %v3123, %v3198
    %v3253 = vsub.f32 %v3124, %v3201
    %v3254 = vsub.f32 %v3125, %v3204
    %v3255 = vsub.f32 %v3126, %v3207
    %v3256 = vsub.f32 %v3127, %v3210
    %v3257 = vsub.f32 %v3128, %v3213
    %v3258 = vsub.f32 %v3129, %v3216
    %v3259 = vsub.f32 %v3130, %v3219
    %v3260 = vsub.f32 %v3131, %v3222
    %v3261 = vsub.f32 %v3132, %v3225
    %v3262 = vsub.f32 %v3133, %v3228
    %v3263 = vsub.f32 %v3134, %v3231
    %v3264 = vmul.f32 %v3232, 1.442695
    %v3265 = vpow.pop %v3264
    %v3266 = vmul.f32 %v3233, 1.442695
    %v3267 = vpow.pop %v3266
    %v3268 = vmul.f32 %v3234, 1.442695
    %v3269 = vpow.pop %v3268
    %v3270 = vmul.f32 %v3235, 1.442695
    %v3271 = vpow.pop %v3270
    %v3272 = vmul.f32 %v3236, 1.442695
    %v3273 = vpow.pop %v3272
    %v3274 = vmul.f32 %v3237, 1.442695
    %v3275 = vpow.pop %v3274
    %v3276 = vmul.f32 %v3238, 1.442695
    %v3277 = vpow.pop %v3276
    %v3278 = vmul.f32 %v3239, 1.442695
    %v3279 = vpow.pop %v3278
    %v3280 = vmul.f32 %v3240, 1.442695
    %v3281 = vpow.pop %v3280
    %v3282 = vmul.f32 %v3241, 1.442695
    %v3283 = vpow.pop %v3282
    %v3284 = vmul.f32 %v3242, 1.442695
    %v3285 = vpow.pop %v3284
    %v3286 = vmul.f32 %v3243, 1.442695
    %v3287 = vpow.pop %v3286
    %v3288 = vmul.f32 %v3244, 1.442695
    %v3289 = vpow.pop %v3288
    %v3290 = vmul.f32 %v3245, 1.442695
    %v3291 = vpow.pop %v3290
    %v3292 = vmul.f32 %v3246, 1.442695
    %v3293 = vpow.pop %v3292
    %v3294 = vmul.f32 %v3247, 1.442695
    %v3295 = vpow.pop %v3294
    %v3296 = vmul.f32 %v3248, 1.442695
    %v3297 = vpow.pop %v3296
    %v3298 = vmul.f32 %v3249, 1.442695
    %v3299 = vpow.pop %v3298
    %v3300 = vmul.f32 %v3250, 1.442695
    %v3301 = vpow.pop %v3300
    %v3302 = vmul.f32 %v3251, 1.442695
    %v3303 = vpow.pop %v3302
    %v3304 = vmul.f32 %v3252, 1.442695
    %v3305 = vpow.pop %v3304
    %v3306 = vmul.f32 %v3253, 1.442695
    %v3307 = vpow.pop %v3306
    %v3308 = vmul.f32 %v3254, 1.442695
    %v3309 = vpow.pop %v3308
    %v3310 = vmul.f32 %v3255, 1.442695
    %v3311 = vpow.pop %v3310
    %v3312 = vmul.f32 %v3256, 1.442695
    %v3313 = vpow.pop %v3312
    %v3314 = vmul.f32 %v3257, 1.442695
    %v3315 = vpow.pop %v3314
    %v3316 = vmul.f32 %v3258, 1.442695
    %v3317 = vpow.pop %v3316
    %v3318 = vmul.f32 %v3259, 1.442695
    %v3319 = vpow.pop %v3318
    %v3320 = vmul.f32 %v3260, 1.442695
    %v3321 = vpow.pop %v3320
    %v3322 = vmul.f32 %v3261, 1.442695
    %v3323 = vpow.pop %v3322
    %v3324 = vmul.f32 %v3262, 1.442695
    %v3325 = vpow.pop %v3324
    %v3326 = vmul.f32 %v3263, 1.442695
    %v3327 = vpow.pop %v3326
    %v3328 = vsel %vm3135, %v3265, 0.0
    %3329 = vadd.xlane.f32.xlu0 %v3328
    %v3330 = vpop.xlane.xlu0 %3329
    %v3331 = vsel %vm3135, %v3267, 0.0
    %3332 = vadd.xlane.f32.xlu0 %v3331
    %v3333 = vpop.xlane.xlu0 %3332
    %v3334 = vsel %vm3135, %v3269, 0.0
    %3335 = vadd.xlane.f32.xlu0 %v3334
    %v3336 = vpop.xlane.xlu0 %3335
    %v3337 = vsel %vm3135, %v3271, 0.0
    %3338 = vadd.xlane.f32.xlu0 %v3337
    %v3339 = vpop.xlane.xlu0 %3338
    %v3340 = vsel %vm3135, %v3273, 0.0
    %3341 = vadd.xlane.f32.xlu0 %v3340
    %v3342 = vpop.xlane.xlu0 %3341
    %v3343 = vsel %vm3135, %v3275, 0.0
    %3344 = vadd.xlane.f32.xlu0 %v3343
    %v3345 = vpop.xlane.xlu0 %3344
    %v3346 = vsel %vm3135, %v3277, 0.0
    %3347 = vadd.xlane.f32.xlu0 %v3346
    %v3348 = vpop.xlane.xlu0 %3347
    %v3349 = vsel %vm3135, %v3279, 0.0
    %3350 = vadd.xlane.f32.xlu0 %v3349
    %v3351 = vpop.xlane.xlu0 %3350
    %v3352 = vsel %vm3135, %v3281, 0.0
    %3353 = vadd.xlane.f32.xlu0 %v3352
    %v3354 = vpop.xlane.xlu0 %3353
    %v3355 = vsel %vm3135, %v3283, 0.0
    %3356 = vadd.xlane.f32.xlu0 %v3355
    %v3357 = vpop.xlane.xlu0 %3356
    %v3358 = vsel %vm3135, %v3285, 0.0
    %3359 = vadd.xlane.f32.xlu0 %v3358
    %v3360 = vpop.xlane.xlu0 %3359
    %v3361 = vsel %vm3135, %v3287, 0.0
    %3362 = vadd.xlane.f32.xlu0 %v3361
    %v3363 = vpop.xlane.xlu0 %3362
    %v3364 = vsel %vm3135, %v3289, 0.0
    %3365 = vadd.xlane.f32.xlu0 %v3364
    %v3366 = vpop.xlane.xlu0 %3365
    %v3367 = vsel %vm3135, %v3291, 0.0
    %3368 = vadd.xlane.f32.xlu0 %v3367
    %v3369 = vpop.xlane.xlu0 %3368
    %v3370 = vsel %vm3135, %v3293, 0.0
    %3371 = vadd.xlane.f32.xlu0 %v3370
    %v3372 = vpop.xlane.xlu0 %3371
    %v3373 = vsel %vm3135, %v3295, 0.0
    %3374 = vadd.xlane.f32.xlu0 %v3373
    %v3375 = vpop.xlane.xlu0 %3374
    %v3376 = vsel %vm3135, %v3297, 0.0
    %3377 = vadd.xlane.f32.xlu0 %v3376
    %v3378 = vpop.xlane.xlu0 %3377
    %v3379 = vsel %vm3135, %v3299, 0.0
    %3380 = vadd.xlane.f32.xlu0 %v3379
    %v3381 = vpop.xlane.xlu0 %3380
    %v3382 = vsel %vm3135, %v3301, 0.0
    %3383 = vadd.xlane.f32.xlu0 %v3382
    %v3384 = vpop.xlane.xlu0 %3383
    %v3385 = vsel %vm3135, %v3303, 0.0
    %3386 = vadd.xlane.f32.xlu0 %v3385
    %v3387 = vpop.xlane.xlu0 %3386
    %v3388 = vsel %vm3135, %v3305, 0.0
    %3389 = vadd.xlane.f32.xlu0 %v3388
    %v3390 = vpop.xlane.xlu0 %3389
    %v3391 = vsel %vm3135, %v3307, 0.0
    %3392 = vadd.xlane.f32.xlu0 %v3391
    %v3393 = vpop.xlane.xlu0 %3392
    %v3394 = vsel %vm3135, %v3309, 0.0
    %3395 = vadd.xlane.f32.xlu0 %v3394
    %v3396 = vpop.xlane.xlu0 %3395
    %v3397 = vsel %vm3135, %v3311, 0.0
    %3398 = vadd.xlane.f32.xlu0 %v3397
    %v3399 = vpop.xlane.xlu0 %3398
    %v3400 = vsel %vm3135, %v3313, 0.0
    %3401 = vadd.xlane.f32.xlu0 %v3400
    %v3402 = vpop.xlane.xlu0 %3401
    %v3403 = vsel %vm3135, %v3315, 0.0
    %3404 = vadd.xlane.f32.xlu0 %v3403
    %v3405 = vpop.xlane.xlu0 %3404
    %v3406 = vsel %vm3135, %v3317, 0.0
    %3407 = vadd.xlane.f32.xlu0 %v3406
    %v3408 = vpop.xlane.xlu0 %3407
    %v3409 = vsel %vm3135, %v3319, 0.0
    %3410 = vadd.xlane.f32.xlu0 %v3409
    %v3411 = vpop.xlane.xlu0 %3410
    %v3412 = vsel %vm3135, %v3321, 0.0
    %3413 = vadd.xlane.f32.xlu0 %v3412
    %v3414 = vpop.xlane.xlu0 %3413
    %v3415 = vsel %vm3135, %v3323, 0.0
    %3416 = vadd.xlane.f32.xlu0 %v3415
    %v3417 = vpop.xlane.xlu0 %3416
    %v3418 = vsel %vm3135, %v3325, 0.0
    %3419 = vadd.xlane.f32.xlu0 %v3418
    %v3420 = vpop.xlane.xlu0 %3419
    %v3421 = vsel %vm3135, %v3327, 0.0
    %3422 = vadd.xlane.f32.xlu0 %v3421
    %v3423 = vpop.xlane.xlu0 %3422
    %v3424 = vrcp.pop %v3330
    %v3425 = vrcp.pop %v3333
    %v3426 = vrcp.pop %v3336
    %v3427 = vrcp.pop %v3339
    %v3428 = vrcp.pop %v3342
    %v3429 = vrcp.pop %v3345
    %v3430 = vrcp.pop %v3348
    %v3431 = vrcp.pop %v3351
    %v3432 = vrcp.pop %v3354
    %v3433 = vrcp.pop %v3357
    %v3434 = vrcp.pop %v3360
    %v3435 = vrcp.pop %v3363
    %v3436 = vrcp.pop %v3366
    %v3437 = vrcp.pop %v3369
    %v3438 = vrcp.pop %v3372
    %v3439 = vrcp.pop %v3375
    %v3440 = vrcp.pop %v3378
    %v3441 = vrcp.pop %v3381
    %v3442 = vrcp.pop %v3384
    %v3443 = vrcp.pop %v3387
    %v3444 = vrcp.pop %v3390
    %v3445 = vrcp.pop %v3393
    %v3446 = vrcp.pop %v3396
    %v3447 = vrcp.pop %v3399
    %v3448 = vrcp.pop %v3402
    %v3449 = vrcp.pop %v3405
    %v3450 = vrcp.pop %v3408
    %v3451 = vrcp.pop %v3411
    %v3452 = vrcp.pop %v3414
    %v3453 = vrcp.pop %v3417
    %v3454 = vrcp.pop %v3420
    %v3455 = vrcp.pop %v3423
    %v3456 = vmul.f32 %v3265, %v3424
    %v3457 = vmul.f32 %v3267, %v3425
    %v3458 = vmul.f32 %v3269, %v3426
    %v3459 = vmul.f32 %v3271, %v3427
    %v3460 = vmul.f32 %v3273, %v3428
    %v3461 = vmul.f32 %v3275, %v3429
    %v3462 = vmul.f32 %v3277, %v3430
    %v3463 = vmul.f32 %v3279, %v3431
    %v3464 = vmul.f32 %v3281, %v3432
    %v3465 = vmul.f32 %v3283, %v3433
    %v3466 = vmul.f32 %v3285, %v3434
    %v3467 = vmul.f32 %v3287, %v3435
    %v3468 = vmul.f32 %v3289, %v3436
    %v3469 = vmul.f32 %v3291, %v3437
    %v3470 = vmul.f32 %v3293, %v3438
    %v3471 = vmul.f32 %v3295, %v3439
    %v3472 = vmul.f32 %v3297, %v3440
    %v3473 = vmul.f32 %v3299, %v3441
    %v3474 = vmul.f32 %v3301, %v3442
    %v3475 = vmul.f32 %v3303, %v3443
    %v3476 = vmul.f32 %v3305, %v3444
    %v3477 = vmul.f32 %v3307, %v3445
    %v3478 = vmul.f32 %v3309, %v3446
    %v3479 = vmul.f32 %v3311, %v3447
    %v3480 = vmul.f32 %v3313, %v3448
    %v3481 = vmul.f32 %v3315, %v3449
    %v3482 = vmul.f32 %v3317, %v3450
    %v3483 = vmul.f32 %v3319, %v3451
    %v3484 = vmul.f32 %v3321, %v3452
    %v3485 = vmul.f32 %v3323, %v3453
    %v3486 = vmul.f32 %v3325, %v3454
    %v3487 = vmul.f32 %v3327, %v3455
    %v3488 = vpack.c.bf16 %v3456, %v3456
    %v3489 = vpack.c.bf16 %v3457, %v3457
    %v3490 = vpack.c.bf16 %v3458, %v3458
    %v3491 = vpack.c.bf16 %v3459, %v3459
    %v3492 = vpack.c.bf16 %v3460, %v3460
    %v3493 = vpack.c.bf16 %v3461, %v3461
    %v3494 = vpack.c.bf16 %v3462, %v3462
    %v3495 = vpack.c.bf16 %v3463, %v3463
    %v3496 = vpack.c.bf16 %v3464, %v3464
    %v3497 = vpack.c.bf16 %v3465, %v3465
    %v3498 = vpack.c.bf16 %v3466, %v3466
    %v3499 = vpack.c.bf16 %v3467, %v3467
    %v3500 = vpack.c.bf16 %v3468, %v3468
    %v3501 = vpack.c.bf16 %v3469, %v3469
    %v3502 = vpack.c.bf16 %v3470, %v3470
    %v3503 = vpack.c.bf16 %v3471, %v3471
    %v3504 = vpack.c.bf16 %v3472, %v3472
    %v3505 = vpack.c.bf16 %v3473, %v3473
    %v3506 = vpack.c.bf16 %v3474, %v3474
    %v3507 = vpack.c.bf16 %v3475, %v3475
    %v3508 = vpack.c.bf16 %v3476, %v3476
    %v3509 = vpack.c.bf16 %v3477, %v3477
    %v3510 = vpack.c.bf16 %v3478, %v3478
    %v3511 = vpack.c.bf16 %v3479, %v3479
    %v3512 = vpack.c.bf16 %v3480, %v3480
    %v3513 = vpack.c.bf16 %v3481, %v3481
    %v3514 = vpack.c.bf16 %v3482, %v3482
    %v3515 = vpack.c.bf16 %v3483, %v3483
    %v3516 = vpack.c.bf16 %v3484, %v3484
    %v3517 = vpack.c.bf16 %v3485, %v3485
    %v3518 = vpack.c.bf16 %v3486, %v3486
    %v3519 = vpack.c.bf16 %v3487, %v3487
    %v3520 = vpack.c.bf16 %v1335, %v1335
    %v3521 = vpack.c.bf16 %v1339, %v1339
    %v3522 = vpack.c.bf16 %v1345, %v1345
    %v3523 = vpack.c.bf16 %v1349, %v1349
    %v3524 = vpack.c.bf16 %v1355, %v1355
    %v3525 = vpack.c.bf16 %v1359, %v1359
    %v3526 = vpack.c.bf16 %v1365, %v1365
    %v3527 = vpack.c.bf16 %v1369, %v1369
    %v3528 = vpack.c.bf16 %v1337, %v1337
    %v3529 = vpack.c.bf16 %v1341, %v1341
    %v3530 = vpack.c.bf16 %v1347, %v1347
    %v3531 = vpack.c.bf16 %v1351, %v1351
    %v3532 = vpack.c.bf16 %v1357, %v1357
    %v3533 = vpack.c.bf16 %v1361, %v1361
    %v3534 = vpack.c.bf16 %v1367, %v1367
    %v3535 = vpack.c.bf16 %v1371, %v1371
    %v3537 = vsel %vm3135, %v3496, 0
    %vm3539 = vcmask 1043456
    %v3541 = vsel %vm3539, %v3528, 0
    %3543 = vmatprep.subr.bf16.mxu0 0
    %3544 = vmatpush1.bf16.msra.mxu0 0
    %3545 = vmatprep.subr.bf16.mxu0 0
    %3546 = vmatpush1.bf16.msra.mxu0 0
    %3547 = vmatprep.subr.bf16.mxu0 0
    %3548 = vmatpush1.bf16.msra.mxu0 0
    %3549 = vmatprep.subr.bf16.mxu0 0
    %3550 = vmatpush1.bf16.msra.mxu0 0
    %3551 = vmatprep.subr.bf16.mxu0 0
    %3552 = vmatpush1.bf16.msra.mxu0 0
    %3553 = vmatprep.subr.bf16.mxu0 0
    %3554 = vmatpush1.bf16.msra.mxu0 0
    %3555 = vmatprep.subr.bf16.mxu0 0
    %3556 = vmatpush1.bf16.msra.mxu0 0
    %3557 = vmatprep.subr.bf16.mxu0 0
    %3558 = vmatpush1.bf16.msra.mxu0 %v3541
    %3559 = vmatprep.subr.bf16.mxu0 0
    %3560 = vmatpush2.bf16.msra.mxu0 0
    %3561 = vmatprep.subr.bf16.mxu0 0
    %3562 = vmatpush2.bf16.msra.mxu0 0
    %3563 = vmatprep.subr.bf16.mxu0 0
    %3564 = vmatpush2.bf16.msra.mxu0 0
    %3565 = vmatprep.subr.bf16.mxu0 0
    %3566 = vmatpush2.bf16.msra.mxu0 0
    %3567 = vmatprep.subr.bf16.mxu0 0
    %3568 = vmatpush2.bf16.msra.mxu0 0
    %3569 = vmatprep.subr.bf16.mxu0 0
    %3570 = vmatpush2.bf16.msra.mxu0 0
    %3571 = vmatprep.subr.bf16.mxu0 0
    %3572 = vmatpush2.bf16.msra.mxu0 0
    %3573 = vmatprep.subr.bf16.mxu0 0
    %3574 = vmatpush2.bf16.msra.mxu0 0
    %3575 = vmatprep.mubr.bf16.mxu0 0
    %3576 = vmatmul.mubr.bf16.gmra.mxu0 %v3537
    %v3577 = vpop.f32.mrf.mxu0
    %v3578 = vadd.f32 0.0, %v3577
    %v3579 = vpop.f32.mrf.mxu0
    %v3580 = vpop.f32.mrf.mxu0
    %v3581 = vpop.f32.mrf.mxu0
    %3582 = vdwg.mxu0
    %v3584 = vsel %vm3135, %v3497, 0
    %v3587 = vsel %vm3539, %v3529, 0
    %3589 = vmatprep.subr.bf16.mxu0 0
    %3590 = vmatpush1.bf16.msra.mxu0 0
    %3591 = vmatprep.subr.bf16.mxu0 0
    %3592 = vmatpush1.bf16.msra.mxu0 0
    %3593 = vmatprep.subr.bf16.mxu0 0
    %3594 = vmatpush1.bf16.msra.mxu0 0
    %3595 = vmatprep.subr.bf16.mxu0 0
    %3596 = vmatpush1.bf16.msra.mxu0 0
    %3597 = vmatprep.subr.bf16.mxu0 0
    %3598 = vmatpush1.bf16.msra.mxu0 0
    %3599 = vmatprep.subr.bf16.mxu0 0
    %3600 = vmatpush1.bf16.msra.mxu0 0
    %3601 = vmatprep.subr.bf16.mxu0 0
    %3602 = vmatpush1.bf16.msra.mxu0 0
    %3603 = vmatprep.subr.bf16.mxu0 0
    %3604 = vmatpush1.bf16.msra.mxu0 %v3587
    %3605 = vmatprep.subr.bf16.mxu0 0
    %3606 = vmatpush2.bf16.msra.mxu0 0
    %3607 = vmatprep.subr.bf16.mxu0 0
    %3608 = vmatpush2.bf16.msra.mxu0 0
    %3609 = vmatprep.subr.bf16.mxu0 0
    %3610 = vmatpush2.bf16.msra.mxu0 0
    %3611 = vmatprep.subr.bf16.mxu0 0
    %3612 = vmatpush2.bf16.msra.mxu0 0
    %3613 = vmatprep.subr.bf16.mxu0 0
    %3614 = vmatpush2.bf16.msra.mxu0 0
    %3615 = vmatprep.subr.bf16.mxu0 0
    %3616 = vmatpush2.bf16.msra.mxu0 0
    %3617 = vmatprep.subr.bf16.mxu0 0
    %3618 = vmatpush2.bf16.msra.mxu0 0
    %3619 = vmatprep.subr.bf16.mxu0 0
    %3620 = vmatpush2.bf16.msra.mxu0 0
    %3621 = vmatprep.mubr.bf16.mxu0 0
    %3622 = vmatmul.mubr.bf16.gmra.mxu0 %v3584
    %v3623 = vpop.f32.mrf.mxu0
    %v3624 = vadd.f32 0.0, %v3623
    %v3625 = vpop.f32.mrf.mxu0
    %v3626 = vpop.f32.mrf.mxu0
    %v3627 = vpop.f32.mrf.mxu0
    %3628 = vdwg.mxu0
    %v3630 = vsel %vm3135, %v3498, 0
    %v3633 = vsel %vm3539, %v3530, 0
    %3635 = vmatprep.subr.bf16.mxu0 0
    %3636 = vmatpush1.bf16.msra.mxu0 0
    %3637 = vmatprep.subr.bf16.mxu0 0
    %3638 = vmatpush1.bf16.msra.mxu0 0
    %3639 = vmatprep.subr.bf16.mxu0 0
    %3640 = vmatpush1.bf16.msra.mxu0 0
    %3641 = vmatprep.subr.bf16.mxu0 0
    %3642 = vmatpush1.bf16.msra.mxu0 0
    %3643 = vmatprep.subr.bf16.mxu0 0
    %3644 = vmatpush1.bf16.msra.mxu0 0
    %3645 = vmatprep.subr.bf16.mxu0 0
    %3646 = vmatpush1.bf16.msra.mxu0 0
    %3647 = vmatprep.subr.bf16.mxu0 0
    %3648 = vmatpush1.bf16.msra.mxu0 0
    %3649 = vmatprep.subr.bf16.mxu0 0
    %3650 = vmatpush1.bf16.msra.mxu0 %v3633
    %3651 = vmatprep.subr.bf16.mxu0 0
    %3652 = vmatpush2.bf16.msra.mxu0 0
    %3653 = vmatprep.subr.bf16.mxu0 0
    %3654 = vmatpush2.bf16.msra.mxu0 0
    %3655 = vmatprep.subr.bf16.mxu0 0
    %3656 = vmatpush2.bf16.msra.mxu0 0
    %3657 = vmatprep.subr.bf16.mxu0 0
    %3658 = vmatpush2.bf16.msra.mxu0 0
    %3659 = vmatprep.subr.bf16.mxu0 0
    %3660 = vmatpush2.bf16.msra.mxu0 0
    %3661 = vmatprep.subr.bf16.mxu0 0
    %3662 = vmatpush2.bf16.msra.mxu0 0
    %3663 = vmatprep.subr.bf16.mxu0 0
    %3664 = vmatpush2.bf16.msra.mxu0 0
    %3665 = vmatprep.subr.bf16.mxu0 0
    %3666 = vmatpush2.bf16.msra.mxu0 0
    %3667 = vmatprep.mubr.bf16.mxu0 0
    %3668 = vmatmul.mubr.bf16.gmra.mxu0 %v3630
    %v3669 = vpop.f32.mrf.mxu0
    %v3670 = vadd.f32 0.0, %v3669
    %v3671 = vpop.f32.mrf.mxu0
    %v3672 = vpop.f32.mrf.mxu0
    %v3673 = vpop.f32.mrf.mxu0
    %3674 = vdwg.mxu0
    %v3676 = vsel %vm3135, %v3499, 0
    %v3679 = vsel %vm3539, %v3531, 0
    %3681 = vmatprep.subr.bf16.mxu0 0
    %3682 = vmatpush1.bf16.msra.mxu0 0
    %3683 = vmatprep.subr.bf16.mxu0 0
    %3684 = vmatpush1.bf16.msra.mxu0 0
    %3685 = vmatprep.subr.bf16.mxu0 0
    %3686 = vmatpush1.bf16.msra.mxu0 0
    %3687 = vmatprep.subr.bf16.mxu0 0
    %3688 = vmatpush1.bf16.msra.mxu0 0
    %3689 = vmatprep.subr.bf16.mxu0 0
    %3690 = vmatpush1.bf16.msra.mxu0 0
    %3691 = vmatprep.subr.bf16.mxu0 0
    %3692 = vmatpush1.bf16.msra.mxu0 0
    %3693 = vmatprep.subr.bf16.mxu0 0
    %3694 = vmatpush1.bf16.msra.mxu0 0
    %3695 = vmatprep.subr.bf16.mxu0 0
    %3696 = vmatpush1.bf16.msra.mxu0 %v3679
    %3697 = vmatprep.subr.bf16.mxu0 0
    %3698 = vmatpush2.bf16.msra.mxu0 0
    %3699 = vmatprep.subr.bf16.mxu0 0
    %3700 = vmatpush2.bf16.msra.mxu0 0
    %3701 = vmatprep.subr.bf16.mxu0 0
    %3702 = vmatpush2.bf16.msra.mxu0 0
    %3703 = vmatprep.subr.bf16.mxu0 0
    %3704 = vmatpush2.bf16.msra.mxu0 0
    %3705 = vmatprep.subr.bf16.mxu0 0
    %3706 = vmatpush2.bf16.msra.mxu0 0
    %3707 = vmatprep.subr.bf16.mxu0 0
    %3708 = vmatpush2.bf16.msra.mxu0 0
    %3709 = vmatprep.subr.bf16.mxu0 0
    %3710 = vmatpush2.bf16.msra.mxu0 0
    %3711 = vmatprep.subr.bf16.mxu0 0
    %3712 = vmatpush2.bf16.msra.mxu0 0
    %3713 = vmatprep.mubr.bf16.mxu0 0
    %3714 = vmatmul.mubr.bf16.gmra.mxu0 %v3676
    %v3715 = vpop.f32.mrf.mxu0
    %v3716 = vadd.f32 0.0, %v3715
    %v3717 = vpop.f32.mrf.mxu0
    %v3718 = vpop.f32.mrf.mxu0
    %v3719 = vpop.f32.mrf.mxu0
    %3720 = vdwg.mxu0
    %v3722 = vsel %vm3135, %v3500, 0
    %v3725 = vsel %vm3539, %v3532, 0
    %3727 = vmatprep.subr.bf16.mxu0 0
    %3728 = vmatpush1.bf16.msra.mxu0 0
    %3729 = vmatprep.subr.bf16.mxu0 0
    %3730 = vmatpush1.bf16.msra.mxu0 0
    %3731 = vmatprep.subr.bf16.mxu0 0
    %3732 = vmatpush1.bf16.msra.mxu0 0
    %3733 = vmatprep.subr.bf16.mxu0 0
    %3734 = vmatpush1.bf16.msra.mxu0 0
    %3735 = vmatprep.subr.bf16.mxu0 0
    %3736 = vmatpush1.bf16.msra.mxu0 0
    %3737 = vmatprep.subr.bf16.mxu0 0
    %3738 = vmatpush1.bf16.msra.mxu0 0
    %3739 = vmatprep.subr.bf16.mxu0 0
    %3740 = vmatpush1.bf16.msra.mxu0 0
    %3741 = vmatprep.subr.bf16.mxu0 0
    %3742 = vmatpush1.bf16.msra.mxu0 %v3725
    %3743 = vmatprep.subr.bf16.mxu0 0
    %3744 = vmatpush2.bf16.msra.mxu0 0
    %3745 = vmatprep.subr.bf16.mxu0 0
    %3746 = vmatpush2.bf16.msra.mxu0 0
    %3747 = vmatprep.subr.bf16.mxu0 0
    %3748 = vmatpush2.bf16.msra.mxu0 0
    %3749 = vmatprep.subr.bf16.mxu0 0
    %3750 = vmatpush2.bf16.msra.mxu0 0
    %3751 = vmatprep.subr.bf16.mxu0 0
    %3752 = vmatpush2.bf16.msra.mxu0 0
    %3753 = vmatprep.subr.bf16.mxu0 0
    %3754 = vmatpush2.bf16.msra.mxu0 0
    %3755 = vmatprep.subr.bf16.mxu0 0
    %3756 = vmatpush2.bf16.msra.mxu0 0
    %3757 = vmatprep.subr.bf16.mxu0 0
    %3758 = vmatpush2.bf16.msra.mxu0 0
    %3759 = vmatprep.mubr.bf16.mxu0 0
    %3760 = vmatmul.mubr.bf16.gmra.mxu0 %v3722
    %v3761 = vpop.f32.mrf.mxu0
    %v3762 = vadd.f32 0.0, %v3761
    %v3763 = vpop.f32.mrf.mxu0
    %v3764 = vpop.f32.mrf.mxu0
    %v3765 = vpop.f32.mrf.mxu0
    %3766 = vdwg.mxu0
    %v3768 = vsel %vm3135, %v3501, 0
    %v3771 = vsel %vm3539, %v3533, 0
    %3773 = vmatprep.subr.bf16.mxu0 0
    %3774 = vmatpush1.bf16.msra.mxu0 0
    %3775 = vmatprep.subr.bf16.mxu0 0
    %3776 = vmatpush1.bf16.msra.mxu0 0
    %3777 = vmatprep.subr.bf16.mxu0 0
    %3778 = vmatpush1.bf16.msra.mxu0 0
    %3779 = vmatprep.subr.bf16.mxu0 0
    %3780 = vmatpush1.bf16.msra.mxu0 0
    %3781 = vmatprep.subr.bf16.mxu0 0
    %3782 = vmatpush1.bf16.msra.mxu0 0
    %3783 = vmatprep.subr.bf16.mxu0 0
    %3784 = vmatpush1.bf16.msra.mxu0 0
    %3785 = vmatprep.subr.bf16.mxu0 0
    %3786 = vmatpush1.bf16.msra.mxu0 0
    %3787 = vmatprep.subr.bf16.mxu0 0
    %3788 = vmatpush1.bf16.msra.mxu0 %v3771
    %3789 = vmatprep.subr.bf16.mxu0 0
    %3790 = vmatpush2.bf16.msra.mxu0 0
    %3791 = vmatprep.subr.bf16.mxu0 0
    %3792 = vmatpush2.bf16.msra.mxu0 0
    %3793 = vmatprep.subr.bf16.mxu0 0
    %3794 = vmatpush2.bf16.msra.mxu0 0
    %3795 = vmatprep.subr.bf16.mxu0 0
    %3796 = vmatpush2.bf16.msra.mxu0 0
    %3797 = vmatprep.subr.bf16.mxu0 0
    %3798 = vmatpush2.bf16.msra.mxu0 0
    %3799 = vmatprep.subr.bf16.mxu0 0
    %3800 = vmatpush2.bf16.msra.mxu0 0
    %3801 = vmatprep.subr.bf16.mxu0 0
    %3802 = vmatpush2.bf16.msra.mxu0 0
    %3803 = vmatprep.subr.bf16.mxu0 0
    %3804 = vmatpush2.bf16.msra.mxu0 0
    %3805 = vmatprep.mubr.bf16.mxu0 0
    %3806 = vmatmul.mubr.bf16.gmra.mxu0 %v3768
    %v3807 = vpop.f32.mrf.mxu0
    %v3808 = vadd.f32 0.0, %v3807
    %v3809 = vpop.f32.mrf.mxu0
    %v3810 = vpop.f32.mrf.mxu0
    %v3811 = vpop.f32.mrf.mxu0
    %3812 = vdwg.mxu0
    %v3814 = vsel %vm3135, %v3502, 0
    %v3817 = vsel %vm3539, %v3534, 0
    %3819 = vmatprep.subr.bf16.mxu0 0
    %3820 = vmatpush1.bf16.msra.mxu0 0
    %3821 = vmatprep.subr.bf16.mxu0 0
    %3822 = vmatpush1.bf16.msra.mxu0 0
    %3823 = vmatprep.subr.bf16.mxu0 0
    %3824 = vmatpush1.bf16.msra.mxu0 0
    %3825 = vmatprep.subr.bf16.mxu0 0
    %3826 = vmatpush1.bf16.msra.mxu0 0
    %3827 = vmatprep.subr.bf16.mxu0 0
    %3828 = vmatpush1.bf16.msra.mxu0 0
    %3829 = vmatprep.subr.bf16.mxu0 0
    %3830 = vmatpush1.bf16.msra.mxu0 0
    %3831 = vmatprep.subr.bf16.mxu0 0
    %3832 = vmatpush1.bf16.msra.mxu0 0
    %3833 = vmatprep.subr.bf16.mxu0 0
    %3834 = vmatpush1.bf16.msra.mxu0 %v3817
    %3835 = vmatprep.subr.bf16.mxu0 0
    %3836 = vmatpush2.bf16.msra.mxu0 0
    %3837 = vmatprep.subr.bf16.mxu0 0
    %3838 = vmatpush2.bf16.msra.mxu0 0
    %3839 = vmatprep.subr.bf16.mxu0 0
    %3840 = vmatpush2.bf16.msra.mxu0 0
    %3841 = vmatprep.subr.bf16.mxu0 0
    %3842 = vmatpush2.bf16.msra.mxu0 0
    %3843 = vmatprep.subr.bf16.mxu0 0
    %3844 = vmatpush2.bf16.msra.mxu0 0
    %3845 = vmatprep.subr.bf16.mxu0 0
    %3846 = vmatpush2.bf16.msra.mxu0 0
    %3847 = vmatprep.subr.bf16.mxu0 0
    %3848 = vmatpush2.bf16.msra.mxu0 0
    %3849 = vmatprep.subr.bf16.mxu0 0
    %3850 = vmatpush2.bf16.msra.mxu0 0
    %3851 = vmatprep.mubr.bf16.mxu0 0
    %3852 = vmatmul.mubr.bf16.gmra.mxu0 %v3814
    %v3853 = vpop.f32.mrf.mxu0
    %v3854 = vadd.f32 0.0, %v3853
    %v3855 = vpop.f32.mrf.mxu0
    %v3856 = vpop.f32.mrf.mxu0
    %v3857 = vpop.f32.mrf.mxu0
    %3858 = vdwg.mxu0
    %v3860 = vsel %vm3135, %v3503, 0
    %v3863 = vsel %vm3539, %v3535, 0
    %3865 = vmatprep.subr.bf16.mxu0 0
    %3866 = vmatpush1.bf16.msra.mxu0 0
    %3867 = vmatprep.subr.bf16.mxu0 0
    %3868 = vmatpush1.bf16.msra.mxu0 0
    %3869 = vmatprep.subr.bf16.mxu0 0
    %3870 = vmatpush1.bf16.msra.mxu0 0
    %3871 = vmatprep.subr.bf16.mxu0 0
    %3872 = vmatpush1.bf16.msra.mxu0 0
    %3873 = vmatprep.subr.bf16.mxu0 0
    %3874 = vmatpush1.bf16.msra.mxu0 0
    %3875 = vmatprep.subr.bf16.mxu0 0
    %3876 = vmatpush1.bf16.msra.mxu0 0
    %3877 = vmatprep.subr.bf16.mxu0 0
    %3878 = vmatpush1.bf16.msra.mxu0 0
    %3879 = vmatprep.subr.bf16.mxu0 0
    %3880 = vmatpush1.bf16.msra.mxu0 %v3863
    %3881 = vmatprep.subr.bf16.mxu0 0
    %3882 = vmatpush2.bf16.msra.mxu0 0
    %3883 = vmatprep.subr.bf16.mxu0 0
    %3884 = vmatpush2.bf16.msra.mxu0 0
    %3885 = vmatprep.subr.bf16.mxu0 0
    %3886 = vmatpush2.bf16.msra.mxu0 0
    %3887 = vmatprep.subr.bf16.mxu0 0
    %3888 = vmatpush2.bf16.msra.mxu0 0
    %3889 = vmatprep.subr.bf16.mxu0 0
    %3890 = vmatpush2.bf16.msra.mxu0 0
    %3891 = vmatprep.subr.bf16.mxu0 0
    %3892 = vmatpush2.bf16.msra.mxu0 0
    %3893 = vmatprep.subr.bf16.mxu0 0
    %3894 = vmatpush2.bf16.msra.mxu0 0
    %3895 = vmatprep.subr.bf16.mxu0 0
    %3896 = vmatpush2.bf16.msra.mxu0 0
    %3897 = vmatprep.mubr.bf16.mxu0 0
    %3898 = vmatmul.mubr.bf16.gmra.mxu0 %v3860
    %v3899 = vpop.f32.mrf.mxu0
    %v3900 = vadd.f32 0.0, %v3899
    %v3901 = vpop.f32.mrf.mxu0
    %v3902 = vpop.f32.mrf.mxu0
    %v3903 = vpop.f32.mrf.mxu0
    %3904 = vdwg.mxu0
    %v3906 = vsel %vm3135, %v3488, 0
    %v3909 = vsel %vm3539, %v3520, 0
    %3911 = vmatprep.subr.bf16.mxu0 0
    %3912 = vmatpush1.bf16.msra.mxu0 0
    %3913 = vmatprep.subr.bf16.mxu0 0
    %3914 = vmatpush1.bf16.msra.mxu0 0
    %3915 = vmatprep.subr.bf16.mxu0 0
    %3916 = vmatpush1.bf16.msra.mxu0 0
    %3917 = vmatprep.subr.bf16.mxu0 0
    %3918 = vmatpush1.bf16.msra.mxu0 0
    %3919 = vmatprep.subr.bf16.mxu0 0
    %3920 = vmatpush1.bf16.msra.mxu0 0
    %3921 = vmatprep.subr.bf16.mxu0 0
    %3922 = vmatpush1.bf16.msra.mxu0 0
    %3923 = vmatprep.subr.bf16.mxu0 0
    %3924 = vmatpush1.bf16.msra.mxu0 0
    %3925 = vmatprep.subr.bf16.mxu0 0
    %3926 = vmatpush1.bf16.msra.mxu0 %v3909
    %3927 = vmatprep.subr.bf16.mxu0 0
    %3928 = vmatpush2.bf16.msra.mxu0 0
    %3929 = vmatprep.subr.bf16.mxu0 0
    %3930 = vmatpush2.bf16.msra.mxu0 0
    %3931 = vmatprep.subr.bf16.mxu0 0
    %3932 = vmatpush2.bf16.msra.mxu0 0
    %3933 = vmatprep.subr.bf16.mxu0 0
    %3934 = vmatpush2.bf16.msra.mxu0 0
    %3935 = vmatprep.subr.bf16.mxu0 0
    %3936 = vmatpush2.bf16.msra.mxu0 0
    %3937 = vmatprep.subr.bf16.mxu0 0
    %3938 = vmatpush2.bf16.msra.mxu0 0
    %3939 = vmatprep.subr.bf16.mxu0 0
    %3940 = vmatpush2.bf16.msra.mxu0 0
    %3941 = vmatprep.subr.bf16.mxu0 0
    %3942 = vmatpush2.bf16.msra.mxu0 0
    %3943 = vmatprep.mubr.bf16.mxu0 0
    %3944 = vmatmul.mubr.bf16.gmra.mxu0 %v3906
    %v3945 = vpop.f32.mrf.mxu0
    %v3946 = vadd.f32 %v3578, %v3945
    %v3947 = vpop.f32.mrf.mxu0
    %v3948 = vpop.f32.mrf.mxu0
    %v3949 = vpop.f32.mrf.mxu0
    %3950 = vdwg.mxu0
    %v3952 = vsel %vm3135, %v3489, 0
    %v3955 = vsel %vm3539, %v3521, 0
    %3957 = vmatprep.subr.bf16.mxu0 0
    %3958 = vmatpush1.bf16.msra.mxu0 0
    %3959 = vmatprep.subr.bf16.mxu0 0
    %3960 = vmatpush1.bf16.msra.mxu0 0
    %3961 = vmatprep.subr.bf16.mxu0 0
    %3962 = vmatpush1.bf16.msra.mxu0 0
    %3963 = vmatprep.subr.bf16.mxu0 0
    %3964 = vmatpush1.bf16.msra.mxu0 0
    %3965 = vmatprep.subr.bf16.mxu0 0
    %3966 = vmatpush1.bf16.msra.mxu0 0
    %3967 = vmatprep.subr.bf16.mxu0 0
    %3968 = vmatpush1.bf16.msra.mxu0 0
    %3969 = vmatprep.subr.bf16.mxu0 0
    %3970 = vmatpush1.bf16.msra.mxu0 0
    %3971 = vmatprep.subr.bf16.mxu0 0
    %3972 = vmatpush1.bf16.msra.mxu0 %v3955
    %3973 = vmatprep.subr.bf16.mxu0 0
    %3974 = vmatpush2.bf16.msra.mxu0 0
    %3975 = vmatprep.subr.bf16.mxu0 0
    %3976 = vmatpush2.bf16.msra.mxu0 0
    %3977 = vmatprep.subr.bf16.mxu0 0
    %3978 = vmatpush2.bf16.msra.mxu0 0
    %3979 = vmatprep.subr.bf16.mxu0 0
    %3980 = vmatpush2.bf16.msra.mxu0 0
    %3981 = vmatprep.subr.bf16.mxu0 0
    %3982 = vmatpush2.bf16.msra.mxu0 0
    %3983 = vmatprep.subr.bf16.mxu0 0
    %3984 = vmatpush2.bf16.msra.mxu0 0
    %3985 = vmatprep.subr.bf16.mxu0 0
    %3986 = vmatpush2.bf16.msra.mxu0 0
    %3987 = vmatprep.subr.bf16.mxu0 0
    %3988 = vmatpush2.bf16.msra.mxu0 0
    %3989 = vmatprep.mubr.bf16.mxu0 0
    %3990 = vmatmul.mubr.bf16.gmra.mxu0 %v3952
    %v3991 = vpop.f32.mrf.mxu0
    %v3992 = vadd.f32 %v3624, %v3991
    %v3993 = vpop.f32.mrf.mxu0
    %v3994 = vpop.f32.mrf.mxu0
    %v3995 = vpop.f32.mrf.mxu0
    %3996 = vdwg.mxu0
    %v3998 = vsel %vm3135, %v3490, 0
    %v4001 = vsel %vm3539, %v3522, 0
    %4003 = vmatprep.subr.bf16.mxu0 0
    %4004 = vmatpush1.bf16.msra.mxu0 0
    %4005 = vmatprep.subr.bf16.mxu0 0
    %4006 = vmatpush1.bf16.msra.mxu0 0
    %4007 = vmatprep.subr.bf16.mxu0 0
    %4008 = vmatpush1.bf16.msra.mxu0 0
    %4009 = vmatprep.subr.bf16.mxu0 0
    %4010 = vmatpush1.bf16.msra.mxu0 0
    %4011 = vmatprep.subr.bf16.mxu0 0
    %4012 = vmatpush1.bf16.msra.mxu0 0
    %4013 = vmatprep.subr.bf16.mxu0 0
    %4014 = vmatpush1.bf16.msra.mxu0 0
    %4015 = vmatprep.subr.bf16.mxu0 0
    %4016 = vmatpush1.bf16.msra.mxu0 0
    %4017 = vmatprep.subr.bf16.mxu0 0
    %4018 = vmatpush1.bf16.msra.mxu0 %v4001
    %4019 = vmatprep.subr.bf16.mxu0 0
    %4020 = vmatpush2.bf16.msra.mxu0 0
    %4021 = vmatprep.subr.bf16.mxu0 0
    %4022 = vmatpush2.bf16.msra.mxu0 0
    %4023 = vmatprep.subr.bf16.mxu0 0
    %4024 = vmatpush2.bf16.msra.mxu0 0
    %4025 = vmatprep.subr.bf16.mxu0 0
    %4026 = vmatpush2.bf16.msra.mxu0 0
    %4027 = vmatprep.subr.bf16.mxu0 0
    %4028 = vmatpush2.bf16.msra.mxu0 0
    %4029 = vmatprep.subr.bf16.mxu0 0
    %4030 = vmatpush2.bf16.msra.mxu0 0
    %4031 = vmatprep.subr.bf16.mxu0 0
    %4032 = vmatpush2.bf16.msra.mxu0 0
    %4033 = vmatprep.subr.bf16.mxu0 0
    %4034 = vmatpush2.bf16.msra.mxu0 0
    %4035 = vmatprep.mubr.bf16.mxu0 0
    %4036 = vmatmul.mubr.bf16.gmra.mxu0 %v3998
    %v4037 = vpop.f32.mrf.mxu0
    %v4038 = vadd.f32 %v3670, %v4037
    %v4039 = vpop.f32.mrf.mxu0
    %v4040 = vpop.f32.mrf.mxu0
    %v4041 = vpop.f32.mrf.mxu0
    %4042 = vdwg.mxu0
    %v4044 = vsel %vm3135, %v3491, 0
    %v4047 = vsel %vm3539, %v3523, 0
    %4049 = vmatprep.subr.bf16.mxu0 0
    %4050 = vmatpush1.bf16.msra.mxu0 0
    %4051 = vmatprep.subr.bf16.mxu0 0
    %4052 = vmatpush1.bf16.msra.mxu0 0
    %4053 = vmatprep.subr.bf16.mxu0 0
    %4054 = vmatpush1.bf16.msra.mxu0 0
    %4055 = vmatprep.subr.bf16.mxu0 0
    %4056 = vmatpush1.bf16.msra.mxu0 0
    %4057 = vmatprep.subr.bf16.mxu0 0
    %4058 = vmatpush1.bf16.msra.mxu0 0
    %4059 = vmatprep.subr.bf16.mxu0 0
    %4060 = vmatpush1.bf16.msra.mxu0 0
    %4061 = vmatprep.subr.bf16.mxu0 0
    %4062 = vmatpush1.bf16.msra.mxu0 0
    %4063 = vmatprep.subr.bf16.mxu0 0
    %4064 = vmatpush1.bf16.msra.mxu0 %v4047
    %4065 = vmatprep.subr.bf16.mxu0 0
    %4066 = vmatpush2.bf16.msra.mxu0 0
    %4067 = vmatprep.subr.bf16.mxu0 0
    %4068 = vmatpush2.bf16.msra.mxu0 0
    %4069 = vmatprep.subr.bf16.mxu0 0
    %4070 = vmatpush2.bf16.msra.mxu0 0
    %4071 = vmatprep.subr.bf16.mxu0 0
    %4072 = vmatpush2.bf16.msra.mxu0 0
    %4073 = vmatprep.subr.bf16.mxu0 0
    %4074 = vmatpush2.bf16.msra.mxu0 0
    %4075 = vmatprep.subr.bf16.mxu0 0
    %4076 = vmatpush2.bf16.msra.mxu0 0
    %4077 = vmatprep.subr.bf16.mxu0 0
    %4078 = vmatpush2.bf16.msra.mxu0 0
    %4079 = vmatprep.subr.bf16.mxu0 0
    %4080 = vmatpush2.bf16.msra.mxu0 0
    %4081 = vmatprep.mubr.bf16.mxu0 0
    %4082 = vmatmul.mubr.bf16.gmra.mxu0 %v4044
    %v4083 = vpop.f32.mrf.mxu0
    %v4084 = vadd.f32 %v3716, %v4083
    %v4085 = vpop.f32.mrf.mxu0
    %v4086 = vpop.f32.mrf.mxu0
    %v4087 = vpop.f32.mrf.mxu0
    %4088 = vdwg.mxu0
    %v4090 = vsel %vm3135, %v3492, 0
    %v4093 = vsel %vm3539, %v3524, 0
    %4095 = vmatprep.subr.bf16.mxu0 0
    %4096 = vmatpush1.bf16.msra.mxu0 0
    %4097 = vmatprep.subr.bf16.mxu0 0
    %4098 = vmatpush1.bf16.msra.mxu0 0
    %4099 = vmatprep.subr.bf16.mxu0 0
    %4100 = vmatpush1.bf16.msra.mxu0 0
    %4101 = vmatprep.subr.bf16.mxu0 0
    %4102 = vmatpush1.bf16.msra.mxu0 0
    %4103 = vmatprep.subr.bf16.mxu0 0
    %4104 = vmatpush1.bf16.msra.mxu0 0
    %4105 = vmatprep.subr.bf16.mxu0 0
    %4106 = vmatpush1.bf16.msra.mxu0 0
    %4107 = vmatprep.subr.bf16.mxu0 0
    %4108 = vmatpush1.bf16.msra.mxu0 0
    %4109 = vmatprep.subr.bf16.mxu0 0
    %4110 = vmatpush1.bf16.msra.mxu0 %v4093
    %4111 = vmatprep.subr.bf16.mxu0 0
    %4112 = vmatpush2.bf16.msra.mxu0 0
    %4113 = vmatprep.subr.bf16.mxu0 0
    %4114 = vmatpush2.bf16.msra.mxu0 0
    %4115 = vmatprep.subr.bf16.mxu0 0
    %4116 = vmatpush2.bf16.msra.mxu0 0
    %4117 = vmatprep.subr.bf16.mxu0 0
    %4118 = vmatpush2.bf16.msra.mxu0 0
    %4119 = vmatprep.subr.bf16.mxu0 0
    %4120 = vmatpush2.bf16.msra.mxu0 0
    %4121 = vmatprep.subr.bf16.mxu0 0
    %4122 = vmatpush2.bf16.msra.mxu0 0
    %4123 = vmatprep.subr.bf16.mxu0 0
    %4124 = vmatpush2.bf16.msra.mxu0 0
    %4125 = vmatprep.subr.bf16.mxu0 0
    %4126 = vmatpush2.bf16.msra.mxu0 0
    %4127 = vmatprep.mubr.bf16.mxu0 0
    %4128 = vmatmul.mubr.bf16.gmra.mxu0 %v4090
    %v4129 = vpop.f32.mrf.mxu0
    %v4130 = vadd.f32 %v3762, %v4129
    %v4131 = vpop.f32.mrf.mxu0
    %v4132 = vpop.f32.mrf.mxu0
    %v4133 = vpop.f32.mrf.mxu0
    %4134 = vdwg.mxu0
    %v4136 = vsel %vm3135, %v3493, 0
    %v4139 = vsel %vm3539, %v3525, 0
    %4141 = vmatprep.subr.bf16.mxu0 0
    %4142 = vmatpush1.bf16.msra.mxu0 0
    %4143 = vmatprep.subr.bf16.mxu0 0
    %4144 = vmatpush1.bf16.msra.mxu0 0
    %4145 = vmatprep.subr.bf16.mxu0 0
    %4146 = vmatpush1.bf16.msra.mxu0 0
    %4147 = vmatprep.subr.bf16.mxu0 0
    %4148 = vmatpush1.bf16.msra.mxu0 0
    %4149 = vmatprep.subr.bf16.mxu0 0
    %4150 = vmatpush1.bf16.msra.mxu0 0
    %4151 = vmatprep.subr.bf16.mxu0 0
    %4152 = vmatpush1.bf16.msra.mxu0 0
    %4153 = vmatprep.subr.bf16.mxu0 0
    %4154 = vmatpush1.bf16.msra.mxu0 0
    %4155 = vmatprep.subr.bf16.mxu0 0
    %4156 = vmatpush1.bf16.msra.mxu0 %v4139
    %4157 = vmatprep.subr.bf16.mxu0 0
    %4158 = vmatpush2.bf16.msra.mxu0 0
    %4159 = vmatprep.subr.bf16.mxu0 0
    %4160 = vmatpush2.bf16.msra.mxu0 0
    %4161 = vmatprep.subr.bf16.mxu0 0
    %4162 = vmatpush2.bf16.msra.mxu0 0
    %4163 = vmatprep.subr.bf16.mxu0 0
    %4164 = vmatpush2.bf16.msra.mxu0 0
    %4165 = vmatprep.subr.bf16.mxu0 0
    %4166 = vmatpush2.bf16.msra.mxu0 0
    %4167 = vmatprep.subr.bf16.mxu0 0
    %4168 = vmatpush2.bf16.msra.mxu0 0
    %4169 = vmatprep.subr.bf16.mxu0 0
    %4170 = vmatpush2.bf16.msra.mxu0 0
    %4171 = vmatprep.subr.bf16.mxu0 0
    %4172 = vmatpush2.bf16.msra.mxu0 0
    %4173 = vmatprep.mubr.bf16.mxu0 0
    %4174 = vmatmul.mubr.bf16.gmra.mxu0 %v4136
    %v4175 = vpop.f32.mrf.mxu0
    %v4176 = vadd.f32 %v3808, %v4175
    %v4177 = vpop.f32.mrf.mxu0
    %v4178 = vpop.f32.mrf.mxu0
    %v4179 = vpop.f32.mrf.mxu0
    %4180 = vdwg.mxu0
    %v4182 = vsel %vm3135, %v3494, 0
    %v4185 = vsel %vm3539, %v3526, 0
    %4187 = vmatprep.subr.bf16.mxu0 0
    %4188 = vmatpush1.bf16.msra.mxu0 0
    %4189 = vmatprep.subr.bf16.mxu0 0
    %4190 = vmatpush1.bf16.msra.mxu0 0
    %4191 = vmatprep.subr.bf16.mxu0 0
    %4192 = vmatpush1.bf16.msra.mxu0 0
    %4193 = vmatprep.subr.bf16.mxu0 0
    %4194 = vmatpush1.bf16.msra.mxu0 0
    %4195 = vmatprep.subr.bf16.mxu0 0
    %4196 = vmatpush1.bf16.msra.mxu0 0
    %4197 = vmatprep.subr.bf16.mxu0 0
    %4198 = vmatpush1.bf16.msra.mxu0 0
    %4199 = vmatprep.subr.bf16.mxu0 0
    %4200 = vmatpush1.bf16.msra.mxu0 0
    %4201 = vmatprep.subr.bf16.mxu0 0
    %4202 = vmatpush1.bf16.msra.mxu0 %v4185
    %4203 = vmatprep.subr.bf16.mxu0 0
    %4204 = vmatpush2.bf16.msra.mxu0 0
    %4205 = vmatprep.subr.bf16.mxu0 0
    %4206 = vmatpush2.bf16.msra.mxu0 0
    %4207 = vmatprep.subr.bf16.mxu0 0
    %4208 = vmatpush2.bf16.msra.mxu0 0
    %4209 = vmatprep.subr.bf16.mxu0 0
    %4210 = vmatpush2.bf16.msra.mxu0 0
    %4211 = vmatprep.subr.bf16.mxu0 0
    %4212 = vmatpush2.bf16.msra.mxu0 0
    %4213 = vmatprep.subr.bf16.mxu0 0
    %4214 = vmatpush2.bf16.msra.mxu0 0
    %4215 = vmatprep.subr.bf16.mxu0 0
    %4216 = vmatpush2.bf16.msra.mxu0 0
    %4217 = vmatprep.subr.bf16.mxu0 0
    %4218 = vmatpush2.bf16.msra.mxu0 0
    %4219 = vmatprep.mubr.bf16.mxu0 0
    %4220 = vmatmul.mubr.bf16.gmra.mxu0 %v4182
    %v4221 = vpop.f32.mrf.mxu0
    %v4222 = vadd.f32 %v3854, %v4221
    %v4223 = vpop.f32.mrf.mxu0
    %v4224 = vpop.f32.mrf.mxu0
    %v4225 = vpop.f32.mrf.mxu0
    %4226 = vdwg.mxu0
    %v4228 = vsel %vm3135, %v3495, 0
    %v4231 = vsel %vm3539, %v3527, 0
    %4233 = vmatprep.subr.bf16.mxu0 0
    %4234 = vmatpush1.bf16.msra.mxu0 0
    %4235 = vmatprep.subr.bf16.mxu0 0
    %4236 = vmatpush1.bf16.msra.mxu0 0
    %4237 = vmatprep.subr.bf16.mxu0 0
    %4238 = vmatpush1.bf16.msra.mxu0 0
    %4239 = vmatprep.subr.bf16.mxu0 0
    %4240 = vmatpush1.bf16.msra.mxu0 0
    %4241 = vmatprep.subr.bf16.mxu0 0
    %4242 = vmatpush1.bf16.msra.mxu0 0
    %4243 = vmatprep.subr.bf16.mxu0 0
    %4244 = vmatpush1.bf16.msra.mxu0 0
    %4245 = vmatprep.subr.bf16.mxu0 0
    %4246 = vmatpush1.bf16.msra.mxu0 0
    %4247 = vmatprep.subr.bf16.mxu0 0
    %4248 = vmatpush1.bf16.msra.mxu0 %v4231
    %4249 = vmatprep.subr.bf16.mxu0 0
    %4250 = vmatpush2.bf16.msra.mxu0 0
    %4251 = vmatprep.subr.bf16.mxu0 0
    %4252 = vmatpush2.bf16.msra.mxu0 0
    %4253 = vmatprep.subr.bf16.mxu0 0
    %4254 = vmatpush2.bf16.msra.mxu0 0
    %4255 = vmatprep.subr.bf16.mxu0 0
    %4256 = vmatpush2.bf16.msra.mxu0 0
    %4257 = vmatprep.subr.bf16.mxu0 0
    %4258 = vmatpush2.bf16.msra.mxu0 0
    %4259 = vmatprep.subr.bf16.mxu0 0
    %4260 = vmatpush2.bf16.msra.mxu0 0
    %4261 = vmatprep.subr.bf16.mxu0 0
    %4262 = vmatpush2.bf16.msra.mxu0 0
    %4263 = vmatprep.subr.bf16.mxu0 0
    %4264 = vmatpush2.bf16.msra.mxu0 0
    %4265 = vmatprep.mubr.bf16.mxu0 0
    %4266 = vmatmul.mubr.bf16.gmra.mxu0 %v4228
    %v4267 = vpop.f32.mrf.mxu0
    %v4268 = vadd.f32 %v3900, %v4267
    %v4269 = vpop.f32.mrf.mxu0
    %v4270 = vpop.f32.mrf.mxu0
    %v4271 = vpop.f32.mrf.mxu0
    %4272 = vdwg.mxu0
    %v4273 = vpack.c.bf16 %v1408, %v1408
    %v4274 = vpack.c.bf16 %v1412, %v1412
    %v4275 = vpack.c.bf16 %v1418, %v1418
    %v4276 = vpack.c.bf16 %v1422, %v1422
    %v4277 = vpack.c.bf16 %v1428, %v1428
    %v4278 = vpack.c.bf16 %v1432, %v1432
    %v4279 = vpack.c.bf16 %v1438, %v1438
    %v4280 = vpack.c.bf16 %v1442, %v1442
    %v4282 = vsel %vm3135, %v3504, 0
    %v4285 = vsel %vm3539, %v4273, 0
    %4287 = vmatprep.subr.bf16.mxu0 0
    %4288 = vmatpush1.bf16.msra.mxu0 0
    %4289 = vmatprep.subr.bf16.mxu0 0
    %4290 = vmatpush1.bf16.msra.mxu0 0
    %4291 = vmatprep.subr.bf16.mxu0 0
    %4292 = vmatpush1.bf16.msra.mxu0 0
    %4293 = vmatprep.subr.bf16.mxu0 0
    %4294 = vmatpush1.bf16.msra.mxu0 0
    %4295 = vmatprep.subr.bf16.mxu0 0
    %4296 = vmatpush1.bf16.msra.mxu0 0
    %4297 = vmatprep.subr.bf16.mxu0 0
    %4298 = vmatpush1.bf16.msra.mxu0 0
    %4299 = vmatprep.subr.bf16.mxu0 0
    %4300 = vmatpush1.bf16.msra.mxu0 0
    %4301 = vmatprep.subr.bf16.mxu0 0
    %4302 = vmatpush1.bf16.msra.mxu0 %v4285
    %4303 = vmatprep.subr.bf16.mxu0 0
    %4304 = vmatpush2.bf16.msra.mxu0 0
    %4305 = vmatprep.subr.bf16.mxu0 0
    %4306 = vmatpush2.bf16.msra.mxu0 0
    %4307 = vmatprep.subr.bf16.mxu0 0
    %4308 = vmatpush2.bf16.msra.mxu0 0
    %4309 = vmatprep.subr.bf16.mxu0 0
    %4310 = vmatpush2.bf16.msra.mxu0 0
    %4311 = vmatprep.subr.bf16.mxu0 0
    %4312 = vmatpush2.bf16.msra.mxu0 0
    %4313 = vmatprep.subr.bf16.mxu0 0
    %4314 = vmatpush2.bf16.msra.mxu0 0
    %4315 = vmatprep.subr.bf16.mxu0 0
    %4316 = vmatpush2.bf16.msra.mxu0 0
    %4317 = vmatprep.subr.bf16.mxu0 0
    %4318 = vmatpush2.bf16.msra.mxu0 0
    %4319 = vmatprep.mubr.bf16.mxu0 0
    %4320 = vmatmul.mubr.bf16.gmra.mxu0 %v4282
    %v4321 = vpop.f32.mrf.mxu0
    %v4322 = vadd.f32 0.0, %v4321
    %v4323 = vpop.f32.mrf.mxu0
    %v4324 = vpop.f32.mrf.mxu0
    %v4325 = vpop.f32.mrf.mxu0
    %4326 = vdwg.mxu0
    %v4328 = vsel %vm3135, %v3505, 0
    %v4331 = vsel %vm3539, %v4274, 0
    %4333 = vmatprep.subr.bf16.mxu0 0
    %4334 = vmatpush1.bf16.msra.mxu0 0
    %4335 = vmatprep.subr.bf16.mxu0 0
    %4336 = vmatpush1.bf16.msra.mxu0 0
    %4337 = vmatprep.subr.bf16.mxu0 0
    %4338 = vmatpush1.bf16.msra.mxu0 0
    %4339 = vmatprep.subr.bf16.mxu0 0
    %4340 = vmatpush1.bf16.msra.mxu0 0
    %4341 = vmatprep.subr.bf16.mxu0 0
    %4342 = vmatpush1.bf16.msra.mxu0 0
    %4343 = vmatprep.subr.bf16.mxu0 0
    %4344 = vmatpush1.bf16.msra.mxu0 0
    %4345 = vmatprep.subr.bf16.mxu0 0
    %4346 = vmatpush1.bf16.msra.mxu0 0
    %4347 = vmatprep.subr.bf16.mxu0 0
    %4348 = vmatpush1.bf16.msra.mxu0 %v4331
    %4349 = vmatprep.subr.bf16.mxu0 0
    %4350 = vmatpush2.bf16.msra.mxu0 0
    %4351 = vmatprep.subr.bf16.mxu0 0
    %4352 = vmatpush2.bf16.msra.mxu0 0
    %4353 = vmatprep.subr.bf16.mxu0 0
    %4354 = vmatpush2.bf16.msra.mxu0 0
    %4355 = vmatprep.subr.bf16.mxu0 0
    %4356 = vmatpush2.bf16.msra.mxu0 0
    %4357 = vmatprep.subr.bf16.mxu0 0
    %4358 = vmatpush2.bf16.msra.mxu0 0
    %4359 = vmatprep.subr.bf16.mxu0 0
    %4360 = vmatpush2.bf16.msra.mxu0 0
    %4361 = vmatprep.subr.bf16.mxu0 0
    %4362 = vmatpush2.bf16.msra.mxu0 0
    %4363 = vmatprep.subr.bf16.mxu0 0
    %4364 = vmatpush2.bf16.msra.mxu0 0
    %4365 = vmatprep.mubr.bf16.mxu0 0
    %4366 = vmatmul.mubr.bf16.gmra.mxu0 %v4328
    %v4367 = vpop.f32.mrf.mxu0
    %v4368 = vadd.f32 0.0, %v4367
    %v4369 = vpop.f32.mrf.mxu0
    %v4370 = vpop.f32.mrf.mxu0
    %v4371 = vpop.f32.mrf.mxu0
    %4372 = vdwg.mxu0
    %v4374 = vsel %vm3135, %v3506, 0
    %v4377 = vsel %vm3539, %v4275, 0
    %4379 = vmatprep.subr.bf16.mxu0 0
    %4380 = vmatpush1.bf16.msra.mxu0 0
    %4381 = vmatprep.subr.bf16.mxu0 0
    %4382 = vmatpush1.bf16.msra.mxu0 0
    %4383 = vmatprep.subr.bf16.mxu0 0
    %4384 = vmatpush1.bf16.msra.mxu0 0
    %4385 = vmatprep.subr.bf16.mxu0 0
    %4386 = vmatpush1.bf16.msra.mxu0 0
    %4387 = vmatprep.subr.bf16.mxu0 0
    %4388 = vmatpush1.bf16.msra.mxu0 0
    %4389 = vmatprep.subr.bf16.mxu0 0
    %4390 = vmatpush1.bf16.msra.mxu0 0
    %4391 = vmatprep.subr.bf16.mxu0 0
    %4392 = vmatpush1.bf16.msra.mxu0 0
    %4393 = vmatprep.subr.bf16.mxu0 0
    %4394 = vmatpush1.bf16.msra.mxu0 %v4377
    %4395 = vmatprep.subr.bf16.mxu0 0
    %4396 = vmatpush2.bf16.msra.mxu0 0
    %4397 = vmatprep.subr.bf16.mxu0 0
    %4398 = vmatpush2.bf16.msra.mxu0 0
    %4399 = vmatprep.subr.bf16.mxu0 0
    %4400 = vmatpush2.bf16.msra.mxu0 0
    %4401 = vmatprep.subr.bf16.mxu0 0
    %4402 = vmatpush2.bf16.msra.mxu0 0
    %4403 = vmatprep.subr.bf16.mxu0 0
    %4404 = vmatpush2.bf16.msra.mxu0 0
    %4405 = vmatprep.subr.bf16.mxu0 0
    %4406 = vmatpush2.bf16.msra.mxu0 0
    %4407 = vmatprep.subr.bf16.mxu0 0
    %4408 = vmatpush2.bf16.msra.mxu0 0
    %4409 = vmatprep.subr.bf16.mxu0 0
    %4410 = vmatpush2.bf16.msra.mxu0 0
    %4411 = vmatprep.mubr.bf16.mxu0 0
    %4412 = vmatmul.mubr.bf16.gmra.mxu0 %v4374
    %v4413 = vpop.f32.mrf.mxu0
    %v4414 = vadd.f32 0.0, %v4413
    %v4415 = vpop.f32.mrf.mxu0
    %v4416 = vpop.f32.mrf.mxu0
    %v4417 = vpop.f32.mrf.mxu0
    %4418 = vdwg.mxu0
    %v4420 = vsel %vm3135, %v3507, 0
    %v4423 = vsel %vm3539, %v4276, 0
    %4425 = vmatprep.subr.bf16.mxu0 0
    %4426 = vmatpush1.bf16.msra.mxu0 0
    %4427 = vmatprep.subr.bf16.mxu0 0
    %4428 = vmatpush1.bf16.msra.mxu0 0
    %4429 = vmatprep.subr.bf16.mxu0 0
    %4430 = vmatpush1.bf16.msra.mxu0 0
    %4431 = vmatprep.subr.bf16.mxu0 0
    %4432 = vmatpush1.bf16.msra.mxu0 0
    %4433 = vmatprep.subr.bf16.mxu0 0
    %4434 = vmatpush1.bf16.msra.mxu0 0
    %4435 = vmatprep.subr.bf16.mxu0 0
    %4436 = vmatpush1.bf16.msra.mxu0 0
    %4437 = vmatprep.subr.bf16.mxu0 0
    %4438 = vmatpush1.bf16.msra.mxu0 0
    %4439 = vmatprep.subr.bf16.mxu0 0
    %4440 = vmatpush1.bf16.msra.mxu0 %v4423
    %4441 = vmatprep.subr.bf16.mxu0 0
    %4442 = vmatpush2.bf16.msra.mxu0 0
    %4443 = vmatprep.subr.bf16.mxu0 0
    %4444 = vmatpush2.bf16.msra.mxu0 0
    %4445 = vmatprep.subr.bf16.mxu0 0
    %4446 = vmatpush2.bf16.msra.mxu0 0
    %4447 = vmatprep.subr.bf16.mxu0 0
    %4448 = vmatpush2.bf16.msra.mxu0 0
    %4449 = vmatprep.subr.bf16.mxu0 0
    %4450 = vmatpush2.bf16.msra.mxu0 0
    %4451 = vmatprep.subr.bf16.mxu0 0
    %4452 = vmatpush2.bf16.msra.mxu0 0
    %4453 = vmatprep.subr.bf16.mxu0 0
    %4454 = vmatpush2.bf16.msra.mxu0 0
    %4455 = vmatprep.subr.bf16.mxu0 0
    %4456 = vmatpush2.bf16.msra.mxu0 0
    %4457 = vmatprep.mubr.bf16.mxu0 0
    %4458 = vmatmul.mubr.bf16.gmra.mxu0 %v4420
    %v4459 = vpop.f32.mrf.mxu0
    %v4460 = vadd.f32 0.0, %v4459
    %v4461 = vpop.f32.mrf.mxu0
    %v4462 = vpop.f32.mrf.mxu0
    %v4463 = vpop.f32.mrf.mxu0
    %4464 = vdwg.mxu0
    %v4466 = vsel %vm3135, %v3508, 0
    %v4469 = vsel %vm3539, %v4277, 0
    %4471 = vmatprep.subr.bf16.mxu0 0
    %4472 = vmatpush1.bf16.msra.mxu0 0
    %4473 = vmatprep.subr.bf16.mxu0 0
    %4474 = vmatpush1.bf16.msra.mxu0 0
    %4475 = vmatprep.subr.bf16.mxu0 0
    %4476 = vmatpush1.bf16.msra.mxu0 0
    %4477 = vmatprep.subr.bf16.mxu0 0
    %4478 = vmatpush1.bf16.msra.mxu0 0
    %4479 = vmatprep.subr.bf16.mxu0 0
    %4480 = vmatpush1.bf16.msra.mxu0 0
    %4481 = vmatprep.subr.bf16.mxu0 0
    %4482 = vmatpush1.bf16.msra.mxu0 0
    %4483 = vmatprep.subr.bf16.mxu0 0
    %4484 = vmatpush1.bf16.msra.mxu0 0
    %4485 = vmatprep.subr.bf16.mxu0 0
    %4486 = vmatpush1.bf16.msra.mxu0 %v4469
    %4487 = vmatprep.subr.bf16.mxu0 0
    %4488 = vmatpush2.bf16.msra.mxu0 0
    %4489 = vmatprep.subr.bf16.mxu0 0
    %4490 = vmatpush2.bf16.msra.mxu0 0
    %4491 = vmatprep.subr.bf16.mxu0 0
    %4492 = vmatpush2.bf16.msra.mxu0 0
    %4493 = vmatprep.subr.bf16.mxu0 0
    %4494 = vmatpush2.bf16.msra.mxu0 0
    %4495 = vmatprep.subr.bf16.mxu0 0
    %4496 = vmatpush2.bf16.msra.mxu0 0
    %4497 = vmatprep.subr.bf16.mxu0 0
    %4498 = vmatpush2.bf16.msra.mxu0 0
    %4499 = vmatprep.subr.bf16.mxu0 0
    %4500 = vmatpush2.bf16.msra.mxu0 0
    %4501 = vmatprep.subr.bf16.mxu0 0
    %4502 = vmatpush2.bf16.msra.mxu0 0
    %4503 = vmatprep.mubr.bf16.mxu0 0
    %4504 = vmatmul.mubr.bf16.gmra.mxu0 %v4466
    %v4505 = vpop.f32.mrf.mxu0
    %v4506 = vadd.f32 0.0, %v4505
    %v4507 = vpop.f32.mrf.mxu0
    %v4508 = vpop.f32.mrf.mxu0
    %v4509 = vpop.f32.mrf.mxu0
    %4510 = vdwg.mxu0
    %v4512 = vsel %vm3135, %v3509, 0
    %v4515 = vsel %vm3539, %v4278, 0
    %4517 = vmatprep.subr.bf16.mxu0 0
    %4518 = vmatpush1.bf16.msra.mxu0 0
    %4519 = vmatprep.subr.bf16.mxu0 0
    %4520 = vmatpush1.bf16.msra.mxu0 0
    %4521 = vmatprep.subr.bf16.mxu0 0
    %4522 = vmatpush1.bf16.msra.mxu0 0
    %4523 = vmatprep.subr.bf16.mxu0 0
    %4524 = vmatpush1.bf16.msra.mxu0 0
    %4525 = vmatprep.subr.bf16.mxu0 0
    %4526 = vmatpush1.bf16.msra.mxu0 0
    %4527 = vmatprep.subr.bf16.mxu0 0
    %4528 = vmatpush1.bf16.msra.mxu0 0
    %4529 = vmatprep.subr.bf16.mxu0 0
    %4530 = vmatpush1.bf16.msra.mxu0 0
    %4531 = vmatprep.subr.bf16.mxu0 0
    %4532 = vmatpush1.bf16.msra.mxu0 %v4515
    %4533 = vmatprep.subr.bf16.mxu0 0
    %4534 = vmatpush2.bf16.msra.mxu0 0
    %4535 = vmatprep.subr.bf16.mxu0 0
    %4536 = vmatpush2.bf16.msra.mxu0 0
    %4537 = vmatprep.subr.bf16.mxu0 0
    %4538 = vmatpush2.bf16.msra.mxu0 0
    %4539 = vmatprep.subr.bf16.mxu0 0
    %4540 = vmatpush2.bf16.msra.mxu0 0
    %4541 = vmatprep.subr.bf16.mxu0 0
    %4542 = vmatpush2.bf16.msra.mxu0 0
    %4543 = vmatprep.subr.bf16.mxu0 0
    %4544 = vmatpush2.bf16.msra.mxu0 0
    %4545 = vmatprep.subr.bf16.mxu0 0
    %4546 = vmatpush2.bf16.msra.mxu0 0
    %4547 = vmatprep.subr.bf16.mxu0 0
    %4548 = vmatpush2.bf16.msra.mxu0 0
    %4549 = vmatprep.mubr.bf16.mxu0 0
    %4550 = vmatmul.mubr.bf16.gmra.mxu0 %v4512
    %v4551 = vpop.f32.mrf.mxu0
    %v4552 = vadd.f32 0.0, %v4551
    %v4553 = vpop.f32.mrf.mxu0
    %v4554 = vpop.f32.mrf.mxu0
    %v4555 = vpop.f32.mrf.mxu0
    %4556 = vdwg.mxu0
    %v4558 = vsel %vm3135, %v3510, 0
    %v4561 = vsel %vm3539, %v4279, 0
    %4563 = vmatprep.subr.bf16.mxu0 0
    %4564 = vmatpush1.bf16.msra.mxu0 0
    %4565 = vmatprep.subr.bf16.mxu0 0
    %4566 = vmatpush1.bf16.msra.mxu0 0
    %4567 = vmatprep.subr.bf16.mxu0 0
    %4568 = vmatpush1.bf16.msra.mxu0 0
    %4569 = vmatprep.subr.bf16.mxu0 0
    %4570 = vmatpush1.bf16.msra.mxu0 0
    %4571 = vmatprep.subr.bf16.mxu0 0
    %4572 = vmatpush1.bf16.msra.mxu0 0
    %4573 = vmatprep.subr.bf16.mxu0 0
    %4574 = vmatpush1.bf16.msra.mxu0 0
    %4575 = vmatprep.subr.bf16.mxu0 0
    %4576 = vmatpush1.bf16.msra.mxu0 0
    %4577 = vmatprep.subr.bf16.mxu0 0
    %4578 = vmatpush1.bf16.msra.mxu0 %v4561
    %4579 = vmatprep.subr.bf16.mxu0 0
    %4580 = vmatpush2.bf16.msra.mxu0 0
    %4581 = vmatprep.subr.bf16.mxu0 0
    %4582 = vmatpush2.bf16.msra.mxu0 0
    %4583 = vmatprep.subr.bf16.mxu0 0
    %4584 = vmatpush2.bf16.msra.mxu0 0
    %4585 = vmatprep.subr.bf16.mxu0 0
    %4586 = vmatpush2.bf16.msra.mxu0 0
    %4587 = vmatprep.subr.bf16.mxu0 0
    %4588 = vmatpush2.bf16.msra.mxu0 0
    %4589 = vmatprep.subr.bf16.mxu0 0
    %4590 = vmatpush2.bf16.msra.mxu0 0
    %4591 = vmatprep.subr.bf16.mxu0 0
    %4592 = vmatpush2.bf16.msra.mxu0 0
    %4593 = vmatprep.subr.bf16.mxu0 0
    %4594 = vmatpush2.bf16.msra.mxu0 0
    %4595 = vmatprep.mubr.bf16.mxu0 0
    %4596 = vmatmul.mubr.bf16.gmra.mxu0 %v4558
    %v4597 = vpop.f32.mrf.mxu0
    %v4598 = vadd.f32 0.0, %v4597
    %v4599 = vpop.f32.mrf.mxu0
    %v4600 = vpop.f32.mrf.mxu0
    %v4601 = vpop.f32.mrf.mxu0
    %4602 = vdwg.mxu0
    %v4604 = vsel %vm3135, %v3511, 0
    %v4607 = vsel %vm3539, %v4280, 0
    %4609 = vmatprep.subr.bf16.mxu0 0
    %4610 = vmatpush1.bf16.msra.mxu0 0
    %4611 = vmatprep.subr.bf16.mxu0 0
    %4612 = vmatpush1.bf16.msra.mxu0 0
    %4613 = vmatprep.subr.bf16.mxu0 0
    %4614 = vmatpush1.bf16.msra.mxu0 0
    %4615 = vmatprep.subr.bf16.mxu0 0
    %4616 = vmatpush1.bf16.msra.mxu0 0
    %4617 = vmatprep.subr.bf16.mxu0 0
    %4618 = vmatpush1.bf16.msra.mxu0 0
    %4619 = vmatprep.subr.bf16.mxu0 0
    %4620 = vmatpush1.bf16.msra.mxu0 0
    %4621 = vmatprep.subr.bf16.mxu0 0
    %4622 = vmatpush1.bf16.msra.mxu0 0
    %4623 = vmatprep.subr.bf16.mxu0 0
    %4624 = vmatpush1.bf16.msra.mxu0 %v4607
    %4625 = vmatprep.subr.bf16.mxu0 0
    %4626 = vmatpush2.bf16.msra.mxu0 0
    %4627 = vmatprep.subr.bf16.mxu0 0
    %4628 = vmatpush2.bf16.msra.mxu0 0
    %4629 = vmatprep.subr.bf16.mxu0 0
    %4630 = vmatpush2.bf16.msra.mxu0 0
    %4631 = vmatprep.subr.bf16.mxu0 0
    %4632 = vmatpush2.bf16.msra.mxu0 0
    %4633 = vmatprep.subr.bf16.mxu0 0
    %4634 = vmatpush2.bf16.msra.mxu0 0
    %4635 = vmatprep.subr.bf16.mxu0 0
    %4636 = vmatpush2.bf16.msra.mxu0 0
    %4637 = vmatprep.subr.bf16.mxu0 0
    %4638 = vmatpush2.bf16.msra.mxu0 0
    %4639 = vmatprep.subr.bf16.mxu0 0
    %4640 = vmatpush2.bf16.msra.mxu0 0
    %4641 = vmatprep.mubr.bf16.mxu0 0
    %4642 = vmatmul.mubr.bf16.gmra.mxu0 %v4604
    %v4643 = vpop.f32.mrf.mxu0
    %v4644 = vadd.f32 0.0, %v4643
    %v4645 = vpop.f32.mrf.mxu0
    %v4646 = vpop.f32.mrf.mxu0
    %v4647 = vpop.f32.mrf.mxu0
    %4648 = vdwg.mxu0
    %v4649 = vadd.f32 %v3946, %v4322
    %v4650 = vadd.f32 %v3992, %v4368
    %v4651 = vadd.f32 %v4038, %v4414
    %v4652 = vadd.f32 %v4084, %v4460
    %v4653 = vadd.f32 %v4130, %v4506
    %v4654 = vadd.f32 %v4176, %v4552
    %v4655 = vadd.f32 %v4222, %v4598
    %v4656 = vadd.f32 %v4268, %v4644
    %v4657 = vpack.c.bf16 %v1410, %v1410
    %v4658 = vpack.c.bf16 %v1414, %v1414
    %v4659 = vpack.c.bf16 %v1420, %v1420
    %v4660 = vpack.c.bf16 %v1424, %v1424
    %v4661 = vpack.c.bf16 %v1430, %v1430
    %v4662 = vpack.c.bf16 %v1434, %v1434
    %v4663 = vpack.c.bf16 %v1440, %v1440
    %v4664 = vpack.c.bf16 %v1444, %v1444
    %v4666 = vsel %vm3135, %v3512, 0
    %v4669 = vsel %vm3539, %v4657, 0
    %4671 = vmatprep.subr.bf16.mxu0 0
    %4672 = vmatpush1.bf16.msra.mxu0 0
    %4673 = vmatprep.subr.bf16.mxu0 0
    %4674 = vmatpush1.bf16.msra.mxu0 0
    %4675 = vmatprep.subr.bf16.mxu0 0
    %4676 = vmatpush1.bf16.msra.mxu0 0
    %4677 = vmatprep.subr.bf16.mxu0 0
    %4678 = vmatpush1.bf16.msra.mxu0 0
    %4679 = vmatprep.subr.bf16.mxu0 0
    %4680 = vmatpush1.bf16.msra.mxu0 0
    %4681 = vmatprep.subr.bf16.mxu0 0
    %4682 = vmatpush1.bf16.msra.mxu0 0
    %4683 = vmatprep.subr.bf16.mxu0 0
    %4684 = vmatpush1.bf16.msra.mxu0 0
    %4685 = vmatprep.subr.bf16.mxu0 0
    %4686 = vmatpush1.bf16.msra.mxu0 %v4669
    %4687 = vmatprep.subr.bf16.mxu0 0
    %4688 = vmatpush2.bf16.msra.mxu0 0
    %4689 = vmatprep.subr.bf16.mxu0 0
    %4690 = vmatpush2.bf16.msra.mxu0 0
    %4691 = vmatprep.subr.bf16.mxu0 0
    %4692 = vmatpush2.bf16.msra.mxu0 0
    %4693 = vmatprep.subr.bf16.mxu0 0
    %4694 = vmatpush2.bf16.msra.mxu0 0
    %4695 = vmatprep.subr.bf16.mxu0 0
    %4696 = vmatpush2.bf16.msra.mxu0 0
    %4697 = vmatprep.subr.bf16.mxu0 0
    %4698 = vmatpush2.bf16.msra.mxu0 0
    %4699 = vmatprep.subr.bf16.mxu0 0
    %4700 = vmatpush2.bf16.msra.mxu0 0
    %4701 = vmatprep.subr.bf16.mxu0 0
    %4702 = vmatpush2.bf16.msra.mxu0 0
    %4703 = vmatprep.mubr.bf16.mxu0 0
    %4704 = vmatmul.mubr.bf16.gmra.mxu0 %v4666
    %v4705 = vpop.f32.mrf.mxu0
    %v4706 = vadd.f32 0.0, %v4705
    %v4707 = vpop.f32.mrf.mxu0
    %v4708 = vpop.f32.mrf.mxu0
    %v4709 = vpop.f32.mrf.mxu0
    %4710 = vdwg.mxu0
    %v4712 = vsel %vm3135, %v3513, 0
    %v4715 = vsel %vm3539, %v4658, 0
    %4717 = vmatprep.subr.bf16.mxu0 0
    %4718 = vmatpush1.bf16.msra.mxu0 0
    %4719 = vmatprep.subr.bf16.mxu0 0
    %4720 = vmatpush1.bf16.msra.mxu0 0
    %4721 = vmatprep.subr.bf16.mxu0 0
    %4722 = vmatpush1.bf16.msra.mxu0 0
    %4723 = vmatprep.subr.bf16.mxu0 0
    %4724 = vmatpush1.bf16.msra.mxu0 0
    %4725 = vmatprep.subr.bf16.mxu0 0
    %4726 = vmatpush1.bf16.msra.mxu0 0
    %4727 = vmatprep.subr.bf16.mxu0 0
    %4728 = vmatpush1.bf16.msra.mxu0 0
    %4729 = vmatprep.subr.bf16.mxu0 0
    %4730 = vmatpush1.bf16.msra.mxu0 0
    %4731 = vmatprep.subr.bf16.mxu0 0
    %4732 = vmatpush1.bf16.msra.mxu0 %v4715
    %4733 = vmatprep.subr.bf16.mxu0 0
    %4734 = vmatpush2.bf16.msra.mxu0 0
    %4735 = vmatprep.subr.bf16.mxu0 0
    %4736 = vmatpush2.bf16.msra.mxu0 0
    %4737 = vmatprep.subr.bf16.mxu0 0
    %4738 = vmatpush2.bf16.msra.mxu0 0
    %4739 = vmatprep.subr.bf16.mxu0 0
    %4740 = vmatpush2.bf16.msra.mxu0 0
    %4741 = vmatprep.subr.bf16.mxu0 0
    %4742 = vmatpush2.bf16.msra.mxu0 0
    %4743 = vmatprep.subr.bf16.mxu0 0
    %4744 = vmatpush2.bf16.msra.mxu0 0
    %4745 = vmatprep.subr.bf16.mxu0 0
    %4746 = vmatpush2.bf16.msra.mxu0 0
    %4747 = vmatprep.subr.bf16.mxu0 0
    %4748 = vmatpush2.bf16.msra.mxu0 0
    %4749 = vmatprep.mubr.bf16.mxu0 0
    %4750 = vmatmul.mubr.bf16.gmra.mxu0 %v4712
    %v4751 = vpop.f32.mrf.mxu0
    %v4752 = vadd.f32 0.0, %v4751
    %v4753 = vpop.f32.mrf.mxu0
    %v4754 = vpop.f32.mrf.mxu0
    %v4755 = vpop.f32.mrf.mxu0
    %4756 = vdwg.mxu0
    %v4758 = vsel %vm3135, %v3514, 0
    %v4761 = vsel %vm3539, %v4659, 0
    %4763 = vmatprep.subr.bf16.mxu0 0
    %4764 = vmatpush1.bf16.msra.mxu0 0
    %4765 = vmatprep.subr.bf16.mxu0 0
    %4766 = vmatpush1.bf16.msra.mxu0 0
    %4767 = vmatprep.subr.bf16.mxu0 0
    %4768 = vmatpush1.bf16.msra.mxu0 0
    %4769 = vmatprep.subr.bf16.mxu0 0
    %4770 = vmatpush1.bf16.msra.mxu0 0
    %4771 = vmatprep.subr.bf16.mxu0 0
    %4772 = vmatpush1.bf16.msra.mxu0 0
    %4773 = vmatprep.subr.bf16.mxu0 0
    %4774 = vmatpush1.bf16.msra.mxu0 0
    %4775 = vmatprep.subr.bf16.mxu0 0
    %4776 = vmatpush1.bf16.msra.mxu0 0
    %4777 = vmatprep.subr.bf16.mxu0 0
    %4778 = vmatpush1.bf16.msra.mxu0 %v4761
    %4779 = vmatprep.subr.bf16.mxu0 0
    %4780 = vmatpush2.bf16.msra.mxu0 0
    %4781 = vmatprep.subr.bf16.mxu0 0
    %4782 = vmatpush2.bf16.msra.mxu0 0
    %4783 = vmatprep.subr.bf16.mxu0 0
    %4784 = vmatpush2.bf16.msra.mxu0 0
    %4785 = vmatprep.subr.bf16.mxu0 0
    %4786 = vmatpush2.bf16.msra.mxu0 0
    %4787 = vmatprep.subr.bf16.mxu0 0
    %4788 = vmatpush2.bf16.msra.mxu0 0
    %4789 = vmatprep.subr.bf16.mxu0 0
    %4790 = vmatpush2.bf16.msra.mxu0 0
    %4791 = vmatprep.subr.bf16.mxu0 0
    %4792 = vmatpush2.bf16.msra.mxu0 0
    %4793 = vmatprep.subr.bf16.mxu0 0
    %4794 = vmatpush2.bf16.msra.mxu0 0
    %4795 = vmatprep.mubr.bf16.mxu0 0
    %4796 = vmatmul.mubr.bf16.gmra.mxu0 %v4758
    %v4797 = vpop.f32.mrf.mxu0
    %v4798 = vadd.f32 0.0, %v4797
    %v4799 = vpop.f32.mrf.mxu0
    %v4800 = vpop.f32.mrf.mxu0
    %v4801 = vpop.f32.mrf.mxu0
    %4802 = vdwg.mxu0
    %v4804 = vsel %vm3135, %v3515, 0
    %v4807 = vsel %vm3539, %v4660, 0
    %4809 = vmatprep.subr.bf16.mxu0 0
    %4810 = vmatpush1.bf16.msra.mxu0 0
    %4811 = vmatprep.subr.bf16.mxu0 0
    %4812 = vmatpush1.bf16.msra.mxu0 0
    %4813 = vmatprep.subr.bf16.mxu0 0
    %4814 = vmatpush1.bf16.msra.mxu0 0
    %4815 = vmatprep.subr.bf16.mxu0 0
    %4816 = vmatpush1.bf16.msra.mxu0 0
    %4817 = vmatprep.subr.bf16.mxu0 0
    %4818 = vmatpush1.bf16.msra.mxu0 0
    %4819 = vmatprep.subr.bf16.mxu0 0
    %4820 = vmatpush1.bf16.msra.mxu0 0
    %4821 = vmatprep.subr.bf16.mxu0 0
    %4822 = vmatpush1.bf16.msra.mxu0 0
    %4823 = vmatprep.subr.bf16.mxu0 0
    %4824 = vmatpush1.bf16.msra.mxu0 %v4807
    %4825 = vmatprep.subr.bf16.mxu0 0
    %4826 = vmatpush2.bf16.msra.mxu0 0
    %4827 = vmatprep.subr.bf16.mxu0 0
    %4828 = vmatpush2.bf16.msra.mxu0 0
    %4829 = vmatprep.subr.bf16.mxu0 0
    %4830 = vmatpush2.bf16.msra.mxu0 0
    %4831 = vmatprep.subr.bf16.mxu0 0
    %4832 = vmatpush2.bf16.msra.mxu0 0
    %4833 = vmatprep.subr.bf16.mxu0 0
    %4834 = vmatpush2.bf16.msra.mxu0 0
    %4835 = vmatprep.subr.bf16.mxu0 0
    %4836 = vmatpush2.bf16.msra.mxu0 0
    %4837 = vmatprep.subr.bf16.mxu0 0
    %4838 = vmatpush2.bf16.msra.mxu0 0
    %4839 = vmatprep.subr.bf16.mxu0 0
    %4840 = vmatpush2.bf16.msra.mxu0 0
    %4841 = vmatprep.mubr.bf16.mxu0 0
    %4842 = vmatmul.mubr.bf16.gmra.mxu0 %v4804
    %v4843 = vpop.f32.mrf.mxu0
    %v4844 = vadd.f32 0.0, %v4843
    %v4845 = vpop.f32.mrf.mxu0
    %v4846 = vpop.f32.mrf.mxu0
    %v4847 = vpop.f32.mrf.mxu0
    %4848 = vdwg.mxu0
    %v4850 = vsel %vm3135, %v3516, 0
    %v4853 = vsel %vm3539, %v4661, 0
    %4855 = vmatprep.subr.bf16.mxu0 0
    %4856 = vmatpush1.bf16.msra.mxu0 0
    %4857 = vmatprep.subr.bf16.mxu0 0
    %4858 = vmatpush1.bf16.msra.mxu0 0
    %4859 = vmatprep.subr.bf16.mxu0 0
    %4860 = vmatpush1.bf16.msra.mxu0 0
    %4861 = vmatprep.subr.bf16.mxu0 0
    %4862 = vmatpush1.bf16.msra.mxu0 0
    %4863 = vmatprep.subr.bf16.mxu0 0
    %4864 = vmatpush1.bf16.msra.mxu0 0
    %4865 = vmatprep.subr.bf16.mxu0 0
    %4866 = vmatpush1.bf16.msra.mxu0 0
    %4867 = vmatprep.subr.bf16.mxu0 0
    %4868 = vmatpush1.bf16.msra.mxu0 0
    %4869 = vmatprep.subr.bf16.mxu0 0
    %4870 = vmatpush1.bf16.msra.mxu0 %v4853
    %4871 = vmatprep.subr.bf16.mxu0 0
    %4872 = vmatpush2.bf16.msra.mxu0 0
    %4873 = vmatprep.subr.bf16.mxu0 0
    %4874 = vmatpush2.bf16.msra.mxu0 0
    %4875 = vmatprep.subr.bf16.mxu0 0
    %4876 = vmatpush2.bf16.msra.mxu0 0
    %4877 = vmatprep.subr.bf16.mxu0 0
    %4878 = vmatpush2.bf16.msra.mxu0 0
    %4879 = vmatprep.subr.bf16.mxu0 0
    %4880 = vmatpush2.bf16.msra.mxu0 0
    %4881 = vmatprep.subr.bf16.mxu0 0
    %4882 = vmatpush2.bf16.msra.mxu0 0
    %4883 = vmatprep.subr.bf16.mxu0 0
    %4884 = vmatpush2.bf16.msra.mxu0 0
    %4885 = vmatprep.subr.bf16.mxu0 0
    %4886 = vmatpush2.bf16.msra.mxu0 0
    %4887 = vmatprep.mubr.bf16.mxu0 0
    %4888 = vmatmul.mubr.bf16.gmra.mxu0 %v4850
    %v4889 = vpop.f32.mrf.mxu0
    %v4890 = vadd.f32 0.0, %v4889
    %v4891 = vpop.f32.mrf.mxu0
    %v4892 = vpop.f32.mrf.mxu0
    %v4893 = vpop.f32.mrf.mxu0
    %4894 = vdwg.mxu0
    %v4896 = vsel %vm3135, %v3517, 0
    %v4899 = vsel %vm3539, %v4662, 0
    %4901 = vmatprep.subr.bf16.mxu0 0
    %4902 = vmatpush1.bf16.msra.mxu0 0
    %4903 = vmatprep.subr.bf16.mxu0 0
    %4904 = vmatpush1.bf16.msra.mxu0 0
    %4905 = vmatprep.subr.bf16.mxu0 0
    %4906 = vmatpush1.bf16.msra.mxu0 0
    %4907 = vmatprep.subr.bf16.mxu0 0
    %4908 = vmatpush1.bf16.msra.mxu0 0
    %4909 = vmatprep.subr.bf16.mxu0 0
    %4910 = vmatpush1.bf16.msra.mxu0 0
    %4911 = vmatprep.subr.bf16.mxu0 0
    %4912 = vmatpush1.bf16.msra.mxu0 0
    %4913 = vmatprep.subr.bf16.mxu0 0
    %4914 = vmatpush1.bf16.msra.mxu0 0
    %4915 = vmatprep.subr.bf16.mxu0 0
    %4916 = vmatpush1.bf16.msra.mxu0 %v4899
    %4917 = vmatprep.subr.bf16.mxu0 0
    %4918 = vmatpush2.bf16.msra.mxu0 0
    %4919 = vmatprep.subr.bf16.mxu0 0
    %4920 = vmatpush2.bf16.msra.mxu0 0
    %4921 = vmatprep.subr.bf16.mxu0 0
    %4922 = vmatpush2.bf16.msra.mxu0 0
    %4923 = vmatprep.subr.bf16.mxu0 0
    %4924 = vmatpush2.bf16.msra.mxu0 0
    %4925 = vmatprep.subr.bf16.mxu0 0
    %4926 = vmatpush2.bf16.msra.mxu0 0
    %4927 = vmatprep.subr.bf16.mxu0 0
    %4928 = vmatpush2.bf16.msra.mxu0 0
    %4929 = vmatprep.subr.bf16.mxu0 0
    %4930 = vmatpush2.bf16.msra.mxu0 0
    %4931 = vmatprep.subr.bf16.mxu0 0
    %4932 = vmatpush2.bf16.msra.mxu0 0
    %4933 = vmatprep.mubr.bf16.mxu0 0
    %4934 = vmatmul.mubr.bf16.gmra.mxu0 %v4896
    %v4935 = vpop.f32.mrf.mxu0
    %v4936 = vadd.f32 0.0, %v4935
    %v4937 = vpop.f32.mrf.mxu0
    %v4938 = vpop.f32.mrf.mxu0
    %v4939 = vpop.f32.mrf.mxu0
    %4940 = vdwg.mxu0
    %v4942 = vsel %vm3135, %v3518, 0
    %v4945 = vsel %vm3539, %v4663, 0
    %4947 = vmatprep.subr.bf16.mxu0 0
    %4948 = vmatpush1.bf16.msra.mxu0 0
    %4949 = vmatprep.subr.bf16.mxu0 0
    %4950 = vmatpush1.bf16.msra.mxu0 0
    %4951 = vmatprep.subr.bf16.mxu0 0
    %4952 = vmatpush1.bf16.msra.mxu0 0
    %4953 = vmatprep.subr.bf16.mxu0 0
    %4954 = vmatpush1.bf16.msra.mxu0 0
    %4955 = vmatprep.subr.bf16.mxu0 0
    %4956 = vmatpush1.bf16.msra.mxu0 0
    %4957 = vmatprep.subr.bf16.mxu0 0
    %4958 = vmatpush1.bf16.msra.mxu0 0
    %4959 = vmatprep.subr.bf16.mxu0 0
    %4960 = vmatpush1.bf16.msra.mxu0 0
    %4961 = vmatprep.subr.bf16.mxu0 0
    %4962 = vmatpush1.bf16.msra.mxu0 %v4945
    %4963 = vmatprep.subr.bf16.mxu0 0
    %4964 = vmatpush2.bf16.msra.mxu0 0
    %4965 = vmatprep.subr.bf16.mxu0 0
    %4966 = vmatpush2.bf16.msra.mxu0 0
    %4967 = vmatprep.subr.bf16.mxu0 0
    %4968 = vmatpush2.bf16.msra.mxu0 0
    %4969 = vmatprep.subr.bf16.mxu0 0
    %4970 = vmatpush2.bf16.msra.mxu0 0
    %4971 = vmatprep.subr.bf16.mxu0 0
    %4972 = vmatpush2.bf16.msra.mxu0 0
    %4973 = vmatprep.subr.bf16.mxu0 0
    %4974 = vmatpush2.bf16.msra.mxu0 0
    %4975 = vmatprep.subr.bf16.mxu0 0
    %4976 = vmatpush2.bf16.msra.mxu0 0
    %4977 = vmatprep.subr.bf16.mxu0 0
    %4978 = vmatpush2.bf16.msra.mxu0 0
    %4979 = vmatprep.mubr.bf16.mxu0 0
    %4980 = vmatmul.mubr.bf16.gmra.mxu0 %v4942
    %v4981 = vpop.f32.mrf.mxu0
    %v4982 = vadd.f32 0.0, %v4981
    %v4983 = vpop.f32.mrf.mxu0
    %v4984 = vpop.f32.mrf.mxu0
    %v4985 = vpop.f32.mrf.mxu0
    %4986 = vdwg.mxu0
    %v4988 = vsel %vm3135, %v3519, 0
    %v4991 = vsel %vm3539, %v4664, 0
    %4993 = vmatprep.subr.bf16.mxu0 0
    %4994 = vmatpush1.bf16.msra.mxu0 0
    %4995 = vmatprep.subr.bf16.mxu0 0
    %4996 = vmatpush1.bf16.msra.mxu0 0
    %4997 = vmatprep.subr.bf16.mxu0 0
    %4998 = vmatpush1.bf16.msra.mxu0 0
    %4999 = vmatprep.subr.bf16.mxu0 0
    %5000 = vmatpush1.bf16.msra.mxu0 0
    %5001 = vmatprep.subr.bf16.mxu0 0
    %5002 = vmatpush1.bf16.msra.mxu0 0
    %5003 = vmatprep.subr.bf16.mxu0 0
    %5004 = vmatpush1.bf16.msra.mxu0 0
    %5005 = vmatprep.subr.bf16.mxu0 0
    %5006 = vmatpush1.bf16.msra.mxu0 0
    %5007 = vmatprep.subr.bf16.mxu0 0
    %5008 = vmatpush1.bf16.msra.mxu0 %v4991
    %5009 = vmatprep.subr.bf16.mxu0 0
    %5010 = vmatpush2.bf16.msra.mxu0 0
    %5011 = vmatprep.subr.bf16.mxu0 0
    %5012 = vmatpush2.bf16.msra.mxu0 0
    %5013 = vmatprep.subr.bf16.mxu0 0
    %5014 = vmatpush2.bf16.msra.mxu0 0
    %5015 = vmatprep.subr.bf16.mxu0 0
    %5016 = vmatpush2.bf16.msra.mxu0 0
    %5017 = vmatprep.subr.bf16.mxu0 0
    %5018 = vmatpush2.bf16.msra.mxu0 0
    %5019 = vmatprep.subr.bf16.mxu0 0
    %5020 = vmatpush2.bf16.msra.mxu0 0
    %5021 = vmatprep.subr.bf16.mxu0 0
    %5022 = vmatpush2.bf16.msra.mxu0 0
    %5023 = vmatprep.subr.bf16.mxu0 0
    %5024 = vmatpush2.bf16.msra.mxu0 0
    %5025 = vmatprep.mubr.bf16.mxu0 0
    %5026 = vmatmul.mubr.bf16.gmra.mxu0 %v4988
    %v5027 = vpop.f32.mrf.mxu0
    %v5028 = vadd.f32 0.0, %v5027
    %v5029 = vpop.f32.mrf.mxu0
    %v5030 = vpop.f32.mrf.mxu0
    %v5031 = vpop.f32.mrf.mxu0
    %5032 = vdwg.mxu0
    %v5033 = vadd.f32 %v4649, %v4706
    %v5034 = vadd.f32 %v4650, %v4752
    %v5035 = vadd.f32 %v4651, %v4798
    %v5036 = vadd.f32 %v4652, %v4844
    %v5037 = vadd.f32 %v4653, %v4890
    %v5038 = vadd.f32 %v4654, %v4936
    %v5039 = vadd.f32 %v4655, %v4982
    %v5040 = vadd.f32 %v4656, %v5028
    %v5041 = vadd.f32 %v808, %v5033
    %v5042 = vadd.f32 %v809, %v5034
    %v5043 = vadd.f32 %v810, %v5035
    %v5044 = vadd.f32 %v811, %v5036
    %v5045 = vadd.f32 %v812, %v5037
    %v5046 = vadd.f32 %v813, %v5038
    %v5047 = vadd.f32 %v814, %v5039
    %v5048 = vadd.f32 %v815, %v5040
    %v5049 = vlaneseq
    %v5050 = vshrl.u32 %v5049, 7
    %v5051 = vsub.s32 3, %v5050
    %v5052 = vrot.slane %v820, %v5051
    %v5053 = vadd.f32 %v5041, %v5052
    %v5054 = vadd.f32 %v5042, %v5052
    %v5055 = vadd.f32 %v5043, %v5052
    %v5056 = vadd.f32 %v5044, %v5052
    %v5057 = vadd.f32 %v5045, %v5052
    %v5058 = vadd.f32 %v5046, %v5052
    %v5059 = vadd.f32 %v5047, %v5052
    %v5060 = vadd.f32 %v5048, %v5052
    %5061 = vadd.xlane.f32.xlu0 %v5053
    %v5062 = vpop.xlane.xlu0 %5061
    %5063 = vadd.xlane.f32.xlu0 %v5054
    %v5064 = vpop.xlane.xlu0 %5063
    %5065 = vadd.xlane.f32.xlu0 %v5055
    %v5066 = vpop.xlane.xlu0 %5065
    %5067 = vadd.xlane.f32.xlu0 %v5056
    %v5068 = vpop.xlane.xlu0 %5067
    %5069 = vadd.xlane.f32.xlu0 %v5057
    %v5070 = vpop.xlane.xlu0 %5069
    %5071 = vadd.xlane.f32.xlu0 %v5058
    %v5072 = vpop.xlane.xlu0 %5071
    %5073 = vadd.xlane.f32.xlu0 %v5059
    %v5074 = vpop.xlane.xlu0 %5073
    %5075 = vadd.xlane.f32.xlu0 %v5060
    %v5076 = vpop.xlane.xlu0 %5075
    %v5077 = vmul.f32 %v5062, %v838
    %v5078 = vmul.f32 %v5064, %v838
    %v5079 = vmul.f32 %v5066, %v838
    %v5080 = vmul.f32 %v5068, %v838
    %v5081 = vmul.f32 %v5070, %v838
    %v5082 = vmul.f32 %v5072, %v838
    %v5083 = vmul.f32 %v5074, %v838
    %v5084 = vmul.f32 %v5076, %v838
    %v5085 = vsub.f32 %v5053, %v5077
    %v5086 = vsub.f32 %v5054, %v5078
    %v5087 = vsub.f32 %v5055, %v5079
    %v5088 = vsub.f32 %v5056, %v5080
    %v5089 = vsub.f32 %v5057, %v5081
    %v5090 = vsub.f32 %v5058, %v5082
    %v5091 = vsub.f32 %v5059, %v5083
    %v5092 = vsub.f32 %v5060, %v5084
    %v5093 = vmul.f32 %v5085, %v5085
    %v5094 = vmul.f32 %v5086, %v5086
    %v5095 = vmul.f32 %v5087, %v5087
    %v5096 = vmul.f32 %v5088, %v5088
    %v5097 = vmul.f32 %v5089, %v5089
    %v5098 = vmul.f32 %v5090, %v5090
    %v5099 = vmul.f32 %v5091, %v5091
    %v5100 = vmul.f32 %v5092, %v5092
    %5101 = vadd.xlane.f32.xlu0 %v5093
    %v5102 = vpop.xlane.xlu0 %5101
    %5103 = vadd.xlane.f32.xlu0 %v5094
    %v5104 = vpop.xlane.xlu0 %5103
    %5105 = vadd.xlane.f32.xlu0 %v5095
    %v5106 = vpop.xlane.xlu0 %5105
    %5107 = vadd.xlane.f32.xlu0 %v5096
    %v5108 = vpop.xlane.xlu0 %5107
    %5109 = vadd.xlane.f32.xlu0 %v5097
    %v5110 = vpop.xlane.xlu0 %5109
    %5111 = vadd.xlane.f32.xlu0 %v5098
    %v5112 = vpop.xlane.xlu0 %5111
    %5113 = vadd.xlane.f32.xlu0 %v5099
    %v5114 = vpop.xlane.xlu0 %5113
    %5115 = vadd.xlane.f32.xlu0 %v5100
    %v5116 = vpop.xlane.xlu0 %5115
    %v5117 = vmul.f32 %v5102, %v838
    %v5118 = vmul.f32 %v5104, %v838
    %v5119 = vmul.f32 %v5106, %v838
    %v5120 = vmul.f32 %v5108, %v838
    %v5121 = vmul.f32 %v5110, %v838
    %v5122 = vmul.f32 %v5112, %v838
    %v5123 = vmul.f32 %v5114, %v838
    %v5124 = vmul.f32 %v5116, %v838
    %v5125 = vadd.f32 %v5117, 1e-12
    %v5126 = vadd.f32 %v5118, 1e-12
    %v5127 = vadd.f32 %v5119, 1e-12
    %v5128 = vadd.f32 %v5120, 1e-12
    %v5129 = vadd.f32 %v5121, 1e-12
    %v5130 = vadd.f32 %v5122, 1e-12
    %v5131 = vadd.f32 %v5123, 1e-12
    %v5132 = vadd.f32 %v5124, 1e-12
    %v5133 = vrsqrt.pop %v5125
    %v5134 = vrsqrt.pop %v5126
    %v5135 = vrsqrt.pop %v5127
    %v5136 = vrsqrt.pop %v5128
    %v5137 = vrsqrt.pop %v5129
    %v5138 = vrsqrt.pop %v5130
    %v5139 = vrsqrt.pop %v5131
    %v5140 = vrsqrt.pop %v5132
    %v5141 = vmul.f32 %v5085, %v5133
    %v5142 = vmul.f32 %v5086, %v5134
    %v5143 = vmul.f32 %v5087, %v5135
    %v5144 = vmul.f32 %v5088, %v5136
    %v5145 = vmul.f32 %v5089, %v5137
    %v5146 = vmul.f32 %v5090, %v5138
    %v5147 = vmul.f32 %v5091, %v5139
    %v5148 = vmul.f32 %v5092, %v5140
    %v5149 = vlaneseq
    %v5150 = vshrl.u32 %v5149, 7
    %v5151 = vsub.s32 4, %v5150
    %v5152 = vrot.slane %v820, %v5151
    %v5153 = vmul.f32 %v5141, %v5152
    %v5154 = vmul.f32 %v5142, %v5152
    %v5155 = vmul.f32 %v5143, %v5152
    %v5156 = vmul.f32 %v5144, %v5152
    %v5157 = vmul.f32 %v5145, %v5152
    %v5158 = vmul.f32 %v5146, %v5152
    %v5159 = vmul.f32 %v5147, %v5152
    %v5160 = vmul.f32 %v5148, %v5152
    %v5161 = vlaneseq
    %v5162 = vshrl.u32 %v5161, 7
    %v5163 = vsub.s32 5, %v5162
    %v5164 = vrot.slane %v820, %v5163
    %v5165 = vadd.f32 %v5153, %v5164
    %v5166 = vadd.f32 %v5154, %v5164
    %v5167 = vadd.f32 %v5155, %v5164
    %v5168 = vadd.f32 %v5156, %v5164
    %v5169 = vadd.f32 %v5157, %v5164
    %v5170 = vadd.f32 %v5158, %v5164
    %v5171 = vadd.f32 %v5159, %v5164
    %v5172 = vadd.f32 %v5160, %v5164
    %v5173 = vld [vmem:[#allocation4] sm:$0xff]
    %v5174 = vld [vmem:[#allocation4 + $0x8] sm:$0xff]
    %v5175 = vld [vmem:[#allocation4 + $0x10] sm:$0xff]
    %v5176 = vld [vmem:[#allocation4 + $0x18] sm:$0xff]
    %v5177 = vld [vmem:[#allocation4 + $0x20] sm:$0xff]
    %v5178 = vld [vmem:[#allocation4 + $0x28] sm:$0xff]
    %v5179 = vld [vmem:[#allocation4 + $0x30] sm:$0xff]
    %v5180 = vld [vmem:[#allocation4 + $0x38] sm:$0xff]
    %v5181 = vld [vmem:[#allocation4 + $0x40] sm:$0xff]
    %v5182 = vld [vmem:[#allocation4 + $0x48] sm:$0xff]
    %v5183 = vld [vmem:[#allocation4 + $0x50] sm:$0xff]
    %v5184 = vld [vmem:[#allocation4 + $0x58] sm:$0xff]
    %v5185 = vld [vmem:[#allocation4 + $0x60] sm:$0xff]
    %v5186 = vld [vmem:[#allocation4 + $0x68] sm:$0xff]
    %v5187 = vld [vmem:[#allocation4 + $0x70] sm:$0xff]
    %v5188 = vld [vmem:[#allocation4 + $0x78] sm:$0xff]
    %v5189 = vpack.c.bf16 %v5166, %v5165
    %v5190 = vpack.c.bf16 %v5168, %v5167
    %v5191 = vpack.c.bf16 %v5170, %v5169
    %v5192 = vpack.c.bf16 %v5172, %v5171
    %v5193 = vlaneseq
    %v5194 = vshrl.u32 %v5193, 7
    %v5195 = vsub.s32 6, %v5194
    %v5196 = vrot.slane %v820, %v5195
    %v5197 = vlaneseq
    %v5198 = vshrl.u32 %v5197, 7
    %v5199 = vsub.s32 6, %v5198
    %v5200 = vrot.slane %v821, %v5199
    %v5217 = vunpack.c.l.b16 %v5173
    %v5218 = vunpack.c.h.b16 %v5173
    %v5219 = vunpack.c.l.b16 %v5174
    %v5220 = vunpack.c.h.b16 %v5174
    %v5221 = vunpack.c.l.b16 %v5175
    %v5222 = vunpack.c.h.b16 %v5175
    %v5223 = vunpack.c.l.b16 %v5176
    %v5224 = vunpack.c.h.b16 %v5176
    %v5225 = vunpack.c.l.b16 %v5177
    %v5226 = vunpack.c.h.b16 %v5177
    %v5227 = vunpack.c.l.b16 %v5178
    %v5228 = vunpack.c.h.b16 %v5178
    %v5229 = vunpack.c.l.b16 %v5179
    %v5230 = vunpack.c.h.b16 %v5179
    %v5231 = vunpack.c.l.b16 %v5180
    %v5232 = vunpack.c.h.b16 %v5180
    %v5233 = vunpack.c.l.b16 %v5181
    %v5234 = vunpack.c.h.b16 %v5181
    %v5235 = vunpack.c.l.b16 %v5182
    %v5236 = vunpack.c.h.b16 %v5182
    %v5237 = vunpack.c.l.b16 %v5183
    %v5238 = vunpack.c.h.b16 %v5183
    %v5239 = vunpack.c.l.b16 %v5184
    %v5240 = vunpack.c.h.b16 %v5184
    %v5241 = vunpack.c.l.b16 %v5185
    %v5242 = vunpack.c.h.b16 %v5185
    %v5243 = vunpack.c.l.b16 %v5186
    %v5244 = vunpack.c.h.b16 %v5186
    %v5245 = vunpack.c.l.b16 %v5187
    %v5246 = vunpack.c.h.b16 %v5187
    %v5247 = vunpack.c.l.b16 %v5188
    %v5248 = vunpack.c.h.b16 %v5188
    %v5249 = vpack.c.b16 %v5219, %v5217
    %v5250 = vpack.c.b16 %v5220, %v5218
    %v5251 = vpack.c.b16 %v5223, %v5221
    %v5252 = vpack.c.b16 %v5224, %v5222
    %v5253 = vpack.c.b16 %v5227, %v5225
    %v5254 = vpack.c.b16 %v5228, %v5226
    %v5255 = vpack.c.b16 %v5231, %v5229
    %v5256 = vpack.c.b16 %v5232, %v5230
    %v5257 = vpack.c.b16 %v5235, %v5233
    %v5258 = vpack.c.b16 %v5236, %v5234
    %v5259 = vpack.c.b16 %v5239, %v5237
    %v5260 = vpack.c.b16 %v5240, %v5238
    %v5261 = vpack.c.b16 %v5243, %v5241
    %v5262 = vpack.c.b16 %v5244, %v5242
    %v5263 = vpack.c.b16 %v5247, %v5245
    %v5264 = vpack.c.b16 %v5248, %v5246
    %5281 = vmatprep.subr.bf16.mxu0 %v5264
    %5282 = vmatpush1.bf16.msra.mxu0 %v5263
    %5283 = vmatprep.subr.bf16.mxu0 %v5262
    %5284 = vmatpush1.bf16.msra.mxu0 %v5261
    %5285 = vmatprep.subr.bf16.mxu0 %v5260
    %5286 = vmatpush1.bf16.msra.mxu0 %v5259
    %5287 = vmatprep.subr.bf16.mxu0 %v5258
    %5288 = vmatpush1.bf16.msra.mxu0 %v5257
    %5289 = vmatprep.subr.bf16.mxu0 %v5256
    %5290 = vmatpush1.bf16.msra.mxu0 %v5255
    %5291 = vmatprep.subr.bf16.mxu0 %v5254
    %5292 = vmatpush1.bf16.msra.mxu0 %v5253
    %5293 = vmatprep.subr.bf16.mxu0 %v5252
    %5294 = vmatpush1.bf16.msra.mxu0 %v5251
    %5295 = vmatprep.subr.bf16.mxu0 %v5250
    %5296 = vmatpush1.bf16.msra.mxu0 %v5249
    %5297 = vmatprep.subr.bf16.mxu0 0
    %5298 = vmatpush2.bf16.msra.mxu0 0
    %5299 = vmatprep.subr.bf16.mxu0 0
    %5300 = vmatpush2.bf16.msra.mxu0 0
    %5301 = vmatprep.subr.bf16.mxu0 0
    %5302 = vmatpush2.bf16.msra.mxu0 0
    %5303 = vmatprep.subr.bf16.mxu0 0
    %5304 = vmatpush2.bf16.msra.mxu0 0
    %5305 = vmatprep.subr.bf16.mxu0 0
    %5306 = vmatpush2.bf16.msra.mxu0 0
    %5307 = vmatprep.subr.bf16.mxu0 0
    %5308 = vmatpush2.bf16.msra.mxu0 0
    %5309 = vmatprep.subr.bf16.mxu0 0
    %5310 = vmatpush2.bf16.msra.mxu0 0
    %5311 = vmatprep.subr.bf16.mxu0 0
    %5312 = vmatpush2.bf16.msra.mxu0 0
    %5313 = vmatprep.mubr.bf16.mxu0 0
    %5314 = vmatmul.mubr.bf16.gmra.mxu0 %v5189
    %v5315 = vpop.f32.mrf.mxu0
    %v5316 = vadd.f32 %v5196, %v5315
    %v5317 = vpop.f32.mrf.mxu0
    %v5318 = vadd.f32 %v5200, %v5317
    %v5319 = vpop.f32.mrf.mxu0
    %v5320 = vadd.f32 %v5196, %v5319
    %v5321 = vpop.f32.mrf.mxu0
    %v5322 = vadd.f32 %v5200, %v5321
    %5323 = vmatprep.mubr.bf16.mxu0 0
    %5324 = vmatmul.mubr.bf16.gmra.mxu0 %v5190
    %v5325 = vpop.f32.mrf.mxu0
    %v5326 = vadd.f32 %v5196, %v5325
    %v5327 = vpop.f32.mrf.mxu0
    %v5328 = vadd.f32 %v5200, %v5327
    %v5329 = vpop.f32.mrf.mxu0
    %v5330 = vadd.f32 %v5196, %v5329
    %v5331 = vpop.f32.mrf.mxu0
    %v5332 = vadd.f32 %v5200, %v5331
    %5333 = vmatprep.mubr.bf16.mxu0 0
    %5334 = vmatmul.mubr.bf16.gmra.mxu0 %v5191
    %v5335 = vpop.f32.mrf.mxu0
    %v5336 = vadd.f32 %v5196, %v5335
    %v5337 = vpop.f32.mrf.mxu0
    %v5338 = vadd.f32 %v5200, %v5337
    %v5339 = vpop.f32.mrf.mxu0
    %v5340 = vadd.f32 %v5196, %v5339
    %v5341 = vpop.f32.mrf.mxu0
    %v5342 = vadd.f32 %v5200, %v5341
    %5343 = vmatprep.mubr.bf16.mxu0 0
    %5344 = vmatmul.mubr.bf16.gmra.mxu0 %v5192
    %v5345 = vpop.f32.mrf.mxu0
    %v5346 = vadd.f32 %v5196, %v5345
    %v5347 = vpop.f32.mrf.mxu0
    %v5348 = vadd.f32 %v5200, %v5347
    %v5349 = vpop.f32.mrf.mxu0
    %v5350 = vadd.f32 %v5196, %v5349
    %v5351 = vpop.f32.mrf.mxu0
    %v5352 = vadd.f32 %v5200, %v5351
    %5353 = vdwg.mxu0
    %v5354 = vmul.f32 %v5316, 0.5
    %v5355 = vmul.f32 %v5318, 0.5
    %v5356 = vmul.f32 %v5320, 0.5
    %v5357 = vmul.f32 %v5322, 0.5
    %v5358 = vmul.f32 %v5326, 0.5
    %v5359 = vmul.f32 %v5328, 0.5
    %v5360 = vmul.f32 %v5330, 0.5
    %v5361 = vmul.f32 %v5332, 0.5
    %v5362 = vmul.f32 %v5336, 0.5
    %v5363 = vmul.f32 %v5338, 0.5
    %v5364 = vmul.f32 %v5340, 0.5
    %v5365 = vmul.f32 %v5342, 0.5
    %v5366 = vmul.f32 %v5346, 0.5
    %v5367 = vmul.f32 %v5348, 0.5
    %v5368 = vmul.f32 %v5350, 0.5
    %v5369 = vmul.f32 %v5352, 0.5
    %v5370 = vmul.f32 %v5316, 0.044715
    %v5371 = vmul.f32 %v5318, 0.044715
    %v5372 = vmul.f32 %v5320, 0.044715
    %v5373 = vmul.f32 %v5322, 0.044715
    %v5374 = vmul.f32 %v5326, 0.044715
    %v5375 = vmul.f32 %v5328, 0.044715
    %v5376 = vmul.f32 %v5330, 0.044715
    %v5377 = vmul.f32 %v5332, 0.044715
    %v5378 = vmul.f32 %v5336, 0.044715
    %v5379 = vmul.f32 %v5338, 0.044715
    %v5380 = vmul.f32 %v5340, 0.044715
    %v5381 = vmul.f32 %v5342, 0.044715
    %v5382 = vmul.f32 %v5346, 0.044715
    %v5383 = vmul.f32 %v5348, 0.044715
    %v5384 = vmul.f32 %v5350, 0.044715
    %v5385 = vmul.f32 %v5352, 0.044715
    %v5386 = vmul.f32 %v5370, %v5316
    %v5387 = vmul.f32 %v5371, %v5318
    %v5388 = vmul.f32 %v5372, %v5320
    %v5389 = vmul.f32 %v5373, %v5322
    %v5390 = vmul.f32 %v5374, %v5326
    %v5391 = vmul.f32 %v5375, %v5328
    %v5392 = vmul.f32 %v5376, %v5330
    %v5393 = vmul.f32 %v5377, %v5332
    %v5394 = vmul.f32 %v5378, %v5336
    %v5395 = vmul.f32 %v5379, %v5338
    %v5396 = vmul.f32 %v5380, %v5340
    %v5397 = vmul.f32 %v5381, %v5342
    %v5398 = vmul.f32 %v5382, %v5346
    %v5399 = vmul.f32 %v5383, %v5348
    %v5400 = vmul.f32 %v5384, %v5350
    %v5401 = vmul.f32 %v5385, %v5352
    %v5402 = vmul.f32 %v5386, %v5316
    %v5403 = vmul.f32 %v5387, %v5318
    %v5404 = vmul.f32 %v5388, %v5320
    %v5405 = vmul.f32 %v5389, %v5322
    %v5406 = vmul.f32 %v5390, %v5326
    %v5407 = vmul.f32 %v5391, %v5328
    %v5408 = vmul.f32 %v5392, %v5330
    %v5409 = vmul.f32 %v5393, %v5332
    %v5410 = vmul.f32 %v5394, %v5336
    %v5411 = vmul.f32 %v5395, %v5338
    %v5412 = vmul.f32 %v5396, %v5340
    %v5413 = vmul.f32 %v5397, %v5342
    %v5414 = vmul.f32 %v5398, %v5346
    %v5415 = vmul.f32 %v5399, %v5348
    %v5416 = vmul.f32 %v5400, %v5350
    %v5417 = vmul.f32 %v5401, %v5352
    %v5418 = vadd.f32 %v5316, %v5402
    %v5419 = vadd.f32 %v5318, %v5403
    %v5420 = vadd.f32 %v5320, %v5404
    %v5421 = vadd.f32 %v5322, %v5405
    %v5422 = vadd.f32 %v5326, %v5406
    %v5423 = vadd.f32 %v5328, %v5407
    %v5424 = vadd.f32 %v5330, %v5408
    %v5425 = vadd.f32 %v5332, %v5409
    %v5426 = vadd.f32 %v5336, %v5410
    %v5427 = vadd.f32 %v5338, %v5411
    %v5428 = vadd.f32 %v5340, %v5412
    %v5429 = vadd.f32 %v5342, %v5413
    %v5430 = vadd.f32 %v5346, %v5414
    %v5431 = vadd.f32 %v5348, %v5415
    %v5432 = vadd.f32 %v5350, %v5416
    %v5433 = vadd.f32 %v5352, %v5417
    %v5434 = vmul.f32 %v5418, 0.7978846
    %v5435 = vmul.f32 %v5419, 0.7978846
    %v5436 = vmul.f32 %v5420, 0.7978846
    %v5437 = vmul.f32 %v5421, 0.7978846
    %v5438 = vmul.f32 %v5422, 0.7978846
    %v5439 = vmul.f32 %v5423, 0.7978846
    %v5440 = vmul.f32 %v5424, 0.7978846
    %v5441 = vmul.f32 %v5425, 0.7978846
    %v5442 = vmul.f32 %v5426, 0.7978846
    %v5443 = vmul.f32 %v5427, 0.7978846
    %v5444 = vmul.f32 %v5428, 0.7978846
    %v5445 = vmul.f32 %v5429, 0.7978846
    %v5446 = vmul.f32 %v5430, 0.7978846
    %v5447 = vmul.f32 %v5431, 0.7978846
    %v5448 = vmul.f32 %v5432, 0.7978846
    %v5449 = vmul.f32 %v5433, 0.7978846
    %v5450 = vtanh.pop %v5434
    %v5451 = vtanh.pop %v5435
    %v5452 = vtanh.pop %v5436
    %v5453 = vtanh.pop %v5437
    %v5454 = vtanh.pop %v5438
    %v5455 = vtanh.pop %v5439
    %v5456 = vtanh.pop %v5440
    %v5457 = vtanh.pop %v5441
    %v5458 = vtanh.pop %v5442
    %v5459 = vtanh.pop %v5443
    %v5460 = vtanh.pop %v5444
    %v5461 = vtanh.pop %v5445
    %v5462 = vtanh.pop %v5446
    %v5463 = vtanh.pop %v5447
    %v5464 = vtanh.pop %v5448
    %v5465 = vtanh.pop %v5449
    %v5466 = vadd.f32 %v5450, 1.0
    %v5467 = vadd.f32 %v5451, 1.0
    %v5468 = vadd.f32 %v5452, 1.0
    %v5469 = vadd.f32 %v5453, 1.0
    %v5470 = vadd.f32 %v5454, 1.0
    %v5471 = vadd.f32 %v5455, 1.0
    %v5472 = vadd.f32 %v5456, 1.0
    %v5473 = vadd.f32 %v5457, 1.0
    %v5474 = vadd.f32 %v5458, 1.0
    %v5475 = vadd.f32 %v5459, 1.0
    %v5476 = vadd.f32 %v5460, 1.0
    %v5477 = vadd.f32 %v5461, 1.0
    %v5478 = vadd.f32 %v5462, 1.0
    %v5479 = vadd.f32 %v5463, 1.0
    %v5480 = vadd.f32 %v5464, 1.0
    %v5481 = vadd.f32 %v5465, 1.0
    %v5482 = vmul.f32 %v5354, %v5466
    %v5483 = vmul.f32 %v5355, %v5467
    %v5484 = vmul.f32 %v5356, %v5468
    %v5485 = vmul.f32 %v5357, %v5469
    %v5486 = vmul.f32 %v5358, %v5470
    %v5487 = vmul.f32 %v5359, %v5471
    %v5488 = vmul.f32 %v5360, %v5472
    %v5489 = vmul.f32 %v5361, %v5473
    %v5490 = vmul.f32 %v5362, %v5474
    %v5491 = vmul.f32 %v5363, %v5475
    %v5492 = vmul.f32 %v5364, %v5476
    %v5493 = vmul.f32 %v5365, %v5477
    %v5494 = vmul.f32 %v5366, %v5478
    %v5495 = vmul.f32 %v5367, %v5479
    %v5496 = vmul.f32 %v5368, %v5480
    %v5497 = vmul.f32 %v5369, %v5481
    %v5498 = vld [vmem:[%s5] sm:$0xf]
    %v5499 = vld [vmem:[%s5 + $0x4] sm:$0xf]
    %v5500 = vld [vmem:[%s5 + $0x8] sm:$0xf]
    %v5501 = vld [vmem:[%s5 + $0xc] sm:$0xf]
    %v5502 = vld [vmem:[%s5 + $0x10] sm:$0xf]
    %v5503 = vld [vmem:[%s5 + $0x14] sm:$0xf]
    %v5504 = vld [vmem:[%s5 + $0x18] sm:$0xf]
    %v5505 = vld [vmem:[%s5 + $0x1c] sm:$0xf]
    %v5506 = vld [vmem:[%s5 + $0x20] sm:$0xf]
    %v5507 = vld [vmem:[%s5 + $0x24] sm:$0xf]
    %v5508 = vld [vmem:[%s5 + $0x28] sm:$0xf]
    %v5509 = vld [vmem:[%s5 + $0x2c] sm:$0xf]
    %v5510 = vld [vmem:[%s5 + $0x30] sm:$0xf]
    %v5511 = vld [vmem:[%s5 + $0x34] sm:$0xf]
    %v5512 = vld [vmem:[%s5 + $0x38] sm:$0xf]
    %v5513 = vld [vmem:[%s5 + $0x3c] sm:$0xf]
    %v5514 = vld [vmem:[%s5 + $0x40] sm:$0xf]
    %v5515 = vld [vmem:[%s5 + $0x44] sm:$0xf]
    %v5516 = vld [vmem:[%s5 + $0x48] sm:$0xf]
    %v5517 = vld [vmem:[%s5 + $0x4c] sm:$0xf]
    %v5518 = vld [vmem:[%s5 + $0x50] sm:$0xf]
    %v5519 = vld [vmem:[%s5 + $0x54] sm:$0xf]
    %v5520 = vld [vmem:[%s5 + $0x58] sm:$0xf]
    %v5521 = vld [vmem:[%s5 + $0x5c] sm:$0xf]
    %v5522 = vld [vmem:[%s5 + $0x60] sm:$0xf]
    %v5523 = vld [vmem:[%s5 + $0x64] sm:$0xf]
    %v5524 = vld [vmem:[%s5 + $0x68] sm:$0xf]
    %v5525 = vld [vmem:[%s5 + $0x6c] sm:$0xf]
    %v5526 = vld [vmem:[%s5 + $0x70] sm:$0xf]
    %v5527 = vld [vmem:[%s5 + $0x74] sm:$0xf]
    %v5528 = vld [vmem:[%s5 + $0x78] sm:$0xf]
    %v5529 = vld [vmem:[%s5 + $0x7c] sm:$0xf]
    %v5530 = vpack.c.bf16 %v5484, %v5482
    %v5531 = vpack.c.bf16 %v5485, %v5483
    %v5532 = vpack.c.bf16 %v5488, %v5486
    %v5533 = vpack.c.bf16 %v5489, %v5487
    %v5534 = vpack.c.bf16 %v5492, %v5490
    %v5535 = vpack.c.bf16 %v5493, %v5491
    %v5536 = vpack.c.bf16 %v5496, %v5494
    %v5537 = vpack.c.bf16 %v5497, %v5495
    %v5570 = vunpack.c.l.b16 %v5498
    %v5571 = vunpack.c.l.b16 %v5499
    %v5572 = vunpack.c.l.b16 %v5500
    %v5573 = vunpack.c.l.b16 %v5501
    %v5574 = vunpack.c.l.b16 %v5502
    %v5575 = vunpack.c.l.b16 %v5503
    %v5576 = vunpack.c.l.b16 %v5504
    %v5577 = vunpack.c.l.b16 %v5505
    %v5578 = vunpack.c.l.b16 %v5506
    %v5579 = vunpack.c.l.b16 %v5507
    %v5580 = vunpack.c.l.b16 %v5508
    %v5581 = vunpack.c.l.b16 %v5509
    %v5582 = vunpack.c.l.b16 %v5510
    %v5583 = vunpack.c.l.b16 %v5511
    %v5584 = vunpack.c.l.b16 %v5512
    %v5585 = vunpack.c.l.b16 %v5513
    %v5586 = vunpack.c.l.b16 %v5514
    %v5587 = vunpack.c.l.b16 %v5515
    %v5588 = vunpack.c.l.b16 %v5516
    %v5589 = vunpack.c.l.b16 %v5517
    %v5590 = vunpack.c.l.b16 %v5518
    %v5591 = vunpack.c.l.b16 %v5519
    %v5592 = vunpack.c.l.b16 %v5520
    %v5593 = vunpack.c.l.b16 %v5521
    %v5594 = vunpack.c.l.b16 %v5522
    %v5595 = vunpack.c.l.b16 %v5523
    %v5596 = vunpack.c.l.b16 %v5524
    %v5597 = vunpack.c.l.b16 %v5525
    %v5598 = vunpack.c.l.b16 %v5526
    %v5599 = vunpack.c.l.b16 %v5527
    %v5600 = vunpack.c.l.b16 %v5528
    %v5601 = vunpack.c.l.b16 %v5529
    %v5602 = vpack.c.b16 %v5571, %v5570
    %v5603 = vpack.c.b16 %v5573, %v5572
    %v5604 = vpack.c.b16 %v5575, %v5574
    %v5605 = vpack.c.b16 %v5577, %v5576
    %v5606 = vpack.c.b16 %v5579, %v5578
    %v5607 = vpack.c.b16 %v5581, %v5580
    %v5608 = vpack.c.b16 %v5583, %v5582
    %v5609 = vpack.c.b16 %v5585, %v5584
    %v5610 = vpack.c.b16 %v5587, %v5586
    %v5611 = vpack.c.b16 %v5589, %v5588
    %v5612 = vpack.c.b16 %v5591, %v5590
    %v5613 = vpack.c.b16 %v5593, %v5592
    %v5614 = vpack.c.b16 %v5595, %v5594
    %v5615 = vpack.c.b16 %v5597, %v5596
    %v5616 = vpack.c.b16 %v5599, %v5598
    %v5617 = vpack.c.b16 %v5601, %v5600
    %5634 = vmatprep.subr.bf16.mxu0 0
    %5635 = vmatpush1.bf16.msra.mxu0 %v5609
    %5636 = vmatprep.subr.bf16.mxu0 0
    %5637 = vmatpush1.bf16.msra.mxu0 %v5608
    %5638 = vmatprep.subr.bf16.mxu0 0
    %5639 = vmatpush1.bf16.msra.mxu0 %v5607
    %5640 = vmatprep.subr.bf16.mxu0 0
    %5641 = vmatpush1.bf16.msra.mxu0 %v5606
    %5642 = vmatprep.subr.bf16.mxu0 0
    %5643 = vmatpush1.bf16.msra.mxu0 %v5605
    %5644 = vmatprep.subr.bf16.mxu0 0
    %5645 = vmatpush1.bf16.msra.mxu0 %v5604
    %5646 = vmatprep.subr.bf16.mxu0 0
    %5647 = vmatpush1.bf16.msra.mxu0 %v5603
    %5648 = vmatprep.subr.bf16.mxu0 0
    %5649 = vmatpush1.bf16.msra.mxu0 %v5602
    %5650 = vmatprep.subr.bf16.mxu0 0
    %5651 = vmatpush2.bf16.msra.mxu0 %v5617
    %5652 = vmatprep.subr.bf16.mxu0 0
    %5653 = vmatpush2.bf16.msra.mxu0 %v5616
    %5654 = vmatprep.subr.bf16.mxu0 0
    %5655 = vmatpush2.bf16.msra.mxu0 %v5615
    %5656 = vmatprep.subr.bf16.mxu0 0
    %5657 = vmatpush2.bf16.msra.mxu0 %v5614
    %5658 = vmatprep.subr.bf16.mxu0 0
    %5659 = vmatpush2.bf16.msra.mxu0 %v5613
    %5660 = vmatprep.subr.bf16.mxu0 0
    %5661 = vmatpush2.bf16.msra.mxu0 %v5612
    %5662 = vmatprep.subr.bf16.mxu0 0
    %5663 = vmatpush2.bf16.msra.mxu0 %v5611
    %5664 = vmatprep.subr.bf16.mxu0 0
    %5665 = vmatpush2.bf16.msra.mxu0 %v5610
    %5666 = vmatprep.mubr.bf16.mxu0 %v5531
    %5667 = vmatmul.mubr.bf16.gmra.mxu0 %v5530
    %v5668 = vpop.f32.mrf.mxu0
    %v5669 = vadd.f32 0.0, %v5668
    %v5670 = vpop.f32.mrf.mxu0
    %v5671 = vpop.f32.mrf.mxu0
    %v5672 = vadd.f32 0.0, %v5671
    %v5673 = vpop.f32.mrf.mxu0
    %5674 = vmatprep.mubr.bf16.mxu0 %v5533
    %5675 = vmatmul.mubr.bf16.gmra.mxu0 %v5532
    %v5676 = vpop.f32.mrf.mxu0
    %v5677 = vadd.f32 0.0, %v5676
    %v5678 = vpop.f32.mrf.mxu0
    %v5679 = vpop.f32.mrf.mxu0
    %v5680 = vadd.f32 0.0, %v5679
    %v5681 = vpop.f32.mrf.mxu0
    %5682 = vmatprep.mubr.bf16.mxu0 %v5535
    %5683 = vmatmul.mubr.bf16.gmra.mxu0 %v5534
    %v5684 = vpop.f32.mrf.mxu0
    %v5685 = vadd.f32 0.0, %v5684
    %v5686 = vpop.f32.mrf.mxu0
    %v5687 = vpop.f32.mrf.mxu0
    %v5688 = vadd.f32 0.0, %v5687
    %v5689 = vpop.f32.mrf.mxu0
    %5690 = vmatprep.mubr.bf16.mxu0 %v5537
    %5691 = vmatmul.mubr.bf16.gmra.mxu0 %v5536
    %v5692 = vpop.f32.mrf.mxu0
    %v5693 = vadd.f32 0.0, %v5692
    %v5694 = vpop.f32.mrf.mxu0
    %v5695 = vpop.f32.mrf.mxu0
    %v5696 = vadd.f32 0.0, %v5695
    %v5697 = vpop.f32.mrf.mxu0
    %5698 = vdwg.mxu0
    %v5699 = vadd.f32 %v5053, %v5669
    %v5700 = vadd.f32 %v5054, %v5672
    %v5701 = vadd.f32 %v5055, %v5677
    %v5702 = vadd.f32 %v5056, %v5680
    %v5703 = vadd.f32 %v5057, %v5685
    %v5704 = vadd.f32 %v5058, %v5688
    %v5705 = vadd.f32 %v5059, %v5693
    %v5706 = vadd.f32 %v5060, %v5696
    %v5707 = vlaneseq
    %v5708 = vshrl.u32 %v5707, 7
    %v5709 = vsub.s32 7, %v5708
    %v5710 = vrot.slane %v820, %v5709
    %v5711 = vadd.f32 %v5699, %v5710
    %v5712 = vadd.f32 %v5700, %v5710
    %v5713 = vadd.f32 %v5701, %v5710
    %v5714 = vadd.f32 %v5702, %v5710
    %v5715 = vadd.f32 %v5703, %v5710
    %v5716 = vadd.f32 %v5704, %v5710
    %v5717 = vadd.f32 %v5705, %v5710
    %v5718 = vadd.f32 %v5706, %v5710
    %s5719 = scalar_lea.vmem %s6, 16
    %v5720 = vld [vmem:[%s5719] sm:$0xff]
    %v5721 = vld [vmem:[%s5719 + $0x8] sm:$0xff]
    %5722 = vadd.xlane.f32.xlu0 %v5711
    %v5723 = vpop.xlane.xlu0 %5722
    %5724 = vadd.xlane.f32.xlu0 %v5712
    %v5725 = vpop.xlane.xlu0 %5724
    %5726 = vadd.xlane.f32.xlu0 %v5713
    %v5727 = vpop.xlane.xlu0 %5726
    %5728 = vadd.xlane.f32.xlu0 %v5714
    %v5729 = vpop.xlane.xlu0 %5728
    %5730 = vadd.xlane.f32.xlu0 %v5715
    %v5731 = vpop.xlane.xlu0 %5730
    %5732 = vadd.xlane.f32.xlu0 %v5716
    %v5733 = vpop.xlane.xlu0 %5732
    %5734 = vadd.xlane.f32.xlu0 %v5717
    %v5735 = vpop.xlane.xlu0 %5734
    %5736 = vadd.xlane.f32.xlu0 %v5718
    %v5737 = vpop.xlane.xlu0 %5736
    %v5738 = vmul.f32 %v5723, %v838
    %v5739 = vmul.f32 %v5725, %v838
    %v5740 = vmul.f32 %v5727, %v838
    %v5741 = vmul.f32 %v5729, %v838
    %v5742 = vmul.f32 %v5731, %v838
    %v5743 = vmul.f32 %v5733, %v838
    %v5744 = vmul.f32 %v5735, %v838
    %v5745 = vmul.f32 %v5737, %v838
    %v5746 = vsub.f32 %v5711, %v5738
    %v5747 = vsub.f32 %v5712, %v5739
    %v5748 = vsub.f32 %v5713, %v5740
    %v5749 = vsub.f32 %v5714, %v5741
    %v5750 = vsub.f32 %v5715, %v5742
    %v5751 = vsub.f32 %v5716, %v5743
    %v5752 = vsub.f32 %v5717, %v5744
    %v5753 = vsub.f32 %v5718, %v5745
    %v5754 = vmul.f32 %v5746, %v5746
    %v5755 = vmul.f32 %v5747, %v5747
    %v5756 = vmul.f32 %v5748, %v5748
    %v5757 = vmul.f32 %v5749, %v5749
    %v5758 = vmul.f32 %v5750, %v5750
    %v5759 = vmul.f32 %v5751, %v5751
    %v5760 = vmul.f32 %v5752, %v5752
    %v5761 = vmul.f32 %v5753, %v5753
    %5762 = vadd.xlane.f32.xlu0 %v5754
    %v5763 = vpop.xlane.xlu0 %5762
    %5764 = vadd.xlane.f32.xlu0 %v5755
    %v5765 = vpop.xlane.xlu0 %5764
    %5766 = vadd.xlane.f32.xlu0 %v5756
    %v5767 = vpop.xlane.xlu0 %5766
    %5768 = vadd.xlane.f32.xlu0 %v5757
    %v5769 = vpop.xlane.xlu0 %5768
    %5770 = vadd.xlane.f32.xlu0 %v5758
    %v5771 = vpop.xlane.xlu0 %5770
    %5772 = vadd.xlane.f32.xlu0 %v5759
    %v5773 = vpop.xlane.xlu0 %5772
    %5774 = vadd.xlane.f32.xlu0 %v5760
    %v5775 = vpop.xlane.xlu0 %5774
    %5776 = vadd.xlane.f32.xlu0 %v5761
    %v5777 = vpop.xlane.xlu0 %5776
    %v5778 = vmul.f32 %v5763, %v838
    %v5779 = vmul.f32 %v5765, %v838
    %v5780 = vmul.f32 %v5767, %v838
    %v5781 = vmul.f32 %v5769, %v838
    %v5782 = vmul.f32 %v5771, %v838
    %v5783 = vmul.f32 %v5773, %v838
    %v5784 = vmul.f32 %v5775, %v838
    %v5785 = vmul.f32 %v5777, %v838
    %v5786 = vadd.f32 %v5778, 1e-12
    %v5787 = vadd.f32 %v5779, 1e-12
    %v5788 = vadd.f32 %v5780, 1e-12
    %v5789 = vadd.f32 %v5781, 1e-12
    %v5790 = vadd.f32 %v5782, 1e-12
    %v5791 = vadd.f32 %v5783, 1e-12
    %v5792 = vadd.f32 %v5784, 1e-12
    %v5793 = vadd.f32 %v5785, 1e-12
    %v5794 = vrsqrt.pop %v5786
    %v5795 = vrsqrt.pop %v5787
    %v5796 = vrsqrt.pop %v5788
    %v5797 = vrsqrt.pop %v5789
    %v5798 = vrsqrt.pop %v5790
    %v5799 = vrsqrt.pop %v5791
    %v5800 = vrsqrt.pop %v5792
    %v5801 = vrsqrt.pop %v5793
    %v5802 = vmul.f32 %v5746, %v5794
    %v5803 = vmul.f32 %v5747, %v5795
    %v5804 = vmul.f32 %v5748, %v5796
    %v5805 = vmul.f32 %v5749, %v5797
    %v5806 = vmul.f32 %v5750, %v5798
    %v5807 = vmul.f32 %v5751, %v5799
    %v5808 = vmul.f32 %v5752, %v5800
    %v5809 = vmul.f32 %v5753, %v5801
    %v5810 = vlaneseq
    %v5811 = vshrl.u32 %v5810, 7
    %v5812 = vsub.s32 0, %v5811
    %v5813 = vrot.slane %v5720, %v5812
    %v5814 = vmul.f32 %v5802, %v5813
    %v5815 = vmul.f32 %v5803, %v5813
    %v5816 = vmul.f32 %v5804, %v5813
    %v5817 = vmul.f32 %v5805, %v5813
    %v5818 = vmul.f32 %v5806, %v5813
    %v5819 = vmul.f32 %v5807, %v5813
    %v5820 = vmul.f32 %v5808, %v5813
    %v5821 = vmul.f32 %v5809, %v5813
    %v5822 = vlaneseq
    %v5823 = vshrl.u32 %v5822, 7
    %v5824 = vsub.s32 1, %v5823
    %v5825 = vrot.slane %v5720, %v5824
    %v5826 = vadd.f32 %v5814, %v5825
    %v5827 = vadd.f32 %v5815, %v5825
    %v5828 = vadd.f32 %v5816, %v5825
    %v5829 = vadd.f32 %v5817, %v5825
    %v5830 = vadd.f32 %v5818, %v5825
    %v5831 = vadd.f32 %v5819, %v5825
    %v5832 = vadd.f32 %v5820, %v5825
    %v5833 = vadd.f32 %v5821, %v5825
    %s5834 = scalar_lea.vmem %s3, 384
    %v5835 = vld [vmem:[%s5834] sm:$0xff]
    %v5836 = vld [vmem:[%s5834 + $0x8] sm:$0xff]
    %v5837 = vld [vmem:[%s5834 + $0x10] sm:$0xff]
    %v5838 = vld [vmem:[%s5834 + $0x18] sm:$0xff]
    %v5839 = vld [vmem:[%s5834 + $0x20] sm:$0xff]
    %v5840 = vld [vmem:[%s5834 + $0x28] sm:$0xff]
    %v5841 = vld [vmem:[%s5834 + $0x30] sm:$0xff]
    %v5842 = vld [vmem:[%s5834 + $0x38] sm:$0xff]
    %v5843 = vld [vmem:[%s5834 + $0x40] sm:$0xff]
    %v5844 = vld [vmem:[%s5834 + $0x48] sm:$0xff]
    %v5845 = vld [vmem:[%s5834 + $0x50] sm:$0xff]
    %v5846 = vld [vmem:[%s5834 + $0x58] sm:$0xff]
    %v5847 = vld [vmem:[%s5834 + $0x60] sm:$0xff]
    %v5848 = vld [vmem:[%s5834 + $0x68] sm:$0xff]
    %v5849 = vld [vmem:[%s5834 + $0x70] sm:$0xff]
    %v5850 = vld [vmem:[%s5834 + $0x78] sm:$0xff]
    %v5851 = vld [vmem:[%s5834 + $0x80] sm:$0xff]
    %v5852 = vld [vmem:[%s5834 + $0x88] sm:$0xff]
    %v5853 = vld [vmem:[%s5834 + $0x90] sm:$0xff]
    %v5854 = vld [vmem:[%s5834 + $0x98] sm:$0xff]
    %v5855 = vld [vmem:[%s5834 + $0xa0] sm:$0xff]
    %v5856 = vld [vmem:[%s5834 + $0xa8] sm:$0xff]
    %v5857 = vld [vmem:[%s5834 + $0xb0] sm:$0xff]
    %v5858 = vld [vmem:[%s5834 + $0xb8] sm:$0xff]
    %v5859 = vld [vmem:[%s5834 + $0xc0] sm:$0xff]
    %v5860 = vld [vmem:[%s5834 + $0xc8] sm:$0xff]
    %v5861 = vld [vmem:[%s5834 + $0xd0] sm:$0xff]
    %v5862 = vld [vmem:[%s5834 + $0xd8] sm:$0xff]
    %v5863 = vld [vmem:[%s5834 + $0xe0] sm:$0xff]
    %v5864 = vld [vmem:[%s5834 + $0xe8] sm:$0xff]
    %v5865 = vld [vmem:[%s5834 + $0xf0] sm:$0xff]
    %v5866 = vld [vmem:[%s5834 + $0xf8] sm:$0xff]
    %v5867 = vld [vmem:[%s5834 + $0x100] sm:$0xff]
    %v5868 = vld [vmem:[%s5834 + $0x108] sm:$0xff]
    %v5869 = vld [vmem:[%s5834 + $0x110] sm:$0xff]
    %v5870 = vld [vmem:[%s5834 + $0x118] sm:$0xff]
    %v5871 = vld [vmem:[%s5834 + $0x120] sm:$0xff]
    %v5872 = vld [vmem:[%s5834 + $0x128] sm:$0xff]
    %v5873 = vld [vmem:[%s5834 + $0x130] sm:$0xff]
    %v5874 = vld [vmem:[%s5834 + $0x138] sm:$0xff]
    %v5875 = vld [vmem:[%s5834 + $0x140] sm:$0xff]
    %v5876 = vld [vmem:[%s5834 + $0x148] sm:$0xff]
    %v5877 = vld [vmem:[%s5834 + $0x150] sm:$0xff]
    %v5878 = vld [vmem:[%s5834 + $0x158] sm:$0xff]
    %v5879 = vld [vmem:[%s5834 + $0x160] sm:$0xff]
    %v5880 = vld [vmem:[%s5834 + $0x168] sm:$0xff]
    %v5881 = vld [vmem:[%s5834 + $0x170] sm:$0xff]
    %v5882 = vld [vmem:[%s5834 + $0x178] sm:$0xff]
    %v5883 = vpack.c.bf16 %v5827, %v5826
    %v5884 = vpack.c.bf16 %v5829, %v5828
    %v5885 = vpack.c.bf16 %v5831, %v5830
    %v5886 = vpack.c.bf16 %v5833, %v5832
    %v5935 = vunpack.c.l.b16 %v5835
    %v5936 = vunpack.c.h.b16 %v5835
    %v5937 = vunpack.c.l.b16 %v5836
    %v5938 = vunpack.c.h.b16 %v5836
    %v5939 = vunpack.c.l.b16 %v5837
    %v5940 = vunpack.c.h.b16 %v5837
    %v5941 = vunpack.c.l.b16 %v5838
    %v5942 = vunpack.c.h.b16 %v5838
    %v5943 = vunpack.c.l.b16 %v5839
    %v5944 = vunpack.c.h.b16 %v5839
    %v5945 = vunpack.c.l.b16 %v5840
    %v5946 = vunpack.c.h.b16 %v5840
    %v5947 = vunpack.c.l.b16 %v5841
    %v5948 = vunpack.c.h.b16 %v5841
    %v5949 = vunpack.c.l.b16 %v5842
    %v5950 = vunpack.c.h.b16 %v5842
    %v5951 = vunpack.c.l.b16 %v5843
    %v5952 = vunpack.c.h.b16 %v5843
    %v5953 = vunpack.c.l.b16 %v5844
    %v5954 = vunpack.c.h.b16 %v5844
    %v5955 = vunpack.c.l.b16 %v5845
    %v5956 = vunpack.c.h.b16 %v5845
    %v5957 = vunpack.c.l.b16 %v5846
    %v5958 = vunpack.c.h.b16 %v5846
    %v5959 = vunpack.c.l.b16 %v5847
    %v5960 = vunpack.c.h.b16 %v5847
    %v5961 = vunpack.c.l.b16 %v5848
    %v5962 = vunpack.c.h.b16 %v5848
    %v5963 = vunpack.c.l.b16 %v5849
    %v5964 = vunpack.c.h.b16 %v5849
    %v5965 = vunpack.c.l.b16 %v5850
    %v5966 = vunpack.c.h.b16 %v5850
    %v5967 = vunpack.c.l.b16 %v5851
    %v5968 = vunpack.c.h.b16 %v5851
    %v5969 = vunpack.c.l.b16 %v5852
    %v5970 = vunpack.c.h.b16 %v5852
    %v5971 = vunpack.c.l.b16 %v5853
    %v5972 = vunpack.c.h.b16 %v5853
    %v5973 = vunpack.c.l.b16 %v5854
    %v5974 = vunpack.c.h.b16 %v5854
    %v5975 = vunpack.c.l.b16 %v5855
    %v5976 = vunpack.c.h.b16 %v5855
    %v5977 = vunpack.c.l.b16 %v5856
    %v5978 = vunpack.c.h.b16 %v5856
    %v5979 = vunpack.c.l.b16 %v5857
    %v5980 = vunpack.c.h.b16 %v5857
    %v5981 = vunpack.c.l.b16 %v5858
    %v5982 = vunpack.c.h.b16 %v5858
    %v5983 = vunpack.c.l.b16 %v5859
    %v5984 = vunpack.c.h.b16 %v5859
    %v5985 = vunpack.c.l.b16 %v5860
    %v5986 = vunpack.c.h.b16 %v5860
    %v5987 = vunpack.c.l.b16 %v5861
    %v5988 = vunpack.c.h.b16 %v5861
    %v5989 = vunpack.c.l.b16 %v5862
    %v5990 = vunpack.c.h.b16 %v5862
    %v5991 = vunpack.c.l.b16 %v5863
    %v5992 = vunpack.c.h.b16 %v5863
    %v5993 = vunpack.c.l.b16 %v5864
    %v5994 = vunpack.c.h.b16 %v5864
    %v5995 = vunpack.c.l.b16 %v5865
    %v5996 = vunpack.c.h.b16 %v5865
    %v5997 = vunpack.c.l.b16 %v5866
    %v5998 = vunpack.c.h.b16 %v5866
    %v5999 = vunpack.c.l.b16 %v5867
    %v6000 = vunpack.c.h.b16 %v5867
    %v6001 = vunpack.c.l.b16 %v5868
    %v6002 = vunpack.c.h.b16 %v5868
    %v6003 = vunpack.c.l.b16 %v5869
    %v6004 = vunpack.c.h.b16 %v5869
    %v6005 = vunpack.c.l.b16 %v5870
    %v6006 = vunpack.c.h.b16 %v5870
    %v6007 = vunpack.c.l.b16 %v5871
    %v6008 = vunpack.c.h.b16 %v5871
    %v6009 = vunpack.c.l.b16 %v5872
    %v6010 = vunpack.c.h.b16 %v5872
    %v6011 = vunpack.c.l.b16 %v5873
    %v6012 = vunpack.c.h.b16 %v5873
    %v6013 = vunpack.c.l.b16 %v5874
    %v6014 = vunpack.c.h.b16 %v5874
    %v6015 = vunpack.c.l.b16 %v5875
    %v6016 = vunpack.c.h.b16 %v5875
    %v6017 = vunpack.c.l.b16 %v5876
    %v6018 = vunpack.c.h.b16 %v5876
    %v6019 = vunpack.c.l.b16 %v5877
    %v6020 = vunpack.c.h.b16 %v5877
    %v6021 = vunpack.c.l.b16 %v5878
    %v6022 = vunpack.c.h.b16 %v5878
    %v6023 = vunpack.c.l.b16 %v5879
    %v6024 = vunpack.c.h.b16 %v5879
    %v6025 = vunpack.c.l.b16 %v5880
    %v6026 = vunpack.c.h.b16 %v5880
    %v6027 = vunpack.c.l.b16 %v5881
    %v6028 = vunpack.c.h.b16 %v5881
    %v6029 = vunpack.c.l.b16 %v5882
    %v6030 = vunpack.c.h.b16 %v5882
    %v6031 = vpack.c.b16 %v5941, %v5935
    %v6032 = vpack.c.b16 %v5942, %v5936
    %v6033 = vpack.c.b16 %v5943, %v5937
    %v6034 = vpack.c.b16 %v5944, %v5938
    %v6035 = vpack.c.b16 %v5945, %v5939
    %v6036 = vpack.c.b16 %v5946, %v5940
    %v6037 = vpack.c.b16 %v5953, %v5947
    %v6038 = vpack.c.b16 %v5954, %v5948
    %v6039 = vpack.c.b16 %v5955, %v5949
    %v6040 = vpack.c.b16 %v5956, %v5950
    %v6041 = vpack.c.b16 %v5957, %v5951
    %v6042 = vpack.c.b16 %v5958, %v5952
    %v6043 = vpack.c.b16 %v5965, %v5959
    %v6044 = vpack.c.b16 %v5966, %v5960
    %v6045 = vpack.c.b16 %v5967, %v5961
    %v6046 = vpack.c.b16 %v5968, %v5962
    %v6047 = vpack.c.b16 %v5969, %v5963
    %v6048 = vpack.c.b16 %v5970, %v5964
    %v6049 = vpack.c.b16 %v5977, %v5971
    %v6050 = vpack.c.b16 %v5978, %v5972
    %v6051 = vpack.c.b16 %v5979, %v5973
    %v6052 = vpack.c.b16 %v5980, %v5974
    %v6053 = vpack.c.b16 %v5981, %v5975
    %v6054 = vpack.c.b16 %v5982, %v5976
    %v6055 = vpack.c.b16 %v5989, %v5983
    %v6056 = vpack.c.b16 %v5990, %v5984
    %v6057 = vpack.c.b16 %v5991, %v5985
    %v6058 = vpack.c.b16 %v5992, %v5986
    %v6059 = vpack.c.b16 %v5993, %v5987
    %v6060 = vpack.c.b16 %v5994, %v5988
    %v6061 = vpack.c.b16 %v6001, %v5995
    %v6062 = vpack.c.b16 %v6002, %v5996
    %v6063 = vpack.c.b16 %v6003, %v5997
    %v6064 = vpack.c.b16 %v6004, %v5998
    %v6065 = vpack.c.b16 %v6005, %v5999
    %v6066 = vpack.c.b16 %v6006, %v6000
    %v6067 = vpack.c.b16 %v6013, %v6007
    %v6068 = vpack.c.b16 %v6014, %v6008
    %v6069 = vpack.c.b16 %v6015, %v6009
    %v6070 = vpack.c.b16 %v6016, %v6010
    %v6071 = vpack.c.b16 %v6017, %v6011
    %v6072 = vpack.c.b16 %v6018, %v6012
    %v6073 = vpack.c.b16 %v6025, %v6019
    %v6074 = vpack.c.b16 %v6026, %v6020
    %v6075 = vpack.c.b16 %v6027, %v6021
    %v6076 = vpack.c.b16 %v6028, %v6022
    %v6077 = vpack.c.b16 %v6029, %v6023
    %v6078 = vpack.c.b16 %v6030, %v6024
    %6127 = vmatprep.subr.bf16.mxu0 %v6074
    %6128 = vmatpush1.bf16.msra.mxu0 %v6073
    %6129 = vmatprep.subr.bf16.mxu0 %v6068
    %6130 = vmatpush1.bf16.msra.mxu0 %v6067
    %6131 = vmatprep.subr.bf16.mxu0 %v6062
    %6132 = vmatpush1.bf16.msra.mxu0 %v6061
    %6133 = vmatprep.subr.bf16.mxu0 %v6056
    %6134 = vmatpush1.bf16.msra.mxu0 %v6055
    %6135 = vmatprep.subr.bf16.mxu0 %v6050
    %6136 = vmatpush1.bf16.msra.mxu0 %v6049
    %6137 = vmatprep.subr.bf16.mxu0 %v6044
    %6138 = vmatpush1.bf16.msra.mxu0 %v6043
    %6139 = vmatprep.subr.bf16.mxu0 %v6038
    %6140 = vmatpush1.bf16.msra.mxu0 %v6037
    %6141 = vmatprep.subr.bf16.mxu0 %v6032
    %6142 = vmatpush1.bf16.msra.mxu0 %v6031
    %6143 = vmatprep.subr.bf16.mxu0 0
    %6144 = vmatpush2.bf16.msra.mxu0 0
    %6145 = vmatprep.subr.bf16.mxu0 0
    %6146 = vmatpush2.bf16.msra.mxu0 0
    %6147 = vmatprep.subr.bf16.mxu0 0
    %6148 = vmatpush2.bf16.msra.mxu0 0
    %6149 = vmatprep.subr.bf16.mxu0 0
    %6150 = vmatpush2.bf16.msra.mxu0 0
    %6151 = vmatprep.subr.bf16.mxu0 0
    %6152 = vmatpush2.bf16.msra.mxu0 0
    %6153 = vmatprep.subr.bf16.mxu0 0
    %6154 = vmatpush2.bf16.msra.mxu0 0
    %6155 = vmatprep.subr.bf16.mxu0 0
    %6156 = vmatpush2.bf16.msra.mxu0 0
    %6157 = vmatprep.subr.bf16.mxu0 0
    %6158 = vmatpush2.bf16.msra.mxu0 0
    %6159 = vmatprep.mubr.bf16.mxu0 0
    %6160 = vmatmul.mubr.bf16.gmra.mxu0 %v5883
    %v6161 = vpop.f32.mrf.mxu0
    %v6162 = vadd.f32 0.0, %v6161
    %v6163 = vpop.f32.mrf.mxu0
    %v6164 = vadd.f32 0.0, %v6163
    %v6165 = vpop.f32.mrf.mxu0
    %v6166 = vadd.f32 0.0, %v6165
    %v6167 = vpop.f32.mrf.mxu0
    %v6168 = vadd.f32 0.0, %v6167
    %6169 = vmatprep.mubr.bf16.mxu0 0
    %6170 = vmatmul.mubr.bf16.gmra.mxu0 %v5884
    %v6171 = vpop.f32.mrf.mxu0
    %v6172 = vadd.f32 0.0, %v6171
    %v6173 = vpop.f32.mrf.mxu0
    %v6174 = vadd.f32 0.0, %v6173
    %v6175 = vpop.f32.mrf.mxu0
    %v6176 = vadd.f32 0.0, %v6175
    %v6177 = vpop.f32.mrf.mxu0
    %v6178 = vadd.f32 0.0, %v6177
    %6179 = vmatprep.mubr.bf16.mxu0 0
    %6180 = vmatmul.mubr.bf16.gmra.mxu0 %v5885
    %v6181 = vpop.f32.mrf.mxu0
    %v6182 = vadd.f32 0.0, %v6181
    %v6183 = vpop.f32.mrf.mxu0
    %v6184 = vadd.f32 0.0, %v6183
    %v6185 = vpop.f32.mrf.mxu0
    %v6186 = vadd.f32 0.0, %v6185
    %v6187 = vpop.f32.mrf.mxu0
    %v6188 = vadd.f32 0.0, %v6187
    %6189 = vmatprep.mubr.bf16.mxu0 0
    %6190 = vmatmul.mubr.bf16.gmra.mxu0 %v5886
    %v6191 = vpop.f32.mrf.mxu0
    %v6192 = vadd.f32 0.0, %v6191
    %v6193 = vpop.f32.mrf.mxu0
    %v6194 = vadd.f32 0.0, %v6193
    %v6195 = vpop.f32.mrf.mxu0
    %v6196 = vadd.f32 0.0, %v6195
    %v6197 = vpop.f32.mrf.mxu0
    %v6198 = vadd.f32 0.0, %v6197
    %6199 = vdwg.mxu0
    %6200 = vmatprep.subr.bf16.mxu0 %v6076
    %6201 = vmatpush1.bf16.msra.mxu0 %v6075
    %6202 = vmatprep.subr.bf16.mxu0 %v6070
    %6203 = vmatpush1.bf16.msra.mxu0 %v6069
    %6204 = vmatprep.subr.bf16.mxu0 %v6064
    %6205 = vmatpush1.bf16.msra.mxu0 %v6063
    %6206 = vmatprep.subr.bf16.mxu0 %v6058
    %6207 = vmatpush1.bf16.msra.mxu0 %v6057
    %6208 = vmatprep.subr.bf16.mxu0 %v6052
    %6209 = vmatpush1.bf16.msra.mxu0 %v6051
    %6210 = vmatprep.subr.bf16.mxu0 %v6046
    %6211 = vmatpush1.bf16.msra.mxu0 %v6045
    %6212 = vmatprep.subr.bf16.mxu0 %v6040
    %6213 = vmatpush1.bf16.msra.mxu0 %v6039
    %6214 = vmatprep.subr.bf16.mxu0 %v6034
    %6215 = vmatpush1.bf16.msra.mxu0 %v6033
    %6216 = vmatprep.subr.bf16.mxu0 0
    %6217 = vmatpush2.bf16.msra.mxu0 0
    %6218 = vmatprep.subr.bf16.mxu0 0
    %6219 = vmatpush2.bf16.msra.mxu0 0
    %6220 = vmatprep.subr.bf16.mxu0 0
    %6221 = vmatpush2.bf16.msra.mxu0 0
    %6222 = vmatprep.subr.bf16.mxu0 0
    %6223 = vmatpush2.bf16.msra.mxu0 0
    %6224 = vmatprep.subr.bf16.mxu0 0
    %6225 = vmatpush2.bf16.msra.mxu0 0
    %6226 = vmatprep.subr.bf16.mxu0 0
    %6227 = vmatpush2.bf16.msra.mxu0 0
    %6228 = vmatprep.subr.bf16.mxu0 0
    %6229 = vmatpush2.bf16.msra.mxu0 0
    %6230 = vmatprep.subr.bf16.mxu0 0
    %6231 = vmatpush2.bf16.msra.mxu0 0
    %6232 = vmatprep.mubr.bf16.mxu0 0
    %6233 = vmatmul.mubr.bf16.gmra.mxu0 %v5883
    %v6234 = vpop.f32.mrf.mxu0
    %v6235 = vadd.f32 0.0, %v6234
    %v6236 = vpop.f32.mrf.mxu0
    %v6237 = vadd.f32 0.0, %v6236
    %v6238 = vpop.f32.mrf.mxu0
    %v6239 = vadd.f32 0.0, %v6238
    %v6240 = vpop.f32.mrf.mxu0
    %v6241 = vadd.f32 0.0, %v6240
    %6242 = vmatprep.mubr.bf16.mxu0 0
    %6243 = vmatmul.mubr.bf16.gmra.mxu0 %v5884
    %v6244 = vpop.f32.mrf.mxu0
    %v6245 = vadd.f32 0.0, %v6244
    %v6246 = vpop.f32.mrf.mxu0
    %v6247 = vadd.f32 0.0, %v6246
    %v6248 = vpop.f32.mrf.mxu0
    %v6249 = vadd.f32 0.0, %v6248
    %v6250 = vpop.f32.mrf.mxu0
    %v6251 = vadd.f32 0.0, %v6250
    %6252 = vmatprep.mubr.bf16.mxu0 0
    %6253 = vmatmul.mubr.bf16.gmra.mxu0 %v5885
    %v6254 = vpop.f32.mrf.mxu0
    %v6255 = vadd.f32 0.0, %v6254
    %v6256 = vpop.f32.mrf.mxu0
    %v6257 = vadd.f32 0.0, %v6256
    %v6258 = vpop.f32.mrf.mxu0
    %v6259 = vadd.f32 0.0, %v6258
    %v6260 = vpop.f32.mrf.mxu0
    %v6261 = vadd.f32 0.0, %v6260
    %6262 = vmatprep.mubr.bf16.mxu0 0
    %6263 = vmatmul.mubr.bf16.gmra.mxu0 %v5886
    %v6264 = vpop.f32.mrf.mxu0
    %v6265 = vadd.f32 0.0, %v6264
    %v6266 = vpop.f32.mrf.mxu0
    %v6267 = vadd.f32 0.0, %v6266
    %v6268 = vpop.f32.mrf.mxu0
    %v6269 = vadd.f32 0.0, %v6268
    %v6270 = vpop.f32.mrf.mxu0
    %v6271 = vadd.f32 0.0, %v6270
    %6272 = vdwg.mxu0
    %6273 = vmatprep.subr.bf16.mxu0 %v6078
    %6274 = vmatpush1.bf16.msra.mxu0 %v6077
    %6275 = vmatprep.subr.bf16.mxu0 %v6072
    %6276 = vmatpush1.bf16.msra.mxu0 %v6071
    %6277 = vmatprep.subr.bf16.mxu0 %v6066
    %6278 = vmatpush1.bf16.msra.mxu0 %v6065
    %6279 = vmatprep.subr.bf16.mxu0 %v6060
    %6280 = vmatpush1.bf16.msra.mxu0 %v6059
    %6281 = vmatprep.subr.bf16.mxu0 %v6054
    %6282 = vmatpush1.bf16.msra.mxu0 %v6053
    %6283 = vmatprep.subr.bf16.mxu0 %v6048
    %6284 = vmatpush1.bf16.msra.mxu0 %v6047
    %6285 = vmatprep.subr.bf16.mxu0 %v6042
    %6286 = vmatpush1.bf16.msra.mxu0 %v6041
    %6287 = vmatprep.subr.bf16.mxu0 %v6036
    %6288 = vmatpush1.bf16.msra.mxu0 %v6035
    %6289 = vmatprep.subr.bf16.mxu0 0
    %6290 = vmatpush2.bf16.msra.mxu0 0
    %6291 = vmatprep.subr.bf16.mxu0 0
    %6292 = vmatpush2.bf16.msra.mxu0 0
    %6293 = vmatprep.subr.bf16.mxu0 0
    %6294 = vmatpush2.bf16.msra.mxu0 0
    %6295 = vmatprep.subr.bf16.mxu0 0
    %6296 = vmatpush2.bf16.msra.mxu0 0
    %6297 = vmatprep.subr.bf16.mxu0 0
    %6298 = vmatpush2.bf16.msra.mxu0 0
    %6299 = vmatprep.subr.bf16.mxu0 0
    %6300 = vmatpush2.bf16.msra.mxu0 0
    %6301 = vmatprep.subr.bf16.mxu0 0
    %6302 = vmatpush2.bf16.msra.mxu0 0
    %6303 = vmatprep.subr.bf16.mxu0 0
    %6304 = vmatpush2.bf16.msra.mxu0 0
    %6305 = vmatprep.mubr.bf16.mxu0 0
    %6306 = vmatmul.mubr.bf16.gmra.mxu0 %v5883
    %v6307 = vpop.f32.mrf.mxu0
    %v6308 = vadd.f32 0.0, %v6307
    %v6309 = vpop.f32.mrf.mxu0
    %v6310 = vadd.f32 0.0, %v6309
    %v6311 = vpop.f32.mrf.mxu0
    %v6312 = vadd.f32 0.0, %v6311
    %v6313 = vpop.f32.mrf.mxu0
    %v6314 = vadd.f32 0.0, %v6313
    %6315 = vmatprep.mubr.bf16.mxu0 0
    %6316 = vmatmul.mubr.bf16.gmra.mxu0 %v5884
    %v6317 = vpop.f32.mrf.mxu0
    %v6318 = vadd.f32 0.0, %v6317
    %v6319 = vpop.f32.mrf.mxu0
    %v6320 = vadd.f32 0.0, %v6319
    %v6321 = vpop.f32.mrf.mxu0
    %v6322 = vadd.f32 0.0, %v6321
    %v6323 = vpop.f32.mrf.mxu0
    %v6324 = vadd.f32 0.0, %v6323
    %6325 = vmatprep.mubr.bf16.mxu0 0
    %6326 = vmatmul.mubr.bf16.gmra.mxu0 %v5885
    %v6327 = vpop.f32.mrf.mxu0
    %v6328 = vadd.f32 0.0, %v6327
    %v6329 = vpop.f32.mrf.mxu0
    %v6330 = vadd.f32 0.0, %v6329
    %v6331 = vpop.f32.mrf.mxu0
    %v6332 = vadd.f32 0.0, %v6331
    %v6333 = vpop.f32.mrf.mxu0
    %v6334 = vadd.f32 0.0, %v6333
    %6335 = vmatprep.mubr.bf16.mxu0 0
    %6336 = vmatmul.mubr.bf16.gmra.mxu0 %v5886
    %v6337 = vpop.f32.mrf.mxu0
    %v6338 = vadd.f32 0.0, %v6337
    %v6339 = vpop.f32.mrf.mxu0
    %v6340 = vadd.f32 0.0, %v6339
    %v6341 = vpop.f32.mrf.mxu0
    %v6342 = vadd.f32 0.0, %v6341
    %v6343 = vpop.f32.mrf.mxu0
    %v6344 = vadd.f32 0.0, %v6343
    %6345 = vdwg.mxu0
    %v6346 = vlaneseq
    %v6347 = vshrl.u32 %v6346, 7
    %v6348 = vsub.s32 2, %v6347
    %v6349 = vrot.slane %v5720, %v6348
    %v6350 = vadd.f32 %v6162, %v6349
    %v6351 = vadd.f32 %v6166, %v6349
    %v6352 = vadd.f32 %v6172, %v6349
    %v6353 = vadd.f32 %v6176, %v6349
    %v6354 = vadd.f32 %v6182, %v6349
    %v6355 = vadd.f32 %v6186, %v6349
    %v6356 = vadd.f32 %v6192, %v6349
    %v6357 = vadd.f32 %v6196, %v6349
    %v6358 = vlaneseq
    %v6359 = vshrl.u32 %v6358, 7
    %v6360 = vsub.s32 2, %v6359
    %v6361 = vrot.slane %v5721, %v6360
    %v6362 = vadd.f32 %v6164, %v6361
    %v6363 = vadd.f32 %v6168, %v6361
    %v6364 = vadd.f32 %v6174, %v6361
    %v6365 = vadd.f32 %v6178, %v6361
    %v6366 = vadd.f32 %v6184, %v6361
    %v6367 = vadd.f32 %v6188, %v6361
    %v6368 = vadd.f32 %v6194, %v6361
    %v6369 = vadd.f32 %v6198, %v6361
    %v6370 = vpack.c.bf16 %v6350, %v6350
    %v6371 = vpack.c.bf16 %v6351, %v6351
    %v6372 = vpack.c.bf16 %v6352, %v6352
    %v6373 = vpack.c.bf16 %v6353, %v6353
    %v6374 = vpack.c.bf16 %v6354, %v6354
    %v6375 = vpack.c.bf16 %v6355, %v6355
    %v6376 = vpack.c.bf16 %v6356, %v6356
    %v6377 = vpack.c.bf16 %v6357, %v6357
    %v6378 = vpack.c.bf16 %v6362, %v6362
    %v6379 = vpack.c.bf16 %v6363, %v6363
    %v6380 = vpack.c.bf16 %v6364, %v6364
    %v6381 = vpack.c.bf16 %v6365, %v6365
    %v6382 = vpack.c.bf16 %v6366, %v6366
    %v6383 = vpack.c.bf16 %v6367, %v6367
    %v6384 = vpack.c.bf16 %v6368, %v6368
    %v6385 = vpack.c.bf16 %v6369, %v6369
    %v6387 = vsel %vm1486, %v6370, 0
    %v6390 = vsel %vm1486, %v6378, 0
    %6392 = vmatprep.subr.bf16.mxu0 0
    %6393 = vmatpush1.bf16.xpose.msra.mxu0 0
    %6394 = vmatprep.subr.bf16.mxu0 0
    %6395 = vmatpush1.bf16.xpose.msra.mxu0 0
    %6396 = vmatprep.subr.bf16.mxu0 0
    %6397 = vmatpush1.bf16.xpose.msra.mxu0 0
    %6398 = vmatprep.subr.bf16.mxu0 0
    %6399 = vmatpush1.bf16.xpose.msra.mxu0 0
    %6400 = vmatprep.subr.bf16.mxu0 0
    %6401 = vmatpush1.bf16.xpose.msra.mxu0 0
    %6402 = vmatprep.subr.bf16.mxu0 0
    %6403 = vmatpush1.bf16.xpose.msra.mxu0 0
    %6404 = vmatprep.subr.bf16.mxu0 0
    %6405 = vmatpush1.bf16.xpose.msra.mxu0 0
    %6406 = vmatprep.subr.bf16.mxu0 0
    %6407 = vmatpush1.bf16.xpose.msra.mxu0 %v6390
    %6408 = vmatprep.subr.bf16.mxu0 0
    %6409 = vmatpush2.bf16.xpose.msra.mxu0 0
    %6410 = vmatprep.subr.bf16.mxu0 0
    %6411 = vmatpush2.bf16.xpose.msra.mxu0 0
    %6412 = vmatprep.subr.bf16.mxu0 0
    %6413 = vmatpush2.bf16.xpose.msra.mxu0 0
    %6414 = vmatprep.subr.bf16.mxu0 0
    %6415 = vmatpush2.bf16.xpose.msra.mxu0 0
    %6416 = vmatprep.subr.bf16.mxu0 0
    %6417 = vmatpush2.bf16.xpose.msra.mxu0 0
    %6418 = vmatprep.subr.bf16.mxu0 0
    %6419 = vmatpush2.bf16.xpose.msra.mxu0 0
    %6420 = vmatprep.subr.bf16.mxu0 0
    %6421 = vmatpush2.bf16.xpose.msra.mxu0 0
    %6422 = vmatprep.subr.bf16.mxu0 0
    %6423 = vmatpush2.bf16.xpose.msra.mxu0 0
    %6424 = vmatprep.mubr.bf16.mxu0 0
    %6425 = vmatmul.mubr.bf16.gmra.mxu0 %v6387
    %v6426 = vpop.f32.mrf.mxu0
    %v6427 = vadd.f32 0.0, %v6426
    %v6428 = vpop.f32.mrf.mxu0
    %v6429 = vpop.f32.mrf.mxu0
    %v6430 = vpop.f32.mrf.mxu0
    %6431 = vdwg.mxu0
    %v6433 = vsel %vm1486, %v6371, 0
    %v6436 = vsel %vm1486, %v6379, 0
    %6438 = vmatprep.subr.bf16.mxu0 0
    %6439 = vmatpush1.bf16.xpose.msra.mxu0 0
    %6440 = vmatprep.subr.bf16.mxu0 0
    %6441 = vmatpush1.bf16.xpose.msra.mxu0 0
    %6442 = vmatprep.subr.bf16.mxu0 0
    %6443 = vmatpush1.bf16.xpose.msra.mxu0 0
    %6444 = vmatprep.subr.bf16.mxu0 0
    %6445 = vmatpush1.bf16.xpose.msra.mxu0 0
    %6446 = vmatprep.subr.bf16.mxu0 0
    %6447 = vmatpush1.bf16.xpose.msra.mxu0 0
    %6448 = vmatprep.subr.bf16.mxu0 0
    %6449 = vmatpush1.bf16.xpose.msra.mxu0 0
    %6450 = vmatprep.subr.bf16.mxu0 0
    %6451 = vmatpush1.bf16.xpose.msra.mxu0 0
    %6452 = vmatprep.subr.bf16.mxu0 0
    %6453 = vmatpush1.bf16.xpose.msra.mxu0 %v6436
    %6454 = vmatprep.subr.bf16.mxu0 0
    %6455 = vmatpush2.bf16.xpose.msra.mxu0 0
    %6456 = vmatprep.subr.bf16.mxu0 0
    %6457 = vmatpush2.bf16.xpose.msra.mxu0 0
    %6458 = vmatprep.subr.bf16.mxu0 0
    %6459 = vmatpush2.bf16.xpose.msra.mxu0 0
    %6460 = vmatprep.subr.bf16.mxu0 0
    %6461 = vmatpush2.bf16.xpose.msra.mxu0 0
    %6462 = vmatprep.subr.bf16.mxu0 0
    %6463 = vmatpush2.bf16.xpose.msra.mxu0 0
    %6464 = vmatprep.subr.bf16.mxu0 0
    %6465 = vmatpush2.bf16.xpose.msra.mxu0 0
    %6466 = vmatprep.subr.bf16.mxu0 0
    %6467 = vmatpush2.bf16.xpose.msra.mxu0 0
    %6468 = vmatprep.subr.bf16.mxu0 0
    %6469 = vmatpush2.bf16.xpose.msra.mxu0 0
    %6470 = vmatprep.mubr.bf16.mxu0 0
    %6471 = vmatmul.mubr.bf16.gmra.mxu0 %v6433
    %v6472 = vpop.f32.mrf.mxu0
    %v6473 = vadd.f32 0.0, %v6472
    %v6474 = vpop.f32.mrf.mxu0
    %v6475 = vpop.f32.mrf.mxu0
    %v6476 = vpop.f32.mrf.mxu0
    %6477 = vdwg.mxu0
    %v6479 = vsel %vm1486, %v6372, 0
    %v6482 = vsel %vm1486, %v6380, 0
    %6484 = vmatprep.subr.bf16.mxu0 0
    %6485 = vmatpush1.bf16.xpose.msra.mxu0 0
    %6486 = vmatprep.subr.bf16.mxu0 0
    %6487 = vmatpush1.bf16.xpose.msra.mxu0 0
    %6488 = vmatprep.subr.bf16.mxu0 0
    %6489 = vmatpush1.bf16.xpose.msra.mxu0 0
    %6490 = vmatprep.subr.bf16.mxu0 0
    %6491 = vmatpush1.bf16.xpose.msra.mxu0 0
    %6492 = vmatprep.subr.bf16.mxu0 0
    %6493 = vmatpush1.bf16.xpose.msra.mxu0 0
    %6494 = vmatprep.subr.bf16.mxu0 0
    %6495 = vmatpush1.bf16.xpose.msra.mxu0 0
    %6496 = vmatprep.subr.bf16.mxu0 0
    %6497 = vmatpush1.bf16.xpose.msra.mxu0 0
    %6498 = vmatprep.subr.bf16.mxu0 0
    %6499 = vmatpush1.bf16.xpose.msra.mxu0 %v6482
    %6500 = vmatprep.subr.bf16.mxu0 0
    %6501 = vmatpush2.bf16.xpose.msra.mxu0 0
    %6502 = vmatprep.subr.bf16.mxu0 0
    %6503 = vmatpush2.bf16.xpose.msra.mxu0 0
    %6504 = vmatprep.subr.bf16.mxu0 0
    %6505 = vmatpush2.bf16.xpose.msra.mxu0 0
    %6506 = vmatprep.subr.bf16.mxu0 0
    %6507 = vmatpush2.bf16.xpose.msra.mxu0 0
    %6508 = vmatprep.subr.bf16.mxu0 0
    %6509 = vmatpush2.bf16.xpose.msra.mxu0 0
    %6510 = vmatprep.subr.bf16.mxu0 0
    %6511 = vmatpush2.bf16.xpose.msra.mxu0 0
    %6512 = vmatprep.subr.bf16.mxu0 0
    %6513 = vmatpush2.bf16.xpose.msra.mxu0 0
    %6514 = vmatprep.subr.bf16.mxu0 0
    %6515 = vmatpush2.bf16.xpose.msra.mxu0 0
    %6516 = vmatprep.mubr.bf16.mxu0 0
    %6517 = vmatmul.mubr.bf16.gmra.mxu0 %v6479
    %v6518 = vpop.f32.mrf.mxu0
    %v6519 = vadd.f32 0.0, %v6518
    %v6520 = vpop.f32.mrf.mxu0
    %v6521 = vpop.f32.mrf.mxu0
    %v6522 = vpop.f32.mrf.mxu0
    %6523 = vdwg.mxu0
    %v6525 = vsel %vm1486, %v6373, 0
    %v6528 = vsel %vm1486, %v6381, 0
    %6530 = vmatprep.subr.bf16.mxu0 0
    %6531 = vmatpush1.bf16.xpose.msra.mxu0 0
    %6532 = vmatprep.subr.bf16.mxu0 0
    %6533 = vmatpush1.bf16.xpose.msra.mxu0 0
    %6534 = vmatprep.subr.bf16.mxu0 0
    %6535 = vmatpush1.bf16.xpose.msra.mxu0 0
    %6536 = vmatprep.subr.bf16.mxu0 0
    %6537 = vmatpush1.bf16.xpose.msra.mxu0 0
    %6538 = vmatprep.subr.bf16.mxu0 0
    %6539 = vmatpush1.bf16.xpose.msra.mxu0 0
    %6540 = vmatprep.subr.bf16.mxu0 0
    %6541 = vmatpush1.bf16.xpose.msra.mxu0 0
    %6542 = vmatprep.subr.bf16.mxu0 0
    %6543 = vmatpush1.bf16.xpose.msra.mxu0 0
    %6544 = vmatprep.subr.bf16.mxu0 0
    %6545 = vmatpush1.bf16.xpose.msra.mxu0 %v6528
    %6546 = vmatprep.subr.bf16.mxu0 0
    %6547 = vmatpush2.bf16.xpose.msra.mxu0 0
    %6548 = vmatprep.subr.bf16.mxu0 0
    %6549 = vmatpush2.bf16.xpose.msra.mxu0 0
    %6550 = vmatprep.subr.bf16.mxu0 0
    %6551 = vmatpush2.bf16.xpose.msra.mxu0 0
    %6552 = vmatprep.subr.bf16.mxu0 0
    %6553 = vmatpush2.bf16.xpose.msra.mxu0 0
    %6554 = vmatprep.subr.bf16.mxu0 0
    %6555 = vmatpush2.bf16.xpose.msra.mxu0 0
    %6556 = vmatprep.subr.bf16.mxu0 0
    %6557 = vmatpush2.bf16.xpose.msra.mxu0 0
    %6558 = vmatprep.subr.bf16.mxu0 0
    %6559 = vmatpush2.bf16.xpose.msra.mxu0 0
    %6560 = vmatprep.subr.bf16.mxu0 0
    %6561 = vmatpush2.bf16.xpose.msra.mxu0 0
    %6562 = vmatprep.mubr.bf16.mxu0 0
    %6563 = vmatmul.mubr.bf16.gmra.mxu0 %v6525
    %v6564 = vpop.f32.mrf.mxu0
    %v6565 = vadd.f32 0.0, %v6564
    %v6566 = vpop.f32.mrf.mxu0
    %v6567 = vpop.f32.mrf.mxu0
    %v6568 = vpop.f32.mrf.mxu0
    %6569 = vdwg.mxu0
    %v6571 = vsel %vm1486, %v6374, 0
    %v6574 = vsel %vm1486, %v6382, 0
    %6576 = vmatprep.subr.bf16.mxu0 0
    %6577 = vmatpush1.bf16.xpose.msra.mxu0 0
    %6578 = vmatprep.subr.bf16.mxu0 0
    %6579 = vmatpush1.bf16.xpose.msra.mxu0 0
    %6580 = vmatprep.subr.bf16.mxu0 0
    %6581 = vmatpush1.bf16.xpose.msra.mxu0 0
    %6582 = vmatprep.subr.bf16.mxu0 0
    %6583 = vmatpush1.bf16.xpose.msra.mxu0 0
    %6584 = vmatprep.subr.bf16.mxu0 0
    %6585 = vmatpush1.bf16.xpose.msra.mxu0 0
    %6586 = vmatprep.subr.bf16.mxu0 0
    %6587 = vmatpush1.bf16.xpose.msra.mxu0 0
    %6588 = vmatprep.subr.bf16.mxu0 0
    %6589 = vmatpush1.bf16.xpose.msra.mxu0 0
    %6590 = vmatprep.subr.bf16.mxu0 0
    %6591 = vmatpush1.bf16.xpose.msra.mxu0 %v6574
    %6592 = vmatprep.subr.bf16.mxu0 0
    %6593 = vmatpush2.bf16.xpose.msra.mxu0 0
    %6594 = vmatprep.subr.bf16.mxu0 0
    %6595 = vmatpush2.bf16.xpose.msra.mxu0 0
    %6596 = vmatprep.subr.bf16.mxu0 0
    %6597 = vmatpush2.bf16.xpose.msra.mxu0 0
    %6598 = vmatprep.subr.bf16.mxu0 0
    %6599 = vmatpush2.bf16.xpose.msra.mxu0 0
    %6600 = vmatprep.subr.bf16.mxu0 0
    %6601 = vmatpush2.bf16.xpose.msra.mxu0 0
    %6602 = vmatprep.subr.bf16.mxu0 0
    %6603 = vmatpush2.bf16.xpose.msra.mxu0 0
    %6604 = vmatprep.subr.bf16.mxu0 0
    %6605 = vmatpush2.bf16.xpose.msra.mxu0 0
    %6606 = vmatprep.subr.bf16.mxu0 0
    %6607 = vmatpush2.bf16.xpose.msra.mxu0 0
    %6608 = vmatprep.mubr.bf16.mxu0 0
    %6609 = vmatmul.mubr.bf16.gmra.mxu0 %v6571
    %v6610 = vpop.f32.mrf.mxu0
    %v6611 = vadd.f32 0.0, %v6610
    %v6612 = vpop.f32.mrf.mxu0
    %v6613 = vpop.f32.mrf.mxu0
    %v6614 = vpop.f32.mrf.mxu0
    %6615 = vdwg.mxu0
    %v6617 = vsel %vm1486, %v6375, 0
    %v6620 = vsel %vm1486, %v6383, 0
    %6622 = vmatprep.subr.bf16.mxu0 0
    %6623 = vmatpush1.bf16.xpose.msra.mxu0 0
    %6624 = vmatprep.subr.bf16.mxu0 0
    %6625 = vmatpush1.bf16.xpose.msra.mxu0 0
    %6626 = vmatprep.subr.bf16.mxu0 0
    %6627 = vmatpush1.bf16.xpose.msra.mxu0 0
    %6628 = vmatprep.subr.bf16.mxu0 0
    %6629 = vmatpush1.bf16.xpose.msra.mxu0 0
    %6630 = vmatprep.subr.bf16.mxu0 0
    %6631 = vmatpush1.bf16.xpose.msra.mxu0 0
    %6632 = vmatprep.subr.bf16.mxu0 0
    %6633 = vmatpush1.bf16.xpose.msra.mxu0 0
    %6634 = vmatprep.subr.bf16.mxu0 0
    %6635 = vmatpush1.bf16.xpose.msra.mxu0 0
    %6636 = vmatprep.subr.bf16.mxu0 0
    %6637 = vmatpush1.bf16.xpose.msra.mxu0 %v6620
    %6638 = vmatprep.subr.bf16.mxu0 0
    %6639 = vmatpush2.bf16.xpose.msra.mxu0 0
    %6640 = vmatprep.subr.bf16.mxu0 0
    %6641 = vmatpush2.bf16.xpose.msra.mxu0 0
    %6642 = vmatprep.subr.bf16.mxu0 0
    %6643 = vmatpush2.bf16.xpose.msra.mxu0 0
    %6644 = vmatprep.subr.bf16.mxu0 0
    %6645 = vmatpush2.bf16.xpose.msra.mxu0 0
    %6646 = vmatprep.subr.bf16.mxu0 0
    %6647 = vmatpush2.bf16.xpose.msra.mxu0 0
    %6648 = vmatprep.subr.bf16.mxu0 0
    %6649 = vmatpush2.bf16.xpose.msra.mxu0 0
    %6650 = vmatprep.subr.bf16.mxu0 0
    %6651 = vmatpush2.bf16.xpose.msra.mxu0 0
    %6652 = vmatprep.subr.bf16.mxu0 0
    %6653 = vmatpush2.bf16.xpose.msra.mxu0 0
    %6654 = vmatprep.mubr.bf16.mxu0 0
    %6655 = vmatmul.mubr.bf16.gmra.mxu0 %v6617
    %v6656 = vpop.f32.mrf.mxu0
    %v6657 = vadd.f32 0.0, %v6656
    %v6658 = vpop.f32.mrf.mxu0
    %v6659 = vpop.f32.mrf.mxu0
    %v6660 = vpop.f32.mrf.mxu0
    %6661 = vdwg.mxu0
    %v6663 = vsel %vm1486, %v6376, 0
    %v6666 = vsel %vm1486, %v6384, 0
    %6668 = vmatprep.subr.bf16.mxu0 0
    %6669 = vmatpush1.bf16.xpose.msra.mxu0 0
    %6670 = vmatprep.subr.bf16.mxu0 0
    %6671 = vmatpush1.bf16.xpose.msra.mxu0 0
    %6672 = vmatprep.subr.bf16.mxu0 0
    %6673 = vmatpush1.bf16.xpose.msra.mxu0 0
    %6674 = vmatprep.subr.bf16.mxu0 0
    %6675 = vmatpush1.bf16.xpose.msra.mxu0 0
    %6676 = vmatprep.subr.bf16.mxu0 0
    %6677 = vmatpush1.bf16.xpose.msra.mxu0 0
    %6678 = vmatprep.subr.bf16.mxu0 0
    %6679 = vmatpush1.bf16.xpose.msra.mxu0 0
    %6680 = vmatprep.subr.bf16.mxu0 0
    %6681 = vmatpush1.bf16.xpose.msra.mxu0 0
    %6682 = vmatprep.subr.bf16.mxu0 0
    %6683 = vmatpush1.bf16.xpose.msra.mxu0 %v6666
    %6684 = vmatprep.subr.bf16.mxu0 0
    %6685 = vmatpush2.bf16.xpose.msra.mxu0 0
    %6686 = vmatprep.subr.bf16.mxu0 0
    %6687 = vmatpush2.bf16.xpose.msra.mxu0 0
    %6688 = vmatprep.subr.bf16.mxu0 0
    %6689 = vmatpush2.bf16.xpose.msra.mxu0 0
    %6690 = vmatprep.subr.bf16.mxu0 0
    %6691 = vmatpush2.bf16.xpose.msra.mxu0 0
    %6692 = vmatprep.subr.bf16.mxu0 0
    %6693 = vmatpush2.bf16.xpose.msra.mxu0 0
    %6694 = vmatprep.subr.bf16.mxu0 0
    %6695 = vmatpush2.bf16.xpose.msra.mxu0 0
    %6696 = vmatprep.subr.bf16.mxu0 0
    %6697 = vmatpush2.bf16.xpose.msra.mxu0 0
    %6698 = vmatprep.subr.bf16.mxu0 0
    %6699 = vmatpush2.bf16.xpose.msra.mxu0 0
    %6700 = vmatprep.mubr.bf16.mxu0 0
    %6701 = vmatmul.mubr.bf16.gmra.mxu0 %v6663
    %v6702 = vpop.f32.mrf.mxu0
    %v6703 = vadd.f32 0.0, %v6702
    %v6704 = vpop.f32.mrf.mxu0
    %v6705 = vpop.f32.mrf.mxu0
    %v6706 = vpop.f32.mrf.mxu0
    %6707 = vdwg.mxu0
    %v6709 = vsel %vm1486, %v6377, 0
    %v6712 = vsel %vm1486, %v6385, 0
    %6714 = vmatprep.subr.bf16.mxu0 0
    %6715 = vmatpush1.bf16.xpose.msra.mxu0 0
    %6716 = vmatprep.subr.bf16.mxu0 0
    %6717 = vmatpush1.bf16.xpose.msra.mxu0 0
    %6718 = vmatprep.subr.bf16.mxu0 0
    %6719 = vmatpush1.bf16.xpose.msra.mxu0 0
    %6720 = vmatprep.subr.bf16.mxu0 0
    %6721 = vmatpush1.bf16.xpose.msra.mxu0 0
    %6722 = vmatprep.subr.bf16.mxu0 0
    %6723 = vmatpush1.bf16.xpose.msra.mxu0 0
    %6724 = vmatprep.subr.bf16.mxu0 0
    %6725 = vmatpush1.bf16.xpose.msra.mxu0 0
    %6726 = vmatprep.subr.bf16.mxu0 0
    %6727 = vmatpush1.bf16.xpose.msra.mxu0 0
    %6728 = vmatprep.subr.bf16.mxu0 0
    %6729 = vmatpush1.bf16.xpose.msra.mxu0 %v6712
    %6730 = vmatprep.subr.bf16.mxu0 0
    %6731 = vmatpush2.bf16.xpose.msra.mxu0 0
    %6732 = vmatprep.subr.bf16.mxu0 0
    %6733 = vmatpush2.bf16.xpose.msra.mxu0 0
    %6734 = vmatprep.subr.bf16.mxu0 0
    %6735 = vmatpush2.bf16.xpose.msra.mxu0 0
    %6736 = vmatprep.subr.bf16.mxu0 0
    %6737 = vmatpush2.bf16.xpose.msra.mxu0 0
    %6738 = vmatprep.subr.bf16.mxu0 0
    %6739 = vmatpush2.bf16.xpose.msra.mxu0 0
    %6740 = vmatprep.subr.bf16.mxu0 0
    %6741 = vmatpush2.bf16.xpose.msra.mxu0 0
    %6742 = vmatprep.subr.bf16.mxu0 0
    %6743 = vmatpush2.bf16.xpose.msra.mxu0 0
    %6744 = vmatprep.subr.bf16.mxu0 0
    %6745 = vmatpush2.bf16.xpose.msra.mxu0 0
    %6746 = vmatprep.mubr.bf16.mxu0 0
    %6747 = vmatmul.mubr.bf16.gmra.mxu0 %v6709
    %v6748 = vpop.f32.mrf.mxu0
    %v6749 = vadd.f32 0.0, %v6748
    %v6750 = vpop.f32.mrf.mxu0
    %v6751 = vpop.f32.mrf.mxu0
    %v6752 = vpop.f32.mrf.mxu0
    %6753 = vdwg.mxu0
    %6755 = vrot.lane.b32.xlu0 %v6370, 96
    %v6756 = vpop.permute.xlu0 %6755
    %6758 = vrot.lane.b32.xlu0 %v6378, 96
    %v6759 = vpop.permute.xlu0 %6758
    %v6761 = vsel %vm1486, %v6756, 0
    %v6764 = vsel %vm1486, %v6759, 0
    %6766 = vmatprep.subr.bf16.mxu0 0
    %6767 = vmatpush1.bf16.xpose.msra.mxu0 0
    %6768 = vmatprep.subr.bf16.mxu0 0
    %6769 = vmatpush1.bf16.xpose.msra.mxu0 0
    %6770 = vmatprep.subr.bf16.mxu0 0
    %6771 = vmatpush1.bf16.xpose.msra.mxu0 0
    %6772 = vmatprep.subr.bf16.mxu0 0
    %6773 = vmatpush1.bf16.xpose.msra.mxu0 0
    %6774 = vmatprep.subr.bf16.mxu0 0
    %6775 = vmatpush1.bf16.xpose.msra.mxu0 0
    %6776 = vmatprep.subr.bf16.mxu0 0
    %6777 = vmatpush1.bf16.xpose.msra.mxu0 0
    %6778 = vmatprep.subr.bf16.mxu0 0
    %6779 = vmatpush1.bf16.xpose.msra.mxu0 0
    %6780 = vmatprep.subr.bf16.mxu0 0
    %6781 = vmatpush1.bf16.xpose.msra.mxu0 %v6764
    %6782 = vmatprep.subr.bf16.mxu0 0
    %6783 = vmatpush2.bf16.xpose.msra.mxu0 0
    %6784 = vmatprep.subr.bf16.mxu0 0
    %6785 = vmatpush2.bf16.xpose.msra.mxu0 0
    %6786 = vmatprep.subr.bf16.mxu0 0
    %6787 = vmatpush2.bf16.xpose.msra.mxu0 0
    %6788 = vmatprep.subr.bf16.mxu0 0
    %6789 = vmatpush2.bf16.xpose.msra.mxu0 0
    %6790 = vmatprep.subr.bf16.mxu0 0
    %6791 = vmatpush2.bf16.xpose.msra.mxu0 0
    %6792 = vmatprep.subr.bf16.mxu0 0
    %6793 = vmatpush2.bf16.xpose.msra.mxu0 0
    %6794 = vmatprep.subr.bf16.mxu0 0
    %6795 = vmatpush2.bf16.xpose.msra.mxu0 0
    %6796 = vmatprep.subr.bf16.mxu0 0
    %6797 = vmatpush2.bf16.xpose.msra.mxu0 0
    %6798 = vmatprep.mubr.bf16.mxu0 0
    %6799 = vmatmul.mubr.bf16.gmra.mxu0 %v6761
    %v6800 = vpop.f32.mrf.mxu0
    %v6801 = vadd.f32 0.0, %v6800
    %v6802 = vpop.f32.mrf.mxu0
    %v6803 = vpop.f32.mrf.mxu0
    %v6804 = vpop.f32.mrf.mxu0
    %6805 = vdwg.mxu0
    %6807 = vrot.lane.b32.xlu0 %v6371, 96
    %v6808 = vpop.permute.xlu0 %6807
    %6810 = vrot.lane.b32.xlu0 %v6379, 96
    %v6811 = vpop.permute.xlu0 %6810
    %v6813 = vsel %vm1486, %v6808, 0
    %v6816 = vsel %vm1486, %v6811, 0
    %6818 = vmatprep.subr.bf16.mxu0 0
    %6819 = vmatpush1.bf16.xpose.msra.mxu0 0
    %6820 = vmatprep.subr.bf16.mxu0 0
    %6821 = vmatpush1.bf16.xpose.msra.mxu0 0
    %6822 = vmatprep.subr.bf16.mxu0 0
    %6823 = vmatpush1.bf16.xpose.msra.mxu0 0
    %6824 = vmatprep.subr.bf16.mxu0 0
    %6825 = vmatpush1.bf16.xpose.msra.mxu0 0
    %6826 = vmatprep.subr.bf16.mxu0 0
    %6827 = vmatpush1.bf16.xpose.msra.mxu0 0
    %6828 = vmatprep.subr.bf16.mxu0 0
    %6829 = vmatpush1.bf16.xpose.msra.mxu0 0
    %6830 = vmatprep.subr.bf16.mxu0 0
    %6831 = vmatpush1.bf16.xpose.msra.mxu0 0
    %6832 = vmatprep.subr.bf16.mxu0 0
    %6833 = vmatpush1.bf16.xpose.msra.mxu0 %v6816
    %6834 = vmatprep.subr.bf16.mxu0 0
    %6835 = vmatpush2.bf16.xpose.msra.mxu0 0
    %6836 = vmatprep.subr.bf16.mxu0 0
    %6837 = vmatpush2.bf16.xpose.msra.mxu0 0
    %6838 = vmatprep.subr.bf16.mxu0 0
    %6839 = vmatpush2.bf16.xpose.msra.mxu0 0
    %6840 = vmatprep.subr.bf16.mxu0 0
    %6841 = vmatpush2.bf16.xpose.msra.mxu0 0
    %6842 = vmatprep.subr.bf16.mxu0 0
    %6843 = vmatpush2.bf16.xpose.msra.mxu0 0
    %6844 = vmatprep.subr.bf16.mxu0 0
    %6845 = vmatpush2.bf16.xpose.msra.mxu0 0
    %6846 = vmatprep.subr.bf16.mxu0 0
    %6847 = vmatpush2.bf16.xpose.msra.mxu0 0
    %6848 = vmatprep.subr.bf16.mxu0 0
    %6849 = vmatpush2.bf16.xpose.msra.mxu0 0
    %6850 = vmatprep.mubr.bf16.mxu0 0
    %6851 = vmatmul.mubr.bf16.gmra.mxu0 %v6813
    %v6852 = vpop.f32.mrf.mxu0
    %v6853 = vadd.f32 0.0, %v6852
    %v6854 = vpop.f32.mrf.mxu0
    %v6855 = vpop.f32.mrf.mxu0
    %v6856 = vpop.f32.mrf.mxu0
    %6857 = vdwg.mxu0
    %6859 = vrot.lane.b32.xlu0 %v6372, 96
    %v6860 = vpop.permute.xlu0 %6859
    %6862 = vrot.lane.b32.xlu0 %v6380, 96
    %v6863 = vpop.permute.xlu0 %6862
    %v6865 = vsel %vm1486, %v6860, 0
    %v6868 = vsel %vm1486, %v6863, 0
    %6870 = vmatprep.subr.bf16.mxu0 0
    %6871 = vmatpush1.bf16.xpose.msra.mxu0 0
    %6872 = vmatprep.subr.bf16.mxu0 0
    %6873 = vmatpush1.bf16.xpose.msra.mxu0 0
    %6874 = vmatprep.subr.bf16.mxu0 0
    %6875 = vmatpush1.bf16.xpose.msra.mxu0 0
    %6876 = vmatprep.subr.bf16.mxu0 0
    %6877 = vmatpush1.bf16.xpose.msra.mxu0 0
    %6878 = vmatprep.subr.bf16.mxu0 0
    %6879 = vmatpush1.bf16.xpose.msra.mxu0 0
    %6880 = vmatprep.subr.bf16.mxu0 0
    %6881 = vmatpush1.bf16.xpose.msra.mxu0 0
    %6882 = vmatprep.subr.bf16.mxu0 0
    %6883 = vmatpush1.bf16.xpose.msra.mxu0 0
    %6884 = vmatprep.subr.bf16.mxu0 0
    %6885 = vmatpush1.bf16.xpose.msra.mxu0 %v6868
    %6886 = vmatprep.subr.bf16.mxu0 0
    %6887 = vmatpush2.bf16.xpose.msra.mxu0 0
    %6888 = vmatprep.subr.bf16.mxu0 0
    %6889 = vmatpush2.bf16.xpose.msra.mxu0 0
    %6890 = vmatprep.subr.bf16.mxu0 0
    %6891 = vmatpush2.bf16.xpose.msra.mxu0 0
    %6892 = vmatprep.subr.bf16.mxu0 0
    %6893 = vmatpush2.bf16.xpose.msra.mxu0 0
    %6894 = vmatprep.subr.bf16.mxu0 0
    %6895 = vmatpush2.bf16.xpose.msra.mxu0 0
    %6896 = vmatprep.subr.bf16.mxu0 0
    %6897 = vmatpush2.bf16.xpose.msra.mxu0 0
    %6898 = vmatprep.subr.bf16.mxu0 0
    %6899 = vmatpush2.bf16.xpose.msra.mxu0 0
    %6900 = vmatprep.subr.bf16.mxu0 0
    %6901 = vmatpush2.bf16.xpose.msra.mxu0 0
    %6902 = vmatprep.mubr.bf16.mxu0 0
    %6903 = vmatmul.mubr.bf16.gmra.mxu0 %v6865
    %v6904 = vpop.f32.mrf.mxu0
    %v6905 = vadd.f32 0.0, %v6904
    %v6906 = vpop.f32.mrf.mxu0
    %v6907 = vpop.f32.mrf.mxu0
    %v6908 = vpop.f32.mrf.mxu0
    %6909 = vdwg.mxu0
    %6911 = vrot.lane.b32.xlu0 %v6373, 96
    %v6912 = vpop.permute.xlu0 %6911
    %6914 = vrot.lane.b32.xlu0 %v6381, 96
    %v6915 = vpop.permute.xlu0 %6914
    %v6917 = vsel %vm1486, %v6912, 0
    %v6920 = vsel %vm1486, %v6915, 0
    %6922 = vmatprep.subr.bf16.mxu0 0
    %6923 = vmatpush1.bf16.xpose.msra.mxu0 0
    %6924 = vmatprep.subr.bf16.mxu0 0
    %6925 = vmatpush1.bf16.xpose.msra.mxu0 0
    %6926 = vmatprep.subr.bf16.mxu0 0
    %6927 = vmatpush1.bf16.xpose.msra.mxu0 0
    %6928 = vmatprep.subr.bf16.mxu0 0
    %6929 = vmatpush1.bf16.xpose.msra.mxu0 0
    %6930 = vmatprep.subr.bf16.mxu0 0
    %6931 = vmatpush1.bf16.xpose.msra.mxu0 0
    %6932 = vmatprep.subr.bf16.mxu0 0
    %6933 = vmatpush1.bf16.xpose.msra.mxu0 0
    %6934 = vmatprep.subr.bf16.mxu0 0
    %6935 = vmatpush1.bf16.xpose.msra.mxu0 0
    %6936 = vmatprep.subr.bf16.mxu0 0
    %6937 = vmatpush1.bf16.xpose.msra.mxu0 %v6920
    %6938 = vmatprep.subr.bf16.mxu0 0
    %6939 = vmatpush2.bf16.xpose.msra.mxu0 0
    %6940 = vmatprep.subr.bf16.mxu0 0
    %6941 = vmatpush2.bf16.xpose.msra.mxu0 0
    %6942 = vmatprep.subr.bf16.mxu0 0
    %6943 = vmatpush2.bf16.xpose.msra.mxu0 0
    %6944 = vmatprep.subr.bf16.mxu0 0
    %6945 = vmatpush2.bf16.xpose.msra.mxu0 0
    %6946 = vmatprep.subr.bf16.mxu0 0
    %6947 = vmatpush2.bf16.xpose.msra.mxu0 0
    %6948 = vmatprep.subr.bf16.mxu0 0
    %6949 = vmatpush2.bf16.xpose.msra.mxu0 0
    %6950 = vmatprep.subr.bf16.mxu0 0
    %6951 = vmatpush2.bf16.xpose.msra.mxu0 0
    %6952 = vmatprep.subr.bf16.mxu0 0
    %6953 = vmatpush2.bf16.xpose.msra.mxu0 0
    %6954 = vmatprep.mubr.bf16.mxu0 0
    %6955 = vmatmul.mubr.bf16.gmra.mxu0 %v6917
    %v6956 = vpop.f32.mrf.mxu0
    %v6957 = vadd.f32 0.0, %v6956
    %v6958 = vpop.f32.mrf.mxu0
    %v6959 = vpop.f32.mrf.mxu0
    %v6960 = vpop.f32.mrf.mxu0
    %6961 = vdwg.mxu0
    %6963 = vrot.lane.b32.xlu0 %v6374, 96
    %v6964 = vpop.permute.xlu0 %6963
    %6966 = vrot.lane.b32.xlu0 %v6382, 96
    %v6967 = vpop.permute.xlu0 %6966
    %v6969 = vsel %vm1486, %v6964, 0
    %v6972 = vsel %vm1486, %v6967, 0
    %6974 = vmatprep.subr.bf16.mxu0 0
    %6975 = vmatpush1.bf16.xpose.msra.mxu0 0
    %6976 = vmatprep.subr.bf16.mxu0 0
    %6977 = vmatpush1.bf16.xpose.msra.mxu0 0
    %6978 = vmatprep.subr.bf16.mxu0 0
    %6979 = vmatpush1.bf16.xpose.msra.mxu0 0
    %6980 = vmatprep.subr.bf16.mxu0 0
    %6981 = vmatpush1.bf16.xpose.msra.mxu0 0
    %6982 = vmatprep.subr.bf16.mxu0 0
    %6983 = vmatpush1.bf16.xpose.msra.mxu0 0
    %6984 = vmatprep.subr.bf16.mxu0 0
    %6985 = vmatpush1.bf16.xpose.msra.mxu0 0
    %6986 = vmatprep.subr.bf16.mxu0 0
    %6987 = vmatpush1.bf16.xpose.msra.mxu0 0
    %6988 = vmatprep.subr.bf16.mxu0 0
    %6989 = vmatpush1.bf16.xpose.msra.mxu0 %v6972
    %6990 = vmatprep.subr.bf16.mxu0 0
    %6991 = vmatpush2.bf16.xpose.msra.mxu0 0
    %6992 = vmatprep.subr.bf16.mxu0 0
    %6993 = vmatpush2.bf16.xpose.msra.mxu0 0
    %6994 = vmatprep.subr.bf16.mxu0 0
    %6995 = vmatpush2.bf16.xpose.msra.mxu0 0
    %6996 = vmatprep.subr.bf16.mxu0 0
    %6997 = vmatpush2.bf16.xpose.msra.mxu0 0
    %6998 = vmatprep.subr.bf16.mxu0 0
    %6999 = vmatpush2.bf16.xpose.msra.mxu0 0
    %7000 = vmatprep.subr.bf16.mxu0 0
    %7001 = vmatpush2.bf16.xpose.msra.mxu0 0
    %7002 = vmatprep.subr.bf16.mxu0 0
    %7003 = vmatpush2.bf16.xpose.msra.mxu0 0
    %7004 = vmatprep.subr.bf16.mxu0 0
    %7005 = vmatpush2.bf16.xpose.msra.mxu0 0
    %7006 = vmatprep.mubr.bf16.mxu0 0
    %7007 = vmatmul.mubr.bf16.gmra.mxu0 %v6969
    %v7008 = vpop.f32.mrf.mxu0
    %v7009 = vadd.f32 0.0, %v7008
    %v7010 = vpop.f32.mrf.mxu0
    %v7011 = vpop.f32.mrf.mxu0
    %v7012 = vpop.f32.mrf.mxu0
    %7013 = vdwg.mxu0
    %7015 = vrot.lane.b32.xlu0 %v6375, 96
    %v7016 = vpop.permute.xlu0 %7015
    %7018 = vrot.lane.b32.xlu0 %v6383, 96
    %v7019 = vpop.permute.xlu0 %7018
    %v7021 = vsel %vm1486, %v7016, 0
    %v7024 = vsel %vm1486, %v7019, 0
    %7026 = vmatprep.subr.bf16.mxu0 0
    %7027 = vmatpush1.bf16.xpose.msra.mxu0 0
    %7028 = vmatprep.subr.bf16.mxu0 0
    %7029 = vmatpush1.bf16.xpose.msra.mxu0 0
    %7030 = vmatprep.subr.bf16.mxu0 0
    %7031 = vmatpush1.bf16.xpose.msra.mxu0 0
    %7032 = vmatprep.subr.bf16.mxu0 0
    %7033 = vmatpush1.bf16.xpose.msra.mxu0 0
    %7034 = vmatprep.subr.bf16.mxu0 0
    %7035 = vmatpush1.bf16.xpose.msra.mxu0 0
    %7036 = vmatprep.subr.bf16.mxu0 0
    %7037 = vmatpush1.bf16.xpose.msra.mxu0 0
    %7038 = vmatprep.subr.bf16.mxu0 0
    %7039 = vmatpush1.bf16.xpose.msra.mxu0 0
    %7040 = vmatprep.subr.bf16.mxu0 0
    %7041 = vmatpush1.bf16.xpose.msra.mxu0 %v7024
    %7042 = vmatprep.subr.bf16.mxu0 0
    %7043 = vmatpush2.bf16.xpose.msra.mxu0 0
    %7044 = vmatprep.subr.bf16.mxu0 0
    %7045 = vmatpush2.bf16.xpose.msra.mxu0 0
    %7046 = vmatprep.subr.bf16.mxu0 0
    %7047 = vmatpush2.bf16.xpose.msra.mxu0 0
    %7048 = vmatprep.subr.bf16.mxu0 0
    %7049 = vmatpush2.bf16.xpose.msra.mxu0 0
    %7050 = vmatprep.subr.bf16.mxu0 0
    %7051 = vmatpush2.bf16.xpose.msra.mxu0 0
    %7052 = vmatprep.subr.bf16.mxu0 0
    %7053 = vmatpush2.bf16.xpose.msra.mxu0 0
    %7054 = vmatprep.subr.bf16.mxu0 0
    %7055 = vmatpush2.bf16.xpose.msra.mxu0 0
    %7056 = vmatprep.subr.bf16.mxu0 0
    %7057 = vmatpush2.bf16.xpose.msra.mxu0 0
    %7058 = vmatprep.mubr.bf16.mxu0 0
    %7059 = vmatmul.mubr.bf16.gmra.mxu0 %v7021
    %v7060 = vpop.f32.mrf.mxu0
    %v7061 = vadd.f32 0.0, %v7060
    %v7062 = vpop.f32.mrf.mxu0
    %v7063 = vpop.f32.mrf.mxu0
    %v7064 = vpop.f32.mrf.mxu0
    %7065 = vdwg.mxu0
    %7067 = vrot.lane.b32.xlu0 %v6376, 96
    %v7068 = vpop.permute.xlu0 %7067
    %7070 = vrot.lane.b32.xlu0 %v6384, 96
    %v7071 = vpop.permute.xlu0 %7070
    %v7073 = vsel %vm1486, %v7068, 0
    %v7076 = vsel %vm1486, %v7071, 0
    %7078 = vmatprep.subr.bf16.mxu0 0
    %7079 = vmatpush1.bf16.xpose.msra.mxu0 0
    %7080 = vmatprep.subr.bf16.mxu0 0
    %7081 = vmatpush1.bf16.xpose.msra.mxu0 0
    %7082 = vmatprep.subr.bf16.mxu0 0
    %7083 = vmatpush1.bf16.xpose.msra.mxu0 0
    %7084 = vmatprep.subr.bf16.mxu0 0
    %7085 = vmatpush1.bf16.xpose.msra.mxu0 0
    %7086 = vmatprep.subr.bf16.mxu0 0
    %7087 = vmatpush1.bf16.xpose.msra.mxu0 0
    %7088 = vmatprep.subr.bf16.mxu0 0
    %7089 = vmatpush1.bf16.xpose.msra.mxu0 0
    %7090 = vmatprep.subr.bf16.mxu0 0
    %7091 = vmatpush1.bf16.xpose.msra.mxu0 0
    %7092 = vmatprep.subr.bf16.mxu0 0
    %7093 = vmatpush1.bf16.xpose.msra.mxu0 %v7076
    %7094 = vmatprep.subr.bf16.mxu0 0
    %7095 = vmatpush2.bf16.xpose.msra.mxu0 0
    %7096 = vmatprep.subr.bf16.mxu0 0
    %7097 = vmatpush2.bf16.xpose.msra.mxu0 0
    %7098 = vmatprep.subr.bf16.mxu0 0
    %7099 = vmatpush2.bf16.xpose.msra.mxu0 0
    %7100 = vmatprep.subr.bf16.mxu0 0
    %7101 = vmatpush2.bf16.xpose.msra.mxu0 0
    %7102 = vmatprep.subr.bf16.mxu0 0
    %7103 = vmatpush2.bf16.xpose.msra.mxu0 0
    %7104 = vmatprep.subr.bf16.mxu0 0
    %7105 = vmatpush2.bf16.xpose.msra.mxu0 0
    %7106 = vmatprep.subr.bf16.mxu0 0
    %7107 = vmatpush2.bf16.xpose.msra.mxu0 0
    %7108 = vmatprep.subr.bf16.mxu0 0
    %7109 = vmatpush2.bf16.xpose.msra.mxu0 0
    %7110 = vmatprep.mubr.bf16.mxu0 0
    %7111 = vmatmul.mubr.bf16.gmra.mxu0 %v7073
    %v7112 = vpop.f32.mrf.mxu0
    %v7113 = vadd.f32 0.0, %v7112
    %v7114 = vpop.f32.mrf.mxu0
    %v7115 = vpop.f32.mrf.mxu0
    %v7116 = vpop.f32.mrf.mxu0
    %7117 = vdwg.mxu0
    %7119 = vrot.lane.b32.xlu0 %v6377, 96
    %v7120 = vpop.permute.xlu0 %7119
    %7122 = vrot.lane.b32.xlu0 %v6385, 96
    %v7123 = vpop.permute.xlu0 %7122
    %v7125 = vsel %vm1486, %v7120, 0
    %v7128 = vsel %vm1486, %v7123, 0
    %7130 = vmatprep.subr.bf16.mxu0 0
    %7131 = vmatpush1.bf16.xpose.msra.mxu0 0
    %7132 = vmatprep.subr.bf16.mxu0 0
    %7133 = vmatpush1.bf16.xpose.msra.mxu0 0
    %7134 = vmatprep.subr.bf16.mxu0 0
    %7135 = vmatpush1.bf16.xpose.msra.mxu0 0
    %7136 = vmatprep.subr.bf16.mxu0 0
    %7137 = vmatpush1.bf16.xpose.msra.mxu0 0
    %7138 = vmatprep.subr.bf16.mxu0 0
    %7139 = vmatpush1.bf16.xpose.msra.mxu0 0
    %7140 = vmatprep.subr.bf16.mxu0 0
    %7141 = vmatpush1.bf16.xpose.msra.mxu0 0
    %7142 = vmatprep.subr.bf16.mxu0 0
    %7143 = vmatpush1.bf16.xpose.msra.mxu0 0
    %7144 = vmatprep.subr.bf16.mxu0 0
    %7145 = vmatpush1.bf16.xpose.msra.mxu0 %v7128
    %7146 = vmatprep.subr.bf16.mxu0 0
    %7147 = vmatpush2.bf16.xpose.msra.mxu0 0
    %7148 = vmatprep.subr.bf16.mxu0 0
    %7149 = vmatpush2.bf16.xpose.msra.mxu0 0
    %7150 = vmatprep.subr.bf16.mxu0 0
    %7151 = vmatpush2.bf16.xpose.msra.mxu0 0
    %7152 = vmatprep.subr.bf16.mxu0 0
    %7153 = vmatpush2.bf16.xpose.msra.mxu0 0
    %7154 = vmatprep.subr.bf16.mxu0 0
    %7155 = vmatpush2.bf16.xpose.msra.mxu0 0
    %7156 = vmatprep.subr.bf16.mxu0 0
    %7157 = vmatpush2.bf16.xpose.msra.mxu0 0
    %7158 = vmatprep.subr.bf16.mxu0 0
    %7159 = vmatpush2.bf16.xpose.msra.mxu0 0
    %7160 = vmatprep.subr.bf16.mxu0 0
    %7161 = vmatpush2.bf16.xpose.msra.mxu0 0
    %7162 = vmatprep.mubr.bf16.mxu0 0
    %7163 = vmatmul.mubr.bf16.gmra.mxu0 %v7125
    %v7164 = vpop.f32.mrf.mxu0
    %v7165 = vadd.f32 0.0, %v7164
    %v7166 = vpop.f32.mrf.mxu0
    %v7167 = vpop.f32.mrf.mxu0
    %v7168 = vpop.f32.mrf.mxu0
    %7169 = vdwg.mxu0
    %7170 = vrot.lane.b32.xlu0 %v6370, 64
    %v7171 = vpop.permute.xlu0 %7170
    %7172 = vrot.lane.b32.xlu0 %v6378, 64
    %v7173 = vpop.permute.xlu0 %7172
    %v7175 = vsel %vm1486, %v7171, 0
    %v7178 = vsel %vm1486, %v7173, 0
    %7180 = vmatprep.subr.bf16.mxu0 0
    %7181 = vmatpush1.bf16.xpose.msra.mxu0 0
    %7182 = vmatprep.subr.bf16.mxu0 0
    %7183 = vmatpush1.bf16.xpose.msra.mxu0 0
    %7184 = vmatprep.subr.bf16.mxu0 0
    %7185 = vmatpush1.bf16.xpose.msra.mxu0 0
    %7186 = vmatprep.subr.bf16.mxu0 0
    %7187 = vmatpush1.bf16.xpose.msra.mxu0 0
    %7188 = vmatprep.subr.bf16.mxu0 0
    %7189 = vmatpush1.bf16.xpose.msra.mxu0 0
    %7190 = vmatprep.subr.bf16.mxu0 0
    %7191 = vmatpush1.bf16.xpose.msra.mxu0 0
    %7192 = vmatprep.subr.bf16.mxu0 0
    %7193 = vmatpush1.bf16.xpose.msra.mxu0 0
    %7194 = vmatprep.subr.bf16.mxu0 0
    %7195 = vmatpush1.bf16.xpose.msra.mxu0 %v7178
    %7196 = vmatprep.subr.bf16.mxu0 0
    %7197 = vmatpush2.bf16.xpose.msra.mxu0 0
    %7198 = vmatprep.subr.bf16.mxu0 0
    %7199 = vmatpush2.bf16.xpose.msra.mxu0 0
    %7200 = vmatprep.subr.bf16.mxu0 0
    %7201 = vmatpush2.bf16.xpose.msra.mxu0 0
    %7202 = vmatprep.subr.bf16.mxu0 0
    %7203 = vmatpush2.bf16.xpose.msra.mxu0 0
    %7204 = vmatprep.subr.bf16.mxu0 0
    %7205 = vmatpush2.bf16.xpose.msra.mxu0 0
    %7206 = vmatprep.subr.bf16.mxu0 0
    %7207 = vmatpush2.bf16.xpose.msra.mxu0 0
    %7208 = vmatprep.subr.bf16.mxu0 0
    %7209 = vmatpush2.bf16.xpose.msra.mxu0 0
    %7210 = vmatprep.subr.bf16.mxu0 0
    %7211 = vmatpush2.bf16.xpose.msra.mxu0 0
    %7212 = vmatprep.mubr.bf16.mxu0 0
    %7213 = vmatmul.mubr.bf16.gmra.mxu0 %v7175
    %v7214 = vpop.f32.mrf.mxu0
    %v7215 = vadd.f32 0.0, %v7214
    %v7216 = vpop.f32.mrf.mxu0
    %v7217 = vpop.f32.mrf.mxu0
    %v7218 = vpop.f32.mrf.mxu0
    %7219 = vdwg.mxu0
    %7220 = vrot.lane.b32.xlu0 %v6371, 64
    %v7221 = vpop.permute.xlu0 %7220
    %7222 = vrot.lane.b32.xlu0 %v6379, 64
    %v7223 = vpop.permute.xlu0 %7222
    %v7225 = vsel %vm1486, %v7221, 0
    %v7228 = vsel %vm1486, %v7223, 0
    %7230 = vmatprep.subr.bf16.mxu0 0
    %7231 = vmatpush1.bf16.xpose.msra.mxu0 0
    %7232 = vmatprep.subr.bf16.mxu0 0
    %7233 = vmatpush1.bf16.xpose.msra.mxu0 0
    %7234 = vmatprep.subr.bf16.mxu0 0
    %7235 = vmatpush1.bf16.xpose.msra.mxu0 0
    %7236 = vmatprep.subr.bf16.mxu0 0
    %7237 = vmatpush1.bf16.xpose.msra.mxu0 0
    %7238 = vmatprep.subr.bf16.mxu0 0
    %7239 = vmatpush1.bf16.xpose.msra.mxu0 0
    %7240 = vmatprep.subr.bf16.mxu0 0
    %7241 = vmatpush1.bf16.xpose.msra.mxu0 0
    %7242 = vmatprep.subr.bf16.mxu0 0
    %7243 = vmatpush1.bf16.xpose.msra.mxu0 0
    %7244 = vmatprep.subr.bf16.mxu0 0
    %7245 = vmatpush1.bf16.xpose.msra.mxu0 %v7228
    %7246 = vmatprep.subr.bf16.mxu0 0
    %7247 = vmatpush2.bf16.xpose.msra.mxu0 0
    %7248 = vmatprep.subr.bf16.mxu0 0
    %7249 = vmatpush2.bf16.xpose.msra.mxu0 0
    %7250 = vmatprep.subr.bf16.mxu0 0
    %7251 = vmatpush2.bf16.xpose.msra.mxu0 0
    %7252 = vmatprep.subr.bf16.mxu0 0
    %7253 = vmatpush2.bf16.xpose.msra.mxu0 0
    %7254 = vmatprep.subr.bf16.mxu0 0
    %7255 = vmatpush2.bf16.xpose.msra.mxu0 0
    %7256 = vmatprep.subr.bf16.mxu0 0
    %7257 = vmatpush2.bf16.xpose.msra.mxu0 0
    %7258 = vmatprep.subr.bf16.mxu0 0
    %7259 = vmatpush2.bf16.xpose.msra.mxu0 0
    %7260 = vmatprep.subr.bf16.mxu0 0
    %7261 = vmatpush2.bf16.xpose.msra.mxu0 0
    %7262 = vmatprep.mubr.bf16.mxu0 0
    %7263 = vmatmul.mubr.bf16.gmra.mxu0 %v7225
    %v7264 = vpop.f32.mrf.mxu0
    %v7265 = vadd.f32 0.0, %v7264
    %v7266 = vpop.f32.mrf.mxu0
    %v7267 = vpop.f32.mrf.mxu0
    %v7268 = vpop.f32.mrf.mxu0
    %7269 = vdwg.mxu0
    %7270 = vrot.lane.b32.xlu0 %v6372, 64
    %v7271 = vpop.permute.xlu0 %7270
    %7272 = vrot.lane.b32.xlu0 %v6380, 64
    %v7273 = vpop.permute.xlu0 %7272
    %v7275 = vsel %vm1486, %v7271, 0
    %v7278 = vsel %vm1486, %v7273, 0
    %7280 = vmatprep.subr.bf16.mxu0 0
    %7281 = vmatpush1.bf16.xpose.msra.mxu0 0
    %7282 = vmatprep.subr.bf16.mxu0 0
    %7283 = vmatpush1.bf16.xpose.msra.mxu0 0
    %7284 = vmatprep.subr.bf16.mxu0 0
    %7285 = vmatpush1.bf16.xpose.msra.mxu0 0
    %7286 = vmatprep.subr.bf16.mxu0 0
    %7287 = vmatpush1.bf16.xpose.msra.mxu0 0
    %7288 = vmatprep.subr.bf16.mxu0 0
    %7289 = vmatpush1.bf16.xpose.msra.mxu0 0
    %7290 = vmatprep.subr.bf16.mxu0 0
    %7291 = vmatpush1.bf16.xpose.msra.mxu0 0
    %7292 = vmatprep.subr.bf16.mxu0 0
    %7293 = vmatpush1.bf16.xpose.msra.mxu0 0
    %7294 = vmatprep.subr.bf16.mxu0 0
    %7295 = vmatpush1.bf16.xpose.msra.mxu0 %v7278
    %7296 = vmatprep.subr.bf16.mxu0 0
    %7297 = vmatpush2.bf16.xpose.msra.mxu0 0
    %7298 = vmatprep.subr.bf16.mxu0 0
    %7299 = vmatpush2.bf16.xpose.msra.mxu0 0
    %7300 = vmatprep.subr.bf16.mxu0 0
    %7301 = vmatpush2.bf16.xpose.msra.mxu0 0
    %7302 = vmatprep.subr.bf16.mxu0 0
    %7303 = vmatpush2.bf16.xpose.msra.mxu0 0
    %7304 = vmatprep.subr.bf16.mxu0 0
    %7305 = vmatpush2.bf16.xpose.msra.mxu0 0
    %7306 = vmatprep.subr.bf16.mxu0 0
    %7307 = vmatpush2.bf16.xpose.msra.mxu0 0
    %7308 = vmatprep.subr.bf16.mxu0 0
    %7309 = vmatpush2.bf16.xpose.msra.mxu0 0
    %7310 = vmatprep.subr.bf16.mxu0 0
    %7311 = vmatpush2.bf16.xpose.msra.mxu0 0
    %7312 = vmatprep.mubr.bf16.mxu0 0
    %7313 = vmatmul.mubr.bf16.gmra.mxu0 %v7275
    %v7314 = vpop.f32.mrf.mxu0
    %v7315 = vadd.f32 0.0, %v7314
    %v7316 = vpop.f32.mrf.mxu0
    %v7317 = vpop.f32.mrf.mxu0
    %v7318 = vpop.f32.mrf.mxu0
    %7319 = vdwg.mxu0
    %7320 = vrot.lane.b32.xlu0 %v6373, 64
    %v7321 = vpop.permute.xlu0 %7320
    %7322 = vrot.lane.b32.xlu0 %v6381, 64
    %v7323 = vpop.permute.xlu0 %7322
    %v7325 = vsel %vm1486, %v7321, 0
    %v7328 = vsel %vm1486, %v7323, 0
    %7330 = vmatprep.subr.bf16.mxu0 0
    %7331 = vmatpush1.bf16.xpose.msra.mxu0 0
    %7332 = vmatprep.subr.bf16.mxu0 0
    %7333 = vmatpush1.bf16.xpose.msra.mxu0 0
    %7334 = vmatprep.subr.bf16.mxu0 0
    %7335 = vmatpush1.bf16.xpose.msra.mxu0 0
    %7336 = vmatprep.subr.bf16.mxu0 0
    %7337 = vmatpush1.bf16.xpose.msra.mxu0 0
    %7338 = vmatprep.subr.bf16.mxu0 0
    %7339 = vmatpush1.bf16.xpose.msra.mxu0 0
    %7340 = vmatprep.subr.bf16.mxu0 0
    %7341 = vmatpush1.bf16.xpose.msra.mxu0 0
    %7342 = vmatprep.subr.bf16.mxu0 0
    %7343 = vmatpush1.bf16.xpose.msra.mxu0 0
    %7344 = vmatprep.subr.bf16.mxu0 0
    %7345 = vmatpush1.bf16.xpose.msra.mxu0 %v7328
    %7346 = vmatprep.subr.bf16.mxu0 0
    %7347 = vmatpush2.bf16.xpose.msra.mxu0 0
    %7348 = vmatprep.subr.bf16.mxu0 0
    %7349 = vmatpush2.bf16.xpose.msra.mxu0 0
    %7350 = vmatprep.subr.bf16.mxu0 0
    %7351 = vmatpush2.bf16.xpose.msra.mxu0 0
    %7352 = vmatprep.subr.bf16.mxu0 0
    %7353 = vmatpush2.bf16.xpose.msra.mxu0 0
    %7354 = vmatprep.subr.bf16.mxu0 0
    %7355 = vmatpush2.bf16.xpose.msra.mxu0 0
    %7356 = vmatprep.subr.bf16.mxu0 0
    %7357 = vmatpush2.bf16.xpose.msra.mxu0 0
    %7358 = vmatprep.subr.bf16.mxu0 0
    %7359 = vmatpush2.bf16.xpose.msra.mxu0 0
    %7360 = vmatprep.subr.bf16.mxu0 0
    %7361 = vmatpush2.bf16.xpose.msra.mxu0 0
    %7362 = vmatprep.mubr.bf16.mxu0 0
    %7363 = vmatmul.mubr.bf16.gmra.mxu0 %v7325
    %v7364 = vpop.f32.mrf.mxu0
    %v7365 = vadd.f32 0.0, %v7364
    %v7366 = vpop.f32.mrf.mxu0
    %v7367 = vpop.f32.mrf.mxu0
    %v7368 = vpop.f32.mrf.mxu0
    %7369 = vdwg.mxu0
    %7370 = vrot.lane.b32.xlu0 %v6374, 64
    %v7371 = vpop.permute.xlu0 %7370
    %7372 = vrot.lane.b32.xlu0 %v6382, 64
    %v7373 = vpop.permute.xlu0 %7372
    %v7375 = vsel %vm1486, %v7371, 0
    %v7378 = vsel %vm1486, %v7373, 0
    %7380 = vmatprep.subr.bf16.mxu0 0
    %7381 = vmatpush1.bf16.xpose.msra.mxu0 0
    %7382 = vmatprep.subr.bf16.mxu0 0
    %7383 = vmatpush1.bf16.xpose.msra.mxu0 0
    %7384 = vmatprep.subr.bf16.mxu0 0
    %7385 = vmatpush1.bf16.xpose.msra.mxu0 0
    %7386 = vmatprep.subr.bf16.mxu0 0
    %7387 = vmatpush1.bf16.xpose.msra.mxu0 0
    %7388 = vmatprep.subr.bf16.mxu0 0
    %7389 = vmatpush1.bf16.xpose.msra.mxu0 0
    %7390 = vmatprep.subr.bf16.mxu0 0
    %7391 = vmatpush1.bf16.xpose.msra.mxu0 0
    %7392 = vmatprep.subr.bf16.mxu0 0
    %7393 = vmatpush1.bf16.xpose.msra.mxu0 0
    %7394 = vmatprep.subr.bf16.mxu0 0
    %7395 = vmatpush1.bf16.xpose.msra.mxu0 %v7378
    %7396 = vmatprep.subr.bf16.mxu0 0
    %7397 = vmatpush2.bf16.xpose.msra.mxu0 0
    %7398 = vmatprep.subr.bf16.mxu0 0
    %7399 = vmatpush2.bf16.xpose.msra.mxu0 0
    %7400 = vmatprep.subr.bf16.mxu0 0
    %7401 = vmatpush2.bf16.xpose.msra.mxu0 0
    %7402 = vmatprep.subr.bf16.mxu0 0
    %7403 = vmatpush2.bf16.xpose.msra.mxu0 0
    %7404 = vmatprep.subr.bf16.mxu0 0
    %7405 = vmatpush2.bf16.xpose.msra.mxu0 0
    %7406 = vmatprep.subr.bf16.mxu0 0
    %7407 = vmatpush2.bf16.xpose.msra.mxu0 0
    %7408 = vmatprep.subr.bf16.mxu0 0
    %7409 = vmatpush2.bf16.xpose.msra.mxu0 0
    %7410 = vmatprep.subr.bf16.mxu0 0
    %7411 = vmatpush2.bf16.xpose.msra.mxu0 0
    %7412 = vmatprep.mubr.bf16.mxu0 0
    %7413 = vmatmul.mubr.bf16.gmra.mxu0 %v7375
    %v7414 = vpop.f32.mrf.mxu0
    %v7415 = vadd.f32 0.0, %v7414
    %v7416 = vpop.f32.mrf.mxu0
    %v7417 = vpop.f32.mrf.mxu0
    %v7418 = vpop.f32.mrf.mxu0
    %7419 = vdwg.mxu0
    %7420 = vrot.lane.b32.xlu0 %v6375, 64
    %v7421 = vpop.permute.xlu0 %7420
    %7422 = vrot.lane.b32.xlu0 %v6383, 64
    %v7423 = vpop.permute.xlu0 %7422
    %v7425 = vsel %vm1486, %v7421, 0
    %v7428 = vsel %vm1486, %v7423, 0
    %7430 = vmatprep.subr.bf16.mxu0 0
    %7431 = vmatpush1.bf16.xpose.msra.mxu0 0
    %7432 = vmatprep.subr.bf16.mxu0 0
    %7433 = vmatpush1.bf16.xpose.msra.mxu0 0
    %7434 = vmatprep.subr.bf16.mxu0 0
    %7435 = vmatpush1.bf16.xpose.msra.mxu0 0
    %7436 = vmatprep.subr.bf16.mxu0 0
    %7437 = vmatpush1.bf16.xpose.msra.mxu0 0
    %7438 = vmatprep.subr.bf16.mxu0 0
    %7439 = vmatpush1.bf16.xpose.msra.mxu0 0
    %7440 = vmatprep.subr.bf16.mxu0 0
    %7441 = vmatpush1.bf16.xpose.msra.mxu0 0
    %7442 = vmatprep.subr.bf16.mxu0 0
    %7443 = vmatpush1.bf16.xpose.msra.mxu0 0
    %7444 = vmatprep.subr.bf16.mxu0 0
    %7445 = vmatpush1.bf16.xpose.msra.mxu0 %v7428
    %7446 = vmatprep.subr.bf16.mxu0 0
    %7447 = vmatpush2.bf16.xpose.msra.mxu0 0
    %7448 = vmatprep.subr.bf16.mxu0 0
    %7449 = vmatpush2.bf16.xpose.msra.mxu0 0
    %7450 = vmatprep.subr.bf16.mxu0 0
    %7451 = vmatpush2.bf16.xpose.msra.mxu0 0
    %7452 = vmatprep.subr.bf16.mxu0 0
    %7453 = vmatpush2.bf16.xpose.msra.mxu0 0
    %7454 = vmatprep.subr.bf16.mxu0 0
    %7455 = vmatpush2.bf16.xpose.msra.mxu0 0
    %7456 = vmatprep.subr.bf16.mxu0 0
    %7457 = vmatpush2.bf16.xpose.msra.mxu0 0
    %7458 = vmatprep.subr.bf16.mxu0 0
    %7459 = vmatpush2.bf16.xpose.msra.mxu0 0
    %7460 = vmatprep.subr.bf16.mxu0 0
    %7461 = vmatpush2.bf16.xpose.msra.mxu0 0
    %7462 = vmatprep.mubr.bf16.mxu0 0
    %7463 = vmatmul.mubr.bf16.gmra.mxu0 %v7425
    %v7464 = vpop.f32.mrf.mxu0
    %v7465 = vadd.f32 0.0, %v7464
    %v7466 = vpop.f32.mrf.mxu0
    %v7467 = vpop.f32.mrf.mxu0
    %v7468 = vpop.f32.mrf.mxu0
    %7469 = vdwg.mxu0
    %7470 = vrot.lane.b32.xlu0 %v6376, 64
    %v7471 = vpop.permute.xlu0 %7470
    %7472 = vrot.lane.b32.xlu0 %v6384, 64
    %v7473 = vpop.permute.xlu0 %7472
    %v7475 = vsel %vm1486, %v7471, 0
    %v7478 = vsel %vm1486, %v7473, 0
    %7480 = vmatprep.subr.bf16.mxu0 0
    %7481 = vmatpush1.bf16.xpose.msra.mxu0 0
    %7482 = vmatprep.subr.bf16.mxu0 0
    %7483 = vmatpush1.bf16.xpose.msra.mxu0 0
    %7484 = vmatprep.subr.bf16.mxu0 0
    %7485 = vmatpush1.bf16.xpose.msra.mxu0 0
    %7486 = vmatprep.subr.bf16.mxu0 0
    %7487 = vmatpush1.bf16.xpose.msra.mxu0 0
    %7488 = vmatprep.subr.bf16.mxu0 0
    %7489 = vmatpush1.bf16.xpose.msra.mxu0 0
    %7490 = vmatprep.subr.bf16.mxu0 0
    %7491 = vmatpush1.bf16.xpose.msra.mxu0 0
    %7492 = vmatprep.subr.bf16.mxu0 0
    %7493 = vmatpush1.bf16.xpose.msra.mxu0 0
    %7494 = vmatprep.subr.bf16.mxu0 0
    %7495 = vmatpush1.bf16.xpose.msra.mxu0 %v7478
    %7496 = vmatprep.subr.bf16.mxu0 0
    %7497 = vmatpush2.bf16.xpose.msra.mxu0 0
    %7498 = vmatprep.subr.bf16.mxu0 0
    %7499 = vmatpush2.bf16.xpose.msra.mxu0 0
    %7500 = vmatprep.subr.bf16.mxu0 0
    %7501 = vmatpush2.bf16.xpose.msra.mxu0 0
    %7502 = vmatprep.subr.bf16.mxu0 0
    %7503 = vmatpush2.bf16.xpose.msra.mxu0 0
    %7504 = vmatprep.subr.bf16.mxu0 0
    %7505 = vmatpush2.bf16.xpose.msra.mxu0 0
    %7506 = vmatprep.subr.bf16.mxu0 0
    %7507 = vmatpush2.bf16.xpose.msra.mxu0 0
    %7508 = vmatprep.subr.bf16.mxu0 0
    %7509 = vmatpush2.bf16.xpose.msra.mxu0 0
    %7510 = vmatprep.subr.bf16.mxu0 0
    %7511 = vmatpush2.bf16.xpose.msra.mxu0 0
    %7512 = vmatprep.mubr.bf16.mxu0 0
    %7513 = vmatmul.mubr.bf16.gmra.mxu0 %v7475
    %v7514 = vpop.f32.mrf.mxu0
    %v7515 = vadd.f32 0.0, %v7514
    %v7516 = vpop.f32.mrf.mxu0
    %v7517 = vpop.f32.mrf.mxu0
    %v7518 = vpop.f32.mrf.mxu0
    %7519 = vdwg.mxu0
    %7520 = vrot.lane.b32.xlu0 %v6377, 64
    %v7521 = vpop.permute.xlu0 %7520
    %7522 = vrot.lane.b32.xlu0 %v6385, 64
    %v7523 = vpop.permute.xlu0 %7522
    %v7525 = vsel %vm1486, %v7521, 0
    %v7528 = vsel %vm1486, %v7523, 0
    %7530 = vmatprep.subr.bf16.mxu0 0
    %7531 = vmatpush1.bf16.xpose.msra.mxu0 0
    %7532 = vmatprep.subr.bf16.mxu0 0
    %7533 = vmatpush1.bf16.xpose.msra.mxu0 0
    %7534 = vmatprep.subr.bf16.mxu0 0
    %7535 = vmatpush1.bf16.xpose.msra.mxu0 0
    %7536 = vmatprep.subr.bf16.mxu0 0
    %7537 = vmatpush1.bf16.xpose.msra.mxu0 0
    %7538 = vmatprep.subr.bf16.mxu0 0
    %7539 = vmatpush1.bf16.xpose.msra.mxu0 0
    %7540 = vmatprep.subr.bf16.mxu0 0
    %7541 = vmatpush1.bf16.xpose.msra.mxu0 0
    %7542 = vmatprep.subr.bf16.mxu0 0
    %7543 = vmatpush1.bf16.xpose.msra.mxu0 0
    %7544 = vmatprep.subr.bf16.mxu0 0
    %7545 = vmatpush1.bf16.xpose.msra.mxu0 %v7528
    %7546 = vmatprep.subr.bf16.mxu0 0
    %7547 = vmatpush2.bf16.xpose.msra.mxu0 0
    %7548 = vmatprep.subr.bf16.mxu0 0
    %7549 = vmatpush2.bf16.xpose.msra.mxu0 0
    %7550 = vmatprep.subr.bf16.mxu0 0
    %7551 = vmatpush2.bf16.xpose.msra.mxu0 0
    %7552 = vmatprep.subr.bf16.mxu0 0
    %7553 = vmatpush2.bf16.xpose.msra.mxu0 0
    %7554 = vmatprep.subr.bf16.mxu0 0
    %7555 = vmatpush2.bf16.xpose.msra.mxu0 0
    %7556 = vmatprep.subr.bf16.mxu0 0
    %7557 = vmatpush2.bf16.xpose.msra.mxu0 0
    %7558 = vmatprep.subr.bf16.mxu0 0
    %7559 = vmatpush2.bf16.xpose.msra.mxu0 0
    %7560 = vmatprep.subr.bf16.mxu0 0
    %7561 = vmatpush2.bf16.xpose.msra.mxu0 0
    %7562 = vmatprep.mubr.bf16.mxu0 0
    %7563 = vmatmul.mubr.bf16.gmra.mxu0 %v7525
    %v7564 = vpop.f32.mrf.mxu0
    %v7565 = vadd.f32 0.0, %v7564
    %v7566 = vpop.f32.mrf.mxu0
    %v7567 = vpop.f32.mrf.mxu0
    %v7568 = vpop.f32.mrf.mxu0
    %7569 = vdwg.mxu0
    %7570 = vrot.lane.b32.xlu0 %v6370, 32
    %v7571 = vpop.permute.xlu0 %7570
    %7572 = vrot.lane.b32.xlu0 %v6378, 32
    %v7573 = vpop.permute.xlu0 %7572
    %v7575 = vsel %vm1486, %v7571, 0
    %v7578 = vsel %vm1486, %v7573, 0
    %7580 = vmatprep.subr.bf16.mxu0 0
    %7581 = vmatpush1.bf16.xpose.msra.mxu0 0
    %7582 = vmatprep.subr.bf16.mxu0 0
    %7583 = vmatpush1.bf16.xpose.msra.mxu0 0
    %7584 = vmatprep.subr.bf16.mxu0 0
    %7585 = vmatpush1.bf16.xpose.msra.mxu0 0
    %7586 = vmatprep.subr.bf16.mxu0 0
    %7587 = vmatpush1.bf16.xpose.msra.mxu0 0
    %7588 = vmatprep.subr.bf16.mxu0 0
    %7589 = vmatpush1.bf16.xpose.msra.mxu0 0
    %7590 = vmatprep.subr.bf16.mxu0 0
    %7591 = vmatpush1.bf16.xpose.msra.mxu0 0
    %7592 = vmatprep.subr.bf16.mxu0 0
    %7593 = vmatpush1.bf16.xpose.msra.mxu0 0
    %7594 = vmatprep.subr.bf16.mxu0 0
    %7595 = vmatpush1.bf16.xpose.msra.mxu0 %v7578
    %7596 = vmatprep.subr.bf16.mxu0 0
    %7597 = vmatpush2.bf16.xpose.msra.mxu0 0
    %7598 = vmatprep.subr.bf16.mxu0 0
    %7599 = vmatpush2.bf16.xpose.msra.mxu0 0
    %7600 = vmatprep.subr.bf16.mxu0 0
    %7601 = vmatpush2.bf16.xpose.msra.mxu0 0
    %7602 = vmatprep.subr.bf16.mxu0 0
    %7603 = vmatpush2.bf16.xpose.msra.mxu0 0
    %7604 = vmatprep.subr.bf16.mxu0 0
    %7605 = vmatpush2.bf16.xpose.msra.mxu0 0
    %7606 = vmatprep.subr.bf16.mxu0 0
    %7607 = vmatpush2.bf16.xpose.msra.mxu0 0
    %7608 = vmatprep.subr.bf16.mxu0 0
    %7609 = vmatpush2.bf16.xpose.msra.mxu0 0
    %7610 = vmatprep.subr.bf16.mxu0 0
    %7611 = vmatpush2.bf16.xpose.msra.mxu0 0
    %7612 = vmatprep.mubr.bf16.mxu0 0
    %7613 = vmatmul.mubr.bf16.gmra.mxu0 %v7575
    %v7614 = vpop.f32.mrf.mxu0
    %v7615 = vadd.f32 0.0, %v7614
    %v7616 = vpop.f32.mrf.mxu0
    %v7617 = vpop.f32.mrf.mxu0
    %v7618 = vpop.f32.mrf.mxu0
    %7619 = vdwg.mxu0
    %7620 = vrot.lane.b32.xlu0 %v6371, 32
    %v7621 = vpop.permute.xlu0 %7620
    %7622 = vrot.lane.b32.xlu0 %v6379, 32
    %v7623 = vpop.permute.xlu0 %7622
    %v7625 = vsel %vm1486, %v7621, 0
    %v7628 = vsel %vm1486, %v7623, 0
    %7630 = vmatprep.subr.bf16.mxu0 0
    %7631 = vmatpush1.bf16.xpose.msra.mxu0 0
    %7632 = vmatprep.subr.bf16.mxu0 0
    %7633 = vmatpush1.bf16.xpose.msra.mxu0 0
    %7634 = vmatprep.subr.bf16.mxu0 0
    %7635 = vmatpush1.bf16.xpose.msra.mxu0 0
    %7636 = vmatprep.subr.bf16.mxu0 0
    %7637 = vmatpush1.bf16.xpose.msra.mxu0 0
    %7638 = vmatprep.subr.bf16.mxu0 0
    %7639 = vmatpush1.bf16.xpose.msra.mxu0 0
    %7640 = vmatprep.subr.bf16.mxu0 0
    %7641 = vmatpush1.bf16.xpose.msra.mxu0 0
    %7642 = vmatprep.subr.bf16.mxu0 0
    %7643 = vmatpush1.bf16.xpose.msra.mxu0 0
    %7644 = vmatprep.subr.bf16.mxu0 0
    %7645 = vmatpush1.bf16.xpose.msra.mxu0 %v7628
    %7646 = vmatprep.subr.bf16.mxu0 0
    %7647 = vmatpush2.bf16.xpose.msra.mxu0 0
    %7648 = vmatprep.subr.bf16.mxu0 0
    %7649 = vmatpush2.bf16.xpose.msra.mxu0 0
    %7650 = vmatprep.subr.bf16.mxu0 0
    %7651 = vmatpush2.bf16.xpose.msra.mxu0 0
    %7652 = vmatprep.subr.bf16.mxu0 0
    %7653 = vmatpush2.bf16.xpose.msra.mxu0 0
    %7654 = vmatprep.subr.bf16.mxu0 0
    %7655 = vmatpush2.bf16.xpose.msra.mxu0 0
    %7656 = vmatprep.subr.bf16.mxu0 0
    %7657 = vmatpush2.bf16.xpose.msra.mxu0 0
    %7658 = vmatprep.subr.bf16.mxu0 0
    %7659 = vmatpush2.bf16.xpose.msra.mxu0 0
    %7660 = vmatprep.subr.bf16.mxu0 0
    %7661 = vmatpush2.bf16.xpose.msra.mxu0 0
    %7662 = vmatprep.mubr.bf16.mxu0 0
    %7663 = vmatmul.mubr.bf16.gmra.mxu0 %v7625
    %v7664 = vpop.f32.mrf.mxu0
    %v7665 = vadd.f32 0.0, %v7664
    %v7666 = vpop.f32.mrf.mxu0
    %v7667 = vpop.f32.mrf.mxu0
    %v7668 = vpop.f32.mrf.mxu0
    %7669 = vdwg.mxu0
    %7670 = vrot.lane.b32.xlu0 %v6372, 32
    %v7671 = vpop.permute.xlu0 %7670
    %7672 = vrot.lane.b32.xlu0 %v6380, 32
    %v7673 = vpop.permute.xlu0 %7672
    %v7675 = vsel %vm1486, %v7671, 0
    %v7678 = vsel %vm1486, %v7673, 0
    %7680 = vmatprep.subr.bf16.mxu0 0
    %7681 = vmatpush1.bf16.xpose.msra.mxu0 0
    %7682 = vmatprep.subr.bf16.mxu0 0
    %7683 = vmatpush1.bf16.xpose.msra.mxu0 0
    %7684 = vmatprep.subr.bf16.mxu0 0
    %7685 = vmatpush1.bf16.xpose.msra.mxu0 0
    %7686 = vmatprep.subr.bf16.mxu0 0
    %7687 = vmatpush1.bf16.xpose.msra.mxu0 0
    %7688 = vmatprep.subr.bf16.mxu0 0
    %7689 = vmatpush1.bf16.xpose.msra.mxu0 0
    %7690 = vmatprep.subr.bf16.mxu0 0
    %7691 = vmatpush1.bf16.xpose.msra.mxu0 0
    %7692 = vmatprep.subr.bf16.mxu0 0
    %7693 = vmatpush1.bf16.xpose.msra.mxu0 0
    %7694 = vmatprep.subr.bf16.mxu0 0
    %7695 = vmatpush1.bf16.xpose.msra.mxu0 %v7678
    %7696 = vmatprep.subr.bf16.mxu0 0
    %7697 = vmatpush2.bf16.xpose.msra.mxu0 0
    %7698 = vmatprep.subr.bf16.mxu0 0
    %7699 = vmatpush2.bf16.xpose.msra.mxu0 0
    %7700 = vmatprep.subr.bf16.mxu0 0
    %7701 = vmatpush2.bf16.xpose.msra.mxu0 0
    %7702 = vmatprep.subr.bf16.mxu0 0
    %7703 = vmatpush2.bf16.xpose.msra.mxu0 0
    %7704 = vmatprep.subr.bf16.mxu0 0
    %7705 = vmatpush2.bf16.xpose.msra.mxu0 0
    %7706 = vmatprep.subr.bf16.mxu0 0
    %7707 = vmatpush2.bf16.xpose.msra.mxu0 0
    %7708 = vmatprep.subr.bf16.mxu0 0
    %7709 = vmatpush2.bf16.xpose.msra.mxu0 0
    %7710 = vmatprep.subr.bf16.mxu0 0
    %7711 = vmatpush2.bf16.xpose.msra.mxu0 0
    %7712 = vmatprep.mubr.bf16.mxu0 0
    %7713 = vmatmul.mubr.bf16.gmra.mxu0 %v7675
    %v7714 = vpop.f32.mrf.mxu0
    %v7715 = vadd.f32 0.0, %v7714
    %v7716 = vpop.f32.mrf.mxu0
    %v7717 = vpop.f32.mrf.mxu0
    %v7718 = vpop.f32.mrf.mxu0
    %7719 = vdwg.mxu0
    %7720 = vrot.lane.b32.xlu0 %v6373, 32
    %v7721 = vpop.permute.xlu0 %7720
    %7722 = vrot.lane.b32.xlu0 %v6381, 32
    %v7723 = vpop.permute.xlu0 %7722
    %v7725 = vsel %vm1486, %v7721, 0
    %v7728 = vsel %vm1486, %v7723, 0
    %7730 = vmatprep.subr.bf16.mxu0 0
    %7731 = vmatpush1.bf16.xpose.msra.mxu0 0
    %7732 = vmatprep.subr.bf16.mxu0 0
    %7733 = vmatpush1.bf16.xpose.msra.mxu0 0
    %7734 = vmatprep.subr.bf16.mxu0 0
    %7735 = vmatpush1.bf16.xpose.msra.mxu0 0
    %7736 = vmatprep.subr.bf16.mxu0 0
    %7737 = vmatpush1.bf16.xpose.msra.mxu0 0
    %7738 = vmatprep.subr.bf16.mxu0 0
    %7739 = vmatpush1.bf16.xpose.msra.mxu0 0
    %7740 = vmatprep.subr.bf16.mxu0 0
    %7741 = vmatpush1.bf16.xpose.msra.mxu0 0
    %7742 = vmatprep.subr.bf16.mxu0 0
    %7743 = vmatpush1.bf16.xpose.msra.mxu0 0
    %7744 = vmatprep.subr.bf16.mxu0 0
    %7745 = vmatpush1.bf16.xpose.msra.mxu0 %v7728
    %7746 = vmatprep.subr.bf16.mxu0 0
    %7747 = vmatpush2.bf16.xpose.msra.mxu0 0
    %7748 = vmatprep.subr.bf16.mxu0 0
    %7749 = vmatpush2.bf16.xpose.msra.mxu0 0
    %7750 = vmatprep.subr.bf16.mxu0 0
    %7751 = vmatpush2.bf16.xpose.msra.mxu0 0
    %7752 = vmatprep.subr.bf16.mxu0 0
    %7753 = vmatpush2.bf16.xpose.msra.mxu0 0
    %7754 = vmatprep.subr.bf16.mxu0 0
    %7755 = vmatpush2.bf16.xpose.msra.mxu0 0
    %7756 = vmatprep.subr.bf16.mxu0 0
    %7757 = vmatpush2.bf16.xpose.msra.mxu0 0
    %7758 = vmatprep.subr.bf16.mxu0 0
    %7759 = vmatpush2.bf16.xpose.msra.mxu0 0
    %7760 = vmatprep.subr.bf16.mxu0 0
    %7761 = vmatpush2.bf16.xpose.msra.mxu0 0
    %7762 = vmatprep.mubr.bf16.mxu0 0
    %7763 = vmatmul.mubr.bf16.gmra.mxu0 %v7725
    %v7764 = vpop.f32.mrf.mxu0
    %v7765 = vadd.f32 0.0, %v7764
    %v7766 = vpop.f32.mrf.mxu0
    %v7767 = vpop.f32.mrf.mxu0
    %v7768 = vpop.f32.mrf.mxu0
    %7769 = vdwg.mxu0
    %7770 = vrot.lane.b32.xlu0 %v6374, 32
    %v7771 = vpop.permute.xlu0 %7770
    %7772 = vrot.lane.b32.xlu0 %v6382, 32
    %v7773 = vpop.permute.xlu0 %7772
    %v7775 = vsel %vm1486, %v7771, 0
    %v7778 = vsel %vm1486, %v7773, 0
    %7780 = vmatprep.subr.bf16.mxu0 0
    %7781 = vmatpush1.bf16.xpose.msra.mxu0 0
    %7782 = vmatprep.subr.bf16.mxu0 0
    %7783 = vmatpush1.bf16.xpose.msra.mxu0 0
    %7784 = vmatprep.subr.bf16.mxu0 0
    %7785 = vmatpush1.bf16.xpose.msra.mxu0 0
    %7786 = vmatprep.subr.bf16.mxu0 0
    %7787 = vmatpush1.bf16.xpose.msra.mxu0 0
    %7788 = vmatprep.subr.bf16.mxu0 0
    %7789 = vmatpush1.bf16.xpose.msra.mxu0 0
    %7790 = vmatprep.subr.bf16.mxu0 0
    %7791 = vmatpush1.bf16.xpose.msra.mxu0 0
    %7792 = vmatprep.subr.bf16.mxu0 0
    %7793 = vmatpush1.bf16.xpose.msra.mxu0 0
    %7794 = vmatprep.subr.bf16.mxu0 0
    %7795 = vmatpush1.bf16.xpose.msra.mxu0 %v7778
    %7796 = vmatprep.subr.bf16.mxu0 0
    %7797 = vmatpush2.bf16.xpose.msra.mxu0 0
    %7798 = vmatprep.subr.bf16.mxu0 0
    %7799 = vmatpush2.bf16.xpose.msra.mxu0 0
    %7800 = vmatprep.subr.bf16.mxu0 0
    %7801 = vmatpush2.bf16.xpose.msra.mxu0 0
    %7802 = vmatprep.subr.bf16.mxu0 0
    %7803 = vmatpush2.bf16.xpose.msra.mxu0 0
    %7804 = vmatprep.subr.bf16.mxu0 0
    %7805 = vmatpush2.bf16.xpose.msra.mxu0 0
    %7806 = vmatprep.subr.bf16.mxu0 0
    %7807 = vmatpush2.bf16.xpose.msra.mxu0 0
    %7808 = vmatprep.subr.bf16.mxu0 0
    %7809 = vmatpush2.bf16.xpose.msra.mxu0 0
    %7810 = vmatprep.subr.bf16.mxu0 0
    %7811 = vmatpush2.bf16.xpose.msra.mxu0 0
    %7812 = vmatprep.mubr.bf16.mxu0 0
    %7813 = vmatmul.mubr.bf16.gmra.mxu0 %v7775
    %v7814 = vpop.f32.mrf.mxu0
    %v7815 = vadd.f32 0.0, %v7814
    %v7816 = vpop.f32.mrf.mxu0
    %v7817 = vpop.f32.mrf.mxu0
    %v7818 = vpop.f32.mrf.mxu0
    %7819 = vdwg.mxu0
    %7820 = vrot.lane.b32.xlu0 %v6375, 32
    %v7821 = vpop.permute.xlu0 %7820
    %7822 = vrot.lane.b32.xlu0 %v6383, 32
    %v7823 = vpop.permute.xlu0 %7822
    %v7825 = vsel %vm1486, %v7821, 0
    %v7828 = vsel %vm1486, %v7823, 0
    %7830 = vmatprep.subr.bf16.mxu0 0
    %7831 = vmatpush1.bf16.xpose.msra.mxu0 0
    %7832 = vmatprep.subr.bf16.mxu0 0
    %7833 = vmatpush1.bf16.xpose.msra.mxu0 0
    %7834 = vmatprep.subr.bf16.mxu0 0
    %7835 = vmatpush1.bf16.xpose.msra.mxu0 0
    %7836 = vmatprep.subr.bf16.mxu0 0
    %7837 = vmatpush1.bf16.xpose.msra.mxu0 0
    %7838 = vmatprep.subr.bf16.mxu0 0
    %7839 = vmatpush1.bf16.xpose.msra.mxu0 0
    %7840 = vmatprep.subr.bf16.mxu0 0
    %7841 = vmatpush1.bf16.xpose.msra.mxu0 0
    %7842 = vmatprep.subr.bf16.mxu0 0
    %7843 = vmatpush1.bf16.xpose.msra.mxu0 0
    %7844 = vmatprep.subr.bf16.mxu0 0
    %7845 = vmatpush1.bf16.xpose.msra.mxu0 %v7828
    %7846 = vmatprep.subr.bf16.mxu0 0
    %7847 = vmatpush2.bf16.xpose.msra.mxu0 0
    %7848 = vmatprep.subr.bf16.mxu0 0
    %7849 = vmatpush2.bf16.xpose.msra.mxu0 0
    %7850 = vmatprep.subr.bf16.mxu0 0
    %7851 = vmatpush2.bf16.xpose.msra.mxu0 0
    %7852 = vmatprep.subr.bf16.mxu0 0
    %7853 = vmatpush2.bf16.xpose.msra.mxu0 0
    %7854 = vmatprep.subr.bf16.mxu0 0
    %7855 = vmatpush2.bf16.xpose.msra.mxu0 0
    %7856 = vmatprep.subr.bf16.mxu0 0
    %7857 = vmatpush2.bf16.xpose.msra.mxu0 0
    %7858 = vmatprep.subr.bf16.mxu0 0
    %7859 = vmatpush2.bf16.xpose.msra.mxu0 0
    %7860 = vmatprep.subr.bf16.mxu0 0
    %7861 = vmatpush2.bf16.xpose.msra.mxu0 0
    %7862 = vmatprep.mubr.bf16.mxu0 0
    %7863 = vmatmul.mubr.bf16.gmra.mxu0 %v7825
    %v7864 = vpop.f32.mrf.mxu0
    %v7865 = vadd.f32 0.0, %v7864
    %v7866 = vpop.f32.mrf.mxu0
    %v7867 = vpop.f32.mrf.mxu0
    %v7868 = vpop.f32.mrf.mxu0
    %7869 = vdwg.mxu0
    %7870 = vrot.lane.b32.xlu0 %v6376, 32
    %v7871 = vpop.permute.xlu0 %7870
    %7872 = vrot.lane.b32.xlu0 %v6384, 32
    %v7873 = vpop.permute.xlu0 %7872
    %v7875 = vsel %vm1486, %v7871, 0
    %v7878 = vsel %vm1486, %v7873, 0
    %7880 = vmatprep.subr.bf16.mxu0 0
    %7881 = vmatpush1.bf16.xpose.msra.mxu0 0
    %7882 = vmatprep.subr.bf16.mxu0 0
    %7883 = vmatpush1.bf16.xpose.msra.mxu0 0
    %7884 = vmatprep.subr.bf16.mxu0 0
    %7885 = vmatpush1.bf16.xpose.msra.mxu0 0
    %7886 = vmatprep.subr.bf16.mxu0 0
    %7887 = vmatpush1.bf16.xpose.msra.mxu0 0
    %7888 = vmatprep.subr.bf16.mxu0 0
    %7889 = vmatpush1.bf16.xpose.msra.mxu0 0
    %7890 = vmatprep.subr.bf16.mxu0 0
    %7891 = vmatpush1.bf16.xpose.msra.mxu0 0
    %7892 = vmatprep.subr.bf16.mxu0 0
    %7893 = vmatpush1.bf16.xpose.msra.mxu0 0
    %7894 = vmatprep.subr.bf16.mxu0 0
    %7895 = vmatpush1.bf16.xpose.msra.mxu0 %v7878
    %7896 = vmatprep.subr.bf16.mxu0 0
    %7897 = vmatpush2.bf16.xpose.msra.mxu0 0
    %7898 = vmatprep.subr.bf16.mxu0 0
    %7899 = vmatpush2.bf16.xpose.msra.mxu0 0
    %7900 = vmatprep.subr.bf16.mxu0 0
    %7901 = vmatpush2.bf16.xpose.msra.mxu0 0
    %7902 = vmatprep.subr.bf16.mxu0 0
    %7903 = vmatpush2.bf16.xpose.msra.mxu0 0
    %7904 = vmatprep.subr.bf16.mxu0 0
    %7905 = vmatpush2.bf16.xpose.msra.mxu0 0
    %7906 = vmatprep.subr.bf16.mxu0 0
    %7907 = vmatpush2.bf16.xpose.msra.mxu0 0
    %7908 = vmatprep.subr.bf16.mxu0 0
    %7909 = vmatpush2.bf16.xpose.msra.mxu0 0
    %7910 = vmatprep.subr.bf16.mxu0 0
    %7911 = vmatpush2.bf16.xpose.msra.mxu0 0
    %7912 = vmatprep.mubr.bf16.mxu0 0
    %7913 = vmatmul.mubr.bf16.gmra.mxu0 %v7875
    %v7914 = vpop.f32.mrf.mxu0
    %v7915 = vadd.f32 0.0, %v7914
    %v7916 = vpop.f32.mrf.mxu0
    %v7917 = vpop.f32.mrf.mxu0
    %v7918 = vpop.f32.mrf.mxu0
    %7919 = vdwg.mxu0
    %7920 = vrot.lane.b32.xlu0 %v6377, 32
    %v7921 = vpop.permute.xlu0 %7920
    %7922 = vrot.lane.b32.xlu0 %v6385, 32
    %v7923 = vpop.permute.xlu0 %7922
    %v7925 = vsel %vm1486, %v7921, 0
    %v7928 = vsel %vm1486, %v7923, 0
    %7930 = vmatprep.subr.bf16.mxu0 0
    %7931 = vmatpush1.bf16.xpose.msra.mxu0 0
    %7932 = vmatprep.subr.bf16.mxu0 0
    %7933 = vmatpush1.bf16.xpose.msra.mxu0 0
    %7934 = vmatprep.subr.bf16.mxu0 0
    %7935 = vmatpush1.bf16.xpose.msra.mxu0 0
    %7936 = vmatprep.subr.bf16.mxu0 0
    %7937 = vmatpush1.bf16.xpose.msra.mxu0 0
    %7938 = vmatprep.subr.bf16.mxu0 0
    %7939 = vmatpush1.bf16.xpose.msra.mxu0 0
    %7940 = vmatprep.subr.bf16.mxu0 0
    %7941 = vmatpush1.bf16.xpose.msra.mxu0 0
    %7942 = vmatprep.subr.bf16.mxu0 0
    %7943 = vmatpush1.bf16.xpose.msra.mxu0 0
    %7944 = vmatprep.subr.bf16.mxu0 0
    %7945 = vmatpush1.bf16.xpose.msra.mxu0 %v7928
    %7946 = vmatprep.subr.bf16.mxu0 0
    %7947 = vmatpush2.bf16.xpose.msra.mxu0 0
    %7948 = vmatprep.subr.bf16.mxu0 0
    %7949 = vmatpush2.bf16.xpose.msra.mxu0 0
    %7950 = vmatprep.subr.bf16.mxu0 0
    %7951 = vmatpush2.bf16.xpose.msra.mxu0 0
    %7952 = vmatprep.subr.bf16.mxu0 0
    %7953 = vmatpush2.bf16.xpose.msra.mxu0 0
    %7954 = vmatprep.subr.bf16.mxu0 0
    %7955 = vmatpush2.bf16.xpose.msra.mxu0 0
    %7956 = vmatprep.subr.bf16.mxu0 0
    %7957 = vmatpush2.bf16.xpose.msra.mxu0 0
    %7958 = vmatprep.subr.bf16.mxu0 0
    %7959 = vmatpush2.bf16.xpose.msra.mxu0 0
    %7960 = vmatprep.subr.bf16.mxu0 0
    %7961 = vmatpush2.bf16.xpose.msra.mxu0 0
    %7962 = vmatprep.mubr.bf16.mxu0 0
    %7963 = vmatmul.mubr.bf16.gmra.mxu0 %v7925
    %v7964 = vpop.f32.mrf.mxu0
    %v7965 = vadd.f32 0.0, %v7964
    %v7966 = vpop.f32.mrf.mxu0
    %v7967 = vpop.f32.mrf.mxu0
    %v7968 = vpop.f32.mrf.mxu0
    %7969 = vdwg.mxu0
    %v7970 = vmul.f32 %v6427, 0.17677669
    %v7971 = vmul.f32 %v6473, 0.17677669
    %v7972 = vmul.f32 %v6519, 0.17677669
    %v7973 = vmul.f32 %v6565, 0.17677669
    %v7974 = vmul.f32 %v6611, 0.17677669
    %v7975 = vmul.f32 %v6657, 0.17677669
    %v7976 = vmul.f32 %v6703, 0.17677669
    %v7977 = vmul.f32 %v6749, 0.17677669
    %v7978 = vmul.f32 %v6801, 0.17677669
    %v7979 = vmul.f32 %v6853, 0.17677669
    %v7980 = vmul.f32 %v6905, 0.17677669
    %v7981 = vmul.f32 %v6957, 0.17677669
    %v7982 = vmul.f32 %v7009, 0.17677669
    %v7983 = vmul.f32 %v7061, 0.17677669
    %v7984 = vmul.f32 %v7113, 0.17677669
    %v7985 = vmul.f32 %v7165, 0.17677669
    %v7986 = vmul.f32 %v7215, 0.17677669
    %v7987 = vmul.f32 %v7265, 0.17677669
    %v7988 = vmul.f32 %v7315, 0.17677669
    %v7989 = vmul.f32 %v7365, 0.17677669
    %v7990 = vmul.f32 %v7415, 0.17677669
    %v7991 = vmul.f32 %v7465, 0.17677669
    %v7992 = vmul.f32 %v7515, 0.17677669
    %v7993 = vmul.f32 %v7565, 0.17677669
    %v7994 = vmul.f32 %v7615, 0.17677669
    %v7995 = vmul.f32 %v7665, 0.17677669
    %v7996 = vmul.f32 %v7715, 0.17677669
    %v7997 = vmul.f32 %v7765, 0.17677669
    %v7998 = vmul.f32 %v7815, 0.17677669
    %v7999 = vmul.f32 %v7865, 0.17677669
    %v8000 = vmul.f32 %v7915, 0.17677669
    %v8001 = vmul.f32 %v7965, 0.17677669
    %v8002 = vadd.f32 %v7970, %v819
    %v8003 = vadd.f32 %v7971, %v819
    %v8004 = vadd.f32 %v7972, %v819
    %v8005 = vadd.f32 %v7973, %v819
    %v8006 = vadd.f32 %v7974, %v819
    %v8007 = vadd.f32 %v7975, %v819
    %v8008 = vadd.f32 %v7976, %v819
    %v8009 = vadd.f32 %v7977, %v819
    %v8010 = vadd.f32 %v7978, %v819
    %v8011 = vadd.f32 %v7979, %v819
    %v8012 = vadd.f32 %v7980, %v819
    %v8013 = vadd.f32 %v7981, %v819
    %v8014 = vadd.f32 %v7982, %v819
    %v8015 = vadd.f32 %v7983, %v819
    %v8016 = vadd.f32 %v7984, %v819
    %v8017 = vadd.f32 %v7985, %v819
    %v8018 = vadd.f32 %v7986, %v819
    %v8019 = vadd.f32 %v7987, %v819
    %v8020 = vadd.f32 %v7988, %v819
    %v8021 = vadd.f32 %v7989, %v819
    %v8022 = vadd.f32 %v7990, %v819
    %v8023 = vadd.f32 %v7991, %v819
    %v8024 = vadd.f32 %v7992, %v819
    %v8025 = vadd.f32 %v7993, %v819
    %v8026 = vadd.f32 %v7994, %v819
    %v8027 = vadd.f32 %v7995, %v819
    %v8028 = vadd.f32 %v7996, %v819
    %v8029 = vadd.f32 %v7997, %v819
    %v8030 = vadd.f32 %v7998, %v819
    %v8031 = vadd.f32 %v7999, %v819
    %v8032 = vadd.f32 %v8000, %v819
    %v8033 = vadd.f32 %v8001, %v819
    %v8034 = vsel %vm3135, %v8002, -inf
    %8035 = vmax.xlane.f32.xlu0 %v8034
    %v8036 = vpop.xlane.xlu0 %8035
    %v8037 = vsel %vm3135, %v8003, -inf
    %8038 = vmax.xlane.f32.xlu0 %v8037
    %v8039 = vpop.xlane.xlu0 %8038
    %v8040 = vsel %vm3135, %v8004, -inf
    %8041 = vmax.xlane.f32.xlu0 %v8040
    %v8042 = vpop.xlane.xlu0 %8041
    %v8043 = vsel %vm3135, %v8005, -inf
    %8044 = vmax.xlane.f32.xlu0 %v8043
    %v8045 = vpop.xlane.xlu0 %8044
    %v8046 = vsel %vm3135, %v8006, -inf
    %8047 = vmax.xlane.f32.xlu0 %v8046
    %v8048 = vpop.xlane.xlu0 %8047
    %v8049 = vsel %vm3135, %v8007, -inf
    %8050 = vmax.xlane.f32.xlu0 %v8049
    %v8051 = vpop.xlane.xlu0 %8050
    %v8052 = vsel %vm3135, %v8008, -inf
    %8053 = vmax.xlane.f32.xlu0 %v8052
    %v8054 = vpop.xlane.xlu0 %8053
    %v8055 = vsel %vm3135, %v8009, -inf
    %8056 = vmax.xlane.f32.xlu0 %v8055
    %v8057 = vpop.xlane.xlu0 %8056
    %v8058 = vsel %vm3135, %v8010, -inf
    %8059 = vmax.xlane.f32.xlu0 %v8058
    %v8060 = vpop.xlane.xlu0 %8059
    %v8061 = vsel %vm3135, %v8011, -inf
    %8062 = vmax.xlane.f32.xlu0 %v8061
    %v8063 = vpop.xlane.xlu0 %8062
    %v8064 = vsel %vm3135, %v8012, -inf
    %8065 = vmax.xlane.f32.xlu0 %v8064
    %v8066 = vpop.xlane.xlu0 %8065
    %v8067 = vsel %vm3135, %v8013, -inf
    %8068 = vmax.xlane.f32.xlu0 %v8067
    %v8069 = vpop.xlane.xlu0 %8068
    %v8070 = vsel %vm3135, %v8014, -inf
    %8071 = vmax.xlane.f32.xlu0 %v8070
    %v8072 = vpop.xlane.xlu0 %8071
    %v8073 = vsel %vm3135, %v8015, -inf
    %8074 = vmax.xlane.f32.xlu0 %v8073
    %v8075 = vpop.xlane.xlu0 %8074
    %v8076 = vsel %vm3135, %v8016, -inf
    %8077 = vmax.xlane.f32.xlu0 %v8076
    %v8078 = vpop.xlane.xlu0 %8077
    %v8079 = vsel %vm3135, %v8017, -inf
    %8080 = vmax.xlane.f32.xlu0 %v8079
    %v8081 = vpop.xlane.xlu0 %8080
    %v8082 = vsel %vm3135, %v8018, -inf
    %8083 = vmax.xlane.f32.xlu0 %v8082
    %v8084 = vpop.xlane.xlu0 %8083
    %v8085 = vsel %vm3135, %v8019, -inf
    %8086 = vmax.xlane.f32.xlu0 %v8085
    %v8087 = vpop.xlane.xlu0 %8086
    %v8088 = vsel %vm3135, %v8020, -inf
    %8089 = vmax.xlane.f32.xlu0 %v8088
    %v8090 = vpop.xlane.xlu0 %8089
    %v8091 = vsel %vm3135, %v8021, -inf
    %8092 = vmax.xlane.f32.xlu0 %v8091
    %v8093 = vpop.xlane.xlu0 %8092
    %v8094 = vsel %vm3135, %v8022, -inf
    %8095 = vmax.xlane.f32.xlu0 %v8094
    %v8096 = vpop.xlane.xlu0 %8095
    %v8097 = vsel %vm3135, %v8023, -inf
    %8098 = vmax.xlane.f32.xlu0 %v8097
    %v8099 = vpop.xlane.xlu0 %8098
    %v8100 = vsel %vm3135, %v8024, -inf
    %8101 = vmax.xlane.f32.xlu0 %v8100
    %v8102 = vpop.xlane.xlu0 %8101
    %v8103 = vsel %vm3135, %v8025, -inf
    %8104 = vmax.xlane.f32.xlu0 %v8103
    %v8105 = vpop.xlane.xlu0 %8104
    %v8106 = vsel %vm3135, %v8026, -inf
    %8107 = vmax.xlane.f32.xlu0 %v8106
    %v8108 = vpop.xlane.xlu0 %8107
    %v8109 = vsel %vm3135, %v8027, -inf
    %8110 = vmax.xlane.f32.xlu0 %v8109
    %v8111 = vpop.xlane.xlu0 %8110
    %v8112 = vsel %vm3135, %v8028, -inf
    %8113 = vmax.xlane.f32.xlu0 %v8112
    %v8114 = vpop.xlane.xlu0 %8113
    %v8115 = vsel %vm3135, %v8029, -inf
    %8116 = vmax.xlane.f32.xlu0 %v8115
    %v8117 = vpop.xlane.xlu0 %8116
    %v8118 = vsel %vm3135, %v8030, -inf
    %8119 = vmax.xlane.f32.xlu0 %v8118
    %v8120 = vpop.xlane.xlu0 %8119
    %v8121 = vsel %vm3135, %v8031, -inf
    %8122 = vmax.xlane.f32.xlu0 %v8121
    %v8123 = vpop.xlane.xlu0 %8122
    %v8124 = vsel %vm3135, %v8032, -inf
    %8125 = vmax.xlane.f32.xlu0 %v8124
    %v8126 = vpop.xlane.xlu0 %8125
    %v8127 = vsel %vm3135, %v8033, -inf
    %8128 = vmax.xlane.f32.xlu0 %v8127
    %v8129 = vpop.xlane.xlu0 %8128
    %v8130 = vsub.f32 %v8002, %v8036
    %v8131 = vsub.f32 %v8003, %v8039
    %v8132 = vsub.f32 %v8004, %v8042
    %v8133 = vsub.f32 %v8005, %v8045
    %v8134 = vsub.f32 %v8006, %v8048
    %v8135 = vsub.f32 %v8007, %v8051
    %v8136 = vsub.f32 %v8008, %v8054
    %v8137 = vsub.f32 %v8009, %v8057
    %v8138 = vsub.f32 %v8010, %v8060
    %v8139 = vsub.f32 %v8011, %v8063
    %v8140 = vsub.f32 %v8012, %v8066
    %v8141 = vsub.f32 %v8013, %v8069
    %v8142 = vsub.f32 %v8014, %v8072
    %v8143 = vsub.f32 %v8015, %v8075
    %v8144 = vsub.f32 %v8016, %v8078
    %v8145 = vsub.f32 %v8017, %v8081
    %v8146 = vsub.f32 %v8018, %v8084
    %v8147 = vsub.f32 %v8019, %v8087
    %v8148 = vsub.f32 %v8020, %v8090
    %v8149 = vsub.f32 %v8021, %v8093
    %v8150 = vsub.f32 %v8022, %v8096
    %v8151 = vsub.f32 %v8023, %v8099
    %v8152 = vsub.f32 %v8024, %v8102
    %v8153 = vsub.f32 %v8025, %v8105
    %v8154 = vsub.f32 %v8026, %v8108
    %v8155 = vsub.f32 %v8027, %v8111
    %v8156 = vsub.f32 %v8028, %v8114
    %v8157 = vsub.f32 %v8029, %v8117
    %v8158 = vsub.f32 %v8030, %v8120
    %v8159 = vsub.f32 %v8031, %v8123
    %v8160 = vsub.f32 %v8032, %v8126
    %v8161 = vsub.f32 %v8033, %v8129
    %v8162 = vmul.f32 %v8130, 1.442695
    %v8163 = vpow.pop %v8162
    %v8164 = vmul.f32 %v8131, 1.442695
    %v8165 = vpow.pop %v8164
    %v8166 = vmul.f32 %v8132, 1.442695
    %v8167 = vpow.pop %v8166
    %v8168 = vmul.f32 %v8133, 1.442695
    %v8169 = vpow.pop %v8168
    %v8170 = vmul.f32 %v8134, 1.442695
    %v8171 = vpow.pop %v8170
    %v8172 = vmul.f32 %v8135, 1.442695
    %v8173 = vpow.pop %v8172
    %v8174 = vmul.f32 %v8136, 1.442695
    %v8175 = vpow.pop %v8174
    %v8176 = vmul.f32 %v8137, 1.442695
    %v8177 = vpow.pop %v8176
    %v8178 = vmul.f32 %v8138, 1.442695
    %v8179 = vpow.pop %v8178
    %v8180 = vmul.f32 %v8139, 1.442695
    %v8181 = vpow.pop %v8180
    %v8182 = vmul.f32 %v8140, 1.442695
    %v8183 = vpow.pop %v8182
    %v8184 = vmul.f32 %v8141, 1.442695
    %v8185 = vpow.pop %v8184
    %v8186 = vmul.f32 %v8142, 1.442695
    %v8187 = vpow.pop %v8186
    %v8188 = vmul.f32 %v8143, 1.442695
    %v8189 = vpow.pop %v8188
    %v8190 = vmul.f32 %v8144, 1.442695
    %v8191 = vpow.pop %v8190
    %v8192 = vmul.f32 %v8145, 1.442695
    %v8193 = vpow.pop %v8192
    %v8194 = vmul.f32 %v8146, 1.442695
    %v8195 = vpow.pop %v8194
    %v8196 = vmul.f32 %v8147, 1.442695
    %v8197 = vpow.pop %v8196
    %v8198 = vmul.f32 %v8148, 1.442695
    %v8199 = vpow.pop %v8198
    %v8200 = vmul.f32 %v8149, 1.442695
    %v8201 = vpow.pop %v8200
    %v8202 = vmul.f32 %v8150, 1.442695
    %v8203 = vpow.pop %v8202
    %v8204 = vmul.f32 %v8151, 1.442695
    %v8205 = vpow.pop %v8204
    %v8206 = vmul.f32 %v8152, 1.442695
    %v8207 = vpow.pop %v8206
    %v8208 = vmul.f32 %v8153, 1.442695
    %v8209 = vpow.pop %v8208
    %v8210 = vmul.f32 %v8154, 1.442695
    %v8211 = vpow.pop %v8210
    %v8212 = vmul.f32 %v8155, 1.442695
    %v8213 = vpow.pop %v8212
    %v8214 = vmul.f32 %v8156, 1.442695
    %v8215 = vpow.pop %v8214
    %v8216 = vmul.f32 %v8157, 1.442695
    %v8217 = vpow.pop %v8216
    %v8218 = vmul.f32 %v8158, 1.442695
    %v8219 = vpow.pop %v8218
    %v8220 = vmul.f32 %v8159, 1.442695
    %v8221 = vpow.pop %v8220
    %v8222 = vmul.f32 %v8160, 1.442695
    %v8223 = vpow.pop %v8222
    %v8224 = vmul.f32 %v8161, 1.442695
    %v8225 = vpow.pop %v8224
    %v8226 = vsel %vm3135, %v8163, 0.0
    %8227 = vadd.xlane.f32.xlu0 %v8226
    %v8228 = vpop.xlane.xlu0 %8227
    %v8229 = vsel %vm3135, %v8165, 0.0
    %8230 = vadd.xlane.f32.xlu0 %v8229
    %v8231 = vpop.xlane.xlu0 %8230
    %v8232 = vsel %vm3135, %v8167, 0.0
    %8233 = vadd.xlane.f32.xlu0 %v8232
    %v8234 = vpop.xlane.xlu0 %8233
    %v8235 = vsel %vm3135, %v8169, 0.0
    %8236 = vadd.xlane.f32.xlu0 %v8235
    %v8237 = vpop.xlane.xlu0 %8236
    %v8238 = vsel %vm3135, %v8171, 0.0
    %8239 = vadd.xlane.f32.xlu0 %v8238
    %v8240 = vpop.xlane.xlu0 %8239
    %v8241 = vsel %vm3135, %v8173, 0.0
    %8242 = vadd.xlane.f32.xlu0 %v8241
    %v8243 = vpop.xlane.xlu0 %8242
    %v8244 = vsel %vm3135, %v8175, 0.0
    %8245 = vadd.xlane.f32.xlu0 %v8244
    %v8246 = vpop.xlane.xlu0 %8245
    %v8247 = vsel %vm3135, %v8177, 0.0
    %8248 = vadd.xlane.f32.xlu0 %v8247
    %v8249 = vpop.xlane.xlu0 %8248
    %v8250 = vsel %vm3135, %v8179, 0.0
    %8251 = vadd.xlane.f32.xlu0 %v8250
    %v8252 = vpop.xlane.xlu0 %8251
    %v8253 = vsel %vm3135, %v8181, 0.0
    %8254 = vadd.xlane.f32.xlu0 %v8253
    %v8255 = vpop.xlane.xlu0 %8254
    %v8256 = vsel %vm3135, %v8183, 0.0
    %8257 = vadd.xlane.f32.xlu0 %v8256
    %v8258 = vpop.xlane.xlu0 %8257
    %v8259 = vsel %vm3135, %v8185, 0.0
    %8260 = vadd.xlane.f32.xlu0 %v8259
    %v8261 = vpop.xlane.xlu0 %8260
    %v8262 = vsel %vm3135, %v8187, 0.0
    %8263 = vadd.xlane.f32.xlu0 %v8262
    %v8264 = vpop.xlane.xlu0 %8263
    %v8265 = vsel %vm3135, %v8189, 0.0
    %8266 = vadd.xlane.f32.xlu0 %v8265
    %v8267 = vpop.xlane.xlu0 %8266
    %v8268 = vsel %vm3135, %v8191, 0.0
    %8269 = vadd.xlane.f32.xlu0 %v8268
    %v8270 = vpop.xlane.xlu0 %8269
    %v8271 = vsel %vm3135, %v8193, 0.0
    %8272 = vadd.xlane.f32.xlu0 %v8271
    %v8273 = vpop.xlane.xlu0 %8272
    %v8274 = vsel %vm3135, %v8195, 0.0
    %8275 = vadd.xlane.f32.xlu0 %v8274
    %v8276 = vpop.xlane.xlu0 %8275
    %v8277 = vsel %vm3135, %v8197, 0.0
    %8278 = vadd.xlane.f32.xlu0 %v8277
    %v8279 = vpop.xlane.xlu0 %8278
    %v8280 = vsel %vm3135, %v8199, 0.0
    %8281 = vadd.xlane.f32.xlu0 %v8280
    %v8282 = vpop.xlane.xlu0 %8281
    %v8283 = vsel %vm3135, %v8201, 0.0
    %8284 = vadd.xlane.f32.xlu0 %v8283
    %v8285 = vpop.xlane.xlu0 %8284
    %v8286 = vsel %vm3135, %v8203, 0.0
    %8287 = vadd.xlane.f32.xlu0 %v8286
    %v8288 = vpop.xlane.xlu0 %8287
    %v8289 = vsel %vm3135, %v8205, 0.0
    %8290 = vadd.xlane.f32.xlu0 %v8289
    %v8291 = vpop.xlane.xlu0 %8290
    %v8292 = vsel %vm3135, %v8207, 0.0
    %8293 = vadd.xlane.f32.xlu0 %v8292
    %v8294 = vpop.xlane.xlu0 %8293
    %v8295 = vsel %vm3135, %v8209, 0.0
    %8296 = vadd.xlane.f32.xlu0 %v8295
    %v8297 = vpop.xlane.xlu0 %8296
    %v8298 = vsel %vm3135, %v8211, 0.0
    %8299 = vadd.xlane.f32.xlu0 %v8298
    %v8300 = vpop.xlane.xlu0 %8299
    %v8301 = vsel %vm3135, %v8213, 0.0
    %8302 = vadd.xlane.f32.xlu0 %v8301
    %v8303 = vpop.xlane.xlu0 %8302
    %v8304 = vsel %vm3135, %v8215, 0.0
    %8305 = vadd.xlane.f32.xlu0 %v8304
    %v8306 = vpop.xlane.xlu0 %8305
    %v8307 = vsel %vm3135, %v8217, 0.0
    %8308 = vadd.xlane.f32.xlu0 %v8307
    %v8309 = vpop.xlane.xlu0 %8308
    %v8310 = vsel %vm3135, %v8219, 0.0
    %8311 = vadd.xlane.f32.xlu0 %v8310
    %v8312 = vpop.xlane.xlu0 %8311
    %v8313 = vsel %vm3135, %v8221, 0.0
    %8314 = vadd.xlane.f32.xlu0 %v8313
    %v8315 = vpop.xlane.xlu0 %8314
    %v8316 = vsel %vm3135, %v8223, 0.0
    %8317 = vadd.xlane.f32.xlu0 %v8316
    %v8318 = vpop.xlane.xlu0 %8317
    %v8319 = vsel %vm3135, %v8225, 0.0
    %8320 = vadd.xlane.f32.xlu0 %v8319
    %v8321 = vpop.xlane.xlu0 %8320
    %v8322 = vrcp.pop %v8228
    %v8323 = vrcp.pop %v8231
    %v8324 = vrcp.pop %v8234
    %v8325 = vrcp.pop %v8237
    %v8326 = vrcp.pop %v8240
    %v8327 = vrcp.pop %v8243
    %v8328 = vrcp.pop %v8246
    %v8329 = vrcp.pop %v8249
    %v8330 = vrcp.pop %v8252
    %v8331 = vrcp.pop %v8255
    %v8332 = vrcp.pop %v8258
    %v8333 = vrcp.pop %v8261
    %v8334 = vrcp.pop %v8264
    %v8335 = vrcp.pop %v8267
    %v8336 = vrcp.pop %v8270
    %v8337 = vrcp.pop %v8273
    %v8338 = vrcp.pop %v8276
    %v8339 = vrcp.pop %v8279
    %v8340 = vrcp.pop %v8282
    %v8341 = vrcp.pop %v8285
    %v8342 = vrcp.pop %v8288
    %v8343 = vrcp.pop %v8291
    %v8344 = vrcp.pop %v8294
    %v8345 = vrcp.pop %v8297
    %v8346 = vrcp.pop %v8300
    %v8347 = vrcp.pop %v8303
    %v8348 = vrcp.pop %v8306
    %v8349 = vrcp.pop %v8309
    %v8350 = vrcp.pop %v8312
    %v8351 = vrcp.pop %v8315
    %v8352 = vrcp.pop %v8318
    %v8353 = vrcp.pop %v8321
    %v8354 = vmul.f32 %v8163, %v8322
    %v8355 = vmul.f32 %v8165, %v8323
    %v8356 = vmul.f32 %v8167, %v8324
    %v8357 = vmul.f32 %v8169, %v8325
    %v8358 = vmul.f32 %v8171, %v8326
    %v8359 = vmul.f32 %v8173, %v8327
    %v8360 = vmul.f32 %v8175, %v8328
    %v8361 = vmul.f32 %v8177, %v8329
    %v8362 = vmul.f32 %v8179, %v8330
    %v8363 = vmul.f32 %v8181, %v8331
    %v8364 = vmul.f32 %v8183, %v8332
    %v8365 = vmul.f32 %v8185, %v8333
    %v8366 = vmul.f32 %v8187, %v8334
    %v8367 = vmul.f32 %v8189, %v8335
    %v8368 = vmul.f32 %v8191, %v8336
    %v8369 = vmul.f32 %v8193, %v8337
    %v8370 = vmul.f32 %v8195, %v8338
    %v8371 = vmul.f32 %v8197, %v8339
    %v8372 = vmul.f32 %v8199, %v8340
    %v8373 = vmul.f32 %v8201, %v8341
    %v8374 = vmul.f32 %v8203, %v8342
    %v8375 = vmul.f32 %v8205, %v8343
    %v8376 = vmul.f32 %v8207, %v8344
    %v8377 = vmul.f32 %v8209, %v8345
    %v8378 = vmul.f32 %v8211, %v8346
    %v8379 = vmul.f32 %v8213, %v8347
    %v8380 = vmul.f32 %v8215, %v8348
    %v8381 = vmul.f32 %v8217, %v8349
    %v8382 = vmul.f32 %v8219, %v8350
    %v8383 = vmul.f32 %v8221, %v8351
    %v8384 = vmul.f32 %v8223, %v8352
    %v8385 = vmul.f32 %v8225, %v8353
    %v8386 = vpack.c.bf16 %v8354, %v8354
    %v8387 = vpack.c.bf16 %v8355, %v8355
    %v8388 = vpack.c.bf16 %v8356, %v8356
    %v8389 = vpack.c.bf16 %v8357, %v8357
    %v8390 = vpack.c.bf16 %v8358, %v8358
    %v8391 = vpack.c.bf16 %v8359, %v8359
    %v8392 = vpack.c.bf16 %v8360, %v8360
    %v8393 = vpack.c.bf16 %v8361, %v8361
    %v8394 = vpack.c.bf16 %v8362, %v8362
    %v8395 = vpack.c.bf16 %v8363, %v8363
    %v8396 = vpack.c.bf16 %v8364, %v8364
    %v8397 = vpack.c.bf16 %v8365, %v8365
    %v8398 = vpack.c.bf16 %v8366, %v8366
    %v8399 = vpack.c.bf16 %v8367, %v8367
    %v8400 = vpack.c.bf16 %v8368, %v8368
    %v8401 = vpack.c.bf16 %v8369, %v8369
    %v8402 = vpack.c.bf16 %v8370, %v8370
    %v8403 = vpack.c.bf16 %v8371, %v8371
    %v8404 = vpack.c.bf16 %v8372, %v8372
    %v8405 = vpack.c.bf16 %v8373, %v8373
    %v8406 = vpack.c.bf16 %v8374, %v8374
    %v8407 = vpack.c.bf16 %v8375, %v8375
    %v8408 = vpack.c.bf16 %v8376, %v8376
    %v8409 = vpack.c.bf16 %v8377, %v8377
    %v8410 = vpack.c.bf16 %v8378, %v8378
    %v8411 = vpack.c.bf16 %v8379, %v8379
    %v8412 = vpack.c.bf16 %v8380, %v8380
    %v8413 = vpack.c.bf16 %v8381, %v8381
    %v8414 = vpack.c.bf16 %v8382, %v8382
    %v8415 = vpack.c.bf16 %v8383, %v8383
    %v8416 = vpack.c.bf16 %v8384, %v8384
    %v8417 = vpack.c.bf16 %v8385, %v8385
    %v8418 = vpack.c.bf16 %v6235, %v6235
    %v8419 = vpack.c.bf16 %v6239, %v6239
    %v8420 = vpack.c.bf16 %v6245, %v6245
    %v8421 = vpack.c.bf16 %v6249, %v6249
    %v8422 = vpack.c.bf16 %v6255, %v6255
    %v8423 = vpack.c.bf16 %v6259, %v6259
    %v8424 = vpack.c.bf16 %v6265, %v6265
    %v8425 = vpack.c.bf16 %v6269, %v6269
    %v8426 = vpack.c.bf16 %v6237, %v6237
    %v8427 = vpack.c.bf16 %v6241, %v6241
    %v8428 = vpack.c.bf16 %v6247, %v6247
    %v8429 = vpack.c.bf16 %v6251, %v6251
    %v8430 = vpack.c.bf16 %v6257, %v6257
    %v8431 = vpack.c.bf16 %v6261, %v6261
    %v8432 = vpack.c.bf16 %v6267, %v6267
    %v8433 = vpack.c.bf16 %v6271, %v6271
    %v8435 = vsel %vm3135, %v8394, 0
    %v8438 = vsel %vm3539, %v8426, 0
    %8440 = vmatprep.subr.bf16.mxu0 0
    %8441 = vmatpush1.bf16.msra.mxu0 0
    %8442 = vmatprep.subr.bf16.mxu0 0
    %8443 = vmatpush1.bf16.msra.mxu0 0
    %8444 = vmatprep.subr.bf16.mxu0 0
    %8445 = vmatpush1.bf16.msra.mxu0 0
    %8446 = vmatprep.subr.bf16.mxu0 0
    %8447 = vmatpush1.bf16.msra.mxu0 0
    %8448 = vmatprep.subr.bf16.mxu0 0
    %8449 = vmatpush1.bf16.msra.mxu0 0
    %8450 = vmatprep.subr.bf16.mxu0 0
    %8451 = vmatpush1.bf16.msra.mxu0 0
    %8452 = vmatprep.subr.bf16.mxu0 0
    %8453 = vmatpush1.bf16.msra.mxu0 0
    %8454 = vmatprep.subr.bf16.mxu0 0
    %8455 = vmatpush1.bf16.msra.mxu0 %v8438
    %8456 = vmatprep.subr.bf16.mxu0 0
    %8457 = vmatpush2.bf16.msra.mxu0 0
    %8458 = vmatprep.subr.bf16.mxu0 0
    %8459 = vmatpush2.bf16.msra.mxu0 0
    %8460 = vmatprep.subr.bf16.mxu0 0
    %8461 = vmatpush2.bf16.msra.mxu0 0
    %8462 = vmatprep.subr.bf16.mxu0 0
    %8463 = vmatpush2.bf16.msra.mxu0 0
    %8464 = vmatprep.subr.bf16.mxu0 0
    %8465 = vmatpush2.bf16.msra.mxu0 0
    %8466 = vmatprep.subr.bf16.mxu0 0
    %8467 = vmatpush2.bf16.msra.mxu0 0
    %8468 = vmatprep.subr.bf16.mxu0 0
    %8469 = vmatpush2.bf16.msra.mxu0 0
    %8470 = vmatprep.subr.bf16.mxu0 0
    %8471 = vmatpush2.bf16.msra.mxu0 0
    %8472 = vmatprep.mubr.bf16.mxu0 0
    %8473 = vmatmul.mubr.bf16.gmra.mxu0 %v8435
    %v8474 = vpop.f32.mrf.mxu0
    %v8475 = vadd.f32 0.0, %v8474
    %v8476 = vpop.f32.mrf.mxu0
    %v8477 = vpop.f32.mrf.mxu0
    %v8478 = vpop.f32.mrf.mxu0
    %8479 = vdwg.mxu0
    %v8481 = vsel %vm3135, %v8395, 0
    %v8484 = vsel %vm3539, %v8427, 0
    %8486 = vmatprep.subr.bf16.mxu0 0
    %8487 = vmatpush1.bf16.msra.mxu0 0
    %8488 = vmatprep.subr.bf16.mxu0 0
    %8489 = vmatpush1.bf16.msra.mxu0 0
    %8490 = vmatprep.subr.bf16.mxu0 0
    %8491 = vmatpush1.bf16.msra.mxu0 0
    %8492 = vmatprep.subr.bf16.mxu0 0
    %8493 = vmatpush1.bf16.msra.mxu0 0
    %8494 = vmatprep.subr.bf16.mxu0 0
    %8495 = vmatpush1.bf16.msra.mxu0 0
    %8496 = vmatprep.subr.bf16.mxu0 0
    %8497 = vmatpush1.bf16.msra.mxu0 0
    %8498 = vmatprep.subr.bf16.mxu0 0
    %8499 = vmatpush1.bf16.msra.mxu0 0
    %8500 = vmatprep.subr.bf16.mxu0 0
    %8501 = vmatpush1.bf16.msra.mxu0 %v8484
    %8502 = vmatprep.subr.bf16.mxu0 0
    %8503 = vmatpush2.bf16.msra.mxu0 0
    %8504 = vmatprep.subr.bf16.mxu0 0
    %8505 = vmatpush2.bf16.msra.mxu0 0
    %8506 = vmatprep.subr.bf16.mxu0 0
    %8507 = vmatpush2.bf16.msra.mxu0 0
    %8508 = vmatprep.subr.bf16.mxu0 0
    %8509 = vmatpush2.bf16.msra.mxu0 0
    %8510 = vmatprep.subr.bf16.mxu0 0
    %8511 = vmatpush2.bf16.msra.mxu0 0
    %8512 = vmatprep.subr.bf16.mxu0 0
    %8513 = vmatpush2.bf16.msra.mxu0 0
    %8514 = vmatprep.subr.bf16.mxu0 0
    %8515 = vmatpush2.bf16.msra.mxu0 0
    %8516 = vmatprep.subr.bf16.mxu0 0
    %8517 = vmatpush2.bf16.msra.mxu0 0
    %8518 = vmatprep.mubr.bf16.mxu0 0
    %8519 = vmatmul.mubr.bf16.gmra.mxu0 %v8481
    %v8520 = vpop.f32.mrf.mxu0
    %v8521 = vadd.f32 0.0, %v8520
    %v8522 = vpop.f32.mrf.mxu0
    %v8523 = vpop.f32.mrf.mxu0
    %v8524 = vpop.f32.mrf.mxu0
    %8525 = vdwg.mxu0
    %v8527 = vsel %vm3135, %v8396, 0
    %v8530 = vsel %vm3539, %v8428, 0
    %8532 = vmatprep.subr.bf16.mxu0 0
    %8533 = vmatpush1.bf16.msra.mxu0 0
    %8534 = vmatprep.subr.bf16.mxu0 0
    %8535 = vmatpush1.bf16.msra.mxu0 0
    %8536 = vmatprep.subr.bf16.mxu0 0
    %8537 = vmatpush1.bf16.msra.mxu0 0
    %8538 = vmatprep.subr.bf16.mxu0 0
    %8539 = vmatpush1.bf16.msra.mxu0 0
    %8540 = vmatprep.subr.bf16.mxu0 0
    %8541 = vmatpush1.bf16.msra.mxu0 0
    %8542 = vmatprep.subr.bf16.mxu0 0
    %8543 = vmatpush1.bf16.msra.mxu0 0
    %8544 = vmatprep.subr.bf16.mxu0 0
    %8545 = vmatpush1.bf16.msra.mxu0 0
    %8546 = vmatprep.subr.bf16.mxu0 0
    %8547 = vmatpush1.bf16.msra.mxu0 %v8530
    %8548 = vmatprep.subr.bf16.mxu0 0
    %8549 = vmatpush2.bf16.msra.mxu0 0
    %8550 = vmatprep.subr.bf16.mxu0 0
    %8551 = vmatpush2.bf16.msra.mxu0 0
    %8552 = vmatprep.subr.bf16.mxu0 0
    %8553 = vmatpush2.bf16.msra.mxu0 0
    %8554 = vmatprep.subr.bf16.mxu0 0
    %8555 = vmatpush2.bf16.msra.mxu0 0
    %8556 = vmatprep.subr.bf16.mxu0 0
    %8557 = vmatpush2.bf16.msra.mxu0 0
    %8558 = vmatprep.subr.bf16.mxu0 0
    %8559 = vmatpush2.bf16.msra.mxu0 0
    %8560 = vmatprep.subr.bf16.mxu0 0
    %8561 = vmatpush2.bf16.msra.mxu0 0
    %8562 = vmatprep.subr.bf16.mxu0 0
    %8563 = vmatpush2.bf16.msra.mxu0 0
    %8564 = vmatprep.mubr.bf16.mxu0 0
    %8565 = vmatmul.mubr.bf16.gmra.mxu0 %v8527
    %v8566 = vpop.f32.mrf.mxu0
    %v8567 = vadd.f32 0.0, %v8566
    %v8568 = vpop.f32.mrf.mxu0
    %v8569 = vpop.f32.mrf.mxu0
    %v8570 = vpop.f32.mrf.mxu0
    %8571 = vdwg.mxu0
    %v8573 = vsel %vm3135, %v8397, 0
    %v8576 = vsel %vm3539, %v8429, 0
    %8578 = vmatprep.subr.bf16.mxu0 0
    %8579 = vmatpush1.bf16.msra.mxu0 0
    %8580 = vmatprep.subr.bf16.mxu0 0
    %8581 = vmatpush1.bf16.msra.mxu0 0
    %8582 = vmatprep.subr.bf16.mxu0 0
    %8583 = vmatpush1.bf16.msra.mxu0 0
    %8584 = vmatprep.subr.bf16.mxu0 0
    %8585 = vmatpush1.bf16.msra.mxu0 0
    %8586 = vmatprep.subr.bf16.mxu0 0
    %8587 = vmatpush1.bf16.msra.mxu0 0
    %8588 = vmatprep.subr.bf16.mxu0 0
    %8589 = vmatpush1.bf16.msra.mxu0 0
    %8590 = vmatprep.subr.bf16.mxu0 0
    %8591 = vmatpush1.bf16.msra.mxu0 0
    %8592 = vmatprep.subr.bf16.mxu0 0
    %8593 = vmatpush1.bf16.msra.mxu0 %v8576
    %8594 = vmatprep.subr.bf16.mxu0 0
    %8595 = vmatpush2.bf16.msra.mxu0 0
    %8596 = vmatprep.subr.bf16.mxu0 0
    %8597 = vmatpush2.bf16.msra.mxu0 0
    %8598 = vmatprep.subr.bf16.mxu0 0
    %8599 = vmatpush2.bf16.msra.mxu0 0
    %8600 = vmatprep.subr.bf16.mxu0 0
    %8601 = vmatpush2.bf16.msra.mxu0 0
    %8602 = vmatprep.subr.bf16.mxu0 0
    %8603 = vmatpush2.bf16.msra.mxu0 0
    %8604 = vmatprep.subr.bf16.mxu0 0
    %8605 = vmatpush2.bf16.msra.mxu0 0
    %8606 = vmatprep.subr.bf16.mxu0 0
    %8607 = vmatpush2.bf16.msra.mxu0 0
    %8608 = vmatprep.subr.bf16.mxu0 0
    %8609 = vmatpush2.bf16.msra.mxu0 0
    %8610 = vmatprep.mubr.bf16.mxu0 0
    %8611 = vmatmul.mubr.bf16.gmra.mxu0 %v8573
    %v8612 = vpop.f32.mrf.mxu0
    %v8613 = vadd.f32 0.0, %v8612
    %v8614 = vpop.f32.mrf.mxu0
    %v8615 = vpop.f32.mrf.mxu0
    %v8616 = vpop.f32.mrf.mxu0
    %8617 = vdwg.mxu0
    %v8619 = vsel %vm3135, %v8398, 0
    %v8622 = vsel %vm3539, %v8430, 0
    %8624 = vmatprep.subr.bf16.mxu0 0
    %8625 = vmatpush1.bf16.msra.mxu0 0
    %8626 = vmatprep.subr.bf16.mxu0 0
    %8627 = vmatpush1.bf16.msra.mxu0 0
    %8628 = vmatprep.subr.bf16.mxu0 0
    %8629 = vmatpush1.bf16.msra.mxu0 0
    %8630 = vmatprep.subr.bf16.mxu0 0
    %8631 = vmatpush1.bf16.msra.mxu0 0
    %8632 = vmatprep.subr.bf16.mxu0 0
    %8633 = vmatpush1.bf16.msra.mxu0 0
    %8634 = vmatprep.subr.bf16.mxu0 0
    %8635 = vmatpush1.bf16.msra.mxu0 0
    %8636 = vmatprep.subr.bf16.mxu0 0
    %8637 = vmatpush1.bf16.msra.mxu0 0
    %8638 = vmatprep.subr.bf16.mxu0 0
    %8639 = vmatpush1.bf16.msra.mxu0 %v8622
    %8640 = vmatprep.subr.bf16.mxu0 0
    %8641 = vmatpush2.bf16.msra.mxu0 0
    %8642 = vmatprep.subr.bf16.mxu0 0
    %8643 = vmatpush2.bf16.msra.mxu0 0
    %8644 = vmatprep.subr.bf16.mxu0 0
    %8645 = vmatpush2.bf16.msra.mxu0 0
    %8646 = vmatprep.subr.bf16.mxu0 0
    %8647 = vmatpush2.bf16.msra.mxu0 0
    %8648 = vmatprep.subr.bf16.mxu0 0
    %8649 = vmatpush2.bf16.msra.mxu0 0
    %8650 = vmatprep.subr.bf16.mxu0 0
    %8651 = vmatpush2.bf16.msra.mxu0 0
    %8652 = vmatprep.subr.bf16.mxu0 0
    %8653 = vmatpush2.bf16.msra.mxu0 0
    %8654 = vmatprep.subr.bf16.mxu0 0
    %8655 = vmatpush2.bf16.msra.mxu0 0
    %8656 = vmatprep.mubr.bf16.mxu0 0
    %8657 = vmatmul.mubr.bf16.gmra.mxu0 %v8619
    %v8658 = vpop.f32.mrf.mxu0
    %v8659 = vadd.f32 0.0, %v8658
    %v8660 = vpop.f32.mrf.mxu0
    %v8661 = vpop.f32.mrf.mxu0
    %v8662 = vpop.f32.mrf.mxu0
    %8663 = vdwg.mxu0
    %v8665 = vsel %vm3135, %v8399, 0
    %v8668 = vsel %vm3539, %v8431, 0
    %8670 = vmatprep.subr.bf16.mxu0 0
    %8671 = vmatpush1.bf16.msra.mxu0 0
    %8672 = vmatprep.subr.bf16.mxu0 0
    %8673 = vmatpush1.bf16.msra.mxu0 0
    %8674 = vmatprep.subr.bf16.mxu0 0
    %8675 = vmatpush1.bf16.msra.mxu0 0
    %8676 = vmatprep.subr.bf16.mxu0 0
    %8677 = vmatpush1.bf16.msra.mxu0 0
    %8678 = vmatprep.subr.bf16.mxu0 0
    %8679 = vmatpush1.bf16.msra.mxu0 0
    %8680 = vmatprep.subr.bf16.mxu0 0
    %8681 = vmatpush1.bf16.msra.mxu0 0
    %8682 = vmatprep.subr.bf16.mxu0 0
    %8683 = vmatpush1.bf16.msra.mxu0 0
    %8684 = vmatprep.subr.bf16.mxu0 0
    %8685 = vmatpush1.bf16.msra.mxu0 %v8668
    %8686 = vmatprep.subr.bf16.mxu0 0
    %8687 = vmatpush2.bf16.msra.mxu0 0
    %8688 = vmatprep.subr.bf16.mxu0 0
    %8689 = vmatpush2.bf16.msra.mxu0 0
    %8690 = vmatprep.subr.bf16.mxu0 0
    %8691 = vmatpush2.bf16.msra.mxu0 0
    %8692 = vmatprep.subr.bf16.mxu0 0
    %8693 = vmatpush2.bf16.msra.mxu0 0
    %8694 = vmatprep.subr.bf16.mxu0 0
    %8695 = vmatpush2.bf16.msra.mxu0 0
    %8696 = vmatprep.subr.bf16.mxu0 0
    %8697 = vmatpush2.bf16.msra.mxu0 0
    %8698 = vmatprep.subr.bf16.mxu0 0
    %8699 = vmatpush2.bf16.msra.mxu0 0
    %8700 = vmatprep.subr.bf16.mxu0 0
    %8701 = vmatpush2.bf16.msra.mxu0 0
    %8702 = vmatprep.mubr.bf16.mxu0 0
    %8703 = vmatmul.mubr.bf16.gmra.mxu0 %v8665
    %v8704 = vpop.f32.mrf.mxu0
    %v8705 = vadd.f32 0.0, %v8704
    %v8706 = vpop.f32.mrf.mxu0
    %v8707 = vpop.f32.mrf.mxu0
    %v8708 = vpop.f32.mrf.mxu0
    %8709 = vdwg.mxu0
    %v8711 = vsel %vm3135, %v8400, 0
    %v8714 = vsel %vm3539, %v8432, 0
    %8716 = vmatprep.subr.bf16.mxu0 0
    %8717 = vmatpush1.bf16.msra.mxu0 0
    %8718 = vmatprep.subr.bf16.mxu0 0
    %8719 = vmatpush1.bf16.msra.mxu0 0
    %8720 = vmatprep.subr.bf16.mxu0 0
    %8721 = vmatpush1.bf16.msra.mxu0 0
    %8722 = vmatprep.subr.bf16.mxu0 0
    %8723 = vmatpush1.bf16.msra.mxu0 0
    %8724 = vmatprep.subr.bf16.mxu0 0
    %8725 = vmatpush1.bf16.msra.mxu0 0
    %8726 = vmatprep.subr.bf16.mxu0 0
    %8727 = vmatpush1.bf16.msra.mxu0 0
    %8728 = vmatprep.subr.bf16.mxu0 0
    %8729 = vmatpush1.bf16.msra.mxu0 0
    %8730 = vmatprep.subr.bf16.mxu0 0
    %8731 = vmatpush1.bf16.msra.mxu0 %v8714
    %8732 = vmatprep.subr.bf16.mxu0 0
    %8733 = vmatpush2.bf16.msra.mxu0 0
    %8734 = vmatprep.subr.bf16.mxu0 0
    %8735 = vmatpush2.bf16.msra.mxu0 0
    %8736 = vmatprep.subr.bf16.mxu0 0
    %8737 = vmatpush2.bf16.msra.mxu0 0
    %8738 = vmatprep.subr.bf16.mxu0 0
    %8739 = vmatpush2.bf16.msra.mxu0 0
    %8740 = vmatprep.subr.bf16.mxu0 0
    %8741 = vmatpush2.bf16.msra.mxu0 0
    %8742 = vmatprep.subr.bf16.mxu0 0
    %8743 = vmatpush2.bf16.msra.mxu0 0
    %8744 = vmatprep.subr.bf16.mxu0 0
    %8745 = vmatpush2.bf16.msra.mxu0 0
    %8746 = vmatprep.subr.bf16.mxu0 0
    %8747 = vmatpush2.bf16.msra.mxu0 0
    %8748 = vmatprep.mubr.bf16.mxu0 0
    %8749 = vmatmul.mubr.bf16.gmra.mxu0 %v8711
    %v8750 = vpop.f32.mrf.mxu0
    %v8751 = vadd.f32 0.0, %v8750
    %v8752 = vpop.f32.mrf.mxu0
    %v8753 = vpop.f32.mrf.mxu0
    %v8754 = vpop.f32.mrf.mxu0
    %8755 = vdwg.mxu0
    %v8757 = vsel %vm3135, %v8401, 0
    %v8760 = vsel %vm3539, %v8433, 0
    %8762 = vmatprep.subr.bf16.mxu0 0
    %8763 = vmatpush1.bf16.msra.mxu0 0
    %8764 = vmatprep.subr.bf16.mxu0 0
    %8765 = vmatpush1.bf16.msra.mxu0 0
    %8766 = vmatprep.subr.bf16.mxu0 0
    %8767 = vmatpush1.bf16.msra.mxu0 0
    %8768 = vmatprep.subr.bf16.mxu0 0
    %8769 = vmatpush1.bf16.msra.mxu0 0
    %8770 = vmatprep.subr.bf16.mxu0 0
    %8771 = vmatpush1.bf16.msra.mxu0 0
    %8772 = vmatprep.subr.bf16.mxu0 0
    %8773 = vmatpush1.bf16.msra.mxu0 0
    %8774 = vmatprep.subr.bf16.mxu0 0
    %8775 = vmatpush1.bf16.msra.mxu0 0
    %8776 = vmatprep.subr.bf16.mxu0 0
    %8777 = vmatpush1.bf16.msra.mxu0 %v8760
    %8778 = vmatprep.subr.bf16.mxu0 0
    %8779 = vmatpush2.bf16.msra.mxu0 0
    %8780 = vmatprep.subr.bf16.mxu0 0
    %8781 = vmatpush2.bf16.msra.mxu0 0
    %8782 = vmatprep.subr.bf16.mxu0 0
    %8783 = vmatpush2.bf16.msra.mxu0 0
    %8784 = vmatprep.subr.bf16.mxu0 0
    %8785 = vmatpush2.bf16.msra.mxu0 0
    %8786 = vmatprep.subr.bf16.mxu0 0
    %8787 = vmatpush2.bf16.msra.mxu0 0
    %8788 = vmatprep.subr.bf16.mxu0 0
    %8789 = vmatpush2.bf16.msra.mxu0 0
    %8790 = vmatprep.subr.bf16.mxu0 0
    %8791 = vmatpush2.bf16.msra.mxu0 0
    %8792 = vmatprep.subr.bf16.mxu0 0
    %8793 = vmatpush2.bf16.msra.mxu0 0
    %8794 = vmatprep.mubr.bf16.mxu0 0
    %8795 = vmatmul.mubr.bf16.gmra.mxu0 %v8757
    %v8796 = vpop.f32.mrf.mxu0
    %v8797 = vadd.f32 0.0, %v8796
    %v8798 = vpop.f32.mrf.mxu0
    %v8799 = vpop.f32.mrf.mxu0
    %v8800 = vpop.f32.mrf.mxu0
    %8801 = vdwg.mxu0
    %v8803 = vsel %vm3135, %v8386, 0
    %v8806 = vsel %vm3539, %v8418, 0
    %8808 = vmatprep.subr.bf16.mxu0 0
    %8809 = vmatpush1.bf16.msra.mxu0 0
    %8810 = vmatprep.subr.bf16.mxu0 0
    %8811 = vmatpush1.bf16.msra.mxu0 0
    %8812 = vmatprep.subr.bf16.mxu0 0
    %8813 = vmatpush1.bf16.msra.mxu0 0
    %8814 = vmatprep.subr.bf16.mxu0 0
    %8815 = vmatpush1.bf16.msra.mxu0 0
    %8816 = vmatprep.subr.bf16.mxu0 0
    %8817 = vmatpush1.bf16.msra.mxu0 0
    %8818 = vmatprep.subr.bf16.mxu0 0
    %8819 = vmatpush1.bf16.msra.mxu0 0
    %8820 = vmatprep.subr.bf16.mxu0 0
    %8821 = vmatpush1.bf16.msra.mxu0 0
    %8822 = vmatprep.subr.bf16.mxu0 0
    %8823 = vmatpush1.bf16.msra.mxu0 %v8806
    %8824 = vmatprep.subr.bf16.mxu0 0
    %8825 = vmatpush2.bf16.msra.mxu0 0
    %8826 = vmatprep.subr.bf16.mxu0 0
    %8827 = vmatpush2.bf16.msra.mxu0 0
    %8828 = vmatprep.subr.bf16.mxu0 0
    %8829 = vmatpush2.bf16.msra.mxu0 0
    %8830 = vmatprep.subr.bf16.mxu0 0
    %8831 = vmatpush2.bf16.msra.mxu0 0
    %8832 = vmatprep.subr.bf16.mxu0 0
    %8833 = vmatpush2.bf16.msra.mxu0 0
    %8834 = vmatprep.subr.bf16.mxu0 0
    %8835 = vmatpush2.bf16.msra.mxu0 0
    %8836 = vmatprep.subr.bf16.mxu0 0
    %8837 = vmatpush2.bf16.msra.mxu0 0
    %8838 = vmatprep.subr.bf16.mxu0 0
    %8839 = vmatpush2.bf16.msra.mxu0 0
    %8840 = vmatprep.mubr.bf16.mxu0 0
    %8841 = vmatmul.mubr.bf16.gmra.mxu0 %v8803
    %v8842 = vpop.f32.mrf.mxu0
    %v8843 = vadd.f32 %v8475, %v8842
    %v8844 = vpop.f32.mrf.mxu0
    %v8845 = vpop.f32.mrf.mxu0
    %v8846 = vpop.f32.mrf.mxu0
    %8847 = vdwg.mxu0
    %v8849 = vsel %vm3135, %v8387, 0
    %v8852 = vsel %vm3539, %v8419, 0
    %8854 = vmatprep.subr.bf16.mxu0 0
    %8855 = vmatpush1.bf16.msra.mxu0 0
    %8856 = vmatprep.subr.bf16.mxu0 0
    %8857 = vmatpush1.bf16.msra.mxu0 0
    %8858 = vmatprep.subr.bf16.mxu0 0
    %8859 = vmatpush1.bf16.msra.mxu0 0
    %8860 = vmatprep.subr.bf16.mxu0 0
    %8861 = vmatpush1.bf16.msra.mxu0 0
    %8862 = vmatprep.subr.bf16.mxu0 0
    %8863 = vmatpush1.bf16.msra.mxu0 0
    %8864 = vmatprep.subr.bf16.mxu0 0
    %8865 = vmatpush1.bf16.msra.mxu0 0
    %8866 = vmatprep.subr.bf16.mxu0 0
    %8867 = vmatpush1.bf16.msra.mxu0 0
    %8868 = vmatprep.subr.bf16.mxu0 0
    %8869 = vmatpush1.bf16.msra.mxu0 %v8852
    %8870 = vmatprep.subr.bf16.mxu0 0
    %8871 = vmatpush2.bf16.msra.mxu0 0
    %8872 = vmatprep.subr.bf16.mxu0 0
    %8873 = vmatpush2.bf16.msra.mxu0 0
    %8874 = vmatprep.subr.bf16.mxu0 0
    %8875 = vmatpush2.bf16.msra.mxu0 0
    %8876 = vmatprep.subr.bf16.mxu0 0
    %8877 = vmatpush2.bf16.msra.mxu0 0
    %8878 = vmatprep.subr.bf16.mxu0 0
    %8879 = vmatpush2.bf16.msra.mxu0 0
    %8880 = vmatprep.subr.bf16.mxu0 0
    %8881 = vmatpush2.bf16.msra.mxu0 0
    %8882 = vmatprep.subr.bf16.mxu0 0
    %8883 = vmatpush2.bf16.msra.mxu0 0
    %8884 = vmatprep.subr.bf16.mxu0 0
    %8885 = vmatpush2.bf16.msra.mxu0 0
    %8886 = vmatprep.mubr.bf16.mxu0 0
    %8887 = vmatmul.mubr.bf16.gmra.mxu0 %v8849
    %v8888 = vpop.f32.mrf.mxu0
    %v8889 = vadd.f32 %v8521, %v8888
    %v8890 = vpop.f32.mrf.mxu0
    %v8891 = vpop.f32.mrf.mxu0
    %v8892 = vpop.f32.mrf.mxu0
    %8893 = vdwg.mxu0
    %v8895 = vsel %vm3135, %v8388, 0
    %v8898 = vsel %vm3539, %v8420, 0
    %8900 = vmatprep.subr.bf16.mxu0 0
    %8901 = vmatpush1.bf16.msra.mxu0 0
    %8902 = vmatprep.subr.bf16.mxu0 0
    %8903 = vmatpush1.bf16.msra.mxu0 0
    %8904 = vmatprep.subr.bf16.mxu0 0
    %8905 = vmatpush1.bf16.msra.mxu0 0
    %8906 = vmatprep.subr.bf16.mxu0 0
    %8907 = vmatpush1.bf16.msra.mxu0 0
    %8908 = vmatprep.subr.bf16.mxu0 0
    %8909 = vmatpush1.bf16.msra.mxu0 0
    %8910 = vmatprep.subr.bf16.mxu0 0
    %8911 = vmatpush1.bf16.msra.mxu0 0
    %8912 = vmatprep.subr.bf16.mxu0 0
    %8913 = vmatpush1.bf16.msra.mxu0 0
    %8914 = vmatprep.subr.bf16.mxu0 0
    %8915 = vmatpush1.bf16.msra.mxu0 %v8898
    %8916 = vmatprep.subr.bf16.mxu0 0
    %8917 = vmatpush2.bf16.msra.mxu0 0
    %8918 = vmatprep.subr.bf16.mxu0 0
    %8919 = vmatpush2.bf16.msra.mxu0 0
    %8920 = vmatprep.subr.bf16.mxu0 0
    %8921 = vmatpush2.bf16.msra.mxu0 0
    %8922 = vmatprep.subr.bf16.mxu0 0
    %8923 = vmatpush2.bf16.msra.mxu0 0
    %8924 = vmatprep.subr.bf16.mxu0 0
    %8925 = vmatpush2.bf16.msra.mxu0 0
    %8926 = vmatprep.subr.bf16.mxu0 0
    %8927 = vmatpush2.bf16.msra.mxu0 0
    %8928 = vmatprep.subr.bf16.mxu0 0
    %8929 = vmatpush2.bf16.msra.mxu0 0
    %8930 = vmatprep.subr.bf16.mxu0 0
    %8931 = vmatpush2.bf16.msra.mxu0 0
    %8932 = vmatprep.mubr.bf16.mxu0 0
    %8933 = vmatmul.mubr.bf16.gmra.mxu0 %v8895
    %v8934 = vpop.f32.mrf.mxu0
    %v8935 = vadd.f32 %v8567, %v8934
    %v8936 = vpop.f32.mrf.mxu0
    %v8937 = vpop.f32.mrf.mxu0
    %v8938 = vpop.f32.mrf.mxu0
    %8939 = vdwg.mxu0
    %v8941 = vsel %vm3135, %v8389, 0
    %v8944 = vsel %vm3539, %v8421, 0
    %8946 = vmatprep.subr.bf16.mxu0 0
    %8947 = vmatpush1.bf16.msra.mxu0 0
    %8948 = vmatprep.subr.bf16.mxu0 0
    %8949 = vmatpush1.bf16.msra.mxu0 0
    %8950 = vmatprep.subr.bf16.mxu0 0
    %8951 = vmatpush1.bf16.msra.mxu0 0
    %8952 = vmatprep.subr.bf16.mxu0 0
    %8953 = vmatpush1.bf16.msra.mxu0 0
    %8954 = vmatprep.subr.bf16.mxu0 0
    %8955 = vmatpush1.bf16.msra.mxu0 0
    %8956 = vmatprep.subr.bf16.mxu0 0
    %8957 = vmatpush1.bf16.msra.mxu0 0
    %8958 = vmatprep.subr.bf16.mxu0 0
    %8959 = vmatpush1.bf16.msra.mxu0 0
    %8960 = vmatprep.subr.bf16.mxu0 0
    %8961 = vmatpush1.bf16.msra.mxu0 %v8944
    %8962 = vmatprep.subr.bf16.mxu0 0
    %8963 = vmatpush2.bf16.msra.mxu0 0
    %8964 = vmatprep.subr.bf16.mxu0 0
    %8965 = vmatpush2.bf16.msra.mxu0 0
    %8966 = vmatprep.subr.bf16.mxu0 0
    %8967 = vmatpush2.bf16.msra.mxu0 0
    %8968 = vmatprep.subr.bf16.mxu0 0
    %8969 = vmatpush2.bf16.msra.mxu0 0
    %8970 = vmatprep.subr.bf16.mxu0 0
    %8971 = vmatpush2.bf16.msra.mxu0 0
    %8972 = vmatprep.subr.bf16.mxu0 0
    %8973 = vmatpush2.bf16.msra.mxu0 0
    %8974 = vmatprep.subr.bf16.mxu0 0
    %8975 = vmatpush2.bf16.msra.mxu0 0
    %8976 = vmatprep.subr.bf16.mxu0 0
    %8977 = vmatpush2.bf16.msra.mxu0 0
    %8978 = vmatprep.mubr.bf16.mxu0 0
    %8979 = vmatmul.mubr.bf16.gmra.mxu0 %v8941
    %v8980 = vpop.f32.mrf.mxu0
    %v8981 = vadd.f32 %v8613, %v8980
    %v8982 = vpop.f32.mrf.mxu0
    %v8983 = vpop.f32.mrf.mxu0
    %v8984 = vpop.f32.mrf.mxu0
    %8985 = vdwg.mxu0
    %v8987 = vsel %vm3135, %v8390, 0
    %v8990 = vsel %vm3539, %v8422, 0
    %8992 = vmatprep.subr.bf16.mxu0 0
    %8993 = vmatpush1.bf16.msra.mxu0 0
    %8994 = vmatprep.subr.bf16.mxu0 0
    %8995 = vmatpush1.bf16.msra.mxu0 0
    %8996 = vmatprep.subr.bf16.mxu0 0
    %8997 = vmatpush1.bf16.msra.mxu0 0
    %8998 = vmatprep.subr.bf16.mxu0 0
    %8999 = vmatpush1.bf16.msra.mxu0 0
    %9000 = vmatprep.subr.bf16.mxu0 0
    %9001 = vmatpush1.bf16.msra.mxu0 0
    %9002 = vmatprep.subr.bf16.mxu0 0
    %9003 = vmatpush1.bf16.msra.mxu0 0
    %9004 = vmatprep.subr.bf16.mxu0 0
    %9005 = vmatpush1.bf16.msra.mxu0 0
    %9006 = vmatprep.subr.bf16.mxu0 0
    %9007 = vmatpush1.bf16.msra.mxu0 %v8990
    %9008 = vmatprep.subr.bf16.mxu0 0
    %9009 = vmatpush2.bf16.msra.mxu0 0
    %9010 = vmatprep.subr.bf16.mxu0 0
    %9011 = vmatpush2.bf16.msra.mxu0 0
    %9012 = vmatprep.subr.bf16.mxu0 0
    %9013 = vmatpush2.bf16.msra.mxu0 0
    %9014 = vmatprep.subr.bf16.mxu0 0
    %9015 = vmatpush2.bf16.msra.mxu0 0
    %9016 = vmatprep.subr.bf16.mxu0 0
    %9017 = vmatpush2.bf16.msra.mxu0 0
    %9018 = vmatprep.subr.bf16.mxu0 0
    %9019 = vmatpush2.bf16.msra.mxu0 0
    %9020 = vmatprep.subr.bf16.mxu0 0
    %9021 = vmatpush2.bf16.msra.mxu0 0
    %9022 = vmatprep.subr.bf16.mxu0 0
    %9023 = vmatpush2.bf16.msra.mxu0 0
    %9024 = vmatprep.mubr.bf16.mxu0 0
    %9025 = vmatmul.mubr.bf16.gmra.mxu0 %v8987
    %v9026 = vpop.f32.mrf.mxu0
    %v9027 = vadd.f32 %v8659, %v9026
    %v9028 = vpop.f32.mrf.mxu0
    %v9029 = vpop.f32.mrf.mxu0
    %v9030 = vpop.f32.mrf.mxu0
    %9031 = vdwg.mxu0
    %v9033 = vsel %vm3135, %v8391, 0
    %v9036 = vsel %vm3539, %v8423, 0
    %9038 = vmatprep.subr.bf16.mxu0 0
    %9039 = vmatpush1.bf16.msra.mxu0 0
    %9040 = vmatprep.subr.bf16.mxu0 0
    %9041 = vmatpush1.bf16.msra.mxu0 0
    %9042 = vmatprep.subr.bf16.mxu0 0
    %9043 = vmatpush1.bf16.msra.mxu0 0
    %9044 = vmatprep.subr.bf16.mxu0 0
    %9045 = vmatpush1.bf16.msra.mxu0 0
    %9046 = vmatprep.subr.bf16.mxu0 0
    %9047 = vmatpush1.bf16.msra.mxu0 0
    %9048 = vmatprep.subr.bf16.mxu0 0
    %9049 = vmatpush1.bf16.msra.mxu0 0
    %9050 = vmatprep.subr.bf16.mxu0 0
    %9051 = vmatpush1.bf16.msra.mxu0 0
    %9052 = vmatprep.subr.bf16.mxu0 0
    %9053 = vmatpush1.bf16.msra.mxu0 %v9036
    %9054 = vmatprep.subr.bf16.mxu0 0
    %9055 = vmatpush2.bf16.msra.mxu0 0
    %9056 = vmatprep.subr.bf16.mxu0 0
    %9057 = vmatpush2.bf16.msra.mxu0 0
    %9058 = vmatprep.subr.bf16.mxu0 0
    %9059 = vmatpush2.bf16.msra.mxu0 0
    %9060 = vmatprep.subr.bf16.mxu0 0
    %9061 = vmatpush2.bf16.msra.mxu0 0
    %9062 = vmatprep.subr.bf16.mxu0 0
    %9063 = vmatpush2.bf16.msra.mxu0 0
    %9064 = vmatprep.subr.bf16.mxu0 0
    %9065 = vmatpush2.bf16.msra.mxu0 0
    %9066 = vmatprep.subr.bf16.mxu0 0
    %9067 = vmatpush2.bf16.msra.mxu0 0
    %9068 = vmatprep.subr.bf16.mxu0 0
    %9069 = vmatpush2.bf16.msra.mxu0 0
    %9070 = vmatprep.mubr.bf16.mxu0 0
    %9071 = vmatmul.mubr.bf16.gmra.mxu0 %v9033
    %v9072 = vpop.f32.mrf.mxu0
    %v9073 = vadd.f32 %v8705, %v9072
    %v9074 = vpop.f32.mrf.mxu0
    %v9075 = vpop.f32.mrf.mxu0
    %v9076 = vpop.f32.mrf.mxu0
    %9077 = vdwg.mxu0
    %v9079 = vsel %vm3135, %v8392, 0
    %v9082 = vsel %vm3539, %v8424, 0
    %9084 = vmatprep.subr.bf16.mxu0 0
    %9085 = vmatpush1.bf16.msra.mxu0 0
    %9086 = vmatprep.subr.bf16.mxu0 0
    %9087 = vmatpush1.bf16.msra.mxu0 0
    %9088 = vmatprep.subr.bf16.mxu0 0
    %9089 = vmatpush1.bf16.msra.mxu0 0
    %9090 = vmatprep.subr.bf16.mxu0 0
    %9091 = vmatpush1.bf16.msra.mxu0 0
    %9092 = vmatprep.subr.bf16.mxu0 0
    %9093 = vmatpush1.bf16.msra.mxu0 0
    %9094 = vmatprep.subr.bf16.mxu0 0
    %9095 = vmatpush1.bf16.msra.mxu0 0
    %9096 = vmatprep.subr.bf16.mxu0 0
    %9097 = vmatpush1.bf16.msra.mxu0 0
    %9098 = vmatprep.subr.bf16.mxu0 0
    %9099 = vmatpush1.bf16.msra.mxu0 %v9082
    %9100 = vmatprep.subr.bf16.mxu0 0
    %9101 = vmatpush2.bf16.msra.mxu0 0
    %9102 = vmatprep.subr.bf16.mxu0 0
    %9103 = vmatpush2.bf16.msra.mxu0 0
    %9104 = vmatprep.subr.bf16.mxu0 0
    %9105 = vmatpush2.bf16.msra.mxu0 0
    %9106 = vmatprep.subr.bf16.mxu0 0
    %9107 = vmatpush2.bf16.msra.mxu0 0
    %9108 = vmatprep.subr.bf16.mxu0 0
    %9109 = vmatpush2.bf16.msra.mxu0 0
    %9110 = vmatprep.subr.bf16.mxu0 0
    %9111 = vmatpush2.bf16.msra.mxu0 0
    %9112 = vmatprep.subr.bf16.mxu0 0
    %9113 = vmatpush2.bf16.msra.mxu0 0
    %9114 = vmatprep.subr.bf16.mxu0 0
    %9115 = vmatpush2.bf16.msra.mxu0 0
    %9116 = vmatprep.mubr.bf16.mxu0 0
    %9117 = vmatmul.mubr.bf16.gmra.mxu0 %v9079
    %v9118 = vpop.f32.mrf.mxu0
    %v9119 = vadd.f32 %v8751, %v9118
    %v9120 = vpop.f32.mrf.mxu0
    %v9121 = vpop.f32.mrf.mxu0
    %v9122 = vpop.f32.mrf.mxu0
    %9123 = vdwg.mxu0
    %v9125 = vsel %vm3135, %v8393, 0
    %v9128 = vsel %vm3539, %v8425, 0
    %9130 = vmatprep.subr.bf16.mxu0 0
    %9131 = vmatpush1.bf16.msra.mxu0 0
    %9132 = vmatprep.subr.bf16.mxu0 0
    %9133 = vmatpush1.bf16.msra.mxu0 0
    %9134 = vmatprep.subr.bf16.mxu0 0
    %9135 = vmatpush1.bf16.msra.mxu0 0
    %9136 = vmatprep.subr.bf16.mxu0 0
    %9137 = vmatpush1.bf16.msra.mxu0 0
    %9138 = vmatprep.subr.bf16.mxu0 0
    %9139 = vmatpush1.bf16.msra.mxu0 0
    %9140 = vmatprep.subr.bf16.mxu0 0
    %9141 = vmatpush1.bf16.msra.mxu0 0
    %9142 = vmatprep.subr.bf16.mxu0 0
    %9143 = vmatpush1.bf16.msra.mxu0 0
    %9144 = vmatprep.subr.bf16.mxu0 0
    %9145 = vmatpush1.bf16.msra.mxu0 %v9128
    %9146 = vmatprep.subr.bf16.mxu0 0
    %9147 = vmatpush2.bf16.msra.mxu0 0
    %9148 = vmatprep.subr.bf16.mxu0 0
    %9149 = vmatpush2.bf16.msra.mxu0 0
    %9150 = vmatprep.subr.bf16.mxu0 0
    %9151 = vmatpush2.bf16.msra.mxu0 0
    %9152 = vmatprep.subr.bf16.mxu0 0
    %9153 = vmatpush2.bf16.msra.mxu0 0
    %9154 = vmatprep.subr.bf16.mxu0 0
    %9155 = vmatpush2.bf16.msra.mxu0 0
    %9156 = vmatprep.subr.bf16.mxu0 0
    %9157 = vmatpush2.bf16.msra.mxu0 0
    %9158 = vmatprep.subr.bf16.mxu0 0
    %9159 = vmatpush2.bf16.msra.mxu0 0
    %9160 = vmatprep.subr.bf16.mxu0 0
    %9161 = vmatpush2.bf16.msra.mxu0 0
    %9162 = vmatprep.mubr.bf16.mxu0 0
    %9163 = vmatmul.mubr.bf16.gmra.mxu0 %v9125
    %v9164 = vpop.f32.mrf.mxu0
    %v9165 = vadd.f32 %v8797, %v9164
    %v9166 = vpop.f32.mrf.mxu0
    %v9167 = vpop.f32.mrf.mxu0
    %v9168 = vpop.f32.mrf.mxu0
    %9169 = vdwg.mxu0
    %v9170 = vpack.c.bf16 %v6308, %v6308
    %v9171 = vpack.c.bf16 %v6312, %v6312
    %v9172 = vpack.c.bf16 %v6318, %v6318
    %v9173 = vpack.c.bf16 %v6322, %v6322
    %v9174 = vpack.c.bf16 %v6328, %v6328
    %v9175 = vpack.c.bf16 %v6332, %v6332
    %v9176 = vpack.c.bf16 %v6338, %v6338
    %v9177 = vpack.c.bf16 %v6342, %v6342
    %v9179 = vsel %vm3135, %v8402, 0
    %v9182 = vsel %vm3539, %v9170, 0
    %9184 = vmatprep.subr.bf16.mxu0 0
    %9185 = vmatpush1.bf16.msra.mxu0 0
    %9186 = vmatprep.subr.bf16.mxu0 0
    %9187 = vmatpush1.bf16.msra.mxu0 0
    %9188 = vmatprep.subr.bf16.mxu0 0
    %9189 = vmatpush1.bf16.msra.mxu0 0
    %9190 = vmatprep.subr.bf16.mxu0 0
    %9191 = vmatpush1.bf16.msra.mxu0 0
    %9192 = vmatprep.subr.bf16.mxu0 0
    %9193 = vmatpush1.bf16.msra.mxu0 0
    %9194 = vmatprep.subr.bf16.mxu0 0
    %9195 = vmatpush1.bf16.msra.mxu0 0
    %9196 = vmatprep.subr.bf16.mxu0 0
    %9197 = vmatpush1.bf16.msra.mxu0 0
    %9198 = vmatprep.subr.bf16.mxu0 0
    %9199 = vmatpush1.bf16.msra.mxu0 %v9182
    %9200 = vmatprep.subr.bf16.mxu0 0
    %9201 = vmatpush2.bf16.msra.mxu0 0
    %9202 = vmatprep.subr.bf16.mxu0 0
    %9203 = vmatpush2.bf16.msra.mxu0 0
    %9204 = vmatprep.subr.bf16.mxu0 0
    %9205 = vmatpush2.bf16.msra.mxu0 0
    %9206 = vmatprep.subr.bf16.mxu0 0
    %9207 = vmatpush2.bf16.msra.mxu0 0
    %9208 = vmatprep.subr.bf16.mxu0 0
    %9209 = vmatpush2.bf16.msra.mxu0 0
    %9210 = vmatprep.subr.bf16.mxu0 0
    %9211 = vmatpush2.bf16.msra.mxu0 0
    %9212 = vmatprep.subr.bf16.mxu0 0
    %9213 = vmatpush2.bf16.msra.mxu0 0
    %9214 = vmatprep.subr.bf16.mxu0 0
    %9215 = vmatpush2.bf16.msra.mxu0 0
    %9216 = vmatprep.mubr.bf16.mxu0 0
    %9217 = vmatmul.mubr.bf16.gmra.mxu0 %v9179
    %v9218 = vpop.f32.mrf.mxu0
    %v9219 = vadd.f32 0.0, %v9218
    %v9220 = vpop.f32.mrf.mxu0
    %v9221 = vpop.f32.mrf.mxu0
    %v9222 = vpop.f32.mrf.mxu0
    %9223 = vdwg.mxu0
    %v9225 = vsel %vm3135, %v8403, 0
    %v9228 = vsel %vm3539, %v9171, 0
    %9230 = vmatprep.subr.bf16.mxu0 0
    %9231 = vmatpush1.bf16.msra.mxu0 0
    %9232 = vmatprep.subr.bf16.mxu0 0
    %9233 = vmatpush1.bf16.msra.mxu0 0
    %9234 = vmatprep.subr.bf16.mxu0 0
    %9235 = vmatpush1.bf16.msra.mxu0 0
    %9236 = vmatprep.subr.bf16.mxu0 0
    %9237 = vmatpush1.bf16.msra.mxu0 0
    %9238 = vmatprep.subr.bf16.mxu0 0
    %9239 = vmatpush1.bf16.msra.mxu0 0
    %9240 = vmatprep.subr.bf16.mxu0 0
    %9241 = vmatpush1.bf16.msra.mxu0 0
    %9242 = vmatprep.subr.bf16.mxu0 0
    %9243 = vmatpush1.bf16.msra.mxu0 0
    %9244 = vmatprep.subr.bf16.mxu0 0
    %9245 = vmatpush1.bf16.msra.mxu0 %v9228
    %9246 = vmatprep.subr.bf16.mxu0 0
    %9247 = vmatpush2.bf16.msra.mxu0 0
    %9248 = vmatprep.subr.bf16.mxu0 0
    %9249 = vmatpush2.bf16.msra.mxu0 0
    %9250 = vmatprep.subr.bf16.mxu0 0
    %9251 = vmatpush2.bf16.msra.mxu0 0
    %9252 = vmatprep.subr.bf16.mxu0 0
    %9253 = vmatpush2.bf16.msra.mxu0 0
    %9254 = vmatprep.subr.bf16.mxu0 0
    %9255 = vmatpush2.bf16.msra.mxu0 0
    %9256 = vmatprep.subr.bf16.mxu0 0
    %9257 = vmatpush2.bf16.msra.mxu0 0
    %9258 = vmatprep.subr.bf16.mxu0 0
    %9259 = vmatpush2.bf16.msra.mxu0 0
    %9260 = vmatprep.subr.bf16.mxu0 0
    %9261 = vmatpush2.bf16.msra.mxu0 0
    %9262 = vmatprep.mubr.bf16.mxu0 0
    %9263 = vmatmul.mubr.bf16.gmra.mxu0 %v9225
    %v9264 = vpop.f32.mrf.mxu0
    %v9265 = vadd.f32 0.0, %v9264
    %v9266 = vpop.f32.mrf.mxu0
    %v9267 = vpop.f32.mrf.mxu0
    %v9268 = vpop.f32.mrf.mxu0
    %9269 = vdwg.mxu0
    %v9271 = vsel %vm3135, %v8404, 0
    %v9274 = vsel %vm3539, %v9172, 0
    %9276 = vmatprep.subr.bf16.mxu0 0
    %9277 = vmatpush1.bf16.msra.mxu0 0
    %9278 = vmatprep.subr.bf16.mxu0 0
    %9279 = vmatpush1.bf16.msra.mxu0 0
    %9280 = vmatprep.subr.bf16.mxu0 0
    %9281 = vmatpush1.bf16.msra.mxu0 0
    %9282 = vmatprep.subr.bf16.mxu0 0
    %9283 = vmatpush1.bf16.msra.mxu0 0
    %9284 = vmatprep.subr.bf16.mxu0 0
    %9285 = vmatpush1.bf16.msra.mxu0 0
    %9286 = vmatprep.subr.bf16.mxu0 0
    %9287 = vmatpush1.bf16.msra.mxu0 0
    %9288 = vmatprep.subr.bf16.mxu0 0
    %9289 = vmatpush1.bf16.msra.mxu0 0
    %9290 = vmatprep.subr.bf16.mxu0 0
    %9291 = vmatpush1.bf16.msra.mxu0 %v9274
    %9292 = vmatprep.subr.bf16.mxu0 0
    %9293 = vmatpush2.bf16.msra.mxu0 0
    %9294 = vmatprep.subr.bf16.mxu0 0
    %9295 = vmatpush2.bf16.msra.mxu0 0
    %9296 = vmatprep.subr.bf16.mxu0 0
    %9297 = vmatpush2.bf16.msra.mxu0 0
    %9298 = vmatprep.subr.bf16.mxu0 0
    %9299 = vmatpush2.bf16.msra.mxu0 0
    %9300 = vmatprep.subr.bf16.mxu0 0
    %9301 = vmatpush2.bf16.msra.mxu0 0
    %9302 = vmatprep.subr.bf16.mxu0 0
    %9303 = vmatpush2.bf16.msra.mxu0 0
    %9304 = vmatprep.subr.bf16.mxu0 0
    %9305 = vmatpush2.bf16.msra.mxu0 0
    %9306 = vmatprep.subr.bf16.mxu0 0
    %9307 = vmatpush2.bf16.msra.mxu0 0
    %9308 = vmatprep.mubr.bf16.mxu0 0
    %9309 = vmatmul.mubr.bf16.gmra.mxu0 %v9271
    %v9310 = vpop.f32.mrf.mxu0
    %v9311 = vadd.f32 0.0, %v9310
    %v9312 = vpop.f32.mrf.mxu0
    %v9313 = vpop.f32.mrf.mxu0
    %v9314 = vpop.f32.mrf.mxu0
    %9315 = vdwg.mxu0
    %v9317 = vsel %vm3135, %v8405, 0
    %v9320 = vsel %vm3539, %v9173, 0
    %9322 = vmatprep.subr.bf16.mxu0 0
    %9323 = vmatpush1.bf16.msra.mxu0 0
    %9324 = vmatprep.subr.bf16.mxu0 0
    %9325 = vmatpush1.bf16.msra.mxu0 0
    %9326 = vmatprep.subr.bf16.mxu0 0
    %9327 = vmatpush1.bf16.msra.mxu0 0
    %9328 = vmatprep.subr.bf16.mxu0 0
    %9329 = vmatpush1.bf16.msra.mxu0 0
    %9330 = vmatprep.subr.bf16.mxu0 0
    %9331 = vmatpush1.bf16.msra.mxu0 0
    %9332 = vmatprep.subr.bf16.mxu0 0
    %9333 = vmatpush1.bf16.msra.mxu0 0
    %9334 = vmatprep.subr.bf16.mxu0 0
    %9335 = vmatpush1.bf16.msra.mxu0 0
    %9336 = vmatprep.subr.bf16.mxu0 0
    %9337 = vmatpush1.bf16.msra.mxu0 %v9320
    %9338 = vmatprep.subr.bf16.mxu0 0
    %9339 = vmatpush2.bf16.msra.mxu0 0
    %9340 = vmatprep.subr.bf16.mxu0 0
    %9341 = vmatpush2.bf16.msra.mxu0 0
    %9342 = vmatprep.subr.bf16.mxu0 0
    %9343 = vmatpush2.bf16.msra.mxu0 0
    %9344 = vmatprep.subr.bf16.mxu0 0
    %9345 = vmatpush2.bf16.msra.mxu0 0
    %9346 = vmatprep.subr.bf16.mxu0 0
    %9347 = vmatpush2.bf16.msra.mxu0 0
    %9348 = vmatprep.subr.bf16.mxu0 0
    %9349 = vmatpush2.bf16.msra.mxu0 0
    %9350 = vmatprep.subr.bf16.mxu0 0
    %9351 = vmatpush2.bf16.msra.mxu0 0
    %9352 = vmatprep.subr.bf16.mxu0 0
    %9353 = vmatpush2.bf16.msra.mxu0 0
    %9354 = vmatprep.mubr.bf16.mxu0 0
    %9355 = vmatmul.mubr.bf16.gmra.mxu0 %v9317
    %v9356 = vpop.f32.mrf.mxu0
    %v9357 = vadd.f32 0.0, %v9356
    %v9358 = vpop.f32.mrf.mxu0
    %v9359 = vpop.f32.mrf.mxu0
    %v9360 = vpop.f32.mrf.mxu0
    %9361 = vdwg.mxu0
    %v9363 = vsel %vm3135, %v8406, 0
    %v9366 = vsel %vm3539, %v9174, 0
    %9368 = vmatprep.subr.bf16.mxu0 0
    %9369 = vmatpush1.bf16.msra.mxu0 0
    %9370 = vmatprep.subr.bf16.mxu0 0
    %9371 = vmatpush1.bf16.msra.mxu0 0
    %9372 = vmatprep.subr.bf16.mxu0 0
    %9373 = vmatpush1.bf16.msra.mxu0 0
    %9374 = vmatprep.subr.bf16.mxu0 0
    %9375 = vmatpush1.bf16.msra.mxu0 0
    %9376 = vmatprep.subr.bf16.mxu0 0
    %9377 = vmatpush1.bf16.msra.mxu0 0
    %9378 = vmatprep.subr.bf16.mxu0 0
    %9379 = vmatpush1.bf16.msra.mxu0 0
    %9380 = vmatprep.subr.bf16.mxu0 0
    %9381 = vmatpush1.bf16.msra.mxu0 0
    %9382 = vmatprep.subr.bf16.mxu0 0
    %9383 = vmatpush1.bf16.msra.mxu0 %v9366
    %9384 = vmatprep.subr.bf16.mxu0 0
    %9385 = vmatpush2.bf16.msra.mxu0 0
    %9386 = vmatprep.subr.bf16.mxu0 0
    %9387 = vmatpush2.bf16.msra.mxu0 0
    %9388 = vmatprep.subr.bf16.mxu0 0
    %9389 = vmatpush2.bf16.msra.mxu0 0
    %9390 = vmatprep.subr.bf16.mxu0 0
    %9391 = vmatpush2.bf16.msra.mxu0 0
    %9392 = vmatprep.subr.bf16.mxu0 0
    %9393 = vmatpush2.bf16.msra.mxu0 0
    %9394 = vmatprep.subr.bf16.mxu0 0
    %9395 = vmatpush2.bf16.msra.mxu0 0
    %9396 = vmatprep.subr.bf16.mxu0 0
    %9397 = vmatpush2.bf16.msra.mxu0 0
    %9398 = vmatprep.subr.bf16.mxu0 0
    %9399 = vmatpush2.bf16.msra.mxu0 0
    %9400 = vmatprep.mubr.bf16.mxu0 0
    %9401 = vmatmul.mubr.bf16.gmra.mxu0 %v9363
    %v9402 = vpop.f32.mrf.mxu0
    %v9403 = vadd.f32 0.0, %v9402
    %v9404 = vpop.f32.mrf.mxu0
    %v9405 = vpop.f32.mrf.mxu0
    %v9406 = vpop.f32.mrf.mxu0
    %9407 = vdwg.mxu0
    %v9409 = vsel %vm3135, %v8407, 0
    %v9412 = vsel %vm3539, %v9175, 0
    %9414 = vmatprep.subr.bf16.mxu0 0
    %9415 = vmatpush1.bf16.msra.mxu0 0
    %9416 = vmatprep.subr.bf16.mxu0 0
    %9417 = vmatpush1.bf16.msra.mxu0 0
    %9418 = vmatprep.subr.bf16.mxu0 0
    %9419 = vmatpush1.bf16.msra.mxu0 0
    %9420 = vmatprep.subr.bf16.mxu0 0
    %9421 = vmatpush1.bf16.msra.mxu0 0
    %9422 = vmatprep.subr.bf16.mxu0 0
    %9423 = vmatpush1.bf16.msra.mxu0 0
    %9424 = vmatprep.subr.bf16.mxu0 0
    %9425 = vmatpush1.bf16.msra.mxu0 0
    %9426 = vmatprep.subr.bf16.mxu0 0
    %9427 = vmatpush1.bf16.msra.mxu0 0
    %9428 = vmatprep.subr.bf16.mxu0 0
    %9429 = vmatpush1.bf16.msra.mxu0 %v9412
    %9430 = vmatprep.subr.bf16.mxu0 0
    %9431 = vmatpush2.bf16.msra.mxu0 0
    %9432 = vmatprep.subr.bf16.mxu0 0
    %9433 = vmatpush2.bf16.msra.mxu0 0
    %9434 = vmatprep.subr.bf16.mxu0 0
    %9435 = vmatpush2.bf16.msra.mxu0 0
    %9436 = vmatprep.subr.bf16.mxu0 0
    %9437 = vmatpush2.bf16.msra.mxu0 0
    %9438 = vmatprep.subr.bf16.mxu0 0
    %9439 = vmatpush2.bf16.msra.mxu0 0
    %9440 = vmatprep.subr.bf16.mxu0 0
    %9441 = vmatpush2.bf16.msra.mxu0 0
    %9442 = vmatprep.subr.bf16.mxu0 0
    %9443 = vmatpush2.bf16.msra.mxu0 0
    %9444 = vmatprep.subr.bf16.mxu0 0
    %9445 = vmatpush2.bf16.msra.mxu0 0
    %9446 = vmatprep.mubr.bf16.mxu0 0
    %9447 = vmatmul.mubr.bf16.gmra.mxu0 %v9409
    %v9448 = vpop.f32.mrf.mxu0
    %v9449 = vadd.f32 0.0, %v9448
    %v9450 = vpop.f32.mrf.mxu0
    %v9451 = vpop.f32.mrf.mxu0
    %v9452 = vpop.f32.mrf.mxu0
    %9453 = vdwg.mxu0
    %v9455 = vsel %vm3135, %v8408, 0
    %v9458 = vsel %vm3539, %v9176, 0
    %9460 = vmatprep.subr.bf16.mxu0 0
    %9461 = vmatpush1.bf16.msra.mxu0 0
    %9462 = vmatprep.subr.bf16.mxu0 0
    %9463 = vmatpush1.bf16.msra.mxu0 0
    %9464 = vmatprep.subr.bf16.mxu0 0
    %9465 = vmatpush1.bf16.msra.mxu0 0
    %9466 = vmatprep.subr.bf16.mxu0 0
    %9467 = vmatpush1.bf16.msra.mxu0 0
    %9468 = vmatprep.subr.bf16.mxu0 0
    %9469 = vmatpush1.bf16.msra.mxu0 0
    %9470 = vmatprep.subr.bf16.mxu0 0
    %9471 = vmatpush1.bf16.msra.mxu0 0
    %9472 = vmatprep.subr.bf16.mxu0 0
    %9473 = vmatpush1.bf16.msra.mxu0 0
    %9474 = vmatprep.subr.bf16.mxu0 0
    %9475 = vmatpush1.bf16.msra.mxu0 %v9458
    %9476 = vmatprep.subr.bf16.mxu0 0
    %9477 = vmatpush2.bf16.msra.mxu0 0
    %9478 = vmatprep.subr.bf16.mxu0 0
    %9479 = vmatpush2.bf16.msra.mxu0 0
    %9480 = vmatprep.subr.bf16.mxu0 0
    %9481 = vmatpush2.bf16.msra.mxu0 0
    %9482 = vmatprep.subr.bf16.mxu0 0
    %9483 = vmatpush2.bf16.msra.mxu0 0
    %9484 = vmatprep.subr.bf16.mxu0 0
    %9485 = vmatpush2.bf16.msra.mxu0 0
    %9486 = vmatprep.subr.bf16.mxu0 0
    %9487 = vmatpush2.bf16.msra.mxu0 0
    %9488 = vmatprep.subr.bf16.mxu0 0
    %9489 = vmatpush2.bf16.msra.mxu0 0
    %9490 = vmatprep.subr.bf16.mxu0 0
    %9491 = vmatpush2.bf16.msra.mxu0 0
    %9492 = vmatprep.mubr.bf16.mxu0 0
    %9493 = vmatmul.mubr.bf16.gmra.mxu0 %v9455
    %v9494 = vpop.f32.mrf.mxu0
    %v9495 = vadd.f32 0.0, %v9494
    %v9496 = vpop.f32.mrf.mxu0
    %v9497 = vpop.f32.mrf.mxu0
    %v9498 = vpop.f32.mrf.mxu0
    %9499 = vdwg.mxu0
    %v9501 = vsel %vm3135, %v8409, 0
    %v9504 = vsel %vm3539, %v9177, 0
    %9506 = vmatprep.subr.bf16.mxu0 0
    %9507 = vmatpush1.bf16.msra.mxu0 0
    %9508 = vmatprep.subr.bf16.mxu0 0
    %9509 = vmatpush1.bf16.msra.mxu0 0
    %9510 = vmatprep.subr.bf16.mxu0 0
    %9511 = vmatpush1.bf16.msra.mxu0 0
    %9512 = vmatprep.subr.bf16.mxu0 0
    %9513 = vmatpush1.bf16.msra.mxu0 0
    %9514 = vmatprep.subr.bf16.mxu0 0
    %9515 = vmatpush1.bf16.msra.mxu0 0
    %9516 = vmatprep.subr.bf16.mxu0 0
    %9517 = vmatpush1.bf16.msra.mxu0 0
    %9518 = vmatprep.subr.bf16.mxu0 0
    %9519 = vmatpush1.bf16.msra.mxu0 0
    %9520 = vmatprep.subr.bf16.mxu0 0
    %9521 = vmatpush1.bf16.msra.mxu0 %v9504
    %9522 = vmatprep.subr.bf16.mxu0 0
    %9523 = vmatpush2.bf16.msra.mxu0 0
    %9524 = vmatprep.subr.bf16.mxu0 0
    %9525 = vmatpush2.bf16.msra.mxu0 0
    %9526 = vmatprep.subr.bf16.mxu0 0
    %9527 = vmatpush2.bf16.msra.mxu0 0
    %9528 = vmatprep.subr.bf16.mxu0 0
    %9529 = vmatpush2.bf16.msra.mxu0 0
    %9530 = vmatprep.subr.bf16.mxu0 0
    %9531 = vmatpush2.bf16.msra.mxu0 0
    %9532 = vmatprep.subr.bf16.mxu0 0
    %9533 = vmatpush2.bf16.msra.mxu0 0
    %9534 = vmatprep.subr.bf16.mxu0 0
    %9535 = vmatpush2.bf16.msra.mxu0 0
    %9536 = vmatprep.subr.bf16.mxu0 0
    %9537 = vmatpush2.bf16.msra.mxu0 0
    %9538 = vmatprep.mubr.bf16.mxu0 0
    %9539 = vmatmul.mubr.bf16.gmra.mxu0 %v9501
    %v9540 = vpop.f32.mrf.mxu0
    %v9541 = vadd.f32 0.0, %v9540
    %v9542 = vpop.f32.mrf.mxu0
    %v9543 = vpop.f32.mrf.mxu0
    %v9544 = vpop.f32.mrf.mxu0
    %9545 = vdwg.mxu0
    %v9546 = vadd.f32 %v8843, %v9219
    %v9547 = vadd.f32 %v8889, %v9265
    %v9548 = vadd.f32 %v8935, %v9311
    %v9549 = vadd.f32 %v8981, %v9357
    %v9550 = vadd.f32 %v9027, %v9403
    %v9551 = vadd.f32 %v9073, %v9449
    %v9552 = vadd.f32 %v9119, %v9495
    %v9553 = vadd.f32 %v9165, %v9541
    %v9554 = vpack.c.bf16 %v6310, %v6310
    %v9555 = vpack.c.bf16 %v6314, %v6314
    %v9556 = vpack.c.bf16 %v6320, %v6320
    %v9557 = vpack.c.bf16 %v6324, %v6324
    %v9558 = vpack.c.bf16 %v6330, %v6330
    %v9559 = vpack.c.bf16 %v6334, %v6334
    %v9560 = vpack.c.bf16 %v6340, %v6340
    %v9561 = vpack.c.bf16 %v6344, %v6344
    %v9563 = vsel %vm3135, %v8410, 0
    %v9566 = vsel %vm3539, %v9554, 0
    %9568 = vmatprep.subr.bf16.mxu0 0
    %9569 = vmatpush1.bf16.msra.mxu0 0
    %9570 = vmatprep.subr.bf16.mxu0 0
    %9571 = vmatpush1.bf16.msra.mxu0 0
    %9572 = vmatprep.subr.bf16.mxu0 0
    %9573 = vmatpush1.bf16.msra.mxu0 0
    %9574 = vmatprep.subr.bf16.mxu0 0
    %9575 = vmatpush1.bf16.msra.mxu0 0
    %9576 = vmatprep.subr.bf16.mxu0 0
    %9577 = vmatpush1.bf16.msra.mxu0 0
    %9578 = vmatprep.subr.bf16.mxu0 0
    %9579 = vmatpush1.bf16.msra.mxu0 0
    %9580 = vmatprep.subr.bf16.mxu0 0
    %9581 = vmatpush1.bf16.msra.mxu0 0
    %9582 = vmatprep.subr.bf16.mxu0 0
    %9583 = vmatpush1.bf16.msra.mxu0 %v9566
    %9584 = vmatprep.subr.bf16.mxu0 0
    %9585 = vmatpush2.bf16.msra.mxu0 0
    %9586 = vmatprep.subr.bf16.mxu0 0
    %9587 = vmatpush2.bf16.msra.mxu0 0
    %9588 = vmatprep.subr.bf16.mxu0 0
    %9589 = vmatpush2.bf16.msra.mxu0 0
    %9590 = vmatprep.subr.bf16.mxu0 0
    %9591 = vmatpush2.bf16.msra.mxu0 0
    %9592 = vmatprep.subr.bf16.mxu0 0
    %9593 = vmatpush2.bf16.msra.mxu0 0
    %9594 = vmatprep.subr.bf16.mxu0 0
    %9595 = vmatpush2.bf16.msra.mxu0 0
    %9596 = vmatprep.subr.bf16.mxu0 0
    %9597 = vmatpush2.bf16.msra.mxu0 0
    %9598 = vmatprep.subr.bf16.mxu0 0
    %9599 = vmatpush2.bf16.msra.mxu0 0
    %9600 = vmatprep.mubr.bf16.mxu0 0
    %9601 = vmatmul.mubr.bf16.gmra.mxu0 %v9563
    %v9602 = vpop.f32.mrf.mxu0
    %v9603 = vadd.f32 0.0, %v9602
    %v9604 = vpop.f32.mrf.mxu0
    %v9605 = vpop.f32.mrf.mxu0
    %v9606 = vpop.f32.mrf.mxu0
    %9607 = vdwg.mxu0
    %v9609 = vsel %vm3135, %v8411, 0
    %v9612 = vsel %vm3539, %v9555, 0
    %9614 = vmatprep.subr.bf16.mxu0 0
    %9615 = vmatpush1.bf16.msra.mxu0 0
    %9616 = vmatprep.subr.bf16.mxu0 0
    %9617 = vmatpush1.bf16.msra.mxu0 0
    %9618 = vmatprep.subr.bf16.mxu0 0
    %9619 = vmatpush1.bf16.msra.mxu0 0
    %9620 = vmatprep.subr.bf16.mxu0 0
    %9621 = vmatpush1.bf16.msra.mxu0 0
    %9622 = vmatprep.subr.bf16.mxu0 0
    %9623 = vmatpush1.bf16.msra.mxu0 0
    %9624 = vmatprep.subr.bf16.mxu0 0
    %9625 = vmatpush1.bf16.msra.mxu0 0
    %9626 = vmatprep.subr.bf16.mxu0 0
    %9627 = vmatpush1.bf16.msra.mxu0 0
    %9628 = vmatprep.subr.bf16.mxu0 0
    %9629 = vmatpush1.bf16.msra.mxu0 %v9612
    %9630 = vmatprep.subr.bf16.mxu0 0
    %9631 = vmatpush2.bf16.msra.mxu0 0
    %9632 = vmatprep.subr.bf16.mxu0 0
    %9633 = vmatpush2.bf16.msra.mxu0 0
    %9634 = vmatprep.subr.bf16.mxu0 0
    %9635 = vmatpush2.bf16.msra.mxu0 0
    %9636 = vmatprep.subr.bf16.mxu0 0
    %9637 = vmatpush2.bf16.msra.mxu0 0
    %9638 = vmatprep.subr.bf16.mxu0 0
    %9639 = vmatpush2.bf16.msra.mxu0 0
    %9640 = vmatprep.subr.bf16.mxu0 0
    %9641 = vmatpush2.bf16.msra.mxu0 0
    %9642 = vmatprep.subr.bf16.mxu0 0
    %9643 = vmatpush2.bf16.msra.mxu0 0
    %9644 = vmatprep.subr.bf16.mxu0 0
    %9645 = vmatpush2.bf16.msra.mxu0 0
    %9646 = vmatprep.mubr.bf16.mxu0 0
    %9647 = vmatmul.mubr.bf16.gmra.mxu0 %v9609
    %v9648 = vpop.f32.mrf.mxu0
    %v9649 = vadd.f32 0.0, %v9648
    %v9650 = vpop.f32.mrf.mxu0
    %v9651 = vpop.f32.mrf.mxu0
    %v9652 = vpop.f32.mrf.mxu0
    %9653 = vdwg.mxu0
    %v9655 = vsel %vm3135, %v8412, 0
    %v9658 = vsel %vm3539, %v9556, 0
    %9660 = vmatprep.subr.bf16.mxu0 0
    %9661 = vmatpush1.bf16.msra.mxu0 0
    %9662 = vmatprep.subr.bf16.mxu0 0
    %9663 = vmatpush1.bf16.msra.mxu0 0
    %9664 = vmatprep.subr.bf16.mxu0 0
    %9665 = vmatpush1.bf16.msra.mxu0 0
    %9666 = vmatprep.subr.bf16.mxu0 0
    %9667 = vmatpush1.bf16.msra.mxu0 0
    %9668 = vmatprep.subr.bf16.mxu0 0
    %9669 = vmatpush1.bf16.msra.mxu0 0
    %9670 = vmatprep.subr.bf16.mxu0 0
    %9671 = vmatpush1.bf16.msra.mxu0 0
    %9672 = vmatprep.subr.bf16.mxu0 0
    %9673 = vmatpush1.bf16.msra.mxu0 0
    %9674 = vmatprep.subr.bf16.mxu0 0
    %9675 = vmatpush1.bf16.msra.mxu0 %v9658
    %9676 = vmatprep.subr.bf16.mxu0 0
    %9677 = vmatpush2.bf16.msra.mxu0 0
    %9678 = vmatprep.subr.bf16.mxu0 0
    %9679 = vmatpush2.bf16.msra.mxu0 0
    %9680 = vmatprep.subr.bf16.mxu0 0
    %9681 = vmatpush2.bf16.msra.mxu0 0
    %9682 = vmatprep.subr.bf16.mxu0 0
    %9683 = vmatpush2.bf16.msra.mxu0 0
    %9684 = vmatprep.subr.bf16.mxu0 0
    %9685 = vmatpush2.bf16.msra.mxu0 0
    %9686 = vmatprep.subr.bf16.mxu0 0
    %9687 = vmatpush2.bf16.msra.mxu0 0
    %9688 = vmatprep.subr.bf16.mxu0 0
    %9689 = vmatpush2.bf16.msra.mxu0 0
    %9690 = vmatprep.subr.bf16.mxu0 0
    %9691 = vmatpush2.bf16.msra.mxu0 0
    %9692 = vmatprep.mubr.bf16.mxu0 0
    %9693 = vmatmul.mubr.bf16.gmra.mxu0 %v9655
    %v9694 = vpop.f32.mrf.mxu0
    %v9695 = vadd.f32 0.0, %v9694
    %v9696 = vpop.f32.mrf.mxu0
    %v9697 = vpop.f32.mrf.mxu0
    %v9698 = vpop.f32.mrf.mxu0
    %9699 = vdwg.mxu0
    %v9701 = vsel %vm3135, %v8413, 0
    %v9704 = vsel %vm3539, %v9557, 0
    %9706 = vmatprep.subr.bf16.mxu0 0
    %9707 = vmatpush1.bf16.msra.mxu0 0
    %9708 = vmatprep.subr.bf16.mxu0 0
    %9709 = vmatpush1.bf16.msra.mxu0 0
    %9710 = vmatprep.subr.bf16.mxu0 0
    %9711 = vmatpush1.bf16.msra.mxu0 0
    %9712 = vmatprep.subr.bf16.mxu0 0
    %9713 = vmatpush1.bf16.msra.mxu0 0
    %9714 = vmatprep.subr.bf16.mxu0 0
    %9715 = vmatpush1.bf16.msra.mxu0 0
    %9716 = vmatprep.subr.bf16.mxu0 0
    %9717 = vmatpush1.bf16.msra.mxu0 0
    %9718 = vmatprep.subr.bf16.mxu0 0
    %9719 = vmatpush1.bf16.msra.mxu0 0
    %9720 = vmatprep.subr.bf16.mxu0 0
    %9721 = vmatpush1.bf16.msra.mxu0 %v9704
    %9722 = vmatprep.subr.bf16.mxu0 0
    %9723 = vmatpush2.bf16.msra.mxu0 0
    %9724 = vmatprep.subr.bf16.mxu0 0
    %9725 = vmatpush2.bf16.msra.mxu0 0
    %9726 = vmatprep.subr.bf16.mxu0 0
    %9727 = vmatpush2.bf16.msra.mxu0 0
    %9728 = vmatprep.subr.bf16.mxu0 0
    %9729 = vmatpush2.bf16.msra.mxu0 0
    %9730 = vmatprep.subr.bf16.mxu0 0
    %9731 = vmatpush2.bf16.msra.mxu0 0
    %9732 = vmatprep.subr.bf16.mxu0 0
    %9733 = vmatpush2.bf16.msra.mxu0 0
    %9734 = vmatprep.subr.bf16.mxu0 0
    %9735 = vmatpush2.bf16.msra.mxu0 0
    %9736 = vmatprep.subr.bf16.mxu0 0
    %9737 = vmatpush2.bf16.msra.mxu0 0
    %9738 = vmatprep.mubr.bf16.mxu0 0
    %9739 = vmatmul.mubr.bf16.gmra.mxu0 %v9701
    %v9740 = vpop.f32.mrf.mxu0
    %v9741 = vadd.f32 0.0, %v9740
    %v9742 = vpop.f32.mrf.mxu0
    %v9743 = vpop.f32.mrf.mxu0
    %v9744 = vpop.f32.mrf.mxu0
    %9745 = vdwg.mxu0
    %v9747 = vsel %vm3135, %v8414, 0
    %v9750 = vsel %vm3539, %v9558, 0
    %9752 = vmatprep.subr.bf16.mxu0 0
    %9753 = vmatpush1.bf16.msra.mxu0 0
    %9754 = vmatprep.subr.bf16.mxu0 0
    %9755 = vmatpush1.bf16.msra.mxu0 0
    %9756 = vmatprep.subr.bf16.mxu0 0
    %9757 = vmatpush1.bf16.msra.mxu0 0
    %9758 = vmatprep.subr.bf16.mxu0 0
    %9759 = vmatpush1.bf16.msra.mxu0 0
    %9760 = vmatprep.subr.bf16.mxu0 0
    %9761 = vmatpush1.bf16.msra.mxu0 0
    %9762 = vmatprep.subr.bf16.mxu0 0
    %9763 = vmatpush1.bf16.msra.mxu0 0
    %9764 = vmatprep.subr.bf16.mxu0 0
    %9765 = vmatpush1.bf16.msra.mxu0 0
    %9766 = vmatprep.subr.bf16.mxu0 0
    %9767 = vmatpush1.bf16.msra.mxu0 %v9750
    %9768 = vmatprep.subr.bf16.mxu0 0
    %9769 = vmatpush2.bf16.msra.mxu0 0
    %9770 = vmatprep.subr.bf16.mxu0 0
    %9771 = vmatpush2.bf16.msra.mxu0 0
    %9772 = vmatprep.subr.bf16.mxu0 0
    %9773 = vmatpush2.bf16.msra.mxu0 0
    %9774 = vmatprep.subr.bf16.mxu0 0
    %9775 = vmatpush2.bf16.msra.mxu0 0
    %9776 = vmatprep.subr.bf16.mxu0 0
    %9777 = vmatpush2.bf16.msra.mxu0 0
    %9778 = vmatprep.subr.bf16.mxu0 0
    %9779 = vmatpush2.bf16.msra.mxu0 0
    %9780 = vmatprep.subr.bf16.mxu0 0
    %9781 = vmatpush2.bf16.msra.mxu0 0
    %9782 = vmatprep.subr.bf16.mxu0 0
    %9783 = vmatpush2.bf16.msra.mxu0 0
    %9784 = vmatprep.mubr.bf16.mxu0 0
    %9785 = vmatmul.mubr.bf16.gmra.mxu0 %v9747
    %v9786 = vpop.f32.mrf.mxu0
    %v9787 = vadd.f32 0.0, %v9786
    %v9788 = vpop.f32.mrf.mxu0
    %v9789 = vpop.f32.mrf.mxu0
    %v9790 = vpop.f32.mrf.mxu0
    %9791 = vdwg.mxu0
    %v9793 = vsel %vm3135, %v8415, 0
    %v9796 = vsel %vm3539, %v9559, 0
    %9798 = vmatprep.subr.bf16.mxu0 0
    %9799 = vmatpush1.bf16.msra.mxu0 0
    %9800 = vmatprep.subr.bf16.mxu0 0
    %9801 = vmatpush1.bf16.msra.mxu0 0
    %9802 = vmatprep.subr.bf16.mxu0 0
    %9803 = vmatpush1.bf16.msra.mxu0 0
    %9804 = vmatprep.subr.bf16.mxu0 0
    %9805 = vmatpush1.bf16.msra.mxu0 0
    %9806 = vmatprep.subr.bf16.mxu0 0
    %9807 = vmatpush1.bf16.msra.mxu0 0
    %9808 = vmatprep.subr.bf16.mxu0 0
    %9809 = vmatpush1.bf16.msra.mxu0 0
    %9810 = vmatprep.subr.bf16.mxu0 0
    %9811 = vmatpush1.bf16.msra.mxu0 0
    %9812 = vmatprep.subr.bf16.mxu0 0
    %9813 = vmatpush1.bf16.msra.mxu0 %v9796
    %9814 = vmatprep.subr.bf16.mxu0 0
    %9815 = vmatpush2.bf16.msra.mxu0 0
    %9816 = vmatprep.subr.bf16.mxu0 0
    %9817 = vmatpush2.bf16.msra.mxu0 0
    %9818 = vmatprep.subr.bf16.mxu0 0
    %9819 = vmatpush2.bf16.msra.mxu0 0
    %9820 = vmatprep.subr.bf16.mxu0 0
    %9821 = vmatpush2.bf16.msra.mxu0 0
    %9822 = vmatprep.subr.bf16.mxu0 0
    %9823 = vmatpush2.bf16.msra.mxu0 0
    %9824 = vmatprep.subr.bf16.mxu0 0
    %9825 = vmatpush2.bf16.msra.mxu0 0
    %9826 = vmatprep.subr.bf16.mxu0 0
    %9827 = vmatpush2.bf16.msra.mxu0 0
    %9828 = vmatprep.subr.bf16.mxu0 0
    %9829 = vmatpush2.bf16.msra.mxu0 0
    %9830 = vmatprep.mubr.bf16.mxu0 0
    %9831 = vmatmul.mubr.bf16.gmra.mxu0 %v9793
    %v9832 = vpop.f32.mrf.mxu0
    %v9833 = vadd.f32 0.0, %v9832
    %v9834 = vpop.f32.mrf.mxu0
    %v9835 = vpop.f32.mrf.mxu0
    %v9836 = vpop.f32.mrf.mxu0
    %9837 = vdwg.mxu0
    %v9839 = vsel %vm3135, %v8416, 0
    %v9842 = vsel %vm3539, %v9560, 0
    %9844 = vmatprep.subr.bf16.mxu0 0
    %9845 = vmatpush1.bf16.msra.mxu0 0
    %9846 = vmatprep.subr.bf16.mxu0 0
    %9847 = vmatpush1.bf16.msra.mxu0 0
    %9848 = vmatprep.subr.bf16.mxu0 0
    %9849 = vmatpush1.bf16.msra.mxu0 0
    %9850 = vmatprep.subr.bf16.mxu0 0
    %9851 = vmatpush1.bf16.msra.mxu0 0
    %9852 = vmatprep.subr.bf16.mxu0 0
    %9853 = vmatpush1.bf16.msra.mxu0 0
    %9854 = vmatprep.subr.bf16.mxu0 0
    %9855 = vmatpush1.bf16.msra.mxu0 0
    %9856 = vmatprep.subr.bf16.mxu0 0
    %9857 = vmatpush1.bf16.msra.mxu0 0
    %9858 = vmatprep.subr.bf16.mxu0 0
    %9859 = vmatpush1.bf16.msra.mxu0 %v9842
    %9860 = vmatprep.subr.bf16.mxu0 0
    %9861 = vmatpush2.bf16.msra.mxu0 0
    %9862 = vmatprep.subr.bf16.mxu0 0
    %9863 = vmatpush2.bf16.msra.mxu0 0
    %9864 = vmatprep.subr.bf16.mxu0 0
    %9865 = vmatpush2.bf16.msra.mxu0 0
    %9866 = vmatprep.subr.bf16.mxu0 0
    %9867 = vmatpush2.bf16.msra.mxu0 0
    %9868 = vmatprep.subr.bf16.mxu0 0
    %9869 = vmatpush2.bf16.msra.mxu0 0
    %9870 = vmatprep.subr.bf16.mxu0 0
    %9871 = vmatpush2.bf16.msra.mxu0 0
    %9872 = vmatprep.subr.bf16.mxu0 0
    %9873 = vmatpush2.bf16.msra.mxu0 0
    %9874 = vmatprep.subr.bf16.mxu0 0
    %9875 = vmatpush2.bf16.msra.mxu0 0
    %9876 = vmatprep.mubr.bf16.mxu0 0
    %9877 = vmatmul.mubr.bf16.gmra.mxu0 %v9839
    %v9878 = vpop.f32.mrf.mxu0
    %v9879 = vadd.f32 0.0, %v9878
    %v9880 = vpop.f32.mrf.mxu0
    %v9881 = vpop.f32.mrf.mxu0
    %v9882 = vpop.f32.mrf.mxu0
    %9883 = vdwg.mxu0
    %v9885 = vsel %vm3135, %v8417, 0
    %v9888 = vsel %vm3539, %v9561, 0
    %9890 = vmatprep.subr.bf16.mxu0 0
    %9891 = vmatpush1.bf16.msra.mxu0 0
    %9892 = vmatprep.subr.bf16.mxu0 0
    %9893 = vmatpush1.bf16.msra.mxu0 0
    %9894 = vmatprep.subr.bf16.mxu0 0
    %9895 = vmatpush1.bf16.msra.mxu0 0
    %9896 = vmatprep.subr.bf16.mxu0 0
    %9897 = vmatpush1.bf16.msra.mxu0 0
    %9898 = vmatprep.subr.bf16.mxu0 0
    %9899 = vmatpush1.bf16.msra.mxu0 0
    %9900 = vmatprep.subr.bf16.mxu0 0
    %9901 = vmatpush1.bf16.msra.mxu0 0
    %9902 = vmatprep.subr.bf16.mxu0 0
    %9903 = vmatpush1.bf16.msra.mxu0 0
    %9904 = vmatprep.subr.bf16.mxu0 0
    %9905 = vmatpush1.bf16.msra.mxu0 %v9888
    %9906 = vmatprep.subr.bf16.mxu0 0
    %9907 = vmatpush2.bf16.msra.mxu0 0
    %9908 = vmatprep.subr.bf16.mxu0 0
    %9909 = vmatpush2.bf16.msra.mxu0 0
    %9910 = vmatprep.subr.bf16.mxu0 0
    %9911 = vmatpush2.bf16.msra.mxu0 0
    %9912 = vmatprep.subr.bf16.mxu0 0
    %9913 = vmatpush2.bf16.msra.mxu0 0
    %9914 = vmatprep.subr.bf16.mxu0 0
    %9915 = vmatpush2.bf16.msra.mxu0 0
    %9916 = vmatprep.subr.bf16.mxu0 0
    %9917 = vmatpush2.bf16.msra.mxu0 0
    %9918 = vmatprep.subr.bf16.mxu0 0
    %9919 = vmatpush2.bf16.msra.mxu0 0
    %9920 = vmatprep.subr.bf16.mxu0 0
    %9921 = vmatpush2.bf16.msra.mxu0 0
    %9922 = vmatprep.mubr.bf16.mxu0 0
    %9923 = vmatmul.mubr.bf16.gmra.mxu0 %v9885
    %v9924 = vpop.f32.mrf.mxu0
    %v9925 = vadd.f32 0.0, %v9924
    %v9926 = vpop.f32.mrf.mxu0
    %v9927 = vpop.f32.mrf.mxu0
    %v9928 = vpop.f32.mrf.mxu0
    %9929 = vdwg.mxu0
    %v9930 = vadd.f32 %v9546, %v9603
    %v9931 = vadd.f32 %v9547, %v9649
    %v9932 = vadd.f32 %v9548, %v9695
    %v9933 = vadd.f32 %v9549, %v9741
    %v9934 = vadd.f32 %v9550, %v9787
    %v9935 = vadd.f32 %v9551, %v9833
    %v9936 = vadd.f32 %v9552, %v9879
    %v9937 = vadd.f32 %v9553, %v9925
    %v9938 = vadd.f32 %v5711, %v9930
    %v9939 = vadd.f32 %v5712, %v9931
    %v9940 = vadd.f32 %v5713, %v9932
    %v9941 = vadd.f32 %v5714, %v9933
    %v9942 = vadd.f32 %v5715, %v9934
    %v9943 = vadd.f32 %v5716, %v9935
    %v9944 = vadd.f32 %v5717, %v9936
    %v9945 = vadd.f32 %v5718, %v9937
    %v9946 = vlaneseq
    %v9947 = vshrl.u32 %v9946, 7
    %v9948 = vsub.s32 3, %v9947
    %v9949 = vrot.slane %v5720, %v9948
    %v9950 = vadd.f32 %v9938, %v9949
    %v9951 = vadd.f32 %v9939, %v9949
    %v9952 = vadd.f32 %v9940, %v9949
    %v9953 = vadd.f32 %v9941, %v9949
    %v9954 = vadd.f32 %v9942, %v9949
    %v9955 = vadd.f32 %v9943, %v9949
    %v9956 = vadd.f32 %v9944, %v9949
    %v9957 = vadd.f32 %v9945, %v9949
    %9958 = vadd.xlane.f32.xlu0 %v9950
    %v9959 = vpop.xlane.xlu0 %9958
    %9960 = vadd.xlane.f32.xlu0 %v9951
    %v9961 = vpop.xlane.xlu0 %9960
    %9962 = vadd.xlane.f32.xlu0 %v9952
    %v9963 = vpop.xlane.xlu0 %9962
    %9964 = vadd.xlane.f32.xlu0 %v9953
    %v9965 = vpop.xlane.xlu0 %9964
    %9966 = vadd.xlane.f32.xlu0 %v9954
    %v9967 = vpop.xlane.xlu0 %9966
    %9968 = vadd.xlane.f32.xlu0 %v9955
    %v9969 = vpop.xlane.xlu0 %9968
    %9970 = vadd.xlane.f32.xlu0 %v9956
    %v9971 = vpop.xlane.xlu0 %9970
    %9972 = vadd.xlane.f32.xlu0 %v9957
    %v9973 = vpop.xlane.xlu0 %9972
    %v9974 = vmul.f32 %v9959, %v838
    %v9975 = vmul.f32 %v9961, %v838
    %v9976 = vmul.f32 %v9963, %v838
    %v9977 = vmul.f32 %v9965, %v838
    %v9978 = vmul.f32 %v9967, %v838
    %v9979 = vmul.f32 %v9969, %v838
    %v9980 = vmul.f32 %v9971, %v838
    %v9981 = vmul.f32 %v9973, %v838
    %v9982 = vsub.f32 %v9950, %v9974
    %v9983 = vsub.f32 %v9951, %v9975
    %v9984 = vsub.f32 %v9952, %v9976
    %v9985 = vsub.f32 %v9953, %v9977
    %v9986 = vsub.f32 %v9954, %v9978
    %v9987 = vsub.f32 %v9955, %v9979
    %v9988 = vsub.f32 %v9956, %v9980
    %v9989 = vsub.f32 %v9957, %v9981
    %v9990 = vmul.f32 %v9982, %v9982
    %v9991 = vmul.f32 %v9983, %v9983
    %v9992 = vmul.f32 %v9984, %v9984
    %v9993 = vmul.f32 %v9985, %v9985
    %v9994 = vmul.f32 %v9986, %v9986
    %v9995 = vmul.f32 %v9987, %v9987
    %v9996 = vmul.f32 %v9988, %v9988
    %v9997 = vmul.f32 %v9989, %v9989
    %9998 = vadd.xlane.f32.xlu0 %v9990
    %v9999 = vpop.xlane.xlu0 %9998
    %10000 = vadd.xlane.f32.xlu0 %v9991
    %v10001 = vpop.xlane.xlu0 %10000
    %10002 = vadd.xlane.f32.xlu0 %v9992
    %v10003 = vpop.xlane.xlu0 %10002
    %10004 = vadd.xlane.f32.xlu0 %v9993
    %v10005 = vpop.xlane.xlu0 %10004
    %10006 = vadd.xlane.f32.xlu0 %v9994
    %v10007 = vpop.xlane.xlu0 %10006
    %10008 = vadd.xlane.f32.xlu0 %v9995
    %v10009 = vpop.xlane.xlu0 %10008
    %10010 = vadd.xlane.f32.xlu0 %v9996
    %v10011 = vpop.xlane.xlu0 %10010
    %10012 = vadd.xlane.f32.xlu0 %v9997
    %v10013 = vpop.xlane.xlu0 %10012
    %v10014 = vmul.f32 %v9999, %v838
    %v10015 = vmul.f32 %v10001, %v838
    %v10016 = vmul.f32 %v10003, %v838
    %v10017 = vmul.f32 %v10005, %v838
    %v10018 = vmul.f32 %v10007, %v838
    %v10019 = vmul.f32 %v10009, %v838
    %v10020 = vmul.f32 %v10011, %v838
    %v10021 = vmul.f32 %v10013, %v838
    %v10022 = vadd.f32 %v10014, 1e-12
    %v10023 = vadd.f32 %v10015, 1e-12
    %v10024 = vadd.f32 %v10016, 1e-12
    %v10025 = vadd.f32 %v10017, 1e-12
    %v10026 = vadd.f32 %v10018, 1e-12
    %v10027 = vadd.f32 %v10019, 1e-12
    %v10028 = vadd.f32 %v10020, 1e-12
    %v10029 = vadd.f32 %v10021, 1e-12
    %v10030 = vrsqrt.pop %v10022
    %v10031 = vrsqrt.pop %v10023
    %v10032 = vrsqrt.pop %v10024
    %v10033 = vrsqrt.pop %v10025
    %v10034 = vrsqrt.pop %v10026
    %v10035 = vrsqrt.pop %v10027
    %v10036 = vrsqrt.pop %v10028
    %v10037 = vrsqrt.pop %v10029
    %v10038 = vmul.f32 %v9982, %v10030
    %v10039 = vmul.f32 %v9983, %v10031
    %v10040 = vmul.f32 %v9984, %v10032
    %v10041 = vmul.f32 %v9985, %v10033
    %v10042 = vmul.f32 %v9986, %v10034
    %v10043 = vmul.f32 %v9987, %v10035
    %v10044 = vmul.f32 %v9988, %v10036
    %v10045 = vmul.f32 %v9989, %v10037
    %v10046 = vlaneseq
    %v10047 = vshrl.u32 %v10046, 7
    %v10048 = vsub.s32 4, %v10047
    %v10049 = vrot.slane %v5720, %v10048
    %v10050 = vmul.f32 %v10038, %v10049
    %v10051 = vmul.f32 %v10039, %v10049
    %v10052 = vmul.f32 %v10040, %v10049
    %v10053 = vmul.f32 %v10041, %v10049
    %v10054 = vmul.f32 %v10042, %v10049
    %v10055 = vmul.f32 %v10043, %v10049
    %v10056 = vmul.f32 %v10044, %v10049
    %v10057 = vmul.f32 %v10045, %v10049
    %v10058 = vlaneseq
    %v10059 = vshrl.u32 %v10058, 7
    %v10060 = vsub.s32 5, %v10059
    %v10061 = vrot.slane %v5720, %v10060
    %v10062 = vadd.f32 %v10050, %v10061
    %v10063 = vadd.f32 %v10051, %v10061
    %v10064 = vadd.f32 %v10052, %v10061
    %v10065 = vadd.f32 %v10053, %v10061
    %v10066 = vadd.f32 %v10054, %v10061
    %v10067 = vadd.f32 %v10055, %v10061
    %v10068 = vadd.f32 %v10056, %v10061
    %v10069 = vadd.f32 %v10057, %v10061
    %s10070 = scalar_lea.vmem [#allocation4], 128
    %v10071 = vld [vmem:[%s10070] sm:$0xff]
    %v10072 = vld [vmem:[%s10070 + $0x8] sm:$0xff]
    %v10073 = vld [vmem:[%s10070 + $0x10] sm:$0xff]
    %v10074 = vld [vmem:[%s10070 + $0x18] sm:$0xff]
    %v10075 = vld [vmem:[%s10070 + $0x20] sm:$0xff]
    %v10076 = vld [vmem:[%s10070 + $0x28] sm:$0xff]
    %v10077 = vld [vmem:[%s10070 + $0x30] sm:$0xff]
    %v10078 = vld [vmem:[%s10070 + $0x38] sm:$0xff]
    %v10079 = vld [vmem:[%s10070 + $0x40] sm:$0xff]
    %v10080 = vld [vmem:[%s10070 + $0x48] sm:$0xff]
    %v10081 = vld [vmem:[%s10070 + $0x50] sm:$0xff]
    %v10082 = vld [vmem:[%s10070 + $0x58] sm:$0xff]
    %v10083 = vld [vmem:[%s10070 + $0x60] sm:$0xff]
    %v10084 = vld [vmem:[%s10070 + $0x68] sm:$0xff]
    %v10085 = vld [vmem:[%s10070 + $0x70] sm:$0xff]
    %v10086 = vld [vmem:[%s10070 + $0x78] sm:$0xff]
    %v10087 = vpack.c.bf16 %v10063, %v10062
    %v10088 = vpack.c.bf16 %v10065, %v10064
    %v10089 = vpack.c.bf16 %v10067, %v10066
    %v10090 = vpack.c.bf16 %v10069, %v10068
    %v10091 = vlaneseq
    %v10092 = vshrl.u32 %v10091, 7
    %v10093 = vsub.s32 6, %v10092
    %v10094 = vrot.slane %v5720, %v10093
    %v10095 = vlaneseq
    %v10096 = vshrl.u32 %v10095, 7
    %v10097 = vsub.s32 6, %v10096
    %v10098 = vrot.slane %v5721, %v10097
    %v10115 = vunpack.c.l.b16 %v10071
    %v10116 = vunpack.c.h.b16 %v10071
    %v10117 = vunpack.c.l.b16 %v10072
    %v10118 = vunpack.c.h.b16 %v10072
    %v10119 = vunpack.c.l.b16 %v10073
    %v10120 = vunpack.c.h.b16 %v10073
    %v10121 = vunpack.c.l.b16 %v10074
    %v10122 = vunpack.c.h.b16 %v10074
    %v10123 = vunpack.c.l.b16 %v10075
    %v10124 = vunpack.c.h.b16 %v10075
    %v10125 = vunpack.c.l.b16 %v10076
    %v10126 = vunpack.c.h.b16 %v10076
    %v10127 = vunpack.c.l.b16 %v10077
    %v10128 = vunpack.c.h.b16 %v10077
    %v10129 = vunpack.c.l.b16 %v10078
    %v10130 = vunpack.c.h.b16 %v10078
    %v10131 = vunpack.c.l.b16 %v10079
    %v10132 = vunpack.c.h.b16 %v10079
    %v10133 = vunpack.c.l.b16 %v10080
    %v10134 = vunpack.c.h.b16 %v10080
    %v10135 = vunpack.c.l.b16 %v10081
    %v10136 = vunpack.c.h.b16 %v10081
    %v10137 = vunpack.c.l.b16 %v10082
    %v10138 = vunpack.c.h.b16 %v10082
    %v10139 = vunpack.c.l.b16 %v10083
    %v10140 = vunpack.c.h.b16 %v10083
    %v10141 = vunpack.c.l.b16 %v10084
    %v10142 = vunpack.c.h.b16 %v10084
    %v10143 = vunpack.c.l.b16 %v10085
    %v10144 = vunpack.c.h.b16 %v10085
    %v10145 = vunpack.c.l.b16 %v10086
    %v10146 = vunpack.c.h.b16 %v10086
    %v10147 = vpack.c.b16 %v10117, %v10115
    %v10148 = vpack.c.b16 %v10118, %v10116
    %v10149 = vpack.c.b16 %v10121, %v10119
    %v10150 = vpack.c.b16 %v10122, %v10120
    %v10151 = vpack.c.b16 %v10125, %v10123
    %v10152 = vpack.c.b16 %v10126, %v10124
    %v10153 = vpack.c.b16 %v10129, %v10127
    %v10154 = vpack.c.b16 %v10130, %v10128
    %v10155 = vpack.c.b16 %v10133, %v10131
    %v10156 = vpack.c.b16 %v10134, %v10132
    %v10157 = vpack.c.b16 %v10137, %v10135
    %v10158 = vpack.c.b16 %v10138, %v10136
    %v10159 = vpack.c.b16 %v10141, %v10139
    %v10160 = vpack.c.b16 %v10142, %v10140
    %v10161 = vpack.c.b16 %v10145, %v10143
    %v10162 = vpack.c.b16 %v10146, %v10144
    %10179 = vmatprep.subr.bf16.mxu0 %v10162
    %10180 = vmatpush1.bf16.msra.mxu0 %v10161
    %10181 = vmatprep.subr.bf16.mxu0 %v10160
    %10182 = vmatpush1.bf16.msra.mxu0 %v10159
    %10183 = vmatprep.subr.bf16.mxu0 %v10158
    %10184 = vmatpush1.bf16.msra.mxu0 %v10157
    %10185 = vmatprep.subr.bf16.mxu0 %v10156
    %10186 = vmatpush1.bf16.msra.mxu0 %v10155
    %10187 = vmatprep.subr.bf16.mxu0 %v10154
    %10188 = vmatpush1.bf16.msra.mxu0 %v10153
    %10189 = vmatprep.subr.bf16.mxu0 %v10152
    %10190 = vmatpush1.bf16.msra.mxu0 %v10151
    %10191 = vmatprep.subr.bf16.mxu0 %v10150
    %10192 = vmatpush1.bf16.msra.mxu0 %v10149
    %10193 = vmatprep.subr.bf16.mxu0 %v10148
    %10194 = vmatpush1.bf16.msra.mxu0 %v10147
    %10195 = vmatprep.subr.bf16.mxu0 0
    %10196 = vmatpush2.bf16.msra.mxu0 0
    %10197 = vmatprep.subr.bf16.mxu0 0
    %10198 = vmatpush2.bf16.msra.mxu0 0
    %10199 = vmatprep.subr.bf16.mxu0 0
    %10200 = vmatpush2.bf16.msra.mxu0 0
    %10201 = vmatprep.subr.bf16.mxu0 0
    %10202 = vmatpush2.bf16.msra.mxu0 0
    %10203 = vmatprep.subr.bf16.mxu0 0
    %10204 = vmatpush2.bf16.msra.mxu0 0
    %10205 = vmatprep.subr.bf16.mxu0 0
    %10206 = vmatpush2.bf16.msra.mxu0 0
    %10207 = vmatprep.subr.bf16.mxu0 0
    %10208 = vmatpush2.bf16.msra.mxu0 0
    %10209 = vmatprep.subr.bf16.mxu0 0
    %10210 = vmatpush2.bf16.msra.mxu0 0
    %10211 = vmatprep.mubr.bf16.mxu0 0
    %10212 = vmatmul.mubr.bf16.gmra.mxu0 %v10087
    %v10213 = vpop.f32.mrf.mxu0
    %v10214 = vadd.f32 %v10094, %v10213
    %v10215 = vpop.f32.mrf.mxu0
    %v10216 = vadd.f32 %v10098, %v10215
    %v10217 = vpop.f32.mrf.mxu0
    %v10218 = vadd.f32 %v10094, %v10217
    %v10219 = vpop.f32.mrf.mxu0
    %v10220 = vadd.f32 %v10098, %v10219
    %10221 = vmatprep.mubr.bf16.mxu0 0
    %10222 = vmatmul.mubr.bf16.gmra.mxu0 %v10088
    %v10223 = vpop.f32.mrf.mxu0
    %v10224 = vadd.f32 %v10094, %v10223
    %v10225 = vpop.f32.mrf.mxu0
    %v10226 = vadd.f32 %v10098, %v10225
    %v10227 = vpop.f32.mrf.mxu0
    %v10228 = vadd.f32 %v10094, %v10227
    %v10229 = vpop.f32.mrf.mxu0
    %v10230 = vadd.f32 %v10098, %v10229
    %10231 = vmatprep.mubr.bf16.mxu0 0
    %10232 = vmatmul.mubr.bf16.gmra.mxu0 %v10089
    %v10233 = vpop.f32.mrf.mxu0
    %v10234 = vadd.f32 %v10094, %v10233
    %v10235 = vpop.f32.mrf.mxu0
    %v10236 = vadd.f32 %v10098, %v10235
    %v10237 = vpop.f32.mrf.mxu0
    %v10238 = vadd.f32 %v10094, %v10237
    %v10239 = vpop.f32.mrf.mxu0
    %v10240 = vadd.f32 %v10098, %v10239
    %10241 = vmatprep.mubr.bf16.mxu0 0
    %10242 = vmatmul.mubr.bf16.gmra.mxu0 %v10090
    %v10243 = vpop.f32.mrf.mxu0
    %v10244 = vadd.f32 %v10094, %v10243
    %v10245 = vpop.f32.mrf.mxu0
    %v10246 = vadd.f32 %v10098, %v10245
    %v10247 = vpop.f32.mrf.mxu0
    %v10248 = vadd.f32 %v10094, %v10247
    %v10249 = vpop.f32.mrf.mxu0
    %v10250 = vadd.f32 %v10098, %v10249
    %10251 = vdwg.mxu0
    %v10252 = vmul.f32 %v10214, 0.5
    %v10253 = vmul.f32 %v10216, 0.5
    %v10254 = vmul.f32 %v10218, 0.5
    %v10255 = vmul.f32 %v10220, 0.5
    %v10256 = vmul.f32 %v10224, 0.5
    %v10257 = vmul.f32 %v10226, 0.5
    %v10258 = vmul.f32 %v10228, 0.5
    %v10259 = vmul.f32 %v10230, 0.5
    %v10260 = vmul.f32 %v10234, 0.5
    %v10261 = vmul.f32 %v10236, 0.5
    %v10262 = vmul.f32 %v10238, 0.5
    %v10263 = vmul.f32 %v10240, 0.5
    %v10264 = vmul.f32 %v10244, 0.5
    %v10265 = vmul.f32 %v10246, 0.5
    %v10266 = vmul.f32 %v10248, 0.5
    %v10267 = vmul.f32 %v10250, 0.5
    %v10268 = vmul.f32 %v10214, 0.044715
    %v10269 = vmul.f32 %v10216, 0.044715
    %v10270 = vmul.f32 %v10218, 0.044715
    %v10271 = vmul.f32 %v10220, 0.044715
    %v10272 = vmul.f32 %v10224, 0.044715
    %v10273 = vmul.f32 %v10226, 0.044715
    %v10274 = vmul.f32 %v10228, 0.044715
    %v10275 = vmul.f32 %v10230, 0.044715
    %v10276 = vmul.f32 %v10234, 0.044715
    %v10277 = vmul.f32 %v10236, 0.044715
    %v10278 = vmul.f32 %v10238, 0.044715
    %v10279 = vmul.f32 %v10240, 0.044715
    %v10280 = vmul.f32 %v10244, 0.044715
    %v10281 = vmul.f32 %v10246, 0.044715
    %v10282 = vmul.f32 %v10248, 0.044715
    %v10283 = vmul.f32 %v10250, 0.044715
    %v10284 = vmul.f32 %v10268, %v10214
    %v10285 = vmul.f32 %v10269, %v10216
    %v10286 = vmul.f32 %v10270, %v10218
    %v10287 = vmul.f32 %v10271, %v10220
    %v10288 = vmul.f32 %v10272, %v10224
    %v10289 = vmul.f32 %v10273, %v10226
    %v10290 = vmul.f32 %v10274, %v10228
    %v10291 = vmul.f32 %v10275, %v10230
    %v10292 = vmul.f32 %v10276, %v10234
    %v10293 = vmul.f32 %v10277, %v10236
    %v10294 = vmul.f32 %v10278, %v10238
    %v10295 = vmul.f32 %v10279, %v10240
    %v10296 = vmul.f32 %v10280, %v10244
    %v10297 = vmul.f32 %v10281, %v10246
    %v10298 = vmul.f32 %v10282, %v10248
    %v10299 = vmul.f32 %v10283, %v10250
    %v10300 = vmul.f32 %v10284, %v10214
    %v10301 = vmul.f32 %v10285, %v10216
    %v10302 = vmul.f32 %v10286, %v10218
    %v10303 = vmul.f32 %v10287, %v10220
    %v10304 = vmul.f32 %v10288, %v10224
    %v10305 = vmul.f32 %v10289, %v10226
    %v10306 = vmul.f32 %v10290, %v10228
    %v10307 = vmul.f32 %v10291, %v10230
    %v10308 = vmul.f32 %v10292, %v10234
    %v10309 = vmul.f32 %v10293, %v10236
    %v10310 = vmul.f32 %v10294, %v10238
    %v10311 = vmul.f32 %v10295, %v10240
    %v10312 = vmul.f32 %v10296, %v10244
    %v10313 = vmul.f32 %v10297, %v10246
    %v10314 = vmul.f32 %v10298, %v10248
    %v10315 = vmul.f32 %v10299, %v10250
    %v10316 = vadd.f32 %v10214, %v10300
    %v10317 = vadd.f32 %v10216, %v10301
    %v10318 = vadd.f32 %v10218, %v10302
    %v10319 = vadd.f32 %v10220, %v10303
    %v10320 = vadd.f32 %v10224, %v10304
    %v10321 = vadd.f32 %v10226, %v10305
    %v10322 = vadd.f32 %v10228, %v10306
    %v10323 = vadd.f32 %v10230, %v10307
    %v10324 = vadd.f32 %v10234, %v10308
    %v10325 = vadd.f32 %v10236, %v10309
    %v10326 = vadd.f32 %v10238, %v10310
    %v10327 = vadd.f32 %v10240, %v10311
    %v10328 = vadd.f32 %v10244, %v10312
    %v10329 = vadd.f32 %v10246, %v10313
    %v10330 = vadd.f32 %v10248, %v10314
    %v10331 = vadd.f32 %v10250, %v10315
    %v10332 = vmul.f32 %v10316, 0.7978846
    %v10333 = vmul.f32 %v10317, 0.7978846
    %v10334 = vmul.f32 %v10318, 0.7978846
    %v10335 = vmul.f32 %v10319, 0.7978846
    %v10336 = vmul.f32 %v10320, 0.7978846
    %v10337 = vmul.f32 %v10321, 0.7978846
    %v10338 = vmul.f32 %v10322, 0.7978846
    %v10339 = vmul.f32 %v10323, 0.7978846
    %v10340 = vmul.f32 %v10324, 0.7978846
    %v10341 = vmul.f32 %v10325, 0.7978846
    %v10342 = vmul.f32 %v10326, 0.7978846
    %v10343 = vmul.f32 %v10327, 0.7978846
    %v10344 = vmul.f32 %v10328, 0.7978846
    %v10345 = vmul.f32 %v10329, 0.7978846
    %v10346 = vmul.f32 %v10330, 0.7978846
    %v10347 = vmul.f32 %v10331, 0.7978846
    %v10348 = vtanh.pop %v10332
    %v10349 = vtanh.pop %v10333
    %v10350 = vtanh.pop %v10334
    %v10351 = vtanh.pop %v10335
    %v10352 = vtanh.pop %v10336
    %v10353 = vtanh.pop %v10337
    %v10354 = vtanh.pop %v10338
    %v10355 = vtanh.pop %v10339
    %v10356 = vtanh.pop %v10340
    %v10357 = vtanh.pop %v10341
    %v10358 = vtanh.pop %v10342
    %v10359 = vtanh.pop %v10343
    %v10360 = vtanh.pop %v10344
    %v10361 = vtanh.pop %v10345
    %v10362 = vtanh.pop %v10346
    %v10363 = vtanh.pop %v10347
    %v10364 = vadd.f32 %v10348, 1.0
    %v10365 = vadd.f32 %v10349, 1.0
    %v10366 = vadd.f32 %v10350, 1.0
    %v10367 = vadd.f32 %v10351, 1.0
    %v10368 = vadd.f32 %v10352, 1.0
    %v10369 = vadd.f32 %v10353, 1.0
    %v10370 = vadd.f32 %v10354, 1.0
    %v10371 = vadd.f32 %v10355, 1.0
    %v10372 = vadd.f32 %v10356, 1.0
    %v10373 = vadd.f32 %v10357, 1.0
    %v10374 = vadd.f32 %v10358, 1.0
    %v10375 = vadd.f32 %v10359, 1.0
    %v10376 = vadd.f32 %v10360, 1.0
    %v10377 = vadd.f32 %v10361, 1.0
    %v10378 = vadd.f32 %v10362, 1.0
    %v10379 = vadd.f32 %v10363, 1.0
    %v10380 = vmul.f32 %v10252, %v10364
    %v10381 = vmul.f32 %v10253, %v10365
    %v10382 = vmul.f32 %v10254, %v10366
    %v10383 = vmul.f32 %v10255, %v10367
    %v10384 = vmul.f32 %v10256, %v10368
    %v10385 = vmul.f32 %v10257, %v10369
    %v10386 = vmul.f32 %v10258, %v10370
    %v10387 = vmul.f32 %v10259, %v10371
    %v10388 = vmul.f32 %v10260, %v10372
    %v10389 = vmul.f32 %v10261, %v10373
    %v10390 = vmul.f32 %v10262, %v10374
    %v10391 = vmul.f32 %v10263, %v10375
    %v10392 = vmul.f32 %v10264, %v10376
    %v10393 = vmul.f32 %v10265, %v10377
    %v10394 = vmul.f32 %v10266, %v10378
    %v10395 = vmul.f32 %v10267, %v10379
    %s10396 = scalar_lea.vmem %s5, 128
    %v10397 = vld [vmem:[%s10396] sm:$0xf]
    %v10398 = vld [vmem:[%s10396 + $0x4] sm:$0xf]
    %v10399 = vld [vmem:[%s10396 + $0x8] sm:$0xf]
    %v10400 = vld [vmem:[%s10396 + $0xc] sm:$0xf]
    %v10401 = vld [vmem:[%s10396 + $0x10] sm:$0xf]
    %v10402 = vld [vmem:[%s10396 + $0x14] sm:$0xf]
    %v10403 = vld [vmem:[%s10396 + $0x18] sm:$0xf]
    %v10404 = vld [vmem:[%s10396 + $0x1c] sm:$0xf]
    %v10405 = vld [vmem:[%s10396 + $0x20] sm:$0xf]
    %v10406 = vld [vmem:[%s10396 + $0x24] sm:$0xf]
    %v10407 = vld [vmem:[%s10396 + $0x28] sm:$0xf]
    %v10408 = vld [vmem:[%s10396 + $0x2c] sm:$0xf]
    %v10409 = vld [vmem:[%s10396 + $0x30] sm:$0xf]
    %v10410 = vld [vmem:[%s10396 + $0x34] sm:$0xf]
    %v10411 = vld [vmem:[%s10396 + $0x38] sm:$0xf]
    %v10412 = vld [vmem:[%s10396 + $0x3c] sm:$0xf]
    %v10413 = vld [vmem:[%s10396 + $0x40] sm:$0xf]
    %v10414 = vld [vmem:[%s10396 + $0x44] sm:$0xf]
    %v10415 = vld [vmem:[%s10396 + $0x48] sm:$0xf]
    %v10416 = vld [vmem:[%s10396 + $0x4c] sm:$0xf]
    %v10417 = vld [vmem:[%s10396 + $0x50] sm:$0xf]
    %v10418 = vld [vmem:[%s10396 + $0x54] sm:$0xf]
    %v10419 = vld [vmem:[%s10396 + $0x58] sm:$0xf]
    %v10420 = vld [vmem:[%s10396 + $0x5c] sm:$0xf]
    %v10421 = vld [vmem:[%s10396 + $0x60] sm:$0xf]
    %v10422 = vld [vmem:[%s10396 + $0x64] sm:$0xf]
    %v10423 = vld [vmem:[%s10396 + $0x68] sm:$0xf]
    %v10424 = vld [vmem:[%s10396 + $0x6c] sm:$0xf]
    %v10425 = vld [vmem:[%s10396 + $0x70] sm:$0xf]
    %v10426 = vld [vmem:[%s10396 + $0x74] sm:$0xf]
    %v10427 = vld [vmem:[%s10396 + $0x78] sm:$0xf]
    %v10428 = vld [vmem:[%s10396 + $0x7c] sm:$0xf]
    %v10429 = vpack.c.bf16 %v10382, %v10380
    %v10430 = vpack.c.bf16 %v10383, %v10381
    %v10431 = vpack.c.bf16 %v10386, %v10384
    %v10432 = vpack.c.bf16 %v10387, %v10385
    %v10433 = vpack.c.bf16 %v10390, %v10388
    %v10434 = vpack.c.bf16 %v10391, %v10389
    %v10435 = vpack.c.bf16 %v10394, %v10392
    %v10436 = vpack.c.bf16 %v10395, %v10393
    %v10469 = vunpack.c.l.b16 %v10397
    %v10470 = vunpack.c.l.b16 %v10398
    %v10471 = vunpack.c.l.b16 %v10399
    %v10472 = vunpack.c.l.b16 %v10400
    %v10473 = vunpack.c.l.b16 %v10401
    %v10474 = vunpack.c.l.b16 %v10402
    %v10475 = vunpack.c.l.b16 %v10403
    %v10476 = vunpack.c.l.b16 %v10404
    %v10477 = vunpack.c.l.b16 %v10405
    %v10478 = vunpack.c.l.b16 %v10406
    %v10479 = vunpack.c.l.b16 %v10407
    %v10480 = vunpack.c.l.b16 %v10408
    %v10481 = vunpack.c.l.b16 %v10409
    %v10482 = vunpack.c.l.b16 %v10410
    %v10483 = vunpack.c.l.b16 %v10411
    %v10484 = vunpack.c.l.b16 %v10412
    %v10485 = vunpack.c.l.b16 %v10413
    %v10486 = vunpack.c.l.b16 %v10414
    %v10487 = vunpack.c.l.b16 %v10415
    %v10488 = vunpack.c.l.b16 %v10416
    %v10489 = vunpack.c.l.b16 %v10417
    %v10490 = vunpack.c.l.b16 %v10418
    %v10491 = vunpack.c.l.b16 %v10419
    %v10492 = vunpack.c.l.b16 %v10420
    %v10493 = vunpack.c.l.b16 %v10421
    %v10494 = vunpack.c.l.b16 %v10422
    %v10495 = vunpack.c.l.b16 %v10423
    %v10496 = vunpack.c.l.b16 %v10424
    %v10497 = vunpack.c.l.b16 %v10425
    %v10498 = vunpack.c.l.b16 %v10426
    %v10499 = vunpack.c.l.b16 %v10427
    %v10500 = vunpack.c.l.b16 %v10428
    %v10501 = vpack.c.b16 %v10470, %v10469
    %v10502 = vpack.c.b16 %v10472, %v10471
    %v10503 = vpack.c.b16 %v10474, %v10473
    %v10504 = vpack.c.b16 %v10476, %v10475
    %v10505 = vpack.c.b16 %v10478, %v10477
    %v10506 = vpack.c.b16 %v10480, %v10479
    %v10507 = vpack.c.b16 %v10482, %v10481
    %v10508 = vpack.c.b16 %v10484, %v10483
    %v10509 = vpack.c.b16 %v10486, %v10485
    %v10510 = vpack.c.b16 %v10488, %v10487
    %v10511 = vpack.c.b16 %v10490, %v10489
    %v10512 = vpack.c.b16 %v10492, %v10491
    %v10513 = vpack.c.b16 %v10494, %v10493
    %v10514 = vpack.c.b16 %v10496, %v10495
    %v10515 = vpack.c.b16 %v10498, %v10497
    %v10516 = vpack.c.b16 %v10500, %v10499
    %10533 = vmatprep.subr.bf16.mxu0 0
    %10534 = vmatpush1.bf16.msra.mxu0 %v10508
    %10535 = vmatprep.subr.bf16.mxu0 0
    %10536 = vmatpush1.bf16.msra.mxu0 %v10507
    %10537 = vmatprep.subr.bf16.mxu0 0
    %10538 = vmatpush1.bf16.msra.mxu0 %v10506
    %10539 = vmatprep.subr.bf16.mxu0 0
    %10540 = vmatpush1.bf16.msra.mxu0 %v10505
    %10541 = vmatprep.subr.bf16.mxu0 0
    %10542 = vmatpush1.bf16.msra.mxu0 %v10504
    %10543 = vmatprep.subr.bf16.mxu0 0
    %10544 = vmatpush1.bf16.msra.mxu0 %v10503
    %10545 = vmatprep.subr.bf16.mxu0 0
    %10546 = vmatpush1.bf16.msra.mxu0 %v10502
    %10547 = vmatprep.subr.bf16.mxu0 0
    %10548 = vmatpush1.bf16.msra.mxu0 %v10501
    %10549 = vmatprep.subr.bf16.mxu0 0
    %10550 = vmatpush2.bf16.msra.mxu0 %v10516
    %10551 = vmatprep.subr.bf16.mxu0 0
    %10552 = vmatpush2.bf16.msra.mxu0 %v10515
    %10553 = vmatprep.subr.bf16.mxu0 0
    %10554 = vmatpush2.bf16.msra.mxu0 %v10514
    %10555 = vmatprep.subr.bf16.mxu0 0
    %10556 = vmatpush2.bf16.msra.mxu0 %v10513
    %10557 = vmatprep.subr.bf16.mxu0 0
    %10558 = vmatpush2.bf16.msra.mxu0 %v10512
    %10559 = vmatprep.subr.bf16.mxu0 0
    %10560 = vmatpush2.bf16.msra.mxu0 %v10511
    %10561 = vmatprep.subr.bf16.mxu0 0
    %10562 = vmatpush2.bf16.msra.mxu0 %v10510
    %10563 = vmatprep.subr.bf16.mxu0 0
    %10564 = vmatpush2.bf16.msra.mxu0 %v10509
    %10565 = vmatprep.mubr.bf16.mxu0 %v10430
    %10566 = vmatmul.mubr.bf16.gmra.mxu0 %v10429
    %v10567 = vpop.f32.mrf.mxu0
    %v10568 = vadd.f32 0.0, %v10567
    %v10569 = vpop.f32.mrf.mxu0
    %v10570 = vpop.f32.mrf.mxu0
    %v10571 = vadd.f32 0.0, %v10570
    %v10572 = vpop.f32.mrf.mxu0
    %10573 = vmatprep.mubr.bf16.mxu0 %v10432
    %10574 = vmatmul.mubr.bf16.gmra.mxu0 %v10431
    %v10575 = vpop.f32.mrf.mxu0
    %v10576 = vadd.f32 0.0, %v10575
    %v10577 = vpop.f32.mrf.mxu0
    %v10578 = vpop.f32.mrf.mxu0
    %v10579 = vadd.f32 0.0, %v10578
    %v10580 = vpop.f32.mrf.mxu0
    %10581 = vmatprep.mubr.bf16.mxu0 %v10434
    %10582 = vmatmul.mubr.bf16.gmra.mxu0 %v10433
    %v10583 = vpop.f32.mrf.mxu0
    %v10584 = vadd.f32 0.0, %v10583
    %v10585 = vpop.f32.mrf.mxu0
    %v10586 = vpop.f32.mrf.mxu0
    %v10587 = vadd.f32 0.0, %v10586
    %v10588 = vpop.f32.mrf.mxu0
    %10589 = vmatprep.mubr.bf16.mxu0 %v10436
    %10590 = vmatmul.mubr.bf16.gmra.mxu0 %v10435
    %v10591 = vpop.f32.mrf.mxu0
    %v10592 = vadd.f32 0.0, %v10591
    %v10593 = vpop.f32.mrf.mxu0
    %v10594 = vpop.f32.mrf.mxu0
    %v10595 = vadd.f32 0.0, %v10594
    %v10596 = vpop.f32.mrf.mxu0
    %10597 = vdwg.mxu0
    %v10598 = vadd.f32 %v9950, %v10568
    %v10599 = vadd.f32 %v9951, %v10571
    %v10600 = vadd.f32 %v9952, %v10576
    %v10601 = vadd.f32 %v9953, %v10579
    %v10602 = vadd.f32 %v9954, %v10584
    %v10603 = vadd.f32 %v9955, %v10587
    %v10604 = vadd.f32 %v9956, %v10592
    %v10605 = vadd.f32 %v9957, %v10595
    %v10606 = vlaneseq
    %v10607 = vshrl.u32 %v10606, 7
    %v10608 = vsub.s32 7, %v10607
    %v10609 = vrot.slane %v5720, %v10608
    %v10610 = vadd.f32 %v10598, %v10609
    %v10611 = vadd.f32 %v10599, %v10609
    %v10612 = vadd.f32 %v10600, %v10609
    %v10613 = vadd.f32 %v10601, %v10609
    %v10614 = vadd.f32 %v10602, %v10609
    %v10615 = vadd.f32 %v10603, %v10609
    %v10616 = vadd.f32 %v10604, %v10609
    %v10617 = vadd.f32 %v10605, %v10609
    %v10618 = vld [vmem:[#allocation6] sm:$0x1]
    %v10619 = vld [vmem:[#allocation6 + $0x1] sm:$0x1]
    %v10620 = vld [vmem:[#allocation6 + $0x2] sm:$0x1]
    %v10629 = vrot.slane %v10611, 7
    %vm10630 = vcmask 1041409
    %v10631 = vsel %vm10630, %v10629, %v10610
    %v10632 = vrot.slane %v10612, 6
    %vm10633 = vcmask 1042434
    %v10634 = vsel %vm10633, %v10632, %v10631
    %v10635 = vrot.slane %v10613, 5
    %vm10636 = vcmask 1043459
    %v10637 = vsel %vm10636, %v10635, %v10634
    %v10638 = vrot.slane %v10614, 4
    %vm10639 = vcmask 1044484
    %v10640 = vsel %vm10639, %v10638, %v10637
    %v10641 = vrot.slane %v10615, 3
    %vm10642 = vcmask 1045509
    %v10643 = vsel %vm10642, %v10641, %v10640
    %v10644 = vrot.slane %v10616, 2
    %vm10645 = vcmask 1046534
    %v10646 = vsel %vm10645, %v10644, %v10643
    %v10647 = vrot.slane %v10617, 1
    %vm10648 = vcmask 1047559
    %v10649 = vsel %vm10648, %v10647, %v10646
    %10651 = vadd.xlane.f32.xlu0 %v10649
    %v10652 = vpop.xlane.xlu0 %10651
    %v10653 = vmul.f32 %v10652, %v838
    %v10655 = vrot.slane %v10653, 1
    %v10656 = vrot.slane %v10653, 2
    %v10657 = vrot.slane %v10653, 3
    %v10658 = vrot.slane %v10653, 4
    %v10659 = vrot.slane %v10653, 5
    %v10660 = vrot.slane %v10653, 6
    %v10661 = vrot.slane %v10653, 7
    %v10670 = vsub.f32 %v10610, %v10653
    %v10671 = vsub.f32 %v10611, %v10655
    %v10672 = vsub.f32 %v10612, %v10656
    %v10673 = vsub.f32 %v10613, %v10657
    %v10674 = vsub.f32 %v10614, %v10658
    %v10675 = vsub.f32 %v10615, %v10659
    %v10676 = vsub.f32 %v10616, %v10660
    %v10677 = vsub.f32 %v10617, %v10661
    %v10678 = vmul.f32 %v10670, %v10670
    %v10679 = vmul.f32 %v10671, %v10671
    %v10680 = vmul.f32 %v10672, %v10672
    %v10681 = vmul.f32 %v10673, %v10673
    %v10682 = vmul.f32 %v10674, %v10674
    %v10683 = vmul.f32 %v10675, %v10675
    %v10684 = vmul.f32 %v10676, %v10676
    %v10685 = vmul.f32 %v10677, %v10677
    %v10694 = vrot.slane %v10679, 7
    %v10695 = vsel %vm10630, %v10694, %v10678
    %v10696 = vrot.slane %v10680, 6
    %v10697 = vsel %vm10633, %v10696, %v10695
    %v10698 = vrot.slane %v10681, 5
    %v10699 = vsel %vm10636, %v10698, %v10697
    %v10700 = vrot.slane %v10682, 4
    %v10701 = vsel %vm10639, %v10700, %v10699
    %v10702 = vrot.slane %v10683, 3
    %v10703 = vsel %vm10642, %v10702, %v10701
    %v10704 = vrot.slane %v10684, 2
    %v10705 = vsel %vm10645, %v10704, %v10703
    %v10706 = vrot.slane %v10685, 1
    %v10707 = vsel %vm10648, %v10706, %v10705
    %10709 = vadd.xlane.f32.xlu0 %v10707
    %v10710 = vpop.xlane.xlu0 %10709
    %v10711 = vmul.f32 %v10710, %v838
    %v10712 = vadd.f32 %v10711, 1e-12
    %v10713 = vrsqrt.pop %v10712
    %v10715 = vrot.slane %v10713, 1
    %v10716 = vrot.slane %v10713, 2
    %v10717 = vrot.slane %v10713, 3
    %v10718 = vrot.slane %v10713, 4
    %v10719 = vrot.slane %v10713, 5
    %v10720 = vrot.slane %v10713, 6
    %v10721 = vrot.slane %v10713, 7
    %v10730 = vmul.f32 %v10670, %v10713
    %v10731 = vmul.f32 %v10671, %v10715
    %v10732 = vmul.f32 %v10672, %v10716
    %v10733 = vmul.f32 %v10673, %v10717
    %v10734 = vmul.f32 %v10674, %v10718
    %v10735 = vmul.f32 %v10675, %v10719
    %v10736 = vmul.f32 %v10676, %v10720
    %v10737 = vmul.f32 %v10677, %v10721
    %v10738 = vlaneseq
    %v10739 = vshrl.u32 %v10738, 7
    %v10740 = vsub.s32 0, %v10739
    %v10741 = vrot.slane %v10618, %v10740
    %v10742 = vmul.f32 %v10730, %v10741
    %v10743 = vmul.f32 %v10731, %v10741
    %v10744 = vmul.f32 %v10732, %v10741
    %v10745 = vmul.f32 %v10733, %v10741
    %v10746 = vmul.f32 %v10734, %v10741
    %v10747 = vmul.f32 %v10735, %v10741
    %v10748 = vmul.f32 %v10736, %v10741
    %v10749 = vmul.f32 %v10737, %v10741
    %v10750 = vlaneseq
    %v10751 = vshrl.u32 %v10750, 7
    %v10752 = vsub.s32 0, %v10751
    %v10753 = vrot.slane %v10619, %v10752
    %v10754 = vadd.f32 %v10742, %v10753
    %v10755 = vadd.f32 %v10743, %v10753
    %v10756 = vadd.f32 %v10744, %v10753
    %v10757 = vadd.f32 %v10745, %v10753
    %v10758 = vadd.f32 %v10746, %v10753
    %v10759 = vadd.f32 %v10747, %v10753
    %v10760 = vadd.f32 %v10748, %v10753
    %v10761 = vadd.f32 %v10749, %v10753
    %v10762 = vld [vmem:[#allocation7] sm:$0xf]
    %v10763 = vld [vmem:[#allocation7 + $0x4] sm:$0xf]
    %v10764 = vld [vmem:[#allocation7 + $0x8] sm:$0xf]
    %v10765 = vld [vmem:[#allocation7 + $0xc] sm:$0xf]
    %v10766 = vld [vmem:[#allocation7 + $0x10] sm:$0xf]
    %v10767 = vld [vmem:[#allocation7 + $0x14] sm:$0xf]
    %v10768 = vld [vmem:[#allocation7 + $0x18] sm:$0xf]
    %v10769 = vld [vmem:[#allocation7 + $0x1c] sm:$0xf]
    %v10770 = vld [vmem:[#allocation7 + $0x20] sm:$0xf]
    %v10771 = vld [vmem:[#allocation7 + $0x24] sm:$0xf]
    %v10772 = vld [vmem:[#allocation7 + $0x28] sm:$0xf]
    %v10773 = vld [vmem:[#allocation7 + $0x2c] sm:$0xf]
    %v10774 = vld [vmem:[#allocation7 + $0x30] sm:$0xf]
    %v10775 = vld [vmem:[#allocation7 + $0x34] sm:$0xf]
    %v10776 = vld [vmem:[#allocation7 + $0x38] sm:$0xf]
    %v10777 = vld [vmem:[#allocation7 + $0x3c] sm:$0xf]
    %v10778 = vpack.c.bf16 %v10754, %v10754
    %v10779 = vpack.c.bf16 %v10755, %v10755
    %v10780 = vpack.c.bf16 %v10756, %v10756
    %v10781 = vpack.c.bf16 %v10757, %v10757
    %v10782 = vpack.c.bf16 %v10758, %v10758
    %v10783 = vpack.c.bf16 %v10759, %v10759
    %v10784 = vpack.c.bf16 %v10760, %v10760
    %v10785 = vpack.c.bf16 %v10761, %v10761
    %v10786 = vlaneseq
    %v10787 = vshrl.u32 %v10786, 7
    %v10788 = vsub.s32 0, %v10787
    %v10789 = vrot.slane %v10620, %v10788
    %v10798 = vunpack.c.l.b16 %v10778
    %v10799 = vunpack.c.l.b16 %v10779
    %v10800 = vunpack.c.l.b16 %v10780
    %v10801 = vunpack.c.l.b16 %v10781
    %v10802 = vunpack.c.l.b16 %v10782
    %v10803 = vunpack.c.l.b16 %v10783
    %v10804 = vunpack.c.l.b16 %v10784
    %v10805 = vunpack.c.l.b16 %v10785
    %v10806 = vrot.slane %v10799, 7
    %v10807 = vsel %vm10630, %v10806, %v10798
    %v10808 = vrot.slane %v10800, 6
    %v10809 = vsel %vm10633, %v10808, %v10807
    %v10810 = vrot.slane %v10801, 5
    %v10811 = vsel %vm10636, %v10810, %v10809
    %v10812 = vrot.slane %v10802, 4
    %v10813 = vsel %vm10639, %v10812, %v10811
    %v10814 = vrot.slane %v10803, 3
    %v10815 = vsel %vm10642, %v10814, %v10813
    %v10816 = vrot.slane %v10804, 2
    %v10817 = vsel %vm10645, %v10816, %v10815
    %v10818 = vrot.slane %v10805, 1
    %v10819 = vsel %vm10648, %v10818, %v10817
    %v10820 = vpack.c.b16 %v10819, %v10819
    %v10838 = vunpack.c.l.b16 %v10762
    %v10839 = vunpack.c.l.b16 %v10763
    %v10840 = vunpack.c.l.b16 %v10764
    %v10841 = vunpack.c.l.b16 %v10765
    %v10842 = vunpack.c.l.b16 %v10766
    %v10843 = vunpack.c.l.b16 %v10767
    %v10844 = vunpack.c.l.b16 %v10768
    %v10845 = vunpack.c.l.b16 %v10769
    %v10846 = vunpack.c.l.b16 %v10770
    %v10847 = vunpack.c.l.b16 %v10771
    %v10848 = vunpack.c.l.b16 %v10772
    %v10849 = vunpack.c.l.b16 %v10773
    %v10850 = vunpack.c.l.b16 %v10774
    %v10851 = vunpack.c.l.b16 %v10775
    %v10852 = vunpack.c.l.b16 %v10776
    %v10853 = vunpack.c.l.b16 %v10777
    %v10854 = vpack.c.b16 %v10839, %v10838
    %v10855 = vpack.c.b16 %v10841, %v10840
    %v10856 = vpack.c.b16 %v10843, %v10842
    %v10857 = vpack.c.b16 %v10845, %v10844
    %v10858 = vpack.c.b16 %v10847, %v10846
    %v10859 = vpack.c.b16 %v10849, %v10848
    %v10860 = vpack.c.b16 %v10851, %v10850
    %v10861 = vpack.c.b16 %v10853, %v10852
    %10870 = vmatprep.subr.bf16.mxu0 0
    %10871 = vmatpush1.bf16.msra.mxu0 %v10861
    %10872 = vmatprep.subr.bf16.mxu0 0
    %10873 = vmatpush1.bf16.msra.mxu0 %v10860
    %10874 = vmatprep.subr.bf16.mxu0 0
    %10875 = vmatpush1.bf16.msra.mxu0 %v10859
    %10876 = vmatprep.subr.bf16.mxu0 0
    %10877 = vmatpush1.bf16.msra.mxu0 %v10858
    %10878 = vmatprep.subr.bf16.mxu0 0
    %10879 = vmatpush1.bf16.msra.mxu0 %v10857
    %10880 = vmatprep.subr.bf16.mxu0 0
    %10881 = vmatpush1.bf16.msra.mxu0 %v10856
    %10882 = vmatprep.subr.bf16.mxu0 0
    %10883 = vmatpush1.bf16.msra.mxu0 %v10855
    %10884 = vmatprep.subr.bf16.mxu0 0
    %10885 = vmatpush1.bf16.msra.mxu0 %v10854
    %10886 = vmatprep.subr.bf16.mxu0 0
    %10887 = vmatpush2.bf16.msra.mxu0 0
    %10888 = vmatprep.subr.bf16.mxu0 0
    %10889 = vmatpush2.bf16.msra.mxu0 0
    %10890 = vmatprep.subr.bf16.mxu0 0
    %10891 = vmatpush2.bf16.msra.mxu0 0
    %10892 = vmatprep.subr.bf16.mxu0 0
    %10893 = vmatpush2.bf16.msra.mxu0 0
    %10894 = vmatprep.subr.bf16.mxu0 0
    %10895 = vmatpush2.bf16.msra.mxu0 0
    %10896 = vmatprep.subr.bf16.mxu0 0
    %10897 = vmatpush2.bf16.msra.mxu0 0
    %10898 = vmatprep.subr.bf16.mxu0 0
    %10899 = vmatpush2.bf16.msra.mxu0 0
    %10900 = vmatprep.subr.bf16.mxu0 0
    %10901 = vmatpush2.bf16.msra.mxu0 0
    %10902 = vmatprep.mubr.bf16.mxu0 0
    %10903 = vmatmul.mubr.bf16.gmra.mxu0 %v10820
    %v10904 = vpop.f32.mrf.mxu0
    %v10905 = vadd.f32 %v10789, %v10904
    %v10906 = vpop.f32.mrf.mxu0
    %v10907 = vpop.f32.mrf.mxu0
    %v10908 = vpop.f32.mrf.mxu0
    %10909 = vdwg.mxu0
    %v10910 = vmul.f32 %v10905, %v10905
    %10911 = vadd.xlane.f32.xlu0 %v10910
    %v10912 = vpop.xlane.xlu0 %10911
    %v10913 = vmax.f32 %v10912, 1e-24
    %v10914 = vrsqrt.pop %v10913
    %v10915 = vmul.f32 %v10905, %v10914
    %10916 = vst [vmem:[%s9] sm:$0xff] %v10915
    // Predicated region
    $region54: #{vit_image_encoder.1} parent=1 // pred_check
      _
    $region55: #{vit_image_encoder.1} parent=1 // pred_check_branch
      %10918 = sbr.rel (0) target = $region57
    $region56: #{vit_image_encoder.1} parent=1 // pred_region
      _
    $region57: #{vit_image_encoder.1} parent=1 // pred_fallthru
      _
    // Predicated region
    $region58: #{vit_image_encoder.1} parent=1 // pred_check
      _
    $region59: #{vit_image_encoder.1} parent=1 // pred_check_branch
      %10920 = sbr.rel (0) target = $region61
    $region60: #{vit_image_encoder.1} parent=1 // pred_region
      _
    $region61: #{vit_image_encoder.1} parent=1 // pred_fallthru
      _
    %10921 = vsyncpa [#allocation3], 1
    %10922 = vsyncpa [#allocation5], 1
    %10923 = vsyncpa [#allocation8], 1

</llo_original>
